<compile_context>
chip_gen: v5e
topology: v5e:2x2
jax: 0.10.0
libtpu: 0.0.40
codegen_flags: <defaults>
</compile_context>

<pallas_src>
import functools
import math

import jax
import jax.numpy as jnp
from jax.experimental import pallas as pl
from jax.experimental.pallas import tpu as pltpu

_PAD = 8  # zeroed tail rows so shifted flat-row taps can over-read safely (needs >= 1)


# ---------------------------------------------------------------------------
# Fused decoder-stage kernel.
# ---------------------------------------------------------------------------
def _fused_stage_kernel(x_ref, encp_ref, wt_ref, bt_ref, w1u_ref, w1e_ref, b1_ref,
                        w2_ref, b2_ref, o_ref, u_ref, p_ref, *, H, W, C, bpg):
    HW = H * W
    L1 = (H - 1) * W          # flat length of conv1 parity planes (incl. wrap-junk cols)
    L2 = (H - 2) * W          # flat length of conv2 parity planes (incl. wrap-junk cols)
    C4 = 4 * C
    offs = ((0, 0), (0, 1), (1, 0), (1, 1))      # oi = 2*u + v  ->  flat shift u*W + v

    # Zero the over-read tail rows once (hoisted; scratch persists across the batch loop).
    u_ref[HW:HW + _PAD, :] = jnp.zeros((_PAD, C4), jnp.float32)
    p_ref[L1:L1 + _PAD, :] = jnp.zeros((_PAD, C4), jnp.float32)

    for bb in range(bpg):     # static, small; per-iteration live set is one (L, 4C) acc
        # ---- ConvTranspose2d(k=2,s=2): one matmul, 4 parity planes packed along lanes,
        #      single wide (HW, 4C) store into VMEM scratch ----
        y = jnp.dot(x_ref[bb], wt_ref[...], preferred_element_type=jnp.float32)
        u_ref[0:HW, :] = y + bt_ref[...]

        # ---- conv1 (VALID 3x3) + ReLU, skip-concat folded in:
        #      4 row offsets x 2 sources, every LHS read is a full-width lane-dense slab;
        #      the per-offset (4C, 4C) weights produce all 4 output parity planes at once ----
        acc = jnp.zeros((L1, C4), jnp.float32)
        for oi, (u, v) in enumerate(offs):
            off = u * W + v
            acc += jnp.dot(u_ref[off:off + L1, :], w1u_ref[oi],
                           preferred_element_type=jnp.float32)
            acc += jnp.dot(encp_ref[bb, off:off + L1, :], w1e_ref[oi],
                           preferred_element_type=jnp.float32)
        p_ref[0:L1, :] = jnp.maximum(acc + b1_ref[...], 0.0)   # normalize == identity

        # ---- conv2 (VALID 3x3): 4 row offsets, lane-dense reads, lane-dense output ----
        acc2 = jnp.zeros((L2, C4), jnp.float32)
        for oi, (u, v) in enumerate(offs):
            off = u * W + v
            acc2 += jnp.dot(p_ref[off:off + L2, :], w2_ref[oi],
                            preferred_element_type=jnp.float32)
        o_ref[bb, :, :] = (acc2 + b2_ref[...]).astype(o_ref.dtype)


# ---------------------------------------------------------------------------
# Host-side plumbing (tiny, KB-scale, all inside the surrounding jit).
# ---------------------------------------------------------------------------
def _center_crop_offsets(He, We, H, W):
    return int(round((He - H) / 2.0)), int(round((We - W) / 2.0))


def _prep_enc_parity(enc, H, W):
    """CenterCrop to (2H,2W), pack the 4 (row,col)-parity planes ALONG LANES:
    output (B, H*W + _PAD, 4*C), lane order (ki, kj, c), zero-padded tail rows."""
    B, He, We, C = enc.shape
    top, left = _center_crop_offsets(He, We, 2 * H, 2 * W)
    e = enc[:, top:top + 2 * H, left:left + 2 * W, :]
    e = e.reshape(B, H, 2, W, 2, C).transpose(0, 1, 3, 2, 4, 5).reshape(B, H * W, 4 * C)
    return jnp.pad(e, ((0, 0), (0, _PAD), (0, 0)))


def _build_parity_weight(w_hwio):
    """(3,3,Cs,C) conv weight -> (4, 4*Cs, 4*C) per-row-offset block matrices.

    For flat row offset index oi = 2*u + v: row block (2*ki+kj) = source parity plane,
    column block (2*pr+pc) = output parity plane; the (Cs, C) block is w[dh, dw] with
    dh = 2*u + ki - pr, dw = 2*v + kj - pc when both lie in [0, 2], else zero.
    """
    Cs, C = w_hwio.shape[2], w_hwio.shape[3]
    zero = jnp.zeros((Cs, C), w_hwio.dtype)
    mats = []
    for u in range(2):
        for v in range(2):
            rows = []
            for ki in range(2):
                for kj in range(2):
                    cols = []
                    for pr in range(2):
                        for pc in range(2):
                            dh = 2 * u + ki - pr
                            dw = 2 * v + kj - pc
                            ok = (0 <= dh <= 2) and (0 <= dw <= 2)
                            cols.append(w_hwio[dh, dw] if ok else zero)
                    rows.append(jnp.concatenate(cols, axis=1))
            mats.append(jnp.concatenate(rows, axis=0))
    return jnp.stack(mats, axis=0)            # (4, 4*Cs, 4*C)


def _batches_per_step(B):
    """v7x has 2 TensorCores -> keep a >=2-step 'parallel' grid when B >= 2.
    Single-TC v5e/v6e are per-step-overhead bound -> fold the whole batch into one
    grid step (in-kernel batch loop)."""
    try:
        kind = jax.devices()[0].device_kind.lower()
    except Exception:
        kind = ""
    bpg = (B + 1) // 2 if ("v7" in kind and B >= 2) else B
    bpg = max(1, min(bpg, 8))                 # cap per-step VMEM block size
    while B % bpg:
        bpg -= 1
    return bpg


def _decoder_stage(x, enc, wt, bt, w1, b1, w2, b2, *, bpg):
    B, H, W, Cin = x.shape
    C = wt.shape[1]
    # Invariants of the parity / wrap-junk scheme (see review correctness notes).
    assert H >= 3 and W >= 3, "parity-plane scheme assumes H, W >= 3"
    assert w1.shape[2] == 2 * C and enc.shape[-1] == C
    HW, L1, L2 = H * W, (H - 1) * W, (H - 2) * W
    C4 = 4 * C

    x2 = x.reshape(B, HW, Cin)
    encp = _prep_enc_parity(enc, H, W)

    # Weight prep: upconv columns ordered (ki, kj, c) == packed plane-major lane order.
    wt_flat = jnp.transpose(wt, (0, 2, 3, 1)).reshape(Cin, C4)
    bt4 = jnp.tile(bt, 4).reshape(1, C4)
    w1u = _build_parity_weight(w1[:, :, :C, :])   # conv1 "up" half of concat
    w1e = _build_parity_weight(w1[:, :, C:, :])   # conv1 "encoder" half of concat
    b1_4 = jnp.tile(b1, 4).reshape(1, C4)
    w2m = _build_parity_weight(w2)
    b2_4 = jnp.tile(b2, 4).reshape(1, C4)

    steps = B // bpg
    kernel = functools.partial(_fused_stage_kernel, H=H, W=W, C=C, bpg=bpg)
    out = pl.pallas_call(
        kernel,
        out_shape=jax.ShapeDtypeStruct((B, L2, C4), x.dtype),
        grid=(steps,),
        in_specs=[
            pl.BlockSpec((bpg, HW, Cin), lambda g: (g, 0, 0)),
            pl.BlockSpec((bpg, HW + _PAD, C4), lambda g: (g, 0, 0)),
            pl.BlockSpec((Cin, C4), lambda g: (0, 0)),
            pl.BlockSpec((1, C4), lambda g: (0, 0)),
            pl.BlockSpec((4, C4, C4), lambda g: (0, 0, 0)),
            pl.BlockSpec((4, C4, C4), lambda g: (0, 0, 0)),
            pl.BlockSpec((1, C4), lambda g: (0, 0)),
            pl.BlockSpec((4, C4, C4), lambda g: (0, 0, 0)),
            pl.BlockSpec((1, C4), lambda g: (0, 0)),
        ],
        out_specs=pl.BlockSpec((bpg, L2, C4), lambda g: (g, 0, 0)),
        scratch_shapes=[
            pltpu.VMEM((HW + _PAD, C4), jnp.float32),   # upconv planes, lane-packed
            pltpu.VMEM((L1 + _PAD, C4), jnp.float32),   # conv1 planes, lane-packed
        ],
        compiler_params=pltpu.CompilerParams(dimension_semantics=("parallel",)),
    )(x2, encp, wt_flat, bt4, w1u, w1e, b1_4, w2m, b2_4)

    # Re-interleave lane-packed output planes (lanes = (qs, qt, c); rows = i*W + j);
    # columns j >= W-2 of each plane are wrap junk and are dropped here.
    o = out.reshape(B, H - 2, W, 2, 2, C).transpose(0, 1, 3, 2, 4, 5)
    return o[:, :, :, :W - 2].reshape(B, 2 * (H - 2), 2 * (W - 2), C)


def decoder_forward(params, x, encoder_list):
    bpg = _batches_per_step(x.shape[0])
    for (wt, bt, w1, b1, w2, b2), enc in zip(params, encoder_list):
        x = _decoder_stage(x, enc, wt, bt, w1, b1, w2, b2, bpg=bpg)
    return x


def init_params(key, channels):
    params = []
    for i in range(len(channels) - 1):
        cin, cout = channels[i], channels[i + 1]
        key, k0, k1, k2, k3, k4, k5 = jax.random.split(key, 7)
        wt = jax.random.normal(k0, (cin, cout, 2, 2), jnp.float32) / math.sqrt(cin * 4)
        bt = 0.05 * jax.random.normal(k1, (cout,), jnp.float32)
        w1 = jax.random.normal(k2, (3, 3, cin, cout), jnp.float32) / math.sqrt(cin * 9)
        b1 = 0.05 * jax.random.normal(k3, (cout,), jnp.float32)
        w2 = jax.random.normal(k4, (3, 3, cout, cout), jnp.float32) / math.sqrt(cout * 9)
        b2 = 0.05 * jax.random.normal(k5, (cout,), jnp.float32)
        params.append((wt, bt, w1, b1, w2, b2))
    return params


# ---------------------------------------------------------------------------
# Pure-JAX reference (correctness check only)
# ---------------------------------------------------------------------------
def center_crop(e, H, W):
    top, left = _center_crop_offsets(e.shape[1], e.shape[2], H, W)
    return e[:, top:top + H, left:left + W, :]


def _ref_conv3x3(x, w_hwio, bias):
    y = jax.lax.conv_general_dilated(
        x, w_hwio, window_strides=(1, 1), padding="VALID",
        dimension_numbers=("NHWC", "HWIO", "NHWC"),
        precision=jax.lax.Precision.HIGHEST)
    return y + bias


def _ref_upconv(x, w_t, bias):
    B, H, W, _ = x.shape
    Cout = w_t.shape[1]
    y = jnp.einsum("bhwi,iokl->bhkwlo", x, w_t, precision=jax.lax.Precision.HIGHEST)
    return y.reshape(B, 2 * H, 2 * W, Cout) + bias


def _ref_decoder(params, x, encoder_list):
    for (wt, bt, w1, b1, w2, b2), enc in zip(params, encoder_list):
        x = _ref_upconv(x, wt, bt)
        e = center_crop(enc, x.shape[1], x.shape[2])
        x = jnp.concatenate([x, e], axis=-1)
        x = jnp.maximum(_ref_conv3x3(x, w1, b1), 0.0)   # Block.conv1 + ReLU
        x = _ref_conv3x3(x, w2, b2)                      # Block.conv2
    return x


if __name__ == "__main__":
    channels = [64, 32, 16]
    B, H0, W0 = 2, 8, 8
    key = jax.random.PRNGKey(0)
    kx, ke0, ke1, kp = jax.random.split(key, 4)

    x = jax.random.normal(kx, (B, H0, W0, channels[0]), jnp.float32)          # NCHW equiv: (2,64,8,8)
    encoder_list = [
        jax.random.normal(ke0, (B, 18, 18, channels[1]), jnp.float32),        # NCHW equiv: (2,32,18,18)
        jax.random.normal(ke1, (B, 26, 26, channels[2]), jnp.float32),        # NCHW equiv: (2,16,26,26)
    ]
    params = init_params(kp, channels)

    fwd = jax.jit(decoder_forward)
    out = jax.block_until_ready(fwd(params, x, encoder_list))

    assert out.shape == (B, 20, 20, channels[-1]), out.shape
    ref = _ref_decoder(params, x, encoder_list)
    err = float(jnp.max(jnp.abs(out - ref)))
    assert jnp.allclose(out, ref, atol=3e-3, rtol=3e-3), err
    print("KERNEL_OK")
</pallas_src>

<mosaic_0001>
module attributes {stable_mosaic.version = 11 : i64} {
  func.func @_fused_stage_kernel(%arg0: i32, %arg1: memref<2x64x64xf32, #tpu.memory_space<vmem>>, %arg2: memref<2x72x128xf32, #tpu.memory_space<vmem>>, %arg3: memref<64x128xf32, #tpu.memory_space<vmem>>, %arg4: memref<1x128xf32, #tpu.memory_space<vmem>>, %arg5: memref<4x128x128xf32, #tpu.memory_space<vmem>>, %arg6: memref<4x128x128xf32, #tpu.memory_space<vmem>>, %arg7: memref<1x128xf32, #tpu.memory_space<vmem>>, %arg8: memref<4x128x128xf32, #tpu.memory_space<vmem>>, %arg9: memref<1x128xf32, #tpu.memory_space<vmem>>, %arg10: memref<2x48x128xf32, #tpu.memory_space<vmem>>, %arg11: memref<72x128xf32, #tpu.memory_space<vmem>>, %arg12: memref<64x128xf32, #tpu.memory_space<vmem>>) attributes {dimension_semantics = [#tpu.dimension_semantics<parallel>], iteration_bounds = array<i64: 1>, scalar_prefetch = 0 : i64, scratch_operands = 2 : i64, tpu.core_type = #tpu.core_type<tc>, window_params = [{transform_indices = @transform_0, window_bounds = array<i64: 2, 64, 64>}, {transform_indices = @transform_1, window_bounds = array<i64: 2, 72, 128>}, {pipeline_mode = #tpu.pipeline_mode<synchronous>, transform_indices = @transform_2, window_bounds = array<i64: 64, 128>}, {pipeline_mode = #tpu.pipeline_mode<synchronous>, transform_indices = @transform_3, window_bounds = array<i64: 1, 128>}, {pipeline_mode = #tpu.pipeline_mode<synchronous>, transform_indices = @transform_4, window_bounds = array<i64: 4, 128, 128>}, {pipeline_mode = #tpu.pipeline_mode<synchronous>, transform_indices = @transform_5, window_bounds = array<i64: 4, 128, 128>}, {pipeline_mode = #tpu.pipeline_mode<synchronous>, transform_indices = @transform_6, window_bounds = array<i64: 1, 128>}, {pipeline_mode = #tpu.pipeline_mode<synchronous>, transform_indices = @transform_7, window_bounds = array<i64: 4, 128, 128>}, {pipeline_mode = #tpu.pipeline_mode<synchronous>, transform_indices = @transform_8, window_bounds = array<i64: 1, 128>}, {transform_indices = @transform_9, window_bounds = array<i64: 2, 48, 128>}]} {
    %cst = arith.constant 0.000000e+00 : f32
    %0 = vector.broadcast %cst : f32 to vector<8x128xf32>
    %c64 = arith.constant 64 : index
    %c0 = arith.constant 0 : index
    %1 = vector.load %arg11[%c64, %c0] : memref<72x128xf32, #tpu.memory_space<vmem>>, vector<8x128xf32>
    tpu.vector_store %arg11[%c64, %c0], %0 {strides = array<i32>} : memref<72x128xf32, #tpu.memory_space<vmem>>, vector<8x128xf32>,
    %cst_0 = arith.constant 0.000000e+00 : f32
    %2 = vector.broadcast %cst_0 : f32 to vector<8x128xf32>
    %c56 = arith.constant 56 : index
    %c0_1 = arith.constant 0 : index
    %3 = vector.load %arg12[%c56, %c0_1] : memref<64x128xf32, #tpu.memory_space<vmem>>, vector<8x128xf32>
    tpu.vector_store %arg12[%c56, %c0_1], %2 {strides = array<i32>} : memref<64x128xf32, #tpu.memory_space<vmem>>, vector<8x128xf32>,
    %c0_2 = arith.constant 0 : index
    %c0_3 = arith.constant 0 : index
    %c0_4 = arith.constant 0 : index
    %4 = vector.load %arg1[%c0_2, %c0_3, %c0_4] : memref<2x64x64xf32, #tpu.memory_space<vmem>>, vector<1x64x64xf32>
    %5 = vector.shape_cast %4 : vector<1x64x64xf32> to vector<64x64xf32>
    %c0_5 = arith.constant 0 : index
    %c0_6 = arith.constant 0 : index
    %6 = vector.load %arg3[%c0_5, %c0_6] : memref<64x128xf32, #tpu.memory_space<vmem>>, vector<64x128xf32>
    %cst_7 = arith.constant dense<0.000000e+00> : vector<64x128xf32>
    %7 = tpu.matmul %5, %6, %cst_7 {dimension_numbers = #tpu.dot_dimension_numbers<[1], [0], [0], [1], [0, 0, 1, 1], [], []>} : vector<64x64xf32>, vector<64x128xf32>, vector<64x128xf32> -> vector<64x128xf32>
    %c0_8 = arith.constant 0 : index
    %c0_9 = arith.constant 0 : index
    %8 = vector.load %arg4[%c0_8, %c0_9] : memref<1x128xf32, #tpu.memory_space<vmem>>, vector<1x128xf32>
    %9 = vector.broadcast %8 : vector<1x128xf32> to vector<64x128xf32>
    %10 = arith.addf %7, %9 : vector<64x128xf32>
    %c0_10 = arith.constant 0 : index
    %c0_11 = arith.constant 0 : index
    %11 = vector.load %arg11[%c0_10, %c0_11] : memref<72x128xf32, #tpu.memory_space<vmem>>, vector<64x128xf32>
    tpu.vector_store %arg11[%c0_10, %c0_11], %10 {strides = array<i32>} : memref<72x128xf32, #tpu.memory_space<vmem>>, vector<64x128xf32>,
    %cst_12 = arith.constant 0.000000e+00 : f32
    %12 = vector.broadcast %cst_12 : f32 to vector<56x128xf32>
    %c0_13 = arith.constant 0 : index
    %c0_14 = arith.constant 0 : index
    %13 = vector.load %arg11[%c0_13, %c0_14] : memref<72x128xf32, #tpu.memory_space<vmem>>, vector<56x128xf32>
    %c0_15 = arith.constant 0 : index
    %c0_16 = arith.constant 0 : index
    %c0_17 = arith.constant 0 : index
    %14 = vector.load %arg5[%c0_15, %c0_16, %c0_17] : memref<4x128x128xf32, #tpu.memory_space<vmem>>, vector<1x128x128xf32>
    %15 = vector.shape_cast %14 : vector<1x128x128xf32> to vector<128x128xf32>
    %cst_18 = arith.constant dense<0.000000e+00> : vector<56x128xf32>
    %16 = tpu.matmul %13, %15, %cst_18 {dimension_numbers = #tpu.dot_dimension_numbers<[1], [0], [0], [1], [0, 0, 1, 1], [], []>} : vector<56x128xf32>, vector<128x128xf32>, vector<56x128xf32> -> vector<56x128xf32>
    %17 = arith.addf %12, %16 : vector<56x128xf32>
    %c0_19 = arith.constant 0 : index
    %c0_20 = arith.constant 0 : index
    %c0_21 = arith.constant 0 : index
    %18 = vector.load %arg2[%c0_19, %c0_20, %c0_21] : memref<2x72x128xf32, #tpu.memory_space<vmem>>, vector<1x56x128xf32>
    %19 = vector.shape_cast %18 : vector<1x56x128xf32> to vector<56x128xf32>
    %c0_22 = arith.constant 0 : index
    %c0_23 = arith.constant 0 : index
    %c0_24 = arith.constant 0 : index
    %20 = vector.load %arg6[%c0_22, %c0_23, %c0_24] : memref<4x128x128xf32, #tpu.memory_space<vmem>>, vector<1x128x128xf32>
    %21 = vector.shape_cast %20 : vector<1x128x128xf32> to vector<128x128xf32>
    %cst_25 = arith.constant dense<0.000000e+00> : vector<56x128xf32>
    %22 = tpu.matmul %19, %21, %cst_25 {dimension_numbers = #tpu.dot_dimension_numbers<[1], [0], [0], [1], [0, 0, 1, 1], [], []>} : vector<56x128xf32>, vector<128x128xf32>, vector<56x128xf32> -> vector<56x128xf32>
    %23 = arith.addf %17, %22 : vector<56x128xf32>
    %c1 = arith.constant 1 : index
    %c0_26 = arith.constant 0 : index
    %24 = vector.load %arg11[%c1, %c0_26] : memref<72x128xf32, #tpu.memory_space<vmem>>, vector<56x128xf32>
    %c1_27 = arith.constant 1 : index
    %c0_28 = arith.constant 0 : index
    %c0_29 = arith.constant 0 : index
    %25 = vector.load %arg5[%c1_27, %c0_28, %c0_29] : memref<4x128x128xf32, #tpu.memory_space<vmem>>, vector<1x128x128xf32>
    %26 = vector.shape_cast %25 : vector<1x128x128xf32> to vector<128x128xf32>
    %cst_30 = arith.constant dense<0.000000e+00> : vector<56x128xf32>
    %27 = tpu.matmul %24, %26, %cst_30 {dimension_numbers = #tpu.dot_dimension_numbers<[1], [0], [0], [1], [0, 0, 1, 1], [], []>} : vector<56x128xf32>, vector<128x128xf32>, vector<56x128xf32> -> vector<56x128xf32>
    %28 = arith.addf %23, %27 : vector<56x128xf32>
    %c0_31 = arith.constant 0 : index
    %c1_32 = arith.constant 1 : index
    %c0_33 = arith.constant 0 : index
    %29 = vector.load %arg2[%c0_31, %c1_32, %c0_33] : memref<2x72x128xf32, #tpu.memory_space<vmem>>, vector<1x56x128xf32>
    %30 = vector.shape_cast %29 : vector<1x56x128xf32> to vector<56x128xf32>
    %c1_34 = arith.constant 1 : index
    %c0_35 = arith.constant 0 : index
    %c0_36 = arith.constant 0 : index
    %31 = vector.load %arg6[%c1_34, %c0_35, %c0_36] : memref<4x128x128xf32, #tpu.memory_space<vmem>>, vector<1x128x128xf32>
    %32 = vector.shape_cast %31 : vector<1x128x128xf32> to vector<128x128xf32>
    %cst_37 = arith.constant dense<0.000000e+00> : vector<56x128xf32>
    %33 = tpu.matmul %30, %32, %cst_37 {dimension_numbers = #tpu.dot_dimension_numbers<[1], [0], [0], [1], [0, 0, 1, 1], [], []>} : vector<56x128xf32>, vector<128x128xf32>, vector<56x128xf32> -> vector<56x128xf32>
    %34 = arith.addf %28, %33 : vector<56x128xf32>
    %c8 = arith.constant 8 : index
    %c0_38 = arith.constant 0 : index
    %35 = vector.load %arg11[%c8, %c0_38] : memref<72x128xf32, #tpu.memory_space<vmem>>, vector<56x128xf32>
    %c2 = arith.constant 2 : index
    %c0_39 = arith.constant 0 : index
    %c0_40 = arith.constant 0 : index
    %36 = vector.load %arg5[%c2, %c0_39, %c0_40] : memref<4x128x128xf32, #tpu.memory_space<vmem>>, vector<1x128x128xf32>
    %37 = vector.shape_cast %36 : vector<1x128x128xf32> to vector<128x128xf32>
    %cst_41 = arith.constant dense<0.000000e+00> : vector<56x128xf32>
    %38 = tpu.matmul %35, %37, %cst_41 {dimension_numbers = #tpu.dot_dimension_numbers<[1], [0], [0], [1], [0, 0, 1, 1], [], []>} : vector<56x128xf32>, vector<128x128xf32>, vector<56x128xf32> -> vector<56x128xf32>
    %39 = arith.addf %34, %38 : vector<56x128xf32>
    %c0_42 = arith.constant 0 : index
    %c8_43 = arith.constant 8 : index
    %c0_44 = arith.constant 0 : index
    %40 = vector.load %arg2[%c0_42, %c8_43, %c0_44] : memref<2x72x128xf32, #tpu.memory_space<vmem>>, vector<1x56x128xf32>
    %41 = vector.shape_cast %40 : vector<1x56x128xf32> to vector<56x128xf32>
    %c2_45 = arith.constant 2 : index
    %c0_46 = arith.constant 0 : index
    %c0_47 = arith.constant 0 : index
    %42 = vector.load %arg6[%c2_45, %c0_46, %c0_47] : memref<4x128x128xf32, #tpu.memory_space<vmem>>, vector<1x128x128xf32>
    %43 = vector.shape_cast %42 : vector<1x128x128xf32> to vector<128x128xf32>
    %cst_48 = arith.constant dense<0.000000e+00> : vector<56x128xf32>
    %44 = tpu.matmul %41, %43, %cst_48 {dimension_numbers = #tpu.dot_dimension_numbers<[1], [0], [0], [1], [0, 0, 1, 1], [], []>} : vector<56x128xf32>, vector<128x128xf32>, vector<56x128xf32> -> vector<56x128xf32>
    %45 = arith.addf %39, %44 : vector<56x128xf32>
    %c9 = arith.constant 9 : index
    %c0_49 = arith.constant 0 : index
    %46 = vector.load %arg11[%c9, %c0_49] : memref<72x128xf32, #tpu.memory_space<vmem>>, vector<56x128xf32>
    %c3 = arith.constant 3 : index
    %c0_50 = arith.constant 0 : index
    %c0_51 = arith.constant 0 : index
    %47 = vector.load %arg5[%c3, %c0_50, %c0_51] : memref<4x128x128xf32, #tpu.memory_space<vmem>>, vector<1x128x128xf32>
    %48 = vector.shape_cast %47 : vector<1x128x128xf32> to vector<128x128xf32>
    %cst_52 = arith.constant dense<0.000000e+00> : vector<56x128xf32>
    %49 = tpu.matmul %46, %48, %cst_52 {dimension_numbers = #tpu.dot_dimension_numbers<[1], [0], [0], [1], [0, 0, 1, 1], [], []>} : vector<56x128xf32>, vector<128x128xf32>, vector<56x128xf32> -> vector<56x128xf32>
    %50 = arith.addf %45, %49 : vector<56x128xf32>
    %c0_53 = arith.constant 0 : index
    %c9_54 = arith.constant 9 : index
    %c0_55 = arith.constant 0 : index
    %51 = vector.load %arg2[%c0_53, %c9_54, %c0_55] : memref<2x72x128xf32, #tpu.memory_space<vmem>>, vector<1x56x128xf32>
    %52 = vector.shape_cast %51 : vector<1x56x128xf32> to vector<56x128xf32>
    %c3_56 = arith.constant 3 : index
    %c0_57 = arith.constant 0 : index
    %c0_58 = arith.constant 0 : index
    %53 = vector.load %arg6[%c3_56, %c0_57, %c0_58] : memref<4x128x128xf32, #tpu.memory_space<vmem>>, vector<1x128x128xf32>
    %54 = vector.shape_cast %53 : vector<1x128x128xf32> to vector<128x128xf32>
    %cst_59 = arith.constant dense<0.000000e+00> : vector<56x128xf32>
    %55 = tpu.matmul %52, %54, %cst_59 {dimension_numbers = #tpu.dot_dimension_numbers<[1], [0], [0], [1], [0, 0, 1, 1], [], []>} : vector<56x128xf32>, vector<128x128xf32>, vector<56x128xf32> -> vector<56x128xf32>
    %56 = arith.addf %50, %55 : vector<56x128xf32>
    %c0_60 = arith.constant 0 : index
    %c0_61 = arith.constant 0 : index
    %57 = vector.load %arg7[%c0_60, %c0_61] : memref<1x128xf32, #tpu.memory_space<vmem>>, vector<1x128xf32>
    %58 = vector.broadcast %57 : vector<1x128xf32> to vector<56x128xf32>
    %59 = arith.addf %56, %58 : vector<56x128xf32>
    %cst_62 = arith.constant 0.000000e+00 : f32
    %60 = vector.broadcast %cst_62 : f32 to vector<56x128xf32>
    %61 = arith.maximumf %59, %60 : vector<56x128xf32>
    %c0_63 = arith.constant 0 : index
    %c0_64 = arith.constant 0 : index
    %62 = vector.load %arg12[%c0_63, %c0_64] : memref<64x128xf32, #tpu.memory_space<vmem>>, vector<56x128xf32>
    tpu.vector_store %arg12[%c0_63, %c0_64], %61 {strides = array<i32>} : memref<64x128xf32, #tpu.memory_space<vmem>>, vector<56x128xf32>,
    %cst_65 = arith.constant 0.000000e+00 : f32
    %63 = vector.broadcast %cst_65 : f32 to vector<48x128xf32>
    %c0_66 = arith.constant 0 : index
    %c0_67 = arith.constant 0 : index
    %64 = vector.load %arg12[%c0_66, %c0_67] : memref<64x128xf32, #tpu.memory_space<vmem>>, vector<48x128xf32>
    %c0_68 = arith.constant 0 : index
    %c0_69 = arith.constant 0 : index
    %c0_70 = arith.constant 0 : index
    %65 = vector.load %arg8[%c0_68, %c0_69, %c0_70] : memref<4x128x128xf32, #tpu.memory_space<vmem>>, vector<1x128x128xf32>
    %66 = vector.shape_cast %65 : vector<1x128x128xf32> to vector<128x128xf32>
    %cst_71 = arith.constant dense<0.000000e+00> : vector<48x128xf32>
    %67 = tpu.matmul %64, %66, %cst_71 {dimension_numbers = #tpu.dot_dimension_numbers<[1], [0], [0], [1], [0, 0, 1, 1], [], []>} : vector<48x128xf32>, vector<128x128xf32>, vector<48x128xf32> -> vector<48x128xf32>
    %68 = arith.addf %63, %67 : vector<48x128xf32>
    %c1_72 = arith.constant 1 : index
    %c0_73 = arith.constant 0 : index
    %69 = vector.load %arg12[%c1_72, %c0_73] : memref<64x128xf32, #tpu.memory_space<vmem>>, vector<48x128xf32>
    %c1_74 = arith.constant 1 : index
    %c0_75 = arith.constant 0 : index
    %c0_76 = arith.constant 0 : index
    %70 = vector.load %arg8[%c1_74, %c0_75, %c0_76] : memref<4x128x128xf32, #tpu.memory_space<vmem>>, vector<1x128x128xf32>
    %71 = vector.shape_cast %70 : vector<1x128x128xf32> to vector<128x128xf32>
    %cst_77 = arith.constant dense<0.000000e+00> : vector<48x128xf32>
    %72 = tpu.matmul %69, %71, %cst_77 {dimension_numbers = #tpu.dot_dimension_numbers<[1], [0], [0], [1], [0, 0, 1, 1], [], []>} : vector<48x128xf32>, vector<128x128xf32>, vector<48x128xf32> -> vector<48x128xf32>
    %73 = arith.addf %68, %72 : vector<48x128xf32>
    %c8_78 = arith.constant 8 : index
    %c0_79 = arith.constant 0 : index
    %74 = vector.load %arg12[%c8_78, %c0_79] : memref<64x128xf32, #tpu.memory_space<vmem>>, vector<48x128xf32>
    %c2_80 = arith.constant 2 : index
    %c0_81 = arith.constant 0 : index
    %c0_82 = arith.constant 0 : index
    %75 = vector.load %arg8[%c2_80, %c0_81, %c0_82] : memref<4x128x128xf32, #tpu.memory_space<vmem>>, vector<1x128x128xf32>
    %76 = vector.shape_cast %75 : vector<1x128x128xf32> to vector<128x128xf32>
    %cst_83 = arith.constant dense<0.000000e+00> : vector<48x128xf32>
    %77 = tpu.matmul %74, %76, %cst_83 {dimension_numbers = #tpu.dot_dimension_numbers<[1], [0], [0], [1], [0, 0, 1, 1], [], []>} : vector<48x128xf32>, vector<128x128xf32>, vector<48x128xf32> -> vector<48x128xf32>
    %78 = arith.addf %73, %77 : vector<48x128xf32>
    %c9_84 = arith.constant 9 : index
    %c0_85 = arith.constant 0 : index
    %79 = vector.load %arg12[%c9_84, %c0_85] : memref<64x128xf32, #tpu.memory_space<vmem>>, vector<48x128xf32>
    %c3_86 = arith.constant 3 : index
    %c0_87 = arith.constant 0 : index
    %c0_88 = arith.constant 0 : index
    %80 = vector.load %arg8[%c3_86, %c0_87, %c0_88] : memref<4x128x128xf32, #tpu.memory_space<vmem>>, vector<1x128x128xf32>
    %81 = vector.shape_cast %80 : vector<1x128x128xf32> to vector<128x128xf32>
    %cst_89 = arith.constant dense<0.000000e+00> : vector<48x128xf32>
    %82 = tpu.matmul %79, %81, %cst_89 {dimension_numbers = #tpu.dot_dimension_numbers<[1], [0], [0], [1], [0, 0, 1, 1], [], []>} : vector<48x128xf32>, vector<128x128xf32>, vector<48x128xf32> -> vector<48x128xf32>
    %83 = arith.addf %78, %82 : vector<48x128xf32>
    %c0_90 = arith.constant 0 : index
    %c0_91 = arith.constant 0 : index
    %84 = vector.load %arg9[%c0_90, %c0_91] : memref<1x128xf32, #tpu.memory_space<vmem>>, vector<1x128xf32>
    %85 = vector.broadcast %84 : vector<1x128xf32> to vector<48x128xf32>
    %86 = arith.addf %83, %85 : vector<48x128xf32>
    %c0_92 = arith.constant 0 : index
    %c0_93 = arith.constant 0 : index
    %c0_94 = arith.constant 0 : index
    %87 = vector.load %arg10[%c0_92, %c0_93, %c0_94] : memref<2x48x128xf32, #tpu.memory_space<vmem>>, vector<1x48x128xf32>
    %88 = vector.shape_cast %87 : vector<1x48x128xf32> to vector<48x128xf32>
    %89 = vector.shape_cast %86 : vector<48x128xf32> to vector<1x48x128xf32>
    tpu.vector_store %arg10[%c0_92, %c0_93, %c0_94], %89 {strides = array<i32>} : memref<2x48x128xf32, #tpu.memory_space<vmem>>, vector<1x48x128xf32>,
    %c1_95 = arith.constant 1 : index
    %c0_96 = arith.constant 0 : index
    %c0_97 = arith.constant 0 : index
    %90 = vector.load %arg1[%c1_95, %c0_96, %c0_97] : memref<2x64x64xf32, #tpu.memory_space<vmem>>, vector<1x64x64xf32>
    %91 = vector.shape_cast %90 : vector<1x64x64xf32> to vector<64x64xf32>
    %c0_98 = arith.constant 0 : index
    %c0_99 = arith.constant 0 : index
    %92 = vector.load %arg3[%c0_98, %c0_99] : memref<64x128xf32, #tpu.memory_space<vmem>>, vector<64x128xf32>
    %cst_100 = arith.constant dense<0.000000e+00> : vector<64x128xf32>
    %93 = tpu.matmul %91, %92, %cst_100 {dimension_numbers = #tpu.dot_dimension_numbers<[1], [0], [0], [1], [0, 0, 1, 1], [], []>} : vector<64x64xf32>, vector<64x128xf32>, vector<64x128xf32> -> vector<64x128xf32>
    %c0_101 = arith.constant 0 : index
    %c0_102 = arith.constant 0 : index
    %94 = vector.load %arg4[%c0_101, %c0_102] : memref<1x128xf32, #tpu.memory_space<vmem>>, vector<1x128xf32>
    %95 = vector.broadcast %94 : vector<1x128xf32> to vector<64x128xf32>
    %96 = arith.addf %93, %95 : vector<64x128xf32>
    %c0_103 = arith.constant 0 : index
    %c0_104 = arith.constant 0 : index
    %97 = vector.load %arg11[%c0_103, %c0_104] : memref<72x128xf32, #tpu.memory_space<vmem>>, vector<64x128xf32>
    tpu.vector_store %arg11[%c0_103, %c0_104], %96 {strides = array<i32>} : memref<72x128xf32, #tpu.memory_space<vmem>>, vector<64x128xf32>,
    %cst_105 = arith.constant 0.000000e+00 : f32
    %98 = vector.broadcast %cst_105 : f32 to vector<56x128xf32>
    %c0_106 = arith.constant 0 : index
    %c0_107 = arith.constant 0 : index
    %99 = vector.load %arg11[%c0_106, %c0_107] : memref<72x128xf32, #tpu.memory_space<vmem>>, vector<56x128xf32>
    %c0_108 = arith.constant 0 : index
    %c0_109 = arith.constant 0 : index
    %c0_110 = arith.constant 0 : index
    %100 = vector.load %arg5[%c0_108, %c0_109, %c0_110] : memref<4x128x128xf32, #tpu.memory_space<vmem>>, vector<1x128x128xf32>
    %101 = vector.shape_cast %100 : vector<1x128x128xf32> to vector<128x128xf32>
    %cst_111 = arith.constant dense<0.000000e+00> : vector<56x128xf32>
    %102 = tpu.matmul %99, %101, %cst_111 {dimension_numbers = #tpu.dot_dimension_numbers<[1], [0], [0], [1], [0, 0, 1, 1], [], []>} : vector<56x128xf32>, vector<128x128xf32>, vector<56x128xf32> -> vector<56x128xf32>
    %103 = arith.addf %98, %102 : vector<56x128xf32>
    %c1_112 = arith.constant 1 : index
    %c0_113 = arith.constant 0 : index
    %c0_114 = arith.constant 0 : index
    %104 = vector.load %arg2[%c1_112, %c0_113, %c0_114] : memref<2x72x128xf32, #tpu.memory_space<vmem>>, vector<1x56x128xf32>
    %105 = vector.shape_cast %104 : vector<1x56x128xf32> to vector<56x128xf32>
    %c0_115 = arith.constant 0 : index
    %c0_116 = arith.constant 0 : index
    %c0_117 = arith.constant 0 : index
    %106 = vector.load %arg6[%c0_115, %c0_116, %c0_117] : memref<4x128x128xf32, #tpu.memory_space<vmem>>, vector<1x128x128xf32>
    %107 = vector.shape_cast %106 : vector<1x128x128xf32> to vector<128x128xf32>
    %cst_118 = arith.constant dense<0.000000e+00> : vector<56x128xf32>
    %108 = tpu.matmul %105, %107, %cst_118 {dimension_numbers = #tpu.dot_dimension_numbers<[1], [0], [0], [1], [0, 0, 1, 1], [], []>} : vector<56x128xf32>, vector<128x128xf32>, vector<56x128xf32> -> vector<56x128xf32>
    %109 = arith.addf %103, %108 : vector<56x128xf32>
    %c1_119 = arith.constant 1 : index
    %c0_120 = arith.constant 0 : index
    %110 = vector.load %arg11[%c1_119, %c0_120] : memref<72x128xf32, #tpu.memory_space<vmem>>, vector<56x128xf32>
    %c1_121 = arith.constant 1 : index
    %c0_122 = arith.constant 0 : index
    %c0_123 = arith.constant 0 : index
    %111 = vector.load %arg5[%c1_121, %c0_122, %c0_123] : memref<4x128x128xf32, #tpu.memory_space<vmem>>, vector<1x128x128xf32>
    %112 = vector.shape_cast %111 : vector<1x128x128xf32> to vector<128x128xf32>
    %cst_124 = arith.constant dense<0.000000e+00> : vector<56x128xf32>
    %113 = tpu.matmul %110, %112, %cst_124 {dimension_numbers = #tpu.dot_dimension_numbers<[1], [0], [0], [1], [0, 0, 1, 1], [], []>} : vector<56x128xf32>, vector<128x128xf32>, vector<56x128xf32> -> vector<56x128xf32>
    %114 = arith.addf %109, %113 : vector<56x128xf32>
    %c1_125 = arith.constant 1 : index
    %c1_126 = arith.constant 1 : index
    %c0_127 = arith.constant 0 : index
    %115 = vector.load %arg2[%c1_125, %c1_126, %c0_127] : memref<2x72x128xf32, #tpu.memory_space<vmem>>, vector<1x56x128xf32>
    %116 = vector.shape_cast %115 : vector<1x56x128xf32> to vector<56x128xf32>
    %c1_128 = arith.constant 1 : index
    %c0_129 = arith.constant 0 : index
    %c0_130 = arith.constant 0 : index
    %117 = vector.load %arg6[%c1_128, %c0_129, %c0_130] : memref<4x128x128xf32, #tpu.memory_space<vmem>>, vector<1x128x128xf32>
    %118 = vector.shape_cast %117 : vector<1x128x128xf32> to vector<128x128xf32>
    %cst_131 = arith.constant dense<0.000000e+00> : vector<56x128xf32>
    %119 = tpu.matmul %116, %118, %cst_131 {dimension_numbers = #tpu.dot_dimension_numbers<[1], [0], [0], [1], [0, 0, 1, 1], [], []>} : vector<56x128xf32>, vector<128x128xf32>, vector<56x128xf32> -> vector<56x128xf32>
    %120 = arith.addf %114, %119 : vector<56x128xf32>
    %c8_132 = arith.constant 8 : index
    %c0_133 = arith.constant 0 : index
    %121 = vector.load %arg11[%c8_132, %c0_133] : memref<72x128xf32, #tpu.memory_space<vmem>>, vector<56x128xf32>
    %c2_134 = arith.constant 2 : index
    %c0_135 = arith.constant 0 : index
    %c0_136 = arith.constant 0 : index
    %122 = vector.load %arg5[%c2_134, %c0_135, %c0_136] : memref<4x128x128xf32, #tpu.memory_space<vmem>>, vector<1x128x128xf32>
    %123 = vector.shape_cast %122 : vector<1x128x128xf32> to vector<128x128xf32>
    %cst_137 = arith.constant dense<0.000000e+00> : vector<56x128xf32>
    %124 = tpu.matmul %121, %123, %cst_137 {dimension_numbers = #tpu.dot_dimension_numbers<[1], [0], [0], [1], [0, 0, 1, 1], [], []>} : vector<56x128xf32>, vector<128x128xf32>, vector<56x128xf32> -> vector<56x128xf32>
    %125 = arith.addf %120, %124 : vector<56x128xf32>
    %c1_138 = arith.constant 1 : index
    %c8_139 = arith.constant 8 : index
    %c0_140 = arith.constant 0 : index
    %126 = vector.load %arg2[%c1_138, %c8_139, %c0_140] : memref<2x72x128xf32, #tpu.memory_space<vmem>>, vector<1x56x128xf32>
    %127 = vector.shape_cast %126 : vector<1x56x128xf32> to vector<56x128xf32>
    %c2_141 = arith.constant 2 : index
    %c0_142 = arith.constant 0 : index
    %c0_143 = arith.constant 0 : index
    %128 = vector.load %arg6[%c2_141, %c0_142, %c0_143] : memref<4x128x128xf32, #tpu.memory_space<vmem>>, vector<1x128x128xf32>
    %129 = vector.shape_cast %128 : vector<1x128x128xf32> to vector<128x128xf32>
    %cst_144 = arith.constant dense<0.000000e+00> : vector<56x128xf32>
    %130 = tpu.matmul %127, %129, %cst_144 {dimension_numbers = #tpu.dot_dimension_numbers<[1], [0], [0], [1], [0, 0, 1, 1], [], []>} : vector<56x128xf32>, vector<128x128xf32>, vector<56x128xf32> -> vector<56x128xf32>
    %131 = arith.addf %125, %130 : vector<56x128xf32>
    %c9_145 = arith.constant 9 : index
    %c0_146 = arith.constant 0 : index
    %132 = vector.load %arg11[%c9_145, %c0_146] : memref<72x128xf32, #tpu.memory_space<vmem>>, vector<56x128xf32>
    %c3_147 = arith.constant 3 : index
    %c0_148 = arith.constant 0 : index
    %c0_149 = arith.constant 0 : index
    %133 = vector.load %arg5[%c3_147, %c0_148, %c0_149] : memref<4x128x128xf32, #tpu.memory_space<vmem>>, vector<1x128x128xf32>
    %134 = vector.shape_cast %133 : vector<1x128x128xf32> to vector<128x128xf32>
    %cst_150 = arith.constant dense<0.000000e+00> : vector<56x128xf32>
    %135 = tpu.matmul %132, %134, %cst_150 {dimension_numbers = #tpu.dot_dimension_numbers<[1], [0], [0], [1], [0, 0, 1, 1], [], []>} : vector<56x128xf32>, vector<128x128xf32>, vector<56x128xf32> -> vector<56x128xf32>
    %136 = arith.addf %131, %135 : vector<56x128xf32>
    %c1_151 = arith.constant 1 : index
    %c9_152 = arith.constant 9 : index
    %c0_153 = arith.constant 0 : index
    %137 = vector.load %arg2[%c1_151, %c9_152, %c0_153] : memref<2x72x128xf32, #tpu.memory_space<vmem>>, vector<1x56x128xf32>
    %138 = vector.shape_cast %137 : vector<1x56x128xf32> to vector<56x128xf32>
    %c3_154 = arith.constant 3 : index
    %c0_155 = arith.constant 0 : index
    %c0_156 = arith.constant 0 : index
    %139 = vector.load %arg6[%c3_154, %c0_155, %c0_156] : memref<4x128x128xf32, #tpu.memory_space<vmem>>, vector<1x128x128xf32>
    %140 = vector.shape_cast %139 : vector<1x128x128xf32> to vector<128x128xf32>
    %cst_157 = arith.constant dense<0.000000e+00> : vector<56x128xf32>
    %141 = tpu.matmul %138, %140, %cst_157 {dimension_numbers = #tpu.dot_dimension_numbers<[1], [0], [0], [1], [0, 0, 1, 1], [], []>} : vector<56x128xf32>, vector<128x128xf32>, vector<56x128xf32> -> vector<56x128xf32>
    %142 = arith.addf %136, %141 : vector<56x128xf32>
    %c0_158 = arith.constant 0 : index
    %c0_159 = arith.constant 0 : index
    %143 = vector.load %arg7[%c0_158, %c0_159] : memref<1x128xf32, #tpu.memory_space<vmem>>, vector<1x128xf32>
    %144 = vector.broadcast %143 : vector<1x128xf32> to vector<56x128xf32>
    %145 = arith.addf %142, %144 : vector<56x128xf32>
    %cst_160 = arith.constant 0.000000e+00 : f32
    %146 = vector.broadcast %cst_160 : f32 to vector<56x128xf32>
    %147 = arith.maximumf %145, %146 : vector<56x128xf32>
    %c0_161 = arith.constant 0 : index
    %c0_162 = arith.constant 0 : index
    %148 = vector.load %arg12[%c0_161, %c0_162] : memref<64x128xf32, #tpu.memory_space<vmem>>, vector<56x128xf32>
    tpu.vector_store %arg12[%c0_161, %c0_162], %147 {strides = array<i32>} : memref<64x128xf32, #tpu.memory_space<vmem>>, vector<56x128xf32>,
    %cst_163 = arith.constant 0.000000e+00 : f32
    %149 = vector.broadcast %cst_163 : f32 to vector<48x128xf32>
    %c0_164 = arith.constant 0 : index
    %c0_165 = arith.constant 0 : index
    %150 = vector.load %arg12[%c0_164, %c0_165] : memref<64x128xf32, #tpu.memory_space<vmem>>, vector<48x128xf32>
    %c0_166 = arith.constant 0 : index
    %c0_167 = arith.constant 0 : index
    %c0_168 = arith.constant 0 : index
    %151 = vector.load %arg8[%c0_166, %c0_167, %c0_168] : memref<4x128x128xf32, #tpu.memory_space<vmem>>, vector<1x128x128xf32>
    %152 = vector.shape_cast %151 : vector<1x128x128xf32> to vector<128x128xf32>
    %cst_169 = arith.constant dense<0.000000e+00> : vector<48x128xf32>
    %153 = tpu.matmul %150, %152, %cst_169 {dimension_numbers = #tpu.dot_dimension_numbers<[1], [0], [0], [1], [0, 0, 1, 1], [], []>} : vector<48x128xf32>, vector<128x128xf32>, vector<48x128xf32> -> vector<48x128xf32>
    %154 = arith.addf %149, %153 : vector<48x128xf32>
    %c1_170 = arith.constant 1 : index
    %c0_171 = arith.constant 0 : index
    %155 = vector.load %arg12[%c1_170, %c0_171] : memref<64x128xf32, #tpu.memory_space<vmem>>, vector<48x128xf32>
    %c1_172 = arith.constant 1 : index
    %c0_173 = arith.constant 0 : index
    %c0_174 = arith.constant 0 : index
    %156 = vector.load %arg8[%c1_172, %c0_173, %c0_174] : memref<4x128x128xf32, #tpu.memory_space<vmem>>, vector<1x128x128xf32>
    %157 = vector.shape_cast %156 : vector<1x128x128xf32> to vector<128x128xf32>
    %cst_175 = arith.constant dense<0.000000e+00> : vector<48x128xf32>
    %158 = tpu.matmul %155, %157, %cst_175 {dimension_numbers = #tpu.dot_dimension_numbers<[1], [0], [0], [1], [0, 0, 1, 1], [], []>} : vector<48x128xf32>, vector<128x128xf32>, vector<48x128xf32> -> vector<48x128xf32>
    %159 = arith.addf %154, %158 : vector<48x128xf32>
    %c8_176 = arith.constant 8 : index
    %c0_177 = arith.constant 0 : index
    %160 = vector.load %arg12[%c8_176, %c0_177] : memref<64x128xf32, #tpu.memory_space<vmem>>, vector<48x128xf32>
    %c2_178 = arith.constant 2 : index
    %c0_179 = arith.constant 0 : index
    %c0_180 = arith.constant 0 : index
    %161 = vector.load %arg8[%c2_178, %c0_179, %c0_180] : memref<4x128x128xf32, #tpu.memory_space<vmem>>, vector<1x128x128xf32>
    %162 = vector.shape_cast %161 : vector<1x128x128xf32> to vector<128x128xf32>
    %cst_181 = arith.constant dense<0.000000e+00> : vector<48x128xf32>
    %163 = tpu.matmul %160, %162, %cst_181 {dimension_numbers = #tpu.dot_dimension_numbers<[1], [0], [0], [1], [0, 0, 1, 1], [], []>} : vector<48x128xf32>, vector<128x128xf32>, vector<48x128xf32> -> vector<48x128xf32>
    %164 = arith.addf %159, %163 : vector<48x128xf32>
    %c9_182 = arith.constant 9 : index
    %c0_183 = arith.constant 0 : index
    %165 = vector.load %arg12[%c9_182, %c0_183] : memref<64x128xf32, #tpu.memory_space<vmem>>, vector<48x128xf32>
    %c3_184 = arith.constant 3 : index
    %c0_185 = arith.constant 0 : index
    %c0_186 = arith.constant 0 : index
    %166 = vector.load %arg8[%c3_184, %c0_185, %c0_186] : memref<4x128x128xf32, #tpu.memory_space<vmem>>, vector<1x128x128xf32>
    %167 = vector.shape_cast %166 : vector<1x128x128xf32> to vector<128x128xf32>
    %cst_187 = arith.constant dense<0.000000e+00> : vector<48x128xf32>
    %168 = tpu.matmul %165, %167, %cst_187 {dimension_numbers = #tpu.dot_dimension_numbers<[1], [0], [0], [1], [0, 0, 1, 1], [], []>} : vector<48x128xf32>, vector<128x128xf32>, vector<48x128xf32> -> vector<48x128xf32>
    %169 = arith.addf %164, %168 : vector<48x128xf32>
    %c0_188 = arith.constant 0 : index
    %c0_189 = arith.constant 0 : index
    %170 = vector.load %arg9[%c0_188, %c0_189] : memref<1x128xf32, #tpu.memory_space<vmem>>, vector<1x128xf32>
    %171 = vector.broadcast %170 : vector<1x128xf32> to vector<48x128xf32>
    %172 = arith.addf %169, %171 : vector<48x128xf32>
    %c1_190 = arith.constant 1 : index
    %c0_191 = arith.constant 0 : index
    %c0_192 = arith.constant 0 : index
    %173 = vector.load %arg10[%c1_190, %c0_191, %c0_192] : memref<2x48x128xf32, #tpu.memory_space<vmem>>, vector<1x48x128xf32>
    %174 = vector.shape_cast %173 : vector<1x48x128xf32> to vector<48x128xf32>
    %175 = vector.shape_cast %172 : vector<48x128xf32> to vector<1x48x128xf32>
    tpu.vector_store %arg10[%c1_190, %c0_191, %c0_192], %175 {strides = array<i32>} : memref<2x48x128xf32, #tpu.memory_space<vmem>>, vector<1x48x128xf32>,
    return
  }
  func.func @transform_0(%arg0: i32) -> (i32, i32, i32) {
    %c0_i32 = arith.constant 0 : i32
    %c0_i32_0 = arith.constant 0 : i32
    %c0_i32_1 = arith.constant 0 : i32
    return %arg0, %c0_i32, %c0_i32_0 : i32, i32, i32
  }
  func.func @transform_1(%arg0: i32) -> (i32, i32, i32) {
    %c0_i32 = arith.constant 0 : i32
    %c0_i32_0 = arith.constant 0 : i32
    %c0_i32_1 = arith.constant 0 : i32
    return %arg0, %c0_i32, %c0_i32_0 : i32, i32, i32
  }
  func.func @transform_2(%arg0: i32) -> (i32, i32) {
    %c0_i32 = arith.constant 0 : i32
    %c0_i32_0 = arith.constant 0 : i32
    %c0_i32_1 = arith.constant 0 : i32
    return %c0_i32, %c0_i32_0 : i32, i32
  }
  func.func @transform_3(%arg0: i32) -> (i32, i32) {
    %c0_i32 = arith.constant 0 : i32
    %c0_i32_0 = arith.constant 0 : i32
    %c0_i32_1 = arith.constant 0 : i32
    return %c0_i32, %c0_i32_0 : i32, i32
  }
  func.func @transform_4(%arg0: i32) -> (i32, i32, i32) {
    %c0_i32 = arith.constant 0 : i32
    %c0_i32_0 = arith.constant 0 : i32
    %c0_i32_1 = arith.constant 0 : i32
    %c0_i32_2 = arith.constant 0 : i32
    return %c0_i32, %c0_i32_0, %c0_i32_1 : i32, i32, i32
  }
  func.func @transform_5(%arg0: i32) -> (i32, i32, i32) {
    %c0_i32 = arith.constant 0 : i32
    %c0_i32_0 = arith.constant 0 : i32
    %c0_i32_1 = arith.constant 0 : i32
    %c0_i32_2 = arith.constant 0 : i32
    return %c0_i32, %c0_i32_0, %c0_i32_1 : i32, i32, i32
  }
  func.func @transform_6(%arg0: i32) -> (i32, i32) {
    %c0_i32 = arith.constant 0 : i32
    %c0_i32_0 = arith.constant 0 : i32
    %c0_i32_1 = arith.constant 0 : i32
    return %c0_i32, %c0_i32_0 : i32, i32
  }
  func.func @transform_7(%arg0: i32) -> (i32, i32, i32) {
    %c0_i32 = arith.constant 0 : i32
    %c0_i32_0 = arith.constant 0 : i32
    %c0_i32_1 = arith.constant 0 : i32
    %c0_i32_2 = arith.constant 0 : i32
    return %c0_i32, %c0_i32_0, %c0_i32_1 : i32, i32, i32
  }
  func.func @transform_8(%arg0: i32) -> (i32, i32) {
    %c0_i32 = arith.constant 0 : i32
    %c0_i32_0 = arith.constant 0 : i32
    %c0_i32_1 = arith.constant 0 : i32
    return %c0_i32, %c0_i32_0 : i32, i32
  }
  func.func @transform_9(%arg0: i32) -> (i32, i32, i32) {
    %c0_i32 = arith.constant 0 : i32
    %c0_i32_0 = arith.constant 0 : i32
    %c0_i32_1 = arith.constant 0 : i32
    return %arg0, %c0_i32, %c0_i32_0 : i32, i32, i32
  }
}

module attributes {stable_mosaic.version = 11 : i64} {
  func.func @_fused_stage_kernel(%arg0: i32, %arg1: memref<2x144x32xf32, #tpu.memory_space<vmem>>, %arg2: memref<2x152x64xf32, #tpu.memory_space<vmem>>, %arg3: memref<32x64xf32, #tpu.memory_space<vmem>>, %arg4: memref<1x64xf32, #tpu.memory_space<vmem>>, %arg5: memref<4x64x64xf32, #tpu.memory_space<vmem>>, %arg6: memref<4x64x64xf32, #tpu.memory_space<vmem>>, %arg7: memref<1x64xf32, #tpu.memory_space<vmem>>, %arg8: memref<4x64x64xf32, #tpu.memory_space<vmem>>, %arg9: memref<1x64xf32, #tpu.memory_space<vmem>>, %arg10: memref<2x120x64xf32, #tpu.memory_space<vmem>>, %arg11: memref<152x64xf32, #tpu.memory_space<vmem>>, %arg12: memref<140x64xf32, #tpu.memory_space<vmem>>) attributes {dimension_semantics = [#tpu.dimension_semantics<parallel>], iteration_bounds = array<i64: 1>, scalar_prefetch = 0 : i64, scratch_operands = 2 : i64, tpu.core_type = #tpu.core_type<tc>, window_params = [{transform_indices = @transform_0, window_bounds = array<i64: 2, 144, 32>}, {transform_indices = @transform_1, window_bounds = array<i64: 2, 152, 64>}, {pipeline_mode = #tpu.pipeline_mode<synchronous>, transform_indices = @transform_2, window_bounds = array<i64: 32, 64>}, {pipeline_mode = #tpu.pipeline_mode<synchronous>, transform_indices = @transform_3, window_bounds = array<i64: 1, 64>}, {pipeline_mode = #tpu.pipeline_mode<synchronous>, transform_indices = @transform_4, window_bounds = array<i64: 4, 64, 64>}, {pipeline_mode = #tpu.pipeline_mode<synchronous>, transform_indices = @transform_5, window_bounds = array<i64: 4, 64, 64>}, {pipeline_mode = #tpu.pipeline_mode<synchronous>, transform_indices = @transform_6, window_bounds = array<i64: 1, 64>}, {pipeline_mode = #tpu.pipeline_mode<synchronous>, transform_indices = @transform_7, window_bounds = array<i64: 4, 64, 64>}, {pipeline_mode = #tpu.pipeline_mode<synchronous>, transform_indices = @transform_8, window_bounds = array<i64: 1, 64>}, {transform_indices = @transform_9, window_bounds = array<i64: 2, 120, 64>}]} {
    %cst = arith.constant 0.000000e+00 : f32
    %0 = vector.broadcast %cst : f32 to vector<8x64xf32>
    %c144 = arith.constant 144 : index
    %c0 = arith.constant 0 : index
    %1 = vector.load %arg11[%c144, %c0] : memref<152x64xf32, #tpu.memory_space<vmem>>, vector<8x64xf32>
    tpu.vector_store %arg11[%c144, %c0], %0 {strides = array<i32>} : memref<152x64xf32, #tpu.memory_space<vmem>>, vector<8x64xf32>,
    %cst_0 = arith.constant 0.000000e+00 : f32
    %2 = vector.broadcast %cst_0 : f32 to vector<8x64xf32>
    %c132 = arith.constant 132 : index
    %c0_1 = arith.constant 0 : index
    %3 = vector.load %arg12[%c132, %c0_1] : memref<140x64xf32, #tpu.memory_space<vmem>>, vector<8x64xf32>
    tpu.vector_store %arg12[%c132, %c0_1], %2 {strides = array<i32>} : memref<140x64xf32, #tpu.memory_space<vmem>>, vector<8x64xf32>,
    %c0_2 = arith.constant 0 : index
    %c0_3 = arith.constant 0 : index
    %c0_4 = arith.constant 0 : index
    %4 = vector.load %arg1[%c0_2, %c0_3, %c0_4] : memref<2x144x32xf32, #tpu.memory_space<vmem>>, vector<1x144x32xf32>
    %5 = vector.shape_cast %4 : vector<1x144x32xf32> to vector<144x32xf32>
    %c0_5 = arith.constant 0 : index
    %c0_6 = arith.constant 0 : index
    %6 = vector.load %arg3[%c0_5, %c0_6] : memref<32x64xf32, #tpu.memory_space<vmem>>, vector<32x64xf32>
    %cst_7 = arith.constant dense<0.000000e+00> : vector<144x64xf32>
    %7 = tpu.matmul %5, %6, %cst_7 {dimension_numbers = #tpu.dot_dimension_numbers<[1], [0], [0], [1], [0, 0, 1, 1], [], []>} : vector<144x32xf32>, vector<32x64xf32>, vector<144x64xf32> -> vector<144x64xf32>
    %c0_8 = arith.constant 0 : index
    %c0_9 = arith.constant 0 : index
    %8 = vector.load %arg4[%c0_8, %c0_9] : memref<1x64xf32, #tpu.memory_space<vmem>>, vector<1x64xf32>
    %9 = vector.broadcast %8 : vector<1x64xf32> to vector<144x64xf32>
    %10 = arith.addf %7, %9 : vector<144x64xf32>
    %c0_10 = arith.constant 0 : index
    %c0_11 = arith.constant 0 : index
    %11 = vector.load %arg11[%c0_10, %c0_11] : memref<152x64xf32, #tpu.memory_space<vmem>>, vector<144x64xf32>
    tpu.vector_store %arg11[%c0_10, %c0_11], %10 {strides = array<i32>} : memref<152x64xf32, #tpu.memory_space<vmem>>, vector<144x64xf32>,
    %cst_12 = arith.constant 0.000000e+00 : f32
    %12 = vector.broadcast %cst_12 : f32 to vector<132x64xf32>
    %c0_13 = arith.constant 0 : index
    %c0_14 = arith.constant 0 : index
    %13 = vector.load %arg11[%c0_13, %c0_14] : memref<152x64xf32, #tpu.memory_space<vmem>>, vector<132x64xf32>
    %c0_15 = arith.constant 0 : index
    %c0_16 = arith.constant 0 : index
    %c0_17 = arith.constant 0 : index
    %14 = vector.load %arg5[%c0_15, %c0_16, %c0_17] : memref<4x64x64xf32, #tpu.memory_space<vmem>>, vector<1x64x64xf32>
    %15 = vector.shape_cast %14 : vector<1x64x64xf32> to vector<64x64xf32>
    %cst_18 = arith.constant dense<0.000000e+00> : vector<132x64xf32>
    %16 = tpu.matmul %13, %15, %cst_18 {dimension_numbers = #tpu.dot_dimension_numbers<[1], [0], [0], [1], [0, 0, 1, 1], [], []>} : vector<132x64xf32>, vector<64x64xf32>, vector<132x64xf32> -> vector<132x64xf32>
    %17 = arith.addf %12, %16 : vector<132x64xf32>
    %c0_19 = arith.constant 0 : index
    %c0_20 = arith.constant 0 : index
    %c0_21 = arith.constant 0 : index
    %18 = vector.load %arg2[%c0_19, %c0_20, %c0_21] : memref<2x152x64xf32, #tpu.memory_space<vmem>>, vector<1x132x64xf32>
    %19 = vector.shape_cast %18 : vector<1x132x64xf32> to vector<132x64xf32>
    %c0_22 = arith.constant 0 : index
    %c0_23 = arith.constant 0 : index
    %c0_24 = arith.constant 0 : index
    %20 = vector.load %arg6[%c0_22, %c0_23, %c0_24] : memref<4x64x64xf32, #tpu.memory_space<vmem>>, vector<1x64x64xf32>
    %21 = vector.shape_cast %20 : vector<1x64x64xf32> to vector<64x64xf32>
    %cst_25 = arith.constant dense<0.000000e+00> : vector<132x64xf32>
    %22 = tpu.matmul %19, %21, %cst_25 {dimension_numbers = #tpu.dot_dimension_numbers<[1], [0], [0], [1], [0, 0, 1, 1], [], []>} : vector<132x64xf32>, vector<64x64xf32>, vector<132x64xf32> -> vector<132x64xf32>
    %23 = arith.addf %17, %22 : vector<132x64xf32>
    %c1 = arith.constant 1 : index
    %c0_26 = arith.constant 0 : index
    %24 = vector.load %arg11[%c1, %c0_26] : memref<152x64xf32, #tpu.memory_space<vmem>>, vector<132x64xf32>
    %c1_27 = arith.constant 1 : index
    %c0_28 = arith.constant 0 : index
    %c0_29 = arith.constant 0 : index
    %25 = vector.load %arg5[%c1_27, %c0_28, %c0_29] : memref<4x64x64xf32, #tpu.memory_space<vmem>>, vector<1x64x64xf32>
    %26 = vector.shape_cast %25 : vector<1x64x64xf32> to vector<64x64xf32>
    %cst_30 = arith.constant dense<0.000000e+00> : vector<132x64xf32>
    %27 = tpu.matmul %24, %26, %cst_30 {dimension_numbers = #tpu.dot_dimension_numbers<[1], [0], [0], [1], [0, 0, 1, 1], [], []>} : vector<132x64xf32>, vector<64x64xf32>, vector<132x64xf32> -> vector<132x64xf32>
    %28 = arith.addf %23, %27 : vector<132x64xf32>
    %c0_31 = arith.constant 0 : index
    %c1_32 = arith.constant 1 : index
    %c0_33 = arith.constant 0 : index
    %29 = vector.load %arg2[%c0_31, %c1_32, %c0_33] : memref<2x152x64xf32, #tpu.memory_space<vmem>>, vector<1x132x64xf32>
    %30 = vector.shape_cast %29 : vector<1x132x64xf32> to vector<132x64xf32>
    %c1_34 = arith.constant 1 : index
    %c0_35 = arith.constant 0 : index
    %c0_36 = arith.constant 0 : index
    %31 = vector.load %arg6[%c1_34, %c0_35, %c0_36] : memref<4x64x64xf32, #tpu.memory_space<vmem>>, vector<1x64x64xf32>
    %32 = vector.shape_cast %31 : vector<1x64x64xf32> to vector<64x64xf32>
    %cst_37 = arith.constant dense<0.000000e+00> : vector<132x64xf32>
    %33 = tpu.matmul %30, %32, %cst_37 {dimension_numbers = #tpu.dot_dimension_numbers<[1], [0], [0], [1], [0, 0, 1, 1], [], []>} : vector<132x64xf32>, vector<64x64xf32>, vector<132x64xf32> -> vector<132x64xf32>
    %34 = arith.addf %28, %33 : vector<132x64xf32>
    %c12 = arith.constant 12 : index
    %c0_38 = arith.constant 0 : index
    %35 = vector.load %arg11[%c12, %c0_38] : memref<152x64xf32, #tpu.memory_space<vmem>>, vector<132x64xf32>
    %c2 = arith.constant 2 : index
    %c0_39 = arith.constant 0 : index
    %c0_40 = arith.constant 0 : index
    %36 = vector.load %arg5[%c2, %c0_39, %c0_40] : memref<4x64x64xf32, #tpu.memory_space<vmem>>, vector<1x64x64xf32>
    %37 = vector.shape_cast %36 : vector<1x64x64xf32> to vector<64x64xf32>
    %cst_41 = arith.constant dense<0.000000e+00> : vector<132x64xf32>
    %38 = tpu.matmul %35, %37, %cst_41 {dimension_numbers = #tpu.dot_dimension_numbers<[1], [0], [0], [1], [0, 0, 1, 1], [], []>} : vector<132x64xf32>, vector<64x64xf32>, vector<132x64xf32> -> vector<132x64xf32>
    %39 = arith.addf %34, %38 : vector<132x64xf32>
    %c0_42 = arith.constant 0 : index
    %c12_43 = arith.constant 12 : index
    %c0_44 = arith.constant 0 : index
    %40 = vector.load %arg2[%c0_42, %c12_43, %c0_44] : memref<2x152x64xf32, #tpu.memory_space<vmem>>, vector<1x132x64xf32>
    %41 = vector.shape_cast %40 : vector<1x132x64xf32> to vector<132x64xf32>
    %c2_45 = arith.constant 2 : index
    %c0_46 = arith.constant 0 : index
    %c0_47 = arith.constant 0 : index
    %42 = vector.load %arg6[%c2_45, %c0_46, %c0_47] : memref<4x64x64xf32, #tpu.memory_space<vmem>>, vector<1x64x64xf32>
    %43 = vector.shape_cast %42 : vector<1x64x64xf32> to vector<64x64xf32>
    %cst_48 = arith.constant dense<0.000000e+00> : vector<132x64xf32>
    %44 = tpu.matmul %41, %43, %cst_48 {dimension_numbers = #tpu.dot_dimension_numbers<[1], [0], [0], [1], [0, 0, 1, 1], [], []>} : vector<132x64xf32>, vector<64x64xf32>, vector<132x64xf32> -> vector<132x64xf32>
    %45 = arith.addf %39, %44 : vector<132x64xf32>
    %c13 = arith.constant 13 : index
    %c0_49 = arith.constant 0 : index
    %46 = vector.load %arg11[%c13, %c0_49] : memref<152x64xf32, #tpu.memory_space<vmem>>, vector<132x64xf32>
    %c3 = arith.constant 3 : index
    %c0_50 = arith.constant 0 : index
    %c0_51 = arith.constant 0 : index
    %47 = vector.load %arg5[%c3, %c0_50, %c0_51] : memref<4x64x64xf32, #tpu.memory_space<vmem>>, vector<1x64x64xf32>
    %48 = vector.shape_cast %47 : vector<1x64x64xf32> to vector<64x64xf32>
    %cst_52 = arith.constant dense<0.000000e+00> : vector<132x64xf32>
    %49 = tpu.matmul %46, %48, %cst_52 {dimension_numbers = #tpu.dot_dimension_numbers<[1], [0], [0], [1], [0, 0, 1, 1], [], []>} : vector<132x64xf32>, vector<64x64xf32>, vector<132x64xf32> -> vector<132x64xf32>
    %50 = arith.addf %45, %49 : vector<132x64xf32>
    %c0_53 = arith.constant 0 : index
    %c13_54 = arith.constant 13 : index
    %c0_55 = arith.constant 0 : index
    %51 = vector.load %arg2[%c0_53, %c13_54, %c0_55] : memref<2x152x64xf32, #tpu.memory_space<vmem>>, vector<1x132x64xf32>
    %52 = vector.shape_cast %51 : vector<1x132x64xf32> to vector<132x64xf32>
    %c3_56 = arith.constant 3 : index
    %c0_57 = arith.constant 0 : index
    %c0_58 = arith.constant 0 : index
    %53 = vector.load %arg6[%c3_56, %c0_57, %c0_58] : memref<4x64x64xf32, #tpu.memory_space<vmem>>, vector<1x64x64xf32>
    %54 = vector.shape_cast %53 : vector<1x64x64xf32> to vector<64x64xf32>
    %cst_59 = arith.constant dense<0.000000e+00> : vector<132x64xf32>
    %55 = tpu.matmul %52, %54, %cst_59 {dimension_numbers = #tpu.dot_dimension_numbers<[1], [0], [0], [1], [0, 0, 1, 1], [], []>} : vector<132x64xf32>, vector<64x64xf32>, vector<132x64xf32> -> vector<132x64xf32>
    %56 = arith.addf %50, %55 : vector<132x64xf32>
    %c0_60 = arith.constant 0 : index
    %c0_61 = arith.constant 0 : index
    %57 = vector.load %arg7[%c0_60, %c0_61] : memref<1x64xf32, #tpu.memory_space<vmem>>, vector<1x64xf32>
    %58 = vector.broadcast %57 : vector<1x64xf32> to vector<132x64xf32>
    %59 = arith.addf %56, %58 : vector<132x64xf32>
    %cst_62 = arith.constant 0.000000e+00 : f32
    %60 = vector.broadcast %cst_62 : f32 to vector<132x64xf32>
    %61 = arith.maximumf %59, %60 : vector<132x64xf32>
    %c0_63 = arith.constant 0 : index
    %c0_64 = arith.constant 0 : index
    %62 = vector.load %arg12[%c0_63, %c0_64] : memref<140x64xf32, #tpu.memory_space<vmem>>, vector<132x64xf32>
    tpu.vector_store %arg12[%c0_63, %c0_64], %61 {strides = array<i32>} : memref<140x64xf32, #tpu.memory_space<vmem>>, vector<132x64xf32>,
    %cst_65 = arith.constant 0.000000e+00 : f32
    %63 = vector.broadcast %cst_65 : f32 to vector<120x64xf32>
    %c0_66 = arith.constant 0 : index
    %c0_67 = arith.constant 0 : index
    %64 = vector.load %arg12[%c0_66, %c0_67] : memref<140x64xf32, #tpu.memory_space<vmem>>, vector<120x64xf32>
    %c0_68 = arith.constant 0 : index
    %c0_69 = arith.constant 0 : index
    %c0_70 = arith.constant 0 : index
    %65 = vector.load %arg8[%c0_68, %c0_69, %c0_70] : memref<4x64x64xf32, #tpu.memory_space<vmem>>, vector<1x64x64xf32>
    %66 = vector.shape_cast %65 : vector<1x64x64xf32> to vector<64x64xf32>
    %cst_71 = arith.constant dense<0.000000e+00> : vector<120x64xf32>
    %67 = tpu.matmul %64, %66, %cst_71 {dimension_numbers = #tpu.dot_dimension_numbers<[1], [0], [0], [1], [0, 0, 1, 1], [], []>} : vector<120x64xf32>, vector<64x64xf32>, vector<120x64xf32> -> vector<120x64xf32>
    %68 = arith.addf %63, %67 : vector<120x64xf32>
    %c1_72 = arith.constant 1 : index
    %c0_73 = arith.constant 0 : index
    %69 = vector.load %arg12[%c1_72, %c0_73] : memref<140x64xf32, #tpu.memory_space<vmem>>, vector<120x64xf32>
    %c1_74 = arith.constant 1 : index
    %c0_75 = arith.constant 0 : index
    %c0_76 = arith.constant 0 : index
    %70 = vector.load %arg8[%c1_74, %c0_75, %c0_76] : memref<4x64x64xf32, #tpu.memory_space<vmem>>, vector<1x64x64xf32>
    %71 = vector.shape_cast %70 : vector<1x64x64xf32> to vector<64x64xf32>
    %cst_77 = arith.constant dense<0.000000e+00> : vector<120x64xf32>
    %72 = tpu.matmul %69, %71, %cst_77 {dimension_numbers = #tpu.dot_dimension_numbers<[1], [0], [0], [1], [0, 0, 1, 1], [], []>} : vector<120x64xf32>, vector<64x64xf32>, vector<120x64xf32> -> vector<120x64xf32>
    %73 = arith.addf %68, %72 : vector<120x64xf32>
    %c12_78 = arith.constant 12 : index
    %c0_79 = arith.constant 0 : index
    %74 = vector.load %arg12[%c12_78, %c0_79] : memref<140x64xf32, #tpu.memory_space<vmem>>, vector<120x64xf32>
    %c2_80 = arith.constant 2 : index
    %c0_81 = arith.constant 0 : index
    %c0_82 = arith.constant 0 : index
    %75 = vector.load %arg8[%c2_80, %c0_81, %c0_82] : memref<4x64x64xf32, #tpu.memory_space<vmem>>, vector<1x64x64xf32>
    %76 = vector.shape_cast %75 : vector<1x64x64xf32> to vector<64x64xf32>
    %cst_83 = arith.constant dense<0.000000e+00> : vector<120x64xf32>
    %77 = tpu.matmul %74, %76, %cst_83 {dimension_numbers = #tpu.dot_dimension_numbers<[1], [0], [0], [1], [0, 0, 1, 1], [], []>} : vector<120x64xf32>, vector<64x64xf32>, vector<120x64xf32> -> vector<120x64xf32>
    %78 = arith.addf %73, %77 : vector<120x64xf32>
    %c13_84 = arith.constant 13 : index
    %c0_85 = arith.constant 0 : index
    %79 = vector.load %arg12[%c13_84, %c0_85] : memref<140x64xf32, #tpu.memory_space<vmem>>, vector<120x64xf32>
    %c3_86 = arith.constant 3 : index
    %c0_87 = arith.constant 0 : index
    %c0_88 = arith.constant 0 : index
    %80 = vector.load %arg8[%c3_86, %c0_87, %c0_88] : memref<4x64x64xf32, #tpu.memory_space<vmem>>, vector<1x64x64xf32>
    %81 = vector.shape_cast %80 : vector<1x64x64xf32> to vector<64x64xf32>
    %cst_89 = arith.constant dense<0.000000e+00> : vector<120x64xf32>
    %82 = tpu.matmul %79, %81, %cst_89 {dimension_numbers = #tpu.dot_dimension_numbers<[1], [0], [0], [1], [0, 0, 1, 1], [], []>} : vector<120x64xf32>, vector<64x64xf32>, vector<120x64xf32> -> vector<120x64xf32>
    %83 = arith.addf %78, %82 : vector<120x64xf32>
    %c0_90 = arith.constant 0 : index
    %c0_91 = arith.constant 0 : index
    %84 = vector.load %arg9[%c0_90, %c0_91] : memref<1x64xf32, #tpu.memory_space<vmem>>, vector<1x64xf32>
    %85 = vector.broadcast %84 : vector<1x64xf32> to vector<120x64xf32>
    %86 = arith.addf %83, %85 : vector<120x64xf32>
    %c0_92 = arith.constant 0 : index
    %c0_93 = arith.constant 0 : index
    %c0_94 = arith.constant 0 : index
    %87 = vector.load %arg10[%c0_92, %c0_93, %c0_94] : memref<2x120x64xf32, #tpu.memory_space<vmem>>, vector<1x120x64xf32>
    %88 = vector.shape_cast %87 : vector<1x120x64xf32> to vector<120x64xf32>
    %89 = vector.shape_cast %86 : vector<120x64xf32> to vector<1x120x64xf32>
    tpu.vector_store %arg10[%c0_92, %c0_93, %c0_94], %89 {strides = array<i32>} : memref<2x120x64xf32, #tpu.memory_space<vmem>>, vector<1x120x64xf32>,
    %c1_95 = arith.constant 1 : index
    %c0_96 = arith.constant 0 : index
    %c0_97 = arith.constant 0 : index
    %90 = vector.load %arg1[%c1_95, %c0_96, %c0_97] : memref<2x144x32xf32, #tpu.memory_space<vmem>>, vector<1x144x32xf32>
    %91 = vector.shape_cast %90 : vector<1x144x32xf32> to vector<144x32xf32>
    %c0_98 = arith.constant 0 : index
    %c0_99 = arith.constant 0 : index
    %92 = vector.load %arg3[%c0_98, %c0_99] : memref<32x64xf32, #tpu.memory_space<vmem>>, vector<32x64xf32>
    %cst_100 = arith.constant dense<0.000000e+00> : vector<144x64xf32>
    %93 = tpu.matmul %91, %92, %cst_100 {dimension_numbers = #tpu.dot_dimension_numbers<[1], [0], [0], [1], [0, 0, 1, 1], [], []>} : vector<144x32xf32>, vector<32x64xf32>, vector<144x64xf32> -> vector<144x64xf32>
    %c0_101 = arith.constant 0 : index
    %c0_102 = arith.constant 0 : index
    %94 = vector.load %arg4[%c0_101, %c0_102] : memref<1x64xf32, #tpu.memory_space<vmem>>, vector<1x64xf32>
    %95 = vector.broadcast %94 : vector<1x64xf32> to vector<144x64xf32>
    %96 = arith.addf %93, %95 : vector<144x64xf32>
    %c0_103 = arith.constant 0 : index
    %c0_104 = arith.constant 0 : index
    %97 = vector.load %arg11[%c0_103, %c0_104] : memref<152x64xf32, #tpu.memory_space<vmem>>, vector<144x64xf32>
    tpu.vector_store %arg11[%c0_103, %c0_104], %96 {strides = array<i32>} : memref<152x64xf32, #tpu.memory_space<vmem>>, vector<144x64xf32>,
    %cst_105 = arith.constant 0.000000e+00 : f32
    %98 = vector.broadcast %cst_105 : f32 to vector<132x64xf32>
    %c0_106 = arith.constant 0 : index
    %c0_107 = arith.constant 0 : index
    %99 = vector.load %arg11[%c0_106, %c0_107] : memref<152x64xf32, #tpu.memory_space<vmem>>, vector<132x64xf32>
    %c0_108 = arith.constant 0 : index
    %c0_109 = arith.constant 0 : index
    %c0_110 = arith.constant 0 : index
    %100 = vector.load %arg5[%c0_108, %c0_109, %c0_110] : memref<4x64x64xf32, #tpu.memory_space<vmem>>, vector<1x64x64xf32>
    %101 = vector.shape_cast %100 : vector<1x64x64xf32> to vector<64x64xf32>
    %cst_111 = arith.constant dense<0.000000e+00> : vector<132x64xf32>
    %102 = tpu.matmul %99, %101, %cst_111 {dimension_numbers = #tpu.dot_dimension_numbers<[1], [0], [0], [1], [0, 0, 1, 1], [], []>} : vector<132x64xf32>, vector<64x64xf32>, vector<132x64xf32> -> vector<132x64xf32>
    %103 = arith.addf %98, %102 : vector<132x64xf32>
    %c1_112 = arith.constant 1 : index
    %c0_113 = arith.constant 0 : index
    %c0_114 = arith.constant 0 : index
    %104 = vector.load %arg2[%c1_112, %c0_113, %c0_114] : memref<2x152x64xf32, #tpu.memory_space<vmem>>, vector<1x132x64xf32>
    %105 = vector.shape_cast %104 : vector<1x132x64xf32> to vector<132x64xf32>
    %c0_115 = arith.constant 0 : index
    %c0_116 = arith.constant 0 : index
    %c0_117 = arith.constant 0 : index
    %106 = vector.load %arg6[%c0_115, %c0_116, %c0_117] : memref<4x64x64xf32, #tpu.memory_space<vmem>>, vector<1x64x64xf32>
    %107 = vector.shape_cast %106 : vector<1x64x64xf32> to vector<64x64xf32>
    %cst_118 = arith.constant dense<0.000000e+00> : vector<132x64xf32>
    %108 = tpu.matmul %105, %107, %cst_118 {dimension_numbers = #tpu.dot_dimension_numbers<[1], [0], [0], [1], [0, 0, 1, 1], [], []>} : vector<132x64xf32>, vector<64x64xf32>, vector<132x64xf32> -> vector<132x64xf32>
    %109 = arith.addf %103, %108 : vector<132x64xf32>
    %c1_119 = arith.constant 1 : index
    %c0_120 = arith.constant 0 : index
    %110 = vector.load %arg11[%c1_119, %c0_120] : memref<152x64xf32, #tpu.memory_space<vmem>>, vector<132x64xf32>
    %c1_121 = arith.constant 1 : index
    %c0_122 = arith.constant 0 : index
    %c0_123 = arith.constant 0 : index
    %111 = vector.load %arg5[%c1_121, %c0_122, %c0_123] : memref<4x64x64xf32, #tpu.memory_space<vmem>>, vector<1x64x64xf32>
    %112 = vector.shape_cast %111 : vector<1x64x64xf32> to vector<64x64xf32>
    %cst_124 = arith.constant dense<0.000000e+00> : vector<132x64xf32>
    %113 = tpu.matmul %110, %112, %cst_124 {dimension_numbers = #tpu.dot_dimension_numbers<[1], [0], [0], [1], [0, 0, 1, 1], [], []>} : vector<132x64xf32>, vector<64x64xf32>, vector<132x64xf32> -> vector<132x64xf32>
    %114 = arith.addf %109, %113 : vector<132x64xf32>
    %c1_125 = arith.constant 1 : index
    %c1_126 = arith.constant 1 : index
    %c0_127 = arith.constant 0 : index
    %115 = vector.load %arg2[%c1_125, %c1_126, %c0_127] : memref<2x152x64xf32, #tpu.memory_space<vmem>>, vector<1x132x64xf32>
    %116 = vector.shape_cast %115 : vector<1x132x64xf32> to vector<132x64xf32>
    %c1_128 = arith.constant 1 : index
    %c0_129 = arith.constant 0 : index
    %c0_130 = arith.constant 0 : index
    %117 = vector.load %arg6[%c1_128, %c0_129, %c0_130] : memref<4x64x64xf32, #tpu.memory_space<vmem>>, vector<1x64x64xf32>
    %118 = vector.shape_cast %117 : vector<1x64x64xf32> to vector<64x64xf32>
    %cst_131 = arith.constant dense<0.000000e+00> : vector<132x64xf32>
    %119 = tpu.matmul %116, %118, %cst_131 {dimension_numbers = #tpu.dot_dimension_numbers<[1], [0], [0], [1], [0, 0, 1, 1], [], []>} : vector<132x64xf32>, vector<64x64xf32>, vector<132x64xf32> -> vector<132x64xf32>
    %120 = arith.addf %114, %119 : vector<132x64xf32>
    %c12_132 = arith.constant 12 : index
    %c0_133 = arith.constant 0 : index
    %121 = vector.load %arg11[%c12_132, %c0_133] : memref<152x64xf32, #tpu.memory_space<vmem>>, vector<132x64xf32>
    %c2_134 = arith.constant 2 : index
    %c0_135 = arith.constant 0 : index
    %c0_136 = arith.constant 0 : index
    %122 = vector.load %arg5[%c2_134, %c0_135, %c0_136] : memref<4x64x64xf32, #tpu.memory_space<vmem>>, vector<1x64x64xf32>
    %123 = vector.shape_cast %122 : vector<1x64x64xf32> to vector<64x64xf32>
    %cst_137 = arith.constant dense<0.000000e+00> : vector<132x64xf32>
    %124 = tpu.matmul %121, %123, %cst_137 {dimension_numbers = #tpu.dot_dimension_numbers<[1], [0], [0], [1], [0, 0, 1, 1], [], []>} : vector<132x64xf32>, vector<64x64xf32>, vector<132x64xf32> -> vector<132x64xf32>
    %125 = arith.addf %120, %124 : vector<132x64xf32>
    %c1_138 = arith.constant 1 : index
    %c12_139 = arith.constant 12 : index
    %c0_140 = arith.constant 0 : index
    %126 = vector.load %arg2[%c1_138, %c12_139, %c0_140] : memref<2x152x64xf32, #tpu.memory_space<vmem>>, vector<1x132x64xf32>
    %127 = vector.shape_cast %126 : vector<1x132x64xf32> to vector<132x64xf32>
    %c2_141 = arith.constant 2 : index
    %c0_142 = arith.constant 0 : index
    %c0_143 = arith.constant 0 : index
    %128 = vector.load %arg6[%c2_141, %c0_142, %c0_143] : memref<4x64x64xf32, #tpu.memory_space<vmem>>, vector<1x64x64xf32>
    %129 = vector.shape_cast %128 : vector<1x64x64xf32> to vector<64x64xf32>
    %cst_144 = arith.constant dense<0.000000e+00> : vector<132x64xf32>
    %130 = tpu.matmul %127, %129, %cst_144 {dimension_numbers = #tpu.dot_dimension_numbers<[1], [0], [0], [1], [0, 0, 1, 1], [], []>} : vector<132x64xf32>, vector<64x64xf32>, vector<132x64xf32> -> vector<132x64xf32>
    %131 = arith.addf %125, %130 : vector<132x64xf32>
    %c13_145 = arith.constant 13 : index
    %c0_146 = arith.constant 0 : index
    %132 = vector.load %arg11[%c13_145, %c0_146] : memref<152x64xf32, #tpu.memory_space<vmem>>, vector<132x64xf32>
    %c3_147 = arith.constant 3 : index
    %c0_148 = arith.constant 0 : index
    %c0_149 = arith.constant 0 : index
    %133 = vector.load %arg5[%c3_147, %c0_148, %c0_149] : memref<4x64x64xf32, #tpu.memory_space<vmem>>, vector<1x64x64xf32>
    %134 = vector.shape_cast %133 : vector<1x64x64xf32> to vector<64x64xf32>
    %cst_150 = arith.constant dense<0.000000e+00> : vector<132x64xf32>
    %135 = tpu.matmul %132, %134, %cst_150 {dimension_numbers = #tpu.dot_dimension_numbers<[1], [0], [0], [1], [0, 0, 1, 1], [], []>} : vector<132x64xf32>, vector<64x64xf32>, vector<132x64xf32> -> vector<132x64xf32>
    %136 = arith.addf %131, %135 : vector<132x64xf32>
    %c1_151 = arith.constant 1 : index
    %c13_152 = arith.constant 13 : index
    %c0_153 = arith.constant 0 : index
    %137 = vector.load %arg2[%c1_151, %c13_152, %c0_153] : memref<2x152x64xf32, #tpu.memory_space<vmem>>, vector<1x132x64xf32>
    %138 = vector.shape_cast %137 : vector<1x132x64xf32> to vector<132x64xf32>
    %c3_154 = arith.constant 3 : index
    %c0_155 = arith.constant 0 : index
    %c0_156 = arith.constant 0 : index
    %139 = vector.load %arg6[%c3_154, %c0_155, %c0_156] : memref<4x64x64xf32, #tpu.memory_space<vmem>>, vector<1x64x64xf32>
    %140 = vector.shape_cast %139 : vector<1x64x64xf32> to vector<64x64xf32>
    %cst_157 = arith.constant dense<0.000000e+00> : vector<132x64xf32>
    %141 = tpu.matmul %138, %140, %cst_157 {dimension_numbers = #tpu.dot_dimension_numbers<[1], [0], [0], [1], [0, 0, 1, 1], [], []>} : vector<132x64xf32>, vector<64x64xf32>, vector<132x64xf32> -> vector<132x64xf32>
    %142 = arith.addf %136, %141 : vector<132x64xf32>
    %c0_158 = arith.constant 0 : index
    %c0_159 = arith.constant 0 : index
    %143 = vector.load %arg7[%c0_158, %c0_159] : memref<1x64xf32, #tpu.memory_space<vmem>>, vector<1x64xf32>
    %144 = vector.broadcast %143 : vector<1x64xf32> to vector<132x64xf32>
    %145 = arith.addf %142, %144 : vector<132x64xf32>
    %cst_160 = arith.constant 0.000000e+00 : f32
    %146 = vector.broadcast %cst_160 : f32 to vector<132x64xf32>
    %147 = arith.maximumf %145, %146 : vector<132x64xf32>
    %c0_161 = arith.constant 0 : index
    %c0_162 = arith.constant 0 : index
    %148 = vector.load %arg12[%c0_161, %c0_162] : memref<140x64xf32, #tpu.memory_space<vmem>>, vector<132x64xf32>
    tpu.vector_store %arg12[%c0_161, %c0_162], %147 {strides = array<i32>} : memref<140x64xf32, #tpu.memory_space<vmem>>, vector<132x64xf32>,
    %cst_163 = arith.constant 0.000000e+00 : f32
    %149 = vector.broadcast %cst_163 : f32 to vector<120x64xf32>
    %c0_164 = arith.constant 0 : index
    %c0_165 = arith.constant 0 : index
    %150 = vector.load %arg12[%c0_164, %c0_165] : memref<140x64xf32, #tpu.memory_space<vmem>>, vector<120x64xf32>
    %c0_166 = arith.constant 0 : index
    %c0_167 = arith.constant 0 : index
    %c0_168 = arith.constant 0 : index
    %151 = vector.load %arg8[%c0_166, %c0_167, %c0_168] : memref<4x64x64xf32, #tpu.memory_space<vmem>>, vector<1x64x64xf32>
    %152 = vector.shape_cast %151 : vector<1x64x64xf32> to vector<64x64xf32>
    %cst_169 = arith.constant dense<0.000000e+00> : vector<120x64xf32>
    %153 = tpu.matmul %150, %152, %cst_169 {dimension_numbers = #tpu.dot_dimension_numbers<[1], [0], [0], [1], [0, 0, 1, 1], [], []>} : vector<120x64xf32>, vector<64x64xf32>, vector<120x64xf32> -> vector<120x64xf32>
    %154 = arith.addf %149, %153 : vector<120x64xf32>
    %c1_170 = arith.constant 1 : index
    %c0_171 = arith.constant 0 : index
    %155 = vector.load %arg12[%c1_170, %c0_171] : memref<140x64xf32, #tpu.memory_space<vmem>>, vector<120x64xf32>
    %c1_172 = arith.constant 1 : index
    %c0_173 = arith.constant 0 : index
    %c0_174 = arith.constant 0 : index
    %156 = vector.load %arg8[%c1_172, %c0_173, %c0_174] : memref<4x64x64xf32, #tpu.memory_space<vmem>>, vector<1x64x64xf32>
    %157 = vector.shape_cast %156 : vector<1x64x64xf32> to vector<64x64xf32>
    %cst_175 = arith.constant dense<0.000000e+00> : vector<120x64xf32>
    %158 = tpu.matmul %155, %157, %cst_175 {dimension_numbers = #tpu.dot_dimension_numbers<[1], [0], [0], [1], [0, 0, 1, 1], [], []>} : vector<120x64xf32>, vector<64x64xf32>, vector<120x64xf32> -> vector<120x64xf32>
    %159 = arith.addf %154, %158 : vector<120x64xf32>
    %c12_176 = arith.constant 12 : index
    %c0_177 = arith.constant 0 : index
    %160 = vector.load %arg12[%c12_176, %c0_177] : memref<140x64xf32, #tpu.memory_space<vmem>>, vector<120x64xf32>
    %c2_178 = arith.constant 2 : index
    %c0_179 = arith.constant 0 : index
    %c0_180 = arith.constant 0 : index
    %161 = vector.load %arg8[%c2_178, %c0_179, %c0_180] : memref<4x64x64xf32, #tpu.memory_space<vmem>>, vector<1x64x64xf32>
    %162 = vector.shape_cast %161 : vector<1x64x64xf32> to vector<64x64xf32>
    %cst_181 = arith.constant dense<0.000000e+00> : vector<120x64xf32>
    %163 = tpu.matmul %160, %162, %cst_181 {dimension_numbers = #tpu.dot_dimension_numbers<[1], [0], [0], [1], [0, 0, 1, 1], [], []>} : vector<120x64xf32>, vector<64x64xf32>, vector<120x64xf32> -> vector<120x64xf32>
    %164 = arith.addf %159, %163 : vector<120x64xf32>
    %c13_182 = arith.constant 13 : index
    %c0_183 = arith.constant 0 : index
    %165 = vector.load %arg12[%c13_182, %c0_183] : memref<140x64xf32, #tpu.memory_space<vmem>>, vector<120x64xf32>
    %c3_184 = arith.constant 3 : index
    %c0_185 = arith.constant 0 : index
    %c0_186 = arith.constant 0 : index
    %166 = vector.load %arg8[%c3_184, %c0_185, %c0_186] : memref<4x64x64xf32, #tpu.memory_space<vmem>>, vector<1x64x64xf32>
    %167 = vector.shape_cast %166 : vector<1x64x64xf32> to vector<64x64xf32>
    %cst_187 = arith.constant dense<0.000000e+00> : vector<120x64xf32>
    %168 = tpu.matmul %165, %167, %cst_187 {dimension_numbers = #tpu.dot_dimension_numbers<[1], [0], [0], [1], [0, 0, 1, 1], [], []>} : vector<120x64xf32>, vector<64x64xf32>, vector<120x64xf32> -> vector<120x64xf32>
    %169 = arith.addf %164, %168 : vector<120x64xf32>
    %c0_188 = arith.constant 0 : index
    %c0_189 = arith.constant 0 : index
    %170 = vector.load %arg9[%c0_188, %c0_189] : memref<1x64xf32, #tpu.memory_space<vmem>>, vector<1x64xf32>
    %171 = vector.broadcast %170 : vector<1x64xf32> to vector<120x64xf32>
    %172 = arith.addf %169, %171 : vector<120x64xf32>
    %c1_190 = arith.constant 1 : index
    %c0_191 = arith.constant 0 : index
    %c0_192 = arith.constant 0 : index
    %173 = vector.load %arg10[%c1_190, %c0_191, %c0_192] : memref<2x120x64xf32, #tpu.memory_space<vmem>>, vector<1x120x64xf32>
    %174 = vector.shape_cast %173 : vector<1x120x64xf32> to vector<120x64xf32>
    %175 = vector.shape_cast %172 : vector<120x64xf32> to vector<1x120x64xf32>
    tpu.vector_store %arg10[%c1_190, %c0_191, %c0_192], %175 {strides = array<i32>} : memref<2x120x64xf32, #tpu.memory_space<vmem>>, vector<1x120x64xf32>,
    return
  }
  func.func @transform_0(%arg0: i32) -> (i32, i32, i32) {
    %c0_i32 = arith.constant 0 : i32
    %c0_i32_0 = arith.constant 0 : i32
    %c0_i32_1 = arith.constant 0 : i32
    return %arg0, %c0_i32, %c0_i32_0 : i32, i32, i32
  }
  func.func @transform_1(%arg0: i32) -> (i32, i32, i32) {
    %c0_i32 = arith.constant 0 : i32
    %c0_i32_0 = arith.constant 0 : i32
    %c0_i32_1 = arith.constant 0 : i32
    return %arg0, %c0_i32, %c0_i32_0 : i32, i32, i32
  }
  func.func @transform_2(%arg0: i32) -> (i32, i32) {
    %c0_i32 = arith.constant 0 : i32
    %c0_i32_0 = arith.constant 0 : i32
    %c0_i32_1 = arith.constant 0 : i32
    return %c0_i32, %c0_i32_0 : i32, i32
  }
  func.func @transform_3(%arg0: i32) -> (i32, i32) {
    %c0_i32 = arith.constant 0 : i32
    %c0_i32_0 = arith.constant 0 : i32
    %c0_i32_1 = arith.constant 0 : i32
    return %c0_i32, %c0_i32_0 : i32, i32
  }
  func.func @transform_4(%arg0: i32) -> (i32, i32, i32) {
    %c0_i32 = arith.constant 0 : i32
    %c0_i32_0 = arith.constant 0 : i32
    %c0_i32_1 = arith.constant 0 : i32
    %c0_i32_2 = arith.constant 0 : i32
    return %c0_i32, %c0_i32_0, %c0_i32_1 : i32, i32, i32
  }
  func.func @transform_5(%arg0: i32) -> (i32, i32, i32) {
    %c0_i32 = arith.constant 0 : i32
    %c0_i32_0 = arith.constant 0 : i32
    %c0_i32_1 = arith.constant 0 : i32
    %c0_i32_2 = arith.constant 0 : i32
    return %c0_i32, %c0_i32_0, %c0_i32_1 : i32, i32, i32
  }
  func.func @transform_6(%arg0: i32) -> (i32, i32) {
    %c0_i32 = arith.constant 0 : i32
    %c0_i32_0 = arith.constant 0 : i32
    %c0_i32_1 = arith.constant 0 : i32
    return %c0_i32, %c0_i32_0 : i32, i32
  }
  func.func @transform_7(%arg0: i32) -> (i32, i32, i32) {
    %c0_i32 = arith.constant 0 : i32
    %c0_i32_0 = arith.constant 0 : i32
    %c0_i32_1 = arith.constant 0 : i32
    %c0_i32_2 = arith.constant 0 : i32
    return %c0_i32, %c0_i32_0, %c0_i32_1 : i32, i32, i32
  }
  func.func @transform_8(%arg0: i32) -> (i32, i32) {
    %c0_i32 = arith.constant 0 : i32
    %c0_i32_0 = arith.constant 0 : i32
    %c0_i32_1 = arith.constant 0 : i32
    return %c0_i32, %c0_i32_0 : i32, i32
  }
  func.func @transform_9(%arg0: i32) -> (i32, i32, i32) {
    %c0_i32 = arith.constant 0 : i32
    %c0_i32_0 = arith.constant 0 : i32
    %c0_i32_1 = arith.constant 0 : i32
    return %arg0, %c0_i32, %c0_i32_0 : i32, i32, i32
  }
}

</mosaic_0001>

<llo_original>
// kernel: tile.33
$region0: #{tile.33}
  #allocation0 [shape = 's32[1]{0}', space=sflag, size = 0x4, scoped, tag = 'scoped memory for tile.33']
  %s0 = inlined_call_operand.vmem [shape: f32[32], index: 0, kind: input, shape index: {}]
  %s1 = inlined_call_operand.vmem [shape: f32[4,32], index: 1, kind: output, shape index: {}]
  // Predicated region
  $region2: #{tile.33} parent=0 // pred_check
    _
  $region3: #{tile.33} parent=0 // pred_check_branch
    %3 = sbr.rel (0) target = $region5
  $region4: #{tile.33} parent=0 // pred_region
    _
  $region5: #{tile.33} parent=0 // pred_fallthru
    _
  %v4 = vld [vmem:[%s0] ss:$0 sm:$0xff]
  %5 = vst [vmem:[%s1] sm:$0xf] %v4

// kernel: tile.34
$region0: #{tile.34}
  %s0 = inlined_call_operand.vmem [shape: f32[4,32], index: 0, kind: input, shape index: {}]
  %s1 = inlined_call_operand.vmem [shape: f32[1,128], index: 1, kind: output, shape index: {}]
  $region1: #{tile.34} parent=0
    #allocation0 [shape = 'u8[4096]{0}', space=vmem, size = 0x1000, scoped, tag = 'scoped mem for output reshape']
    #allocation1 [shape = 'u8[4096]{0}', space=vmem, size = 0x1000, scoped, tag = 'scoped mem for input reshape']
    %s3 = ssub.s32 16, 1
    %v4 = vld [vmem:[%s0] sm:%s3]
    %5 = vst [vmem:[#allocation1] sm:%s3] %v4
    %v6 = vld [vmem:[#allocation1] sm:$0x1]
    %vm7 = vcmask 261120
    %8 = vst.msk [vmem:[#allocation0] sm:$0x1] %vm7, %v6
    %s9 = scalar_lea.vmem [#allocation1], 3
    %v10 = vld [vmem:[%s9] sm:$0x1]
    %11 = vrot.lane.b32.xlu0 %v10, 96
    %v12 = vpop.permute.xlu0 %11
    %vm13 = vcmask 1048320
    %14 = vst.msk [vmem:[#allocation0] sm:$0x1] %vm13, %v12
    %s15 = scalar_lea.vmem [#allocation1], 2
    %v16 = vld [vmem:[%s15] sm:$0x1]
    %17 = vrot.lane.b32.xlu0 %v16, 64
    %v18 = vpop.permute.xlu0 %17
    %vm19 = vcmask 785920
    %20 = vst.msk [vmem:[#allocation0] sm:$0x1] %vm19, %v18
    %s21 = scalar_lea.vmem [#allocation1], 1
    %v22 = vld [vmem:[%s21] sm:$0x1]
    %23 = vrot.lane.b32.xlu0 %v22, 32
    %v24 = vpop.permute.xlu0 %23
    %vm25 = vcmask 523520
    %26 = vst.msk [vmem:[#allocation0] sm:$0x1] %vm25, %v24
    %s28 = ssub.s32 2, 1
    %v29 = vld [vmem:[#allocation0] sm:%s28]
    %s31 = ssub.s32 2, 1
    %32 = vst [vmem:[%s1] sm:%s31] %v29

// kernel: tile.48
$region0: #{tile.48}
  #allocation0 [shape = 's32[1]{0}', space=sflag, size = 0x4, scoped, tag = 'scoped memory for tile.48']
  %s0 = inlined_call_operand.vmem [shape: f32[16], index: 0, kind: input, shape index: {}]
  %s1 = inlined_call_operand.vmem [shape: f32[4,16], index: 1, kind: output, shape index: {}]
  // Predicated region
  $region2: #{tile.48} parent=0 // pred_check
    _
  $region3: #{tile.48} parent=0 // pred_check_branch
    %3 = sbr.rel (0) target = $region5
  $region4: #{tile.48} parent=0 // pred_region
    _
  $region5: #{tile.48} parent=0 // pred_fallthru
    _
  %v4 = vld [vmem:[%s0] ss:$0 sm:$0xff]
  %5 = vst [vmem:[%s1] sm:$0xf] %v4

// kernel: tile.49
$region0: #{tile.49}
  %s0 = inlined_call_operand.vmem [shape: f32[4,16], index: 0, kind: input, shape index: {}]
  %s1 = inlined_call_operand.vmem [shape: f32[1,64], index: 1, kind: output, shape index: {}]
  $region1: #{tile.49} parent=0
    #allocation0 [shape = 'u8[4096]{0}', space=vmem, size = 0x1000, scoped, tag = 'scoped mem for output reshape']
    #allocation1 [shape = 'u8[4096]{0}', space=vmem, size = 0x1000, scoped, tag = 'scoped mem for input reshape']
    %s3 = ssub.s32 16, 1
    %v4 = vld [vmem:[%s0] sm:%s3]
    %5 = vst [vmem:[#allocation1] sm:%s3] %v4
    %v6 = vld [vmem:[#allocation1] sm:$0x1]
    %vm7 = vcmask 130048
    %8 = vst.msk [vmem:[#allocation0] sm:$0x1] %vm7, %v6
    %s9 = scalar_lea.vmem [#allocation1], 3
    %v10 = vld [vmem:[%s9] sm:$0x1]
    %11 = vrot.lane.b32.xlu0 %v10, 48
    %v12 = vpop.permute.xlu0 %11
    %vm13 = vcmask 523648
    %14 = vst.msk [vmem:[#allocation0] sm:$0x1] %vm13, %v12
    %s15 = scalar_lea.vmem [#allocation1], 2
    %v16 = vld [vmem:[%s15] sm:$0x1]
    %17 = vrot.lane.b32.xlu0 %v16, 32
    %v18 = vpop.permute.xlu0 %17
    %vm19 = vcmask 392448
    %20 = vst.msk [vmem:[#allocation0] sm:$0x1] %vm19, %v18
    %s21 = scalar_lea.vmem [#allocation1], 1
    %v22 = vld [vmem:[%s21] sm:$0x1]
    %23 = vrot.lane.b32.xlu0 %v22, 16
    %v24 = vpop.permute.xlu0 %23
    %vm25 = vcmask 261248
    %26 = vst.msk [vmem:[#allocation0] sm:$0x1] %vm25, %v24
    %s28 = ssub.s32 2, 1
    %v29 = vld [vmem:[#allocation0] sm:%s28]
    %s31 = ssub.s32 2, 1
    %32 = vst [vmem:[%s1] sm:%s31] %v29

// kernel: decoder_forward.2
$region0: #{decoder_forward.2}
  #allocation0 [shape = 'u32[]', space=smem, size = 0x4, offset = 0x4, fixed_abs, tag = 'smem constant byte address 0x4 - core index']
  #allocation1 [shape = 'u32[72,128]{1,0:T(1,128)}', space=vmem, size = 0x9000, scoped, tag = 'internal scratch']
  #allocation2 [shape = 'f32[72,128]{1,0:T(8,128)}', space=vmem, size = 0x9000, scoped, tag = 'scratch operand']
  #allocation3 [shape = 'f32[64,128]{1,0:T(8,128)}', space=vmem, size = 0x8000, scoped, tag = 'scratch operand']
  %s0 = inlined_call_operand.vmem [shape: f32[2,64,64], index: 0, kind: input, shape index: {}]
  %s1 = inlined_call_operand.vmem [shape: f32[2,72,128], index: 1, kind: input, shape index: {}]
  %s2 = inlined_call_operand.vmem [shape: f32[64,128], index: 2, kind: input, shape index: {}]
  %s3 = inlined_call_operand.vmem [shape: f32[1,128], index: 3, kind: input, shape index: {}]
  %s4 = inlined_call_operand.vmem [shape: f32[4,128,128], index: 4, kind: input, shape index: {}]
  %s5 = inlined_call_operand.vmem [shape: f32[4,128,128], index: 5, kind: input, shape index: {}]
  %s6 = inlined_call_operand.vmem [shape: f32[1,128], index: 6, kind: input, shape index: {}]
  %s7 = inlined_call_operand.vmem [shape: f32[4,128,128], index: 7, kind: input, shape index: {}]
  %s8 = inlined_call_operand.vmem [shape: f32[1,128], index: 8, kind: input, shape index: {}]
  %s9 = inlined_call_operand.vmem [shape: f32[2,48,128], index: 9, kind: output, shape index: {}]
  %s10 = sld [smem:[#allocation0]]
  $region46: #{decoder_forward.2} parent=0
    _
  %s12 = ssub.s32 1, %s10
  %s13 = scalar_select 0, %s12, %s10
  // Predicated region
  $region2: #{decoder_forward.2} parent=0 // pred_check
    _
  $region3: #{decoder_forward.2} parent=0 // pred_check_branch
    %15 = sbr.rel (0) target = $region5
  $region4: #{decoder_forward.2} parent=0 // pred_region
    _
  $region5: #{decoder_forward.2} parent=0 // pred_fallthru
    _
  // Predicated region
  $region6: #{decoder_forward.2} parent=0 // pred_check
    _
  $region7: #{decoder_forward.2} parent=0 // pred_check_branch
    %17 = sbr.rel (0) target = $region9
  $region8: #{decoder_forward.2} parent=0 // pred_region
    _
  $region9: #{decoder_forward.2} parent=0 // pred_fallthru
    _
  // Predicated region
  $region10: #{decoder_forward.2} parent=0 // pred_check
    _
  $region11: #{decoder_forward.2} parent=0 // pred_check_branch
    %19 = sbr.rel (0) target = $region13
  $region12: #{decoder_forward.2} parent=0 // pred_region
    _
  $region13: #{decoder_forward.2} parent=0 // pred_fallthru
    _
  // Predicated region
  $region14: #{decoder_forward.2} parent=0 // pred_check
    _
  $region15: #{decoder_forward.2} parent=0 // pred_check_branch
    %21 = sbr.rel (0) target = $region17
  $region16: #{decoder_forward.2} parent=0 // pred_region
    _
  $region17: #{decoder_forward.2} parent=0 // pred_fallthru
    _
  // Predicated region
  $region18: #{decoder_forward.2} parent=0 // pred_check
    _
  $region19: #{decoder_forward.2} parent=0 // pred_check_branch
    %23 = sbr.rel (0) target = $region21
  $region20: #{decoder_forward.2} parent=0 // pred_region
    _
  $region21: #{decoder_forward.2} parent=0 // pred_fallthru
    _
  // Predicated region
  $region22: #{decoder_forward.2} parent=0 // pred_check
    _
  $region23: #{decoder_forward.2} parent=0 // pred_check_branch
    %25 = sbr.rel (0) target = $region25
  $region24: #{decoder_forward.2} parent=0 // pred_region
    _
  $region25: #{decoder_forward.2} parent=0 // pred_fallthru
    _
  // Predicated region
  $region26: #{decoder_forward.2} parent=0 // pred_check
    _
  $region27: #{decoder_forward.2} parent=0 // pred_check_branch
    %27 = sbr.rel (0) target = $region29
  $region28: #{decoder_forward.2} parent=0 // pred_region
    _
  $region29: #{decoder_forward.2} parent=0 // pred_fallthru
    _
  // Predicated region
  $region30: #{decoder_forward.2} parent=0 // pred_check
    _
  $region31: #{decoder_forward.2} parent=0 // pred_check_branch
    %29 = sbr.rel (0) target = $region33
  $region32: #{decoder_forward.2} parent=0 // pred_region
    _
  $region33: #{decoder_forward.2} parent=0 // pred_fallthru
    _
  // Predicated region
  $region34: #{decoder_forward.2} parent=0 // pred_check
    _
  $region35: #{decoder_forward.2} parent=0 // pred_check_branch
    %31 = sbr.rel (0) target = $region37
  $region36: #{decoder_forward.2} parent=0 // pred_region
    _
  $region37: #{decoder_forward.2} parent=0 // pred_fallthru
    _
  %32 = vst [vmem:[#allocation2 + $0x40] sm:$0xff] 0.0
  %33 = vst [vmem:[#allocation3 + $0x38] sm:$0xff] 0.0
  %v34 = vld [vmem:[%s0] sm:$0xff]
  %v35 = vld [vmem:[%s0 + $0x8] sm:$0xff]
  %v36 = vld [vmem:[%s0 + $0x10] sm:$0xff]
  %v37 = vld [vmem:[%s0 + $0x18] sm:$0xff]
  %v38 = vld [vmem:[%s0 + $0x20] sm:$0xff]
  %v39 = vld [vmem:[%s0 + $0x28] sm:$0xff]
  %v40 = vld [vmem:[%s0 + $0x30] sm:$0xff]
  %v41 = vld [vmem:[%s0 + $0x38] sm:$0xff]
  %v42 = vld [vmem:[%s2] sm:$0xff]
  %v43 = vld [vmem:[%s2 + $0x8] sm:$0xff]
  %v44 = vld [vmem:[%s2 + $0x10] sm:$0xff]
  %v45 = vld [vmem:[%s2 + $0x18] sm:$0xff]
  %v46 = vld [vmem:[%s2 + $0x20] sm:$0xff]
  %v47 = vld [vmem:[%s2 + $0x28] sm:$0xff]
  %v48 = vld [vmem:[%s2 + $0x30] sm:$0xff]
  %v49 = vld [vmem:[%s2 + $0x38] sm:$0xff]
  %v50 = vld [vmem:[%s3] sm:$0x1]
  %v52 = vperm.slane %v50, 0
  %vm54 = vcmask 523264
  %v56 = vsel %vm54, %v34, 0
  %v59 = vsel %vm54, %v35, 0
  %v62 = vsel %vm54, %v36, 0
  %v65 = vsel %vm54, %v37, 0
  %v68 = vsel %vm54, %v38, 0
  %v71 = vsel %vm54, %v39, 0
  %v74 = vsel %vm54, %v40, 0
  %v77 = vsel %vm54, %v41, 0
  %79 = vmatpush.msra.mxu0 0.0
  %80 = vmatpush.msra.mxu0 0.0
  %81 = vmatpush.msra.mxu0 0.0
  %82 = vmatpush.msra.mxu0 0.0
  %83 = vmatpush.msra.mxu0 0.0
  %84 = vmatpush.msra.mxu0 0.0
  %85 = vmatpush.msra.mxu0 0.0
  %86 = vmatpush.msra.mxu0 0.0
  %87 = vmatpush.msra.mxu0 %v49
  %88 = vmatpush.msra.mxu0 %v48
  %89 = vmatpush.msra.mxu0 %v47
  %90 = vmatpush.msra.mxu0 %v46
  %91 = vmatpush.msra.mxu0 %v45
  %92 = vmatpush.msra.mxu0 %v44
  %93 = vmatpush.msra.mxu0 %v43
  %94 = vmatpush.msra.mxu0 %v42
  %95 = vmatmul.f32.gmra.mxu0 %v56
  %v96 = vpop.f32.mrf.mxu0
  %v97 = vadd.f32 %v52, %v96
  %98 = vmatmul.f32.gmra.mxu0 %v59
  %v99 = vpop.f32.mrf.mxu0
  %v100 = vadd.f32 %v52, %v99
  %101 = vmatmul.f32.gmra.mxu0 %v62
  %v102 = vpop.f32.mrf.mxu0
  %v103 = vadd.f32 %v52, %v102
  %104 = vmatmul.f32.gmra.mxu0 %v65
  %v105 = vpop.f32.mrf.mxu0
  %v106 = vadd.f32 %v52, %v105
  %107 = vmatmul.f32.gmra.mxu0 %v68
  %v108 = vpop.f32.mrf.mxu0
  %v109 = vadd.f32 %v52, %v108
  %110 = vmatmul.f32.gmra.mxu0 %v71
  %v111 = vpop.f32.mrf.mxu0
  %v112 = vadd.f32 %v52, %v111
  %113 = vmatmul.f32.gmra.mxu0 %v74
  %v114 = vpop.f32.mrf.mxu0
  %v115 = vadd.f32 %v52, %v114
  %116 = vmatmul.f32.gmra.mxu0 %v77
  %v117 = vpop.f32.mrf.mxu0
  %v118 = vadd.f32 %v52, %v117
  %119 = vdwg.mxu0
  %120 = vst [vmem:[#allocation2] sm:$0xff] %v97
  %121 = vst [vmem:[#allocation2 + $0x8] sm:$0xff] %v100
  %122 = vst [vmem:[#allocation2 + $0x10] sm:$0xff] %v103
  %123 = vst [vmem:[#allocation2 + $0x18] sm:$0xff] %v106
  %124 = vst [vmem:[#allocation2 + $0x20] sm:$0xff] %v109
  %125 = vst [vmem:[#allocation2 + $0x28] sm:$0xff] %v112
  %126 = vst [vmem:[#allocation2 + $0x30] sm:$0xff] %v115
  %127 = vst [vmem:[#allocation2 + $0x38] sm:$0xff] %v118
  %v128 = vld [vmem:[#allocation2] sm:$0xff]
  %v129 = vld [vmem:[#allocation2 + $0x8] sm:$0xff]
  %v130 = vld [vmem:[#allocation2 + $0x10] sm:$0xff]
  %v131 = vld [vmem:[#allocation2 + $0x18] sm:$0xff]
  %v132 = vld [vmem:[#allocation2 + $0x20] sm:$0xff]
  %v133 = vld [vmem:[#allocation2 + $0x28] sm:$0xff]
  %v134 = vld [vmem:[#allocation2 + $0x30] sm:$0xff]
  %v135 = vld [vmem:[%s4] sm:$0xff]
  %v136 = vld [vmem:[%s4 + $0x8] sm:$0xff]
  %v137 = vld [vmem:[%s4 + $0x10] sm:$0xff]
  %v138 = vld [vmem:[%s4 + $0x18] sm:$0xff]
  %v139 = vld [vmem:[%s4 + $0x20] sm:$0xff]
  %v140 = vld [vmem:[%s4 + $0x28] sm:$0xff]
  %v141 = vld [vmem:[%s4 + $0x30] sm:$0xff]
  %v142 = vld [vmem:[%s4 + $0x38] sm:$0xff]
  %v143 = vld [vmem:[%s4 + $0x40] sm:$0xff]
  %v144 = vld [vmem:[%s4 + $0x48] sm:$0xff]
  %v145 = vld [vmem:[%s4 + $0x50] sm:$0xff]
  %v146 = vld [vmem:[%s4 + $0x58] sm:$0xff]
  %v147 = vld [vmem:[%s4 + $0x60] sm:$0xff]
  %v148 = vld [vmem:[%s4 + $0x68] sm:$0xff]
  %v149 = vld [vmem:[%s4 + $0x70] sm:$0xff]
  %v150 = vld [vmem:[%s4 + $0x78] sm:$0xff]
  %v151 = vld [vmem:[%s1] sm:$0xff]
  %v152 = vld [vmem:[%s1 + $0x8] sm:$0xff]
  %v153 = vld [vmem:[%s1 + $0x10] sm:$0xff]
  %v154 = vld [vmem:[%s1 + $0x18] sm:$0xff]
  %v155 = vld [vmem:[%s1 + $0x20] sm:$0xff]
  %v156 = vld [vmem:[%s1 + $0x28] sm:$0xff]
  %v157 = vld [vmem:[%s1 + $0x30] sm:$0xff]
  %v158 = vld [vmem:[%s5] sm:$0xff]
  %v159 = vld [vmem:[%s5 + $0x8] sm:$0xff]
  %v160 = vld [vmem:[%s5 + $0x10] sm:$0xff]
  %v161 = vld [vmem:[%s5 + $0x18] sm:$0xff]
  %v162 = vld [vmem:[%s5 + $0x20] sm:$0xff]
  %v163 = vld [vmem:[%s5 + $0x28] sm:$0xff]
  %v164 = vld [vmem:[%s5 + $0x30] sm:$0xff]
  %v165 = vld [vmem:[%s5 + $0x38] sm:$0xff]
  %v166 = vld [vmem:[%s5 + $0x40] sm:$0xff]
  %v167 = vld [vmem:[%s5 + $0x48] sm:$0xff]
  %v168 = vld [vmem:[%s5 + $0x50] sm:$0xff]
  %v169 = vld [vmem:[%s5 + $0x58] sm:$0xff]
  %v170 = vld [vmem:[%s5 + $0x60] sm:$0xff]
  %v171 = vld [vmem:[%s5 + $0x68] sm:$0xff]
  %v172 = vld [vmem:[%s5 + $0x70] sm:$0xff]
  %v173 = vld [vmem:[%s5 + $0x78] sm:$0xff]
  %174 = vmatpush.msra.mxu0 %v173
  %175 = vmatpush.msra.mxu0 %v172
  %176 = vmatpush.msra.mxu0 %v171
  %177 = vmatpush.msra.mxu0 %v170
  %178 = vmatpush.msra.mxu0 %v169
  %179 = vmatpush.msra.mxu0 %v168
  %180 = vmatpush.msra.mxu0 %v167
  %181 = vmatpush.msra.mxu0 %v166
  %182 = vmatpush.msra.mxu0 %v165
  %183 = vmatpush.msra.mxu0 %v164
  %184 = vmatpush.msra.mxu0 %v163
  %185 = vmatpush.msra.mxu0 %v162
  %186 = vmatpush.msra.mxu0 %v161
  %187 = vmatpush.msra.mxu0 %v160
  %188 = vmatpush.msra.mxu0 %v159
  %189 = vmatpush.msra.mxu0 %v158
  %190 = vmatmul.f32.gmra.mxu0 %v151
  %v191 = vpop.f32.mrf.mxu0
  %v192 = vadd.f32 0.0, %v191
  %193 = vmatmul.f32.gmra.mxu0 %v152
  %v194 = vpop.f32.mrf.mxu0
  %v195 = vadd.f32 0.0, %v194
  %196 = vmatmul.f32.gmra.mxu0 %v153
  %v197 = vpop.f32.mrf.mxu0
  %v198 = vadd.f32 0.0, %v197
  %199 = vmatmul.f32.gmra.mxu0 %v154
  %v200 = vpop.f32.mrf.mxu0
  %v201 = vadd.f32 0.0, %v200
  %202 = vmatmul.f32.gmra.mxu0 %v155
  %v203 = vpop.f32.mrf.mxu0
  %v204 = vadd.f32 0.0, %v203
  %205 = vmatmul.f32.gmra.mxu0 %v156
  %v206 = vpop.f32.mrf.mxu0
  %v207 = vadd.f32 0.0, %v206
  %208 = vmatmul.f32.gmra.mxu0 %v157
  %v209 = vpop.f32.mrf.mxu0
  %v210 = vadd.f32 0.0, %v209
  %211 = vdwg.mxu0
  %212 = vmatpush.msra.mxu0 %v150
  %213 = vmatpush.msra.mxu0 %v149
  %214 = vmatpush.msra.mxu0 %v148
  %215 = vmatpush.msra.mxu0 %v147
  %216 = vmatpush.msra.mxu0 %v146
  %217 = vmatpush.msra.mxu0 %v145
  %218 = vmatpush.msra.mxu0 %v144
  %219 = vmatpush.msra.mxu0 %v143
  %220 = vmatpush.msra.mxu0 %v142
  %221 = vmatpush.msra.mxu0 %v141
  %222 = vmatpush.msra.mxu0 %v140
  %223 = vmatpush.msra.mxu0 %v139
  %224 = vmatpush.msra.mxu0 %v138
  %225 = vmatpush.msra.mxu0 %v137
  %226 = vmatpush.msra.mxu0 %v136
  %227 = vmatpush.msra.mxu0 %v135
  %228 = vmatmul.f32.gmra.mxu0 %v128
  %v229 = vpop.f32.mrf.mxu0
  %v230 = vadd.f32 %v192, %v229
  %231 = vmatmul.f32.gmra.mxu0 %v129
  %v232 = vpop.f32.mrf.mxu0
  %v233 = vadd.f32 %v195, %v232
  %234 = vmatmul.f32.gmra.mxu0 %v130
  %v235 = vpop.f32.mrf.mxu0
  %v236 = vadd.f32 %v198, %v235
  %237 = vmatmul.f32.gmra.mxu0 %v131
  %v238 = vpop.f32.mrf.mxu0
  %v239 = vadd.f32 %v201, %v238
  %240 = vmatmul.f32.gmra.mxu0 %v132
  %v241 = vpop.f32.mrf.mxu0
  %v242 = vadd.f32 %v204, %v241
  %243 = vmatmul.f32.gmra.mxu0 %v133
  %v244 = vpop.f32.mrf.mxu0
  %v245 = vadd.f32 %v207, %v244
  %246 = vmatmul.f32.gmra.mxu0 %v134
  %v247 = vpop.f32.mrf.mxu0
  %v248 = vadd.f32 %v210, %v247
  %249 = vdwg.mxu0
  %v250 = vld [vmem:[#allocation2 + $0x1] sm:$0xff]
  %v251 = vld [vmem:[#allocation2 + $0x9] sm:$0xff]
  %v252 = vld [vmem:[#allocation2 + $0x11] sm:$0xff]
  %v253 = vld [vmem:[#allocation2 + $0x19] sm:$0xff]
  %v254 = vld [vmem:[#allocation2 + $0x21] sm:$0xff]
  %v255 = vld [vmem:[#allocation2 + $0x29] sm:$0xff]
  %v256 = vld [vmem:[#allocation2 + $0x31] sm:$0xff]
  %s257 = scalar_lea.vmem %s4, 128
  %v258 = vld [vmem:[%s257] sm:$0xff]
  %v259 = vld [vmem:[%s257 + $0x8] sm:$0xff]
  %v260 = vld [vmem:[%s257 + $0x10] sm:$0xff]
  %v261 = vld [vmem:[%s257 + $0x18] sm:$0xff]
  %v262 = vld [vmem:[%s257 + $0x20] sm:$0xff]
  %v263 = vld [vmem:[%s257 + $0x28] sm:$0xff]
  %v264 = vld [vmem:[%s257 + $0x30] sm:$0xff]
  %v265 = vld [vmem:[%s257 + $0x38] sm:$0xff]
  %v266 = vld [vmem:[%s257 + $0x40] sm:$0xff]
  %v267 = vld [vmem:[%s257 + $0x48] sm:$0xff]
  %v268 = vld [vmem:[%s257 + $0x50] sm:$0xff]
  %v269 = vld [vmem:[%s257 + $0x58] sm:$0xff]
  %v270 = vld [vmem:[%s257 + $0x60] sm:$0xff]
  %v271 = vld [vmem:[%s257 + $0x68] sm:$0xff]
  %v272 = vld [vmem:[%s257 + $0x70] sm:$0xff]
  %v273 = vld [vmem:[%s257 + $0x78] sm:$0xff]
  %274 = vmatpush.msra.mxu0 %v273
  %275 = vmatpush.msra.mxu0 %v272
  %276 = vmatpush.msra.mxu0 %v271
  %277 = vmatpush.msra.mxu0 %v270
  %278 = vmatpush.msra.mxu0 %v269
  %279 = vmatpush.msra.mxu0 %v268
  %280 = vmatpush.msra.mxu0 %v267
  %281 = vmatpush.msra.mxu0 %v266
  %282 = vmatpush.msra.mxu0 %v265
  %283 = vmatpush.msra.mxu0 %v264
  %284 = vmatpush.msra.mxu0 %v263
  %285 = vmatpush.msra.mxu0 %v262
  %286 = vmatpush.msra.mxu0 %v261
  %287 = vmatpush.msra.mxu0 %v260
  %288 = vmatpush.msra.mxu0 %v259
  %289 = vmatpush.msra.mxu0 %v258
  %290 = vmatmul.f32.gmra.mxu0 %v250
  %v291 = vpop.f32.mrf.mxu0
  %v292 = vadd.f32 0.0, %v291
  %293 = vmatmul.f32.gmra.mxu0 %v251
  %v294 = vpop.f32.mrf.mxu0
  %v295 = vadd.f32 0.0, %v294
  %296 = vmatmul.f32.gmra.mxu0 %v252
  %v297 = vpop.f32.mrf.mxu0
  %v298 = vadd.f32 0.0, %v297
  %299 = vmatmul.f32.gmra.mxu0 %v253
  %v300 = vpop.f32.mrf.mxu0
  %v301 = vadd.f32 0.0, %v300
  %302 = vmatmul.f32.gmra.mxu0 %v254
  %v303 = vpop.f32.mrf.mxu0
  %v304 = vadd.f32 0.0, %v303
  %305 = vmatmul.f32.gmra.mxu0 %v255
  %v306 = vpop.f32.mrf.mxu0
  %v307 = vadd.f32 0.0, %v306
  %308 = vmatmul.f32.gmra.mxu0 %v256
  %v309 = vpop.f32.mrf.mxu0
  %v310 = vadd.f32 0.0, %v309
  %311 = vdwg.mxu0
  %v312 = vadd.f32 %v230, %v292
  %v313 = vadd.f32 %v233, %v295
  %v314 = vadd.f32 %v236, %v298
  %v315 = vadd.f32 %v239, %v301
  %v316 = vadd.f32 %v242, %v304
  %v317 = vadd.f32 %v245, %v307
  %v318 = vadd.f32 %v248, %v310
  %v319 = vld [vmem:[%s1 + $0x1] sm:$0xff]
  %v320 = vld [vmem:[%s1 + $0x9] sm:$0xff]
  %v321 = vld [vmem:[%s1 + $0x11] sm:$0xff]
  %v322 = vld [vmem:[%s1 + $0x19] sm:$0xff]
  %v323 = vld [vmem:[%s1 + $0x21] sm:$0xff]
  %v324 = vld [vmem:[%s1 + $0x29] sm:$0xff]
  %v325 = vld [vmem:[%s1 + $0x31] sm:$0xff]
  %s326 = scalar_lea.vmem %s5, 128
  %v327 = vld [vmem:[%s326] sm:$0xff]
  %v328 = vld [vmem:[%s326 + $0x8] sm:$0xff]
  %v329 = vld [vmem:[%s326 + $0x10] sm:$0xff]
  %v330 = vld [vmem:[%s326 + $0x18] sm:$0xff]
  %v331 = vld [vmem:[%s326 + $0x20] sm:$0xff]
  %v332 = vld [vmem:[%s326 + $0x28] sm:$0xff]
  %v333 = vld [vmem:[%s326 + $0x30] sm:$0xff]
  %v334 = vld [vmem:[%s326 + $0x38] sm:$0xff]
  %v335 = vld [vmem:[%s326 + $0x40] sm:$0xff]
  %v336 = vld [vmem:[%s326 + $0x48] sm:$0xff]
  %v337 = vld [vmem:[%s326 + $0x50] sm:$0xff]
  %v338 = vld [vmem:[%s326 + $0x58] sm:$0xff]
  %v339 = vld [vmem:[%s326 + $0x60] sm:$0xff]
  %v340 = vld [vmem:[%s326 + $0x68] sm:$0xff]
  %v341 = vld [vmem:[%s326 + $0x70] sm:$0xff]
  %v342 = vld [vmem:[%s326 + $0x78] sm:$0xff]
  %343 = vmatpush.msra.mxu0 %v342
  %344 = vmatpush.msra.mxu0 %v341
  %345 = vmatpush.msra.mxu0 %v340
  %346 = vmatpush.msra.mxu0 %v339
  %347 = vmatpush.msra.mxu0 %v338
  %348 = vmatpush.msra.mxu0 %v337
  %349 = vmatpush.msra.mxu0 %v336
  %350 = vmatpush.msra.mxu0 %v335
  %351 = vmatpush.msra.mxu0 %v334
  %352 = vmatpush.msra.mxu0 %v333
  %353 = vmatpush.msra.mxu0 %v332
  %354 = vmatpush.msra.mxu0 %v331
  %355 = vmatpush.msra.mxu0 %v330
  %356 = vmatpush.msra.mxu0 %v329
  %357 = vmatpush.msra.mxu0 %v328
  %358 = vmatpush.msra.mxu0 %v327
  %359 = vmatmul.f32.gmra.mxu0 %v319
  %v360 = vpop.f32.mrf.mxu0
  %v361 = vadd.f32 0.0, %v360
  %362 = vmatmul.f32.gmra.mxu0 %v320
  %v363 = vpop.f32.mrf.mxu0
  %v364 = vadd.f32 0.0, %v363
  %365 = vmatmul.f32.gmra.mxu0 %v321
  %v366 = vpop.f32.mrf.mxu0
  %v367 = vadd.f32 0.0, %v366
  %368 = vmatmul.f32.gmra.mxu0 %v322
  %v369 = vpop.f32.mrf.mxu0
  %v370 = vadd.f32 0.0, %v369
  %371 = vmatmul.f32.gmra.mxu0 %v323
  %v372 = vpop.f32.mrf.mxu0
  %v373 = vadd.f32 0.0, %v372
  %374 = vmatmul.f32.gmra.mxu0 %v324
  %v375 = vpop.f32.mrf.mxu0
  %v376 = vadd.f32 0.0, %v375
  %377 = vmatmul.f32.gmra.mxu0 %v325
  %v378 = vpop.f32.mrf.mxu0
  %v379 = vadd.f32 0.0, %v378
  %380 = vdwg.mxu0
  %v381 = vadd.f32 %v312, %v361
  %v382 = vadd.f32 %v313, %v364
  %v383 = vadd.f32 %v314, %v367
  %v384 = vadd.f32 %v315, %v370
  %v385 = vadd.f32 %v316, %v373
  %v386 = vadd.f32 %v317, %v376
  %v387 = vadd.f32 %v318, %v379
  %v388 = vld [vmem:[#allocation2 + $0x8] sm:$0xff]
  %v389 = vld [vmem:[#allocation2 + $0x10] sm:$0xff]
  %v390 = vld [vmem:[#allocation2 + $0x18] sm:$0xff]
  %v391 = vld [vmem:[#allocation2 + $0x20] sm:$0xff]
  %v392 = vld [vmem:[#allocation2 + $0x28] sm:$0xff]
  %v393 = vld [vmem:[#allocation2 + $0x30] sm:$0xff]
  %v394 = vld [vmem:[#allocation2 + $0x38] sm:$0xff]
  %s395 = scalar_lea.vmem %s4, 256
  %v396 = vld [vmem:[%s395] sm:$0xff]
  %v397 = vld [vmem:[%s395 + $0x8] sm:$0xff]
  %v398 = vld [vmem:[%s395 + $0x10] sm:$0xff]
  %v399 = vld [vmem:[%s395 + $0x18] sm:$0xff]
  %v400 = vld [vmem:[%s395 + $0x20] sm:$0xff]
  %v401 = vld [vmem:[%s395 + $0x28] sm:$0xff]
  %v402 = vld [vmem:[%s395 + $0x30] sm:$0xff]
  %v403 = vld [vmem:[%s395 + $0x38] sm:$0xff]
  %v404 = vld [vmem:[%s395 + $0x40] sm:$0xff]
  %v405 = vld [vmem:[%s395 + $0x48] sm:$0xff]
  %v406 = vld [vmem:[%s395 + $0x50] sm:$0xff]
  %v407 = vld [vmem:[%s395 + $0x58] sm:$0xff]
  %v408 = vld [vmem:[%s395 + $0x60] sm:$0xff]
  %v409 = vld [vmem:[%s395 + $0x68] sm:$0xff]
  %v410 = vld [vmem:[%s395 + $0x70] sm:$0xff]
  %v411 = vld [vmem:[%s395 + $0x78] sm:$0xff]
  %412 = vmatpush.msra.mxu0 %v411
  %413 = vmatpush.msra.mxu0 %v410
  %414 = vmatpush.msra.mxu0 %v409
  %415 = vmatpush.msra.mxu0 %v408
  %416 = vmatpush.msra.mxu0 %v407
  %417 = vmatpush.msra.mxu0 %v406
  %418 = vmatpush.msra.mxu0 %v405
  %419 = vmatpush.msra.mxu0 %v404
  %420 = vmatpush.msra.mxu0 %v403
  %421 = vmatpush.msra.mxu0 %v402
  %422 = vmatpush.msra.mxu0 %v401
  %423 = vmatpush.msra.mxu0 %v400
  %424 = vmatpush.msra.mxu0 %v399
  %425 = vmatpush.msra.mxu0 %v398
  %426 = vmatpush.msra.mxu0 %v397
  %427 = vmatpush.msra.mxu0 %v396
  %428 = vmatmul.f32.gmra.mxu0 %v388
  %v429 = vpop.f32.mrf.mxu0
  %v430 = vadd.f32 0.0, %v429
  %431 = vmatmul.f32.gmra.mxu0 %v389
  %v432 = vpop.f32.mrf.mxu0
  %v433 = vadd.f32 0.0, %v432
  %434 = vmatmul.f32.gmra.mxu0 %v390
  %v435 = vpop.f32.mrf.mxu0
  %v436 = vadd.f32 0.0, %v435
  %437 = vmatmul.f32.gmra.mxu0 %v391
  %v438 = vpop.f32.mrf.mxu0
  %v439 = vadd.f32 0.0, %v438
  %440 = vmatmul.f32.gmra.mxu0 %v392
  %v441 = vpop.f32.mrf.mxu0
  %v442 = vadd.f32 0.0, %v441
  %443 = vmatmul.f32.gmra.mxu0 %v393
  %v444 = vpop.f32.mrf.mxu0
  %v445 = vadd.f32 0.0, %v444
  %446 = vmatmul.f32.gmra.mxu0 %v394
  %v447 = vpop.f32.mrf.mxu0
  %v448 = vadd.f32 0.0, %v447
  %449 = vdwg.mxu0
  %v450 = vadd.f32 %v381, %v430
  %v451 = vadd.f32 %v382, %v433
  %v452 = vadd.f32 %v383, %v436
  %v453 = vadd.f32 %v384, %v439
  %v454 = vadd.f32 %v385, %v442
  %v455 = vadd.f32 %v386, %v445
  %v456 = vadd.f32 %v387, %v448
  %v457 = vld [vmem:[%s1 + $0x8] sm:$0xff]
  %v458 = vld [vmem:[%s1 + $0x10] sm:$0xff]
  %v459 = vld [vmem:[%s1 + $0x18] sm:$0xff]
  %v460 = vld [vmem:[%s1 + $0x20] sm:$0xff]
  %v461 = vld [vmem:[%s1 + $0x28] sm:$0xff]
  %v462 = vld [vmem:[%s1 + $0x30] sm:$0xff]
  %v463 = vld [vmem:[%s1 + $0x38] sm:$0xff]
  %s464 = scalar_lea.vmem %s5, 256
  %v465 = vld [vmem:[%s464] sm:$0xff]
  %v466 = vld [vmem:[%s464 + $0x8] sm:$0xff]
  %v467 = vld [vmem:[%s464 + $0x10] sm:$0xff]
  %v468 = vld [vmem:[%s464 + $0x18] sm:$0xff]
  %v469 = vld [vmem:[%s464 + $0x20] sm:$0xff]
  %v470 = vld [vmem:[%s464 + $0x28] sm:$0xff]
  %v471 = vld [vmem:[%s464 + $0x30] sm:$0xff]
  %v472 = vld [vmem:[%s464 + $0x38] sm:$0xff]
  %v473 = vld [vmem:[%s464 + $0x40] sm:$0xff]
  %v474 = vld [vmem:[%s464 + $0x48] sm:$0xff]
  %v475 = vld [vmem:[%s464 + $0x50] sm:$0xff]
  %v476 = vld [vmem:[%s464 + $0x58] sm:$0xff]
  %v477 = vld [vmem:[%s464 + $0x60] sm:$0xff]
  %v478 = vld [vmem:[%s464 + $0x68] sm:$0xff]
  %v479 = vld [vmem:[%s464 + $0x70] sm:$0xff]
  %v480 = vld [vmem:[%s464 + $0x78] sm:$0xff]
  %481 = vmatpush.msra.mxu0 %v480
  %482 = vmatpush.msra.mxu0 %v479
  %483 = vmatpush.msra.mxu0 %v478
  %484 = vmatpush.msra.mxu0 %v477
  %485 = vmatpush.msra.mxu0 %v476
  %486 = vmatpush.msra.mxu0 %v475
  %487 = vmatpush.msra.mxu0 %v474
  %488 = vmatpush.msra.mxu0 %v473
  %489 = vmatpush.msra.mxu0 %v472
  %490 = vmatpush.msra.mxu0 %v471
  %491 = vmatpush.msra.mxu0 %v470
  %492 = vmatpush.msra.mxu0 %v469
  %493 = vmatpush.msra.mxu0 %v468
  %494 = vmatpush.msra.mxu0 %v467
  %495 = vmatpush.msra.mxu0 %v466
  %496 = vmatpush.msra.mxu0 %v465
  %497 = vmatmul.f32.gmra.mxu0 %v457
  %v498 = vpop.f32.mrf.mxu0
  %v499 = vadd.f32 0.0, %v498
  %500 = vmatmul.f32.gmra.mxu0 %v458
  %v501 = vpop.f32.mrf.mxu0
  %v502 = vadd.f32 0.0, %v501
  %503 = vmatmul.f32.gmra.mxu0 %v459
  %v504 = vpop.f32.mrf.mxu0
  %v505 = vadd.f32 0.0, %v504
  %506 = vmatmul.f32.gmra.mxu0 %v460
  %v507 = vpop.f32.mrf.mxu0
  %v508 = vadd.f32 0.0, %v507
  %509 = vmatmul.f32.gmra.mxu0 %v461
  %v510 = vpop.f32.mrf.mxu0
  %v511 = vadd.f32 0.0, %v510
  %512 = vmatmul.f32.gmra.mxu0 %v462
  %v513 = vpop.f32.mrf.mxu0
  %v514 = vadd.f32 0.0, %v513
  %515 = vmatmul.f32.gmra.mxu0 %v463
  %v516 = vpop.f32.mrf.mxu0
  %v517 = vadd.f32 0.0, %v516
  %518 = vdwg.mxu0
  %v519 = vadd.f32 %v450, %v499
  %v520 = vadd.f32 %v451, %v502
  %v521 = vadd.f32 %v452, %v505
  %v522 = vadd.f32 %v453, %v508
  %v523 = vadd.f32 %v454, %v511
  %v524 = vadd.f32 %v455, %v514
  %v525 = vadd.f32 %v456, %v517
  %v526 = vld [vmem:[#allocation2 + $0x9] sm:$0xff]
  %v527 = vld [vmem:[#allocation2 + $0x11] sm:$0xff]
  %v528 = vld [vmem:[#allocation2 + $0x19] sm:$0xff]
  %v529 = vld [vmem:[#allocation2 + $0x21] sm:$0xff]
  %v530 = vld [vmem:[#allocation2 + $0x29] sm:$0xff]
  %v531 = vld [vmem:[#allocation2 + $0x31] sm:$0xff]
  %v532 = vld [vmem:[#allocation2 + $0x39] sm:$0xff]
  %s533 = scalar_lea.vmem %s4, 384
  %v534 = vld [vmem:[%s533] sm:$0xff]
  %v535 = vld [vmem:[%s533 + $0x8] sm:$0xff]
  %v536 = vld [vmem:[%s533 + $0x10] sm:$0xff]
  %v537 = vld [vmem:[%s533 + $0x18] sm:$0xff]
  %v538 = vld [vmem:[%s533 + $0x20] sm:$0xff]
  %v539 = vld [vmem:[%s533 + $0x28] sm:$0xff]
  %v540 = vld [vmem:[%s533 + $0x30] sm:$0xff]
  %v541 = vld [vmem:[%s533 + $0x38] sm:$0xff]
  %v542 = vld [vmem:[%s533 + $0x40] sm:$0xff]
  %v543 = vld [vmem:[%s533 + $0x48] sm:$0xff]
  %v544 = vld [vmem:[%s533 + $0x50] sm:$0xff]
  %v545 = vld [vmem:[%s533 + $0x58] sm:$0xff]
  %v546 = vld [vmem:[%s533 + $0x60] sm:$0xff]
  %v547 = vld [vmem:[%s533 + $0x68] sm:$0xff]
  %v548 = vld [vmem:[%s533 + $0x70] sm:$0xff]
  %v549 = vld [vmem:[%s533 + $0x78] sm:$0xff]
  %550 = vmatpush.msra.mxu0 %v549
  %551 = vmatpush.msra.mxu0 %v548
  %552 = vmatpush.msra.mxu0 %v547
  %553 = vmatpush.msra.mxu0 %v546
  %554 = vmatpush.msra.mxu0 %v545
  %555 = vmatpush.msra.mxu0 %v544
  %556 = vmatpush.msra.mxu0 %v543
  %557 = vmatpush.msra.mxu0 %v542
  %558 = vmatpush.msra.mxu0 %v541
  %559 = vmatpush.msra.mxu0 %v540
  %560 = vmatpush.msra.mxu0 %v539
  %561 = vmatpush.msra.mxu0 %v538
  %562 = vmatpush.msra.mxu0 %v537
  %563 = vmatpush.msra.mxu0 %v536
  %564 = vmatpush.msra.mxu0 %v535
  %565 = vmatpush.msra.mxu0 %v534
  %566 = vmatmul.f32.gmra.mxu0 %v526
  %v567 = vpop.f32.mrf.mxu0
  %v568 = vadd.f32 0.0, %v567
  %569 = vmatmul.f32.gmra.mxu0 %v527
  %v570 = vpop.f32.mrf.mxu0
  %v571 = vadd.f32 0.0, %v570
  %572 = vmatmul.f32.gmra.mxu0 %v528
  %v573 = vpop.f32.mrf.mxu0
  %v574 = vadd.f32 0.0, %v573
  %575 = vmatmul.f32.gmra.mxu0 %v529
  %v576 = vpop.f32.mrf.mxu0
  %v577 = vadd.f32 0.0, %v576
  %578 = vmatmul.f32.gmra.mxu0 %v530
  %v579 = vpop.f32.mrf.mxu0
  %v580 = vadd.f32 0.0, %v579
  %581 = vmatmul.f32.gmra.mxu0 %v531
  %v582 = vpop.f32.mrf.mxu0
  %v583 = vadd.f32 0.0, %v582
  %584 = vmatmul.f32.gmra.mxu0 %v532
  %v585 = vpop.f32.mrf.mxu0
  %v586 = vadd.f32 0.0, %v585
  %587 = vdwg.mxu0
  %v588 = vadd.f32 %v519, %v568
  %v589 = vadd.f32 %v520, %v571
  %v590 = vadd.f32 %v521, %v574
  %v591 = vadd.f32 %v522, %v577
  %v592 = vadd.f32 %v523, %v580
  %v593 = vadd.f32 %v524, %v583
  %v594 = vadd.f32 %v525, %v586
  %v595 = vld [vmem:[%s1 + $0x9] sm:$0xff]
  %v596 = vld [vmem:[%s1 + $0x11] sm:$0xff]
  %v597 = vld [vmem:[%s1 + $0x19] sm:$0xff]
  %v598 = vld [vmem:[%s1 + $0x21] sm:$0xff]
  %v599 = vld [vmem:[%s1 + $0x29] sm:$0xff]
  %v600 = vld [vmem:[%s1 + $0x31] sm:$0xff]
  %v601 = vld [vmem:[%s1 + $0x39] sm:$0xff]
  %s602 = scalar_lea.vmem %s5, 384
  %v603 = vld [vmem:[%s602] sm:$0xff]
  %v604 = vld [vmem:[%s602 + $0x8] sm:$0xff]
  %v605 = vld [vmem:[%s602 + $0x10] sm:$0xff]
  %v606 = vld [vmem:[%s602 + $0x18] sm:$0xff]
  %v607 = vld [vmem:[%s602 + $0x20] sm:$0xff]
  %v608 = vld [vmem:[%s602 + $0x28] sm:$0xff]
  %v609 = vld [vmem:[%s602 + $0x30] sm:$0xff]
  %v610 = vld [vmem:[%s602 + $0x38] sm:$0xff]
  %v611 = vld [vmem:[%s602 + $0x40] sm:$0xff]
  %v612 = vld [vmem:[%s602 + $0x48] sm:$0xff]
  %v613 = vld [vmem:[%s602 + $0x50] sm:$0xff]
  %v614 = vld [vmem:[%s602 + $0x58] sm:$0xff]
  %v615 = vld [vmem:[%s602 + $0x60] sm:$0xff]
  %v616 = vld [vmem:[%s602 + $0x68] sm:$0xff]
  %v617 = vld [vmem:[%s602 + $0x70] sm:$0xff]
  %v618 = vld [vmem:[%s602 + $0x78] sm:$0xff]
  %619 = vmatpush.msra.mxu0 %v618
  %620 = vmatpush.msra.mxu0 %v617
  %621 = vmatpush.msra.mxu0 %v616
  %622 = vmatpush.msra.mxu0 %v615
  %623 = vmatpush.msra.mxu0 %v614
  %624 = vmatpush.msra.mxu0 %v613
  %625 = vmatpush.msra.mxu0 %v612
  %626 = vmatpush.msra.mxu0 %v611
  %627 = vmatpush.msra.mxu0 %v610
  %628 = vmatpush.msra.mxu0 %v609
  %629 = vmatpush.msra.mxu0 %v608
  %630 = vmatpush.msra.mxu0 %v607
  %631 = vmatpush.msra.mxu0 %v606
  %632 = vmatpush.msra.mxu0 %v605
  %633 = vmatpush.msra.mxu0 %v604
  %634 = vmatpush.msra.mxu0 %v603
  %635 = vmatmul.f32.gmra.mxu0 %v595
  %v636 = vpop.f32.mrf.mxu0
  %v637 = vadd.f32 0.0, %v636
  %638 = vmatmul.f32.gmra.mxu0 %v596
  %v639 = vpop.f32.mrf.mxu0
  %v640 = vadd.f32 0.0, %v639
  %641 = vmatmul.f32.gmra.mxu0 %v597
  %v642 = vpop.f32.mrf.mxu0
  %v643 = vadd.f32 0.0, %v642
  %644 = vmatmul.f32.gmra.mxu0 %v598
  %v645 = vpop.f32.mrf.mxu0
  %v646 = vadd.f32 0.0, %v645
  %647 = vmatmul.f32.gmra.mxu0 %v599
  %v648 = vpop.f32.mrf.mxu0
  %v649 = vadd.f32 0.0, %v648
  %650 = vmatmul.f32.gmra.mxu0 %v600
  %v651 = vpop.f32.mrf.mxu0
  %v652 = vadd.f32 0.0, %v651
  %653 = vmatmul.f32.gmra.mxu0 %v601
  %v654 = vpop.f32.mrf.mxu0
  %v655 = vadd.f32 0.0, %v654
  %656 = vdwg.mxu0
  %v657 = vadd.f32 %v588, %v637
  %v658 = vadd.f32 %v589, %v640
  %v659 = vadd.f32 %v590, %v643
  %v660 = vadd.f32 %v591, %v646
  %v661 = vadd.f32 %v592, %v649
  %v662 = vadd.f32 %v593, %v652
  %v663 = vadd.f32 %v594, %v655
  %v664 = vld [vmem:[%s6] sm:$0x1]
  %v666 = vperm.slane %v664, 0
  %v668 = vadd.f32 %v657, %v666
  %v669 = vadd.f32 %v658, %v666
  %v670 = vadd.f32 %v659, %v666
  %v671 = vadd.f32 %v660, %v666
  %v672 = vadd.f32 %v661, %v666
  %v673 = vadd.f32 %v662, %v666
  %v674 = vadd.f32 %v663, %v666
  %v675 = vmax.f32 %v668, 0.0
  %v676 = vmax.f32 %v669, 0.0
  %v677 = vmax.f32 %v670, 0.0
  %v678 = vmax.f32 %v671, 0.0
  %v679 = vmax.f32 %v672, 0.0
  %v680 = vmax.f32 %v673, 0.0
  %v681 = vmax.f32 %v674, 0.0
  %682 = vst [vmem:[#allocation3] sm:$0xff] %v675
  %683 = vst [vmem:[#allocation3 + $0x8] sm:$0xff] %v676
  %684 = vst [vmem:[#allocation3 + $0x10] sm:$0xff] %v677
  %685 = vst [vmem:[#allocation3 + $0x18] sm:$0xff] %v678
  %686 = vst [vmem:[#allocation3 + $0x20] sm:$0xff] %v679
  %687 = vst [vmem:[#allocation3 + $0x28] sm:$0xff] %v680
  %688 = vst [vmem:[#allocation3 + $0x30] sm:$0xff] %v681
  %v689 = vld [vmem:[#allocation3] sm:$0xff]
  %v690 = vld [vmem:[#allocation3 + $0x8] sm:$0xff]
  %v691 = vld [vmem:[#allocation3 + $0x10] sm:$0xff]
  %v692 = vld [vmem:[#allocation3 + $0x18] sm:$0xff]
  %v693 = vld [vmem:[#allocation3 + $0x20] sm:$0xff]
  %v694 = vld [vmem:[#allocation3 + $0x28] sm:$0xff]
  %v695 = vld [vmem:[%s7] sm:$0xff]
  %v696 = vld [vmem:[%s7 + $0x8] sm:$0xff]
  %v697 = vld [vmem:[%s7 + $0x10] sm:$0xff]
  %v698 = vld [vmem:[%s7 + $0x18] sm:$0xff]
  %v699 = vld [vmem:[%s7 + $0x20] sm:$0xff]
  %v700 = vld [vmem:[%s7 + $0x28] sm:$0xff]
  %v701 = vld [vmem:[%s7 + $0x30] sm:$0xff]
  %v702 = vld [vmem:[%s7 + $0x38] sm:$0xff]
  %v703 = vld [vmem:[%s7 + $0x40] sm:$0xff]
  %v704 = vld [vmem:[%s7 + $0x48] sm:$0xff]
  %v705 = vld [vmem:[%s7 + $0x50] sm:$0xff]
  %v706 = vld [vmem:[%s7 + $0x58] sm:$0xff]
  %v707 = vld [vmem:[%s7 + $0x60] sm:$0xff]
  %v708 = vld [vmem:[%s7 + $0x68] sm:$0xff]
  %v709 = vld [vmem:[%s7 + $0x70] sm:$0xff]
  %v710 = vld [vmem:[%s7 + $0x78] sm:$0xff]
  %v711 = vld [vmem:[#allocation3 + $0x1] sm:$0xff]
  %v712 = vld [vmem:[#allocation3 + $0x9] sm:$0xff]
  %v713 = vld [vmem:[#allocation3 + $0x11] sm:$0xff]
  %v714 = vld [vmem:[#allocation3 + $0x19] sm:$0xff]
  %v715 = vld [vmem:[#allocation3 + $0x21] sm:$0xff]
  %v716 = vld [vmem:[#allocation3 + $0x29] sm:$0xff]
  %s717 = scalar_lea.vmem %s7, 128
  %v718 = vld [vmem:[%s717] sm:$0xff]
  %v719 = vld [vmem:[%s717 + $0x8] sm:$0xff]
  %v720 = vld [vmem:[%s717 + $0x10] sm:$0xff]
  %v721 = vld [vmem:[%s717 + $0x18] sm:$0xff]
  %v722 = vld [vmem:[%s717 + $0x20] sm:$0xff]
  %v723 = vld [vmem:[%s717 + $0x28] sm:$0xff]
  %v724 = vld [vmem:[%s717 + $0x30] sm:$0xff]
  %v725 = vld [vmem:[%s717 + $0x38] sm:$0xff]
  %v726 = vld [vmem:[%s717 + $0x40] sm:$0xff]
  %v727 = vld [vmem:[%s717 + $0x48] sm:$0xff]
  %v728 = vld [vmem:[%s717 + $0x50] sm:$0xff]
  %v729 = vld [vmem:[%s717 + $0x58] sm:$0xff]
  %v730 = vld [vmem:[%s717 + $0x60] sm:$0xff]
  %v731 = vld [vmem:[%s717 + $0x68] sm:$0xff]
  %v732 = vld [vmem:[%s717 + $0x70] sm:$0xff]
  %v733 = vld [vmem:[%s717 + $0x78] sm:$0xff]
  %734 = vmatpush.msra.mxu0 %v733
  %735 = vmatpush.msra.mxu0 %v732
  %736 = vmatpush.msra.mxu0 %v731
  %737 = vmatpush.msra.mxu0 %v730
  %738 = vmatpush.msra.mxu0 %v729
  %739 = vmatpush.msra.mxu0 %v728
  %740 = vmatpush.msra.mxu0 %v727
  %741 = vmatpush.msra.mxu0 %v726
  %742 = vmatpush.msra.mxu0 %v725
  %743 = vmatpush.msra.mxu0 %v724
  %744 = vmatpush.msra.mxu0 %v723
  %745 = vmatpush.msra.mxu0 %v722
  %746 = vmatpush.msra.mxu0 %v721
  %747 = vmatpush.msra.mxu0 %v720
  %748 = vmatpush.msra.mxu0 %v719
  %749 = vmatpush.msra.mxu0 %v718
  %750 = vmatmul.f32.gmra.mxu0 %v711
  %v751 = vpop.f32.mrf.mxu0
  %v752 = vadd.f32 0.0, %v751
  %753 = vmatmul.f32.gmra.mxu0 %v712
  %v754 = vpop.f32.mrf.mxu0
  %v755 = vadd.f32 0.0, %v754
  %756 = vmatmul.f32.gmra.mxu0 %v713
  %v757 = vpop.f32.mrf.mxu0
  %v758 = vadd.f32 0.0, %v757
  %759 = vmatmul.f32.gmra.mxu0 %v714
  %v760 = vpop.f32.mrf.mxu0
  %v761 = vadd.f32 0.0, %v760
  %762 = vmatmul.f32.gmra.mxu0 %v715
  %v763 = vpop.f32.mrf.mxu0
  %v764 = vadd.f32 0.0, %v763
  %765 = vmatmul.f32.gmra.mxu0 %v716
  %v766 = vpop.f32.mrf.mxu0
  %v767 = vadd.f32 0.0, %v766
  %768 = vdwg.mxu0
  %769 = vmatpush.msra.mxu0 %v710
  %770 = vmatpush.msra.mxu0 %v709
  %771 = vmatpush.msra.mxu0 %v708
  %772 = vmatpush.msra.mxu0 %v707
  %773 = vmatpush.msra.mxu0 %v706
  %774 = vmatpush.msra.mxu0 %v705
  %775 = vmatpush.msra.mxu0 %v704
  %776 = vmatpush.msra.mxu0 %v703
  %777 = vmatpush.msra.mxu0 %v702
  %778 = vmatpush.msra.mxu0 %v701
  %779 = vmatpush.msra.mxu0 %v700
  %780 = vmatpush.msra.mxu0 %v699
  %781 = vmatpush.msra.mxu0 %v698
  %782 = vmatpush.msra.mxu0 %v697
  %783 = vmatpush.msra.mxu0 %v696
  %784 = vmatpush.msra.mxu0 %v695
  %785 = vmatmul.f32.gmra.mxu0 %v689
  %v786 = vpop.f32.mrf.mxu0
  %v787 = vadd.f32 %v752, %v786
  %788 = vmatmul.f32.gmra.mxu0 %v690
  %v789 = vpop.f32.mrf.mxu0
  %v790 = vadd.f32 %v755, %v789
  %791 = vmatmul.f32.gmra.mxu0 %v691
  %v792 = vpop.f32.mrf.mxu0
  %v793 = vadd.f32 %v758, %v792
  %794 = vmatmul.f32.gmra.mxu0 %v692
  %v795 = vpop.f32.mrf.mxu0
  %v796 = vadd.f32 %v761, %v795
  %797 = vmatmul.f32.gmra.mxu0 %v693
  %v798 = vpop.f32.mrf.mxu0
  %v799 = vadd.f32 %v764, %v798
  %800 = vmatmul.f32.gmra.mxu0 %v694
  %v801 = vpop.f32.mrf.mxu0
  %v802 = vadd.f32 %v767, %v801
  %803 = vdwg.mxu0
  %v804 = vld [vmem:[#allocation3 + $0x8] sm:$0xff]
  %v805 = vld [vmem:[#allocation3 + $0x10] sm:$0xff]
  %v806 = vld [vmem:[#allocation3 + $0x18] sm:$0xff]
  %v807 = vld [vmem:[#allocation3 + $0x20] sm:$0xff]
  %v808 = vld [vmem:[#allocation3 + $0x28] sm:$0xff]
  %v809 = vld [vmem:[#allocation3 + $0x30] sm:$0xff]
  %s810 = scalar_lea.vmem %s7, 256
  %v811 = vld [vmem:[%s810] sm:$0xff]
  %v812 = vld [vmem:[%s810 + $0x8] sm:$0xff]
  %v813 = vld [vmem:[%s810 + $0x10] sm:$0xff]
  %v814 = vld [vmem:[%s810 + $0x18] sm:$0xff]
  %v815 = vld [vmem:[%s810 + $0x20] sm:$0xff]
  %v816 = vld [vmem:[%s810 + $0x28] sm:$0xff]
  %v817 = vld [vmem:[%s810 + $0x30] sm:$0xff]
  %v818 = vld [vmem:[%s810 + $0x38] sm:$0xff]
  %v819 = vld [vmem:[%s810 + $0x40] sm:$0xff]
  %v820 = vld [vmem:[%s810 + $0x48] sm:$0xff]
  %v821 = vld [vmem:[%s810 + $0x50] sm:$0xff]
  %v822 = vld [vmem:[%s810 + $0x58] sm:$0xff]
  %v823 = vld [vmem:[%s810 + $0x60] sm:$0xff]
  %v824 = vld [vmem:[%s810 + $0x68] sm:$0xff]
  %v825 = vld [vmem:[%s810 + $0x70] sm:$0xff]
  %v826 = vld [vmem:[%s810 + $0x78] sm:$0xff]
  %827 = vmatpush.msra.mxu0 %v826
  %828 = vmatpush.msra.mxu0 %v825
  %829 = vmatpush.msra.mxu0 %v824
  %830 = vmatpush.msra.mxu0 %v823
  %831 = vmatpush.msra.mxu0 %v822
  %832 = vmatpush.msra.mxu0 %v821
  %833 = vmatpush.msra.mxu0 %v820
  %834 = vmatpush.msra.mxu0 %v819
  %835 = vmatpush.msra.mxu0 %v818
  %836 = vmatpush.msra.mxu0 %v817
  %837 = vmatpush.msra.mxu0 %v816
  %838 = vmatpush.msra.mxu0 %v815
  %839 = vmatpush.msra.mxu0 %v814
  %840 = vmatpush.msra.mxu0 %v813
  %841 = vmatpush.msra.mxu0 %v812
  %842 = vmatpush.msra.mxu0 %v811
  %843 = vmatmul.f32.gmra.mxu0 %v804
  %v844 = vpop.f32.mrf.mxu0
  %v845 = vadd.f32 0.0, %v844
  %846 = vmatmul.f32.gmra.mxu0 %v805
  %v847 = vpop.f32.mrf.mxu0
  %v848 = vadd.f32 0.0, %v847
  %849 = vmatmul.f32.gmra.mxu0 %v806
  %v850 = vpop.f32.mrf.mxu0
  %v851 = vadd.f32 0.0, %v850
  %852 = vmatmul.f32.gmra.mxu0 %v807
  %v853 = vpop.f32.mrf.mxu0
  %v854 = vadd.f32 0.0, %v853
  %855 = vmatmul.f32.gmra.mxu0 %v808
  %v856 = vpop.f32.mrf.mxu0
  %v857 = vadd.f32 0.0, %v856
  %858 = vmatmul.f32.gmra.mxu0 %v809
  %v859 = vpop.f32.mrf.mxu0
  %v860 = vadd.f32 0.0, %v859
  %861 = vdwg.mxu0
  %v862 = vadd.f32 %v787, %v845
  %v863 = vadd.f32 %v790, %v848
  %v864 = vadd.f32 %v793, %v851
  %v865 = vadd.f32 %v796, %v854
  %v866 = vadd.f32 %v799, %v857
  %v867 = vadd.f32 %v802, %v860
  %v868 = vld [vmem:[#allocation3 + $0x9] sm:$0xff]
  %v869 = vld [vmem:[#allocation3 + $0x11] sm:$0xff]
  %v870 = vld [vmem:[#allocation3 + $0x19] sm:$0xff]
  %v871 = vld [vmem:[#allocation3 + $0x21] sm:$0xff]
  %v872 = vld [vmem:[#allocation3 + $0x29] sm:$0xff]
  %v873 = vld [vmem:[#allocation3 + $0x31] sm:$0xff]
  %s874 = scalar_lea.vmem %s7, 384
  %v875 = vld [vmem:[%s874] sm:$0xff]
  %v876 = vld [vmem:[%s874 + $0x8] sm:$0xff]
  %v877 = vld [vmem:[%s874 + $0x10] sm:$0xff]
  %v878 = vld [vmem:[%s874 + $0x18] sm:$0xff]
  %v879 = vld [vmem:[%s874 + $0x20] sm:$0xff]
  %v880 = vld [vmem:[%s874 + $0x28] sm:$0xff]
  %v881 = vld [vmem:[%s874 + $0x30] sm:$0xff]
  %v882 = vld [vmem:[%s874 + $0x38] sm:$0xff]
  %v883 = vld [vmem:[%s874 + $0x40] sm:$0xff]
  %v884 = vld [vmem:[%s874 + $0x48] sm:$0xff]
  %v885 = vld [vmem:[%s874 + $0x50] sm:$0xff]
  %v886 = vld [vmem:[%s874 + $0x58] sm:$0xff]
  %v887 = vld [vmem:[%s874 + $0x60] sm:$0xff]
  %v888 = vld [vmem:[%s874 + $0x68] sm:$0xff]
  %v889 = vld [vmem:[%s874 + $0x70] sm:$0xff]
  %v890 = vld [vmem:[%s874 + $0x78] sm:$0xff]
  %891 = vmatpush.msra.mxu0 %v890
  %892 = vmatpush.msra.mxu0 %v889
  %893 = vmatpush.msra.mxu0 %v888
  %894 = vmatpush.msra.mxu0 %v887
  %895 = vmatpush.msra.mxu0 %v886
  %896 = vmatpush.msra.mxu0 %v885
  %897 = vmatpush.msra.mxu0 %v884
  %898 = vmatpush.msra.mxu0 %v883
  %899 = vmatpush.msra.mxu0 %v882
  %900 = vmatpush.msra.mxu0 %v881
  %901 = vmatpush.msra.mxu0 %v880
  %902 = vmatpush.msra.mxu0 %v879
  %903 = vmatpush.msra.mxu0 %v878
  %904 = vmatpush.msra.mxu0 %v877
  %905 = vmatpush.msra.mxu0 %v876
  %906 = vmatpush.msra.mxu0 %v875
  %907 = vmatmul.f32.gmra.mxu0 %v868
  %v908 = vpop.f32.mrf.mxu0
  %v909 = vadd.f32 0.0, %v908
  %910 = vmatmul.f32.gmra.mxu0 %v869
  %v911 = vpop.f32.mrf.mxu0
  %v912 = vadd.f32 0.0, %v911
  %913 = vmatmul.f32.gmra.mxu0 %v870
  %v914 = vpop.f32.mrf.mxu0
  %v915 = vadd.f32 0.0, %v914
  %916 = vmatmul.f32.gmra.mxu0 %v871
  %v917 = vpop.f32.mrf.mxu0
  %v918 = vadd.f32 0.0, %v917
  %919 = vmatmul.f32.gmra.mxu0 %v872
  %v920 = vpop.f32.mrf.mxu0
  %v921 = vadd.f32 0.0, %v920
  %922 = vmatmul.f32.gmra.mxu0 %v873
  %v923 = vpop.f32.mrf.mxu0
  %v924 = vadd.f32 0.0, %v923
  %925 = vdwg.mxu0
  %v926 = vadd.f32 %v862, %v909
  %v927 = vadd.f32 %v863, %v912
  %v928 = vadd.f32 %v864, %v915
  %v929 = vadd.f32 %v865, %v918
  %v930 = vadd.f32 %v866, %v921
  %v931 = vadd.f32 %v867, %v924
  %v932 = vld [vmem:[%s8] sm:$0x1]
  %v934 = vperm.slane %v932, 0
  %v936 = vadd.f32 %v926, %v934
  %v937 = vadd.f32 %v927, %v934
  %v938 = vadd.f32 %v928, %v934
  %v939 = vadd.f32 %v929, %v934
  %v940 = vadd.f32 %v930, %v934
  %v941 = vadd.f32 %v931, %v934
  %942 = vst [vmem:[%s9] sm:$0xff] %v936
  %943 = vst [vmem:[%s9 + $0x8] sm:$0xff] %v937
  %944 = vst [vmem:[%s9 + $0x10] sm:$0xff] %v938
  %945 = vst [vmem:[%s9 + $0x18] sm:$0xff] %v939
  %946 = vst [vmem:[%s9 + $0x20] sm:$0xff] %v940
  %947 = vst [vmem:[%s9 + $0x28] sm:$0xff] %v941
  %s948 = scalar_lea.vmem %s0, 64
  %v949 = vld [vmem:[%s948] sm:$0xff]
  %v950 = vld [vmem:[%s948 + $0x8] sm:$0xff]
  %v951 = vld [vmem:[%s948 + $0x10] sm:$0xff]
  %v952 = vld [vmem:[%s948 + $0x18] sm:$0xff]
  %v953 = vld [vmem:[%s948 + $0x20] sm:$0xff]
  %v954 = vld [vmem:[%s948 + $0x28] sm:$0xff]
  %v955 = vld [vmem:[%s948 + $0x30] sm:$0xff]
  %v956 = vld [vmem:[%s948 + $0x38] sm:$0xff]
  %v957 = vld [vmem:[%s2] sm:$0xff]
  %v958 = vld [vmem:[%s2 + $0x8] sm:$0xff]
  %v959 = vld [vmem:[%s2 + $0x10] sm:$0xff]
  %v960 = vld [vmem:[%s2 + $0x18] sm:$0xff]
  %v961 = vld [vmem:[%s2 + $0x20] sm:$0xff]
  %v962 = vld [vmem:[%s2 + $0x28] sm:$0xff]
  %v963 = vld [vmem:[%s2 + $0x30] sm:$0xff]
  %v964 = vld [vmem:[%s2 + $0x38] sm:$0xff]
  %v965 = vld [vmem:[%s3] sm:$0x1]
  %v967 = vperm.slane %v965, 0
  %v970 = vsel %vm54, %v949, 0
  %v973 = vsel %vm54, %v950, 0
  %v976 = vsel %vm54, %v951, 0
  %v979 = vsel %vm54, %v952, 0
  %v982 = vsel %vm54, %v953, 0
  %v985 = vsel %vm54, %v954, 0
  %v988 = vsel %vm54, %v955, 0
  %v991 = vsel %vm54, %v956, 0
  %993 = vmatpush.msra.mxu0 0.0
  %994 = vmatpush.msra.mxu0 0.0
  %995 = vmatpush.msra.mxu0 0.0
  %996 = vmatpush.msra.mxu0 0.0
  %997 = vmatpush.msra.mxu0 0.0
  %998 = vmatpush.msra.mxu0 0.0
  %999 = vmatpush.msra.mxu0 0.0
  %1000 = vmatpush.msra.mxu0 0.0
  %1001 = vmatpush.msra.mxu0 %v964
  %1002 = vmatpush.msra.mxu0 %v963
  %1003 = vmatpush.msra.mxu0 %v962
  %1004 = vmatpush.msra.mxu0 %v961
  %1005 = vmatpush.msra.mxu0 %v960
  %1006 = vmatpush.msra.mxu0 %v959
  %1007 = vmatpush.msra.mxu0 %v958
  %1008 = vmatpush.msra.mxu0 %v957
  %1009 = vmatmul.f32.gmra.mxu0 %v970
  %v1010 = vpop.f32.mrf.mxu0
  %v1011 = vadd.f32 %v967, %v1010
  %1012 = vmatmul.f32.gmra.mxu0 %v973
  %v1013 = vpop.f32.mrf.mxu0
  %v1014 = vadd.f32 %v967, %v1013
  %1015 = vmatmul.f32.gmra.mxu0 %v976
  %v1016 = vpop.f32.mrf.mxu0
  %v1017 = vadd.f32 %v967, %v1016
  %1018 = vmatmul.f32.gmra.mxu0 %v979
  %v1019 = vpop.f32.mrf.mxu0
  %v1020 = vadd.f32 %v967, %v1019
  %1021 = vmatmul.f32.gmra.mxu0 %v982
  %v1022 = vpop.f32.mrf.mxu0
  %v1023 = vadd.f32 %v967, %v1022
  %1024 = vmatmul.f32.gmra.mxu0 %v985
  %v1025 = vpop.f32.mrf.mxu0
  %v1026 = vadd.f32 %v967, %v1025
  %1027 = vmatmul.f32.gmra.mxu0 %v988
  %v1028 = vpop.f32.mrf.mxu0
  %v1029 = vadd.f32 %v967, %v1028
  %1030 = vmatmul.f32.gmra.mxu0 %v991
  %v1031 = vpop.f32.mrf.mxu0
  %v1032 = vadd.f32 %v967, %v1031
  %1033 = vdwg.mxu0
  %1034 = vst [vmem:[#allocation2] sm:$0xff] %v1011
  %1035 = vst [vmem:[#allocation2 + $0x8] sm:$0xff] %v1014
  %1036 = vst [vmem:[#allocation2 + $0x10] sm:$0xff] %v1017
  %1037 = vst [vmem:[#allocation2 + $0x18] sm:$0xff] %v1020
  %1038 = vst [vmem:[#allocation2 + $0x20] sm:$0xff] %v1023
  %1039 = vst [vmem:[#allocation2 + $0x28] sm:$0xff] %v1026
  %1040 = vst [vmem:[#allocation2 + $0x30] sm:$0xff] %v1029
  %1041 = vst [vmem:[#allocation2 + $0x38] sm:$0xff] %v1032
  %v1042 = vld [vmem:[#allocation2] sm:$0xff]
  %v1043 = vld [vmem:[#allocation2 + $0x8] sm:$0xff]
  %v1044 = vld [vmem:[#allocation2 + $0x10] sm:$0xff]
  %v1045 = vld [vmem:[#allocation2 + $0x18] sm:$0xff]
  %v1046 = vld [vmem:[#allocation2 + $0x20] sm:$0xff]
  %v1047 = vld [vmem:[#allocation2 + $0x28] sm:$0xff]
  %v1048 = vld [vmem:[#allocation2 + $0x30] sm:$0xff]
  %v1049 = vld [vmem:[%s4] sm:$0xff]
  %v1050 = vld [vmem:[%s4 + $0x8] sm:$0xff]
  %v1051 = vld [vmem:[%s4 + $0x10] sm:$0xff]
  %v1052 = vld [vmem:[%s4 + $0x18] sm:$0xff]
  %v1053 = vld [vmem:[%s4 + $0x20] sm:$0xff]
  %v1054 = vld [vmem:[%s4 + $0x28] sm:$0xff]
  %v1055 = vld [vmem:[%s4 + $0x30] sm:$0xff]
  %v1056 = vld [vmem:[%s4 + $0x38] sm:$0xff]
  %v1057 = vld [vmem:[%s4 + $0x40] sm:$0xff]
  %v1058 = vld [vmem:[%s4 + $0x48] sm:$0xff]
  %v1059 = vld [vmem:[%s4 + $0x50] sm:$0xff]
  %v1060 = vld [vmem:[%s4 + $0x58] sm:$0xff]
  %v1061 = vld [vmem:[%s4 + $0x60] sm:$0xff]
  %v1062 = vld [vmem:[%s4 + $0x68] sm:$0xff]
  %v1063 = vld [vmem:[%s4 + $0x70] sm:$0xff]
  %v1064 = vld [vmem:[%s4 + $0x78] sm:$0xff]
  %s1065 = scalar_lea.vmem %s1, 72
  %v1066 = vld [vmem:[%s1065] sm:$0xff]
  %v1067 = vld [vmem:[%s1065 + $0x8] sm:$0xff]
  %v1068 = vld [vmem:[%s1065 + $0x10] sm:$0xff]
  %v1069 = vld [vmem:[%s1065 + $0x18] sm:$0xff]
  %v1070 = vld [vmem:[%s1065 + $0x20] sm:$0xff]
  %v1071 = vld [vmem:[%s1065 + $0x28] sm:$0xff]
  %v1072 = vld [vmem:[%s1065 + $0x30] sm:$0xff]
  %v1073 = vld [vmem:[%s5] sm:$0xff]
  %v1074 = vld [vmem:[%s5 + $0x8] sm:$0xff]
  %v1075 = vld [vmem:[%s5 + $0x10] sm:$0xff]
  %v1076 = vld [vmem:[%s5 + $0x18] sm:$0xff]
  %v1077 = vld [vmem:[%s5 + $0x20] sm:$0xff]
  %v1078 = vld [vmem:[%s5 + $0x28] sm:$0xff]
  %v1079 = vld [vmem:[%s5 + $0x30] sm:$0xff]
  %v1080 = vld [vmem:[%s5 + $0x38] sm:$0xff]
  %v1081 = vld [vmem:[%s5 + $0x40] sm:$0xff]
  %v1082 = vld [vmem:[%s5 + $0x48] sm:$0xff]
  %v1083 = vld [vmem:[%s5 + $0x50] sm:$0xff]
  %v1084 = vld [vmem:[%s5 + $0x58] sm:$0xff]
  %v1085 = vld [vmem:[%s5 + $0x60] sm:$0xff]
  %v1086 = vld [vmem:[%s5 + $0x68] sm:$0xff]
  %v1087 = vld [vmem:[%s5 + $0x70] sm:$0xff]
  %v1088 = vld [vmem:[%s5 + $0x78] sm:$0xff]
  %1089 = vmatpush.msra.mxu0 %v1088
  %1090 = vmatpush.msra.mxu0 %v1087
  %1091 = vmatpush.msra.mxu0 %v1086
  %1092 = vmatpush.msra.mxu0 %v1085
  %1093 = vmatpush.msra.mxu0 %v1084
  %1094 = vmatpush.msra.mxu0 %v1083
  %1095 = vmatpush.msra.mxu0 %v1082
  %1096 = vmatpush.msra.mxu0 %v1081
  %1097 = vmatpush.msra.mxu0 %v1080
  %1098 = vmatpush.msra.mxu0 %v1079
  %1099 = vmatpush.msra.mxu0 %v1078
  %1100 = vmatpush.msra.mxu0 %v1077
  %1101 = vmatpush.msra.mxu0 %v1076
  %1102 = vmatpush.msra.mxu0 %v1075
  %1103 = vmatpush.msra.mxu0 %v1074
  %1104 = vmatpush.msra.mxu0 %v1073
  %1105 = vmatmul.f32.gmra.mxu0 %v1066
  %v1106 = vpop.f32.mrf.mxu0
  %v1107 = vadd.f32 0.0, %v1106
  %1108 = vmatmul.f32.gmra.mxu0 %v1067
  %v1109 = vpop.f32.mrf.mxu0
  %v1110 = vadd.f32 0.0, %v1109
  %1111 = vmatmul.f32.gmra.mxu0 %v1068
  %v1112 = vpop.f32.mrf.mxu0
  %v1113 = vadd.f32 0.0, %v1112
  %1114 = vmatmul.f32.gmra.mxu0 %v1069
  %v1115 = vpop.f32.mrf.mxu0
  %v1116 = vadd.f32 0.0, %v1115
  %1117 = vmatmul.f32.gmra.mxu0 %v1070
  %v1118 = vpop.f32.mrf.mxu0
  %v1119 = vadd.f32 0.0, %v1118
  %1120 = vmatmul.f32.gmra.mxu0 %v1071
  %v1121 = vpop.f32.mrf.mxu0
  %v1122 = vadd.f32 0.0, %v1121
  %1123 = vmatmul.f32.gmra.mxu0 %v1072
  %v1124 = vpop.f32.mrf.mxu0
  %v1125 = vadd.f32 0.0, %v1124
  %1126 = vdwg.mxu0
  %1127 = vmatpush.msra.mxu0 %v1064
  %1128 = vmatpush.msra.mxu0 %v1063
  %1129 = vmatpush.msra.mxu0 %v1062
  %1130 = vmatpush.msra.mxu0 %v1061
  %1131 = vmatpush.msra.mxu0 %v1060
  %1132 = vmatpush.msra.mxu0 %v1059
  %1133 = vmatpush.msra.mxu0 %v1058
  %1134 = vmatpush.msra.mxu0 %v1057
  %1135 = vmatpush.msra.mxu0 %v1056
  %1136 = vmatpush.msra.mxu0 %v1055
  %1137 = vmatpush.msra.mxu0 %v1054
  %1138 = vmatpush.msra.mxu0 %v1053
  %1139 = vmatpush.msra.mxu0 %v1052
  %1140 = vmatpush.msra.mxu0 %v1051
  %1141 = vmatpush.msra.mxu0 %v1050
  %1142 = vmatpush.msra.mxu0 %v1049
  %1143 = vmatmul.f32.gmra.mxu0 %v1042
  %v1144 = vpop.f32.mrf.mxu0
  %v1145 = vadd.f32 %v1107, %v1144
  %1146 = vmatmul.f32.gmra.mxu0 %v1043
  %v1147 = vpop.f32.mrf.mxu0
  %v1148 = vadd.f32 %v1110, %v1147
  %1149 = vmatmul.f32.gmra.mxu0 %v1044
  %v1150 = vpop.f32.mrf.mxu0
  %v1151 = vadd.f32 %v1113, %v1150
  %1152 = vmatmul.f32.gmra.mxu0 %v1045
  %v1153 = vpop.f32.mrf.mxu0
  %v1154 = vadd.f32 %v1116, %v1153
  %1155 = vmatmul.f32.gmra.mxu0 %v1046
  %v1156 = vpop.f32.mrf.mxu0
  %v1157 = vadd.f32 %v1119, %v1156
  %1158 = vmatmul.f32.gmra.mxu0 %v1047
  %v1159 = vpop.f32.mrf.mxu0
  %v1160 = vadd.f32 %v1122, %v1159
  %1161 = vmatmul.f32.gmra.mxu0 %v1048
  %v1162 = vpop.f32.mrf.mxu0
  %v1163 = vadd.f32 %v1125, %v1162
  %1164 = vdwg.mxu0
  %v1165 = vld [vmem:[#allocation2 + $0x1] sm:$0xff]
  %v1166 = vld [vmem:[#allocation2 + $0x9] sm:$0xff]
  %v1167 = vld [vmem:[#allocation2 + $0x11] sm:$0xff]
  %v1168 = vld [vmem:[#allocation2 + $0x19] sm:$0xff]
  %v1169 = vld [vmem:[#allocation2 + $0x21] sm:$0xff]
  %v1170 = vld [vmem:[#allocation2 + $0x29] sm:$0xff]
  %v1171 = vld [vmem:[#allocation2 + $0x31] sm:$0xff]
  %v1172 = vld [vmem:[%s257] sm:$0xff]
  %v1173 = vld [vmem:[%s257 + $0x8] sm:$0xff]
  %v1174 = vld [vmem:[%s257 + $0x10] sm:$0xff]
  %v1175 = vld [vmem:[%s257 + $0x18] sm:$0xff]
  %v1176 = vld [vmem:[%s257 + $0x20] sm:$0xff]
  %v1177 = vld [vmem:[%s257 + $0x28] sm:$0xff]
  %v1178 = vld [vmem:[%s257 + $0x30] sm:$0xff]
  %v1179 = vld [vmem:[%s257 + $0x38] sm:$0xff]
  %v1180 = vld [vmem:[%s257 + $0x40] sm:$0xff]
  %v1181 = vld [vmem:[%s257 + $0x48] sm:$0xff]
  %v1182 = vld [vmem:[%s257 + $0x50] sm:$0xff]
  %v1183 = vld [vmem:[%s257 + $0x58] sm:$0xff]
  %v1184 = vld [vmem:[%s257 + $0x60] sm:$0xff]
  %v1185 = vld [vmem:[%s257 + $0x68] sm:$0xff]
  %v1186 = vld [vmem:[%s257 + $0x70] sm:$0xff]
  %v1187 = vld [vmem:[%s257 + $0x78] sm:$0xff]
  %1188 = vmatpush.msra.mxu0 %v1187
  %1189 = vmatpush.msra.mxu0 %v1186
  %1190 = vmatpush.msra.mxu0 %v1185
  %1191 = vmatpush.msra.mxu0 %v1184
  %1192 = vmatpush.msra.mxu0 %v1183
  %1193 = vmatpush.msra.mxu0 %v1182
  %1194 = vmatpush.msra.mxu0 %v1181
  %1195 = vmatpush.msra.mxu0 %v1180
  %1196 = vmatpush.msra.mxu0 %v1179
  %1197 = vmatpush.msra.mxu0 %v1178
  %1198 = vmatpush.msra.mxu0 %v1177
  %1199 = vmatpush.msra.mxu0 %v1176
  %1200 = vmatpush.msra.mxu0 %v1175
  %1201 = vmatpush.msra.mxu0 %v1174
  %1202 = vmatpush.msra.mxu0 %v1173
  %1203 = vmatpush.msra.mxu0 %v1172
  %1204 = vmatmul.f32.gmra.mxu0 %v1165
  %v1205 = vpop.f32.mrf.mxu0
  %v1206 = vadd.f32 0.0, %v1205
  %1207 = vmatmul.f32.gmra.mxu0 %v1166
  %v1208 = vpop.f32.mrf.mxu0
  %v1209 = vadd.f32 0.0, %v1208
  %1210 = vmatmul.f32.gmra.mxu0 %v1167
  %v1211 = vpop.f32.mrf.mxu0
  %v1212 = vadd.f32 0.0, %v1211
  %1213 = vmatmul.f32.gmra.mxu0 %v1168
  %v1214 = vpop.f32.mrf.mxu0
  %v1215 = vadd.f32 0.0, %v1214
  %1216 = vmatmul.f32.gmra.mxu0 %v1169
  %v1217 = vpop.f32.mrf.mxu0
  %v1218 = vadd.f32 0.0, %v1217
  %1219 = vmatmul.f32.gmra.mxu0 %v1170
  %v1220 = vpop.f32.mrf.mxu0
  %v1221 = vadd.f32 0.0, %v1220
  %1222 = vmatmul.f32.gmra.mxu0 %v1171
  %v1223 = vpop.f32.mrf.mxu0
  %v1224 = vadd.f32 0.0, %v1223
  %1225 = vdwg.mxu0
  %v1226 = vadd.f32 %v1145, %v1206
  %v1227 = vadd.f32 %v1148, %v1209
  %v1228 = vadd.f32 %v1151, %v1212
  %v1229 = vadd.f32 %v1154, %v1215
  %v1230 = vadd.f32 %v1157, %v1218
  %v1231 = vadd.f32 %v1160, %v1221
  %v1232 = vadd.f32 %v1163, %v1224
  %v1233 = vld [vmem:[%s1065 + $0x1] sm:$0xff]
  %v1234 = vld [vmem:[%s1065 + $0x9] sm:$0xff]
  %v1235 = vld [vmem:[%s1065 + $0x11] sm:$0xff]
  %v1236 = vld [vmem:[%s1065 + $0x19] sm:$0xff]
  %v1237 = vld [vmem:[%s1065 + $0x21] sm:$0xff]
  %v1238 = vld [vmem:[%s1065 + $0x29] sm:$0xff]
  %v1239 = vld [vmem:[%s1065 + $0x31] sm:$0xff]
  %v1240 = vld [vmem:[%s326] sm:$0xff]
  %v1241 = vld [vmem:[%s326 + $0x8] sm:$0xff]
  %v1242 = vld [vmem:[%s326 + $0x10] sm:$0xff]
  %v1243 = vld [vmem:[%s326 + $0x18] sm:$0xff]
  %v1244 = vld [vmem:[%s326 + $0x20] sm:$0xff]
  %v1245 = vld [vmem:[%s326 + $0x28] sm:$0xff]
  %v1246 = vld [vmem:[%s326 + $0x30] sm:$0xff]
  %v1247 = vld [vmem:[%s326 + $0x38] sm:$0xff]
  %v1248 = vld [vmem:[%s326 + $0x40] sm:$0xff]
  %v1249 = vld [vmem:[%s326 + $0x48] sm:$0xff]
  %v1250 = vld [vmem:[%s326 + $0x50] sm:$0xff]
  %v1251 = vld [vmem:[%s326 + $0x58] sm:$0xff]
  %v1252 = vld [vmem:[%s326 + $0x60] sm:$0xff]
  %v1253 = vld [vmem:[%s326 + $0x68] sm:$0xff]
  %v1254 = vld [vmem:[%s326 + $0x70] sm:$0xff]
  %v1255 = vld [vmem:[%s326 + $0x78] sm:$0xff]
  %1256 = vmatpush.msra.mxu0 %v1255
  %1257 = vmatpush.msra.mxu0 %v1254
  %1258 = vmatpush.msra.mxu0 %v1253
  %1259 = vmatpush.msra.mxu0 %v1252
  %1260 = vmatpush.msra.mxu0 %v1251
  %1261 = vmatpush.msra.mxu0 %v1250
  %1262 = vmatpush.msra.mxu0 %v1249
  %1263 = vmatpush.msra.mxu0 %v1248
  %1264 = vmatpush.msra.mxu0 %v1247
  %1265 = vmatpush.msra.mxu0 %v1246
  %1266 = vmatpush.msra.mxu0 %v1245
  %1267 = vmatpush.msra.mxu0 %v1244
  %1268 = vmatpush.msra.mxu0 %v1243
  %1269 = vmatpush.msra.mxu0 %v1242
  %1270 = vmatpush.msra.mxu0 %v1241
  %1271 = vmatpush.msra.mxu0 %v1240
  %1272 = vmatmul.f32.gmra.mxu0 %v1233
  %v1273 = vpop.f32.mrf.mxu0
  %v1274 = vadd.f32 0.0, %v1273
  %1275 = vmatmul.f32.gmra.mxu0 %v1234
  %v1276 = vpop.f32.mrf.mxu0
  %v1277 = vadd.f32 0.0, %v1276
  %1278 = vmatmul.f32.gmra.mxu0 %v1235
  %v1279 = vpop.f32.mrf.mxu0
  %v1280 = vadd.f32 0.0, %v1279
  %1281 = vmatmul.f32.gmra.mxu0 %v1236
  %v1282 = vpop.f32.mrf.mxu0
  %v1283 = vadd.f32 0.0, %v1282
  %1284 = vmatmul.f32.gmra.mxu0 %v1237
  %v1285 = vpop.f32.mrf.mxu0
  %v1286 = vadd.f32 0.0, %v1285
  %1287 = vmatmul.f32.gmra.mxu0 %v1238
  %v1288 = vpop.f32.mrf.mxu0
  %v1289 = vadd.f32 0.0, %v1288
  %1290 = vmatmul.f32.gmra.mxu0 %v1239
  %v1291 = vpop.f32.mrf.mxu0
  %v1292 = vadd.f32 0.0, %v1291
  %1293 = vdwg.mxu0
  %v1294 = vadd.f32 %v1226, %v1274
  %v1295 = vadd.f32 %v1227, %v1277
  %v1296 = vadd.f32 %v1228, %v1280
  %v1297 = vadd.f32 %v1229, %v1283
  %v1298 = vadd.f32 %v1230, %v1286
  %v1299 = vadd.f32 %v1231, %v1289
  %v1300 = vadd.f32 %v1232, %v1292
  %v1301 = vld [vmem:[#allocation2 + $0x8] sm:$0xff]
  %v1302 = vld [vmem:[#allocation2 + $0x10] sm:$0xff]
  %v1303 = vld [vmem:[#allocation2 + $0x18] sm:$0xff]
  %v1304 = vld [vmem:[#allocation2 + $0x20] sm:$0xff]
  %v1305 = vld [vmem:[#allocation2 + $0x28] sm:$0xff]
  %v1306 = vld [vmem:[#allocation2 + $0x30] sm:$0xff]
  %v1307 = vld [vmem:[#allocation2 + $0x38] sm:$0xff]
  %v1308 = vld [vmem:[%s395] sm:$0xff]
  %v1309 = vld [vmem:[%s395 + $0x8] sm:$0xff]
  %v1310 = vld [vmem:[%s395 + $0x10] sm:$0xff]
  %v1311 = vld [vmem:[%s395 + $0x18] sm:$0xff]
  %v1312 = vld [vmem:[%s395 + $0x20] sm:$0xff]
  %v1313 = vld [vmem:[%s395 + $0x28] sm:$0xff]
  %v1314 = vld [vmem:[%s395 + $0x30] sm:$0xff]
  %v1315 = vld [vmem:[%s395 + $0x38] sm:$0xff]
  %v1316 = vld [vmem:[%s395 + $0x40] sm:$0xff]
  %v1317 = vld [vmem:[%s395 + $0x48] sm:$0xff]
  %v1318 = vld [vmem:[%s395 + $0x50] sm:$0xff]
  %v1319 = vld [vmem:[%s395 + $0x58] sm:$0xff]
  %v1320 = vld [vmem:[%s395 + $0x60] sm:$0xff]
  %v1321 = vld [vmem:[%s395 + $0x68] sm:$0xff]
  %v1322 = vld [vmem:[%s395 + $0x70] sm:$0xff]
  %v1323 = vld [vmem:[%s395 + $0x78] sm:$0xff]
  %1324 = vmatpush.msra.mxu0 %v1323
  %1325 = vmatpush.msra.mxu0 %v1322
  %1326 = vmatpush.msra.mxu0 %v1321
  %1327 = vmatpush.msra.mxu0 %v1320
  %1328 = vmatpush.msra.mxu0 %v1319
  %1329 = vmatpush.msra.mxu0 %v1318
  %1330 = vmatpush.msra.mxu0 %v1317
  %1331 = vmatpush.msra.mxu0 %v1316
  %1332 = vmatpush.msra.mxu0 %v1315
  %1333 = vmatpush.msra.mxu0 %v1314
  %1334 = vmatpush.msra.mxu0 %v1313
  %1335 = vmatpush.msra.mxu0 %v1312
  %1336 = vmatpush.msra.mxu0 %v1311
  %1337 = vmatpush.msra.mxu0 %v1310
  %1338 = vmatpush.msra.mxu0 %v1309
  %1339 = vmatpush.msra.mxu0 %v1308
  %1340 = vmatmul.f32.gmra.mxu0 %v1301
  %v1341 = vpop.f32.mrf.mxu0
  %v1342 = vadd.f32 0.0, %v1341
  %1343 = vmatmul.f32.gmra.mxu0 %v1302
  %v1344 = vpop.f32.mrf.mxu0
  %v1345 = vadd.f32 0.0, %v1344
  %1346 = vmatmul.f32.gmra.mxu0 %v1303
  %v1347 = vpop.f32.mrf.mxu0
  %v1348 = vadd.f32 0.0, %v1347
  %1349 = vmatmul.f32.gmra.mxu0 %v1304
  %v1350 = vpop.f32.mrf.mxu0
  %v1351 = vadd.f32 0.0, %v1350
  %1352 = vmatmul.f32.gmra.mxu0 %v1305
  %v1353 = vpop.f32.mrf.mxu0
  %v1354 = vadd.f32 0.0, %v1353
  %1355 = vmatmul.f32.gmra.mxu0 %v1306
  %v1356 = vpop.f32.mrf.mxu0
  %v1357 = vadd.f32 0.0, %v1356
  %1358 = vmatmul.f32.gmra.mxu0 %v1307
  %v1359 = vpop.f32.mrf.mxu0
  %v1360 = vadd.f32 0.0, %v1359
  %1361 = vdwg.mxu0
  %v1362 = vadd.f32 %v1294, %v1342
  %v1363 = vadd.f32 %v1295, %v1345
  %v1364 = vadd.f32 %v1296, %v1348
  %v1365 = vadd.f32 %v1297, %v1351
  %v1366 = vadd.f32 %v1298, %v1354
  %v1367 = vadd.f32 %v1299, %v1357
  %v1368 = vadd.f32 %v1300, %v1360
  %v1369 = vld [vmem:[%s1065 + $0x8] sm:$0xff]
  %v1370 = vld [vmem:[%s1065 + $0x10] sm:$0xff]
  %v1371 = vld [vmem:[%s1065 + $0x18] sm:$0xff]
  %v1372 = vld [vmem:[%s1065 + $0x20] sm:$0xff]
  %v1373 = vld [vmem:[%s1065 + $0x28] sm:$0xff]
  %v1374 = vld [vmem:[%s1065 + $0x30] sm:$0xff]
  %v1375 = vld [vmem:[%s1065 + $0x38] sm:$0xff]
  %v1376 = vld [vmem:[%s464] sm:$0xff]
  %v1377 = vld [vmem:[%s464 + $0x8] sm:$0xff]
  %v1378 = vld [vmem:[%s464 + $0x10] sm:$0xff]
  %v1379 = vld [vmem:[%s464 + $0x18] sm:$0xff]
  %v1380 = vld [vmem:[%s464 + $0x20] sm:$0xff]
  %v1381 = vld [vmem:[%s464 + $0x28] sm:$0xff]
  %v1382 = vld [vmem:[%s464 + $0x30] sm:$0xff]
  %v1383 = vld [vmem:[%s464 + $0x38] sm:$0xff]
  %v1384 = vld [vmem:[%s464 + $0x40] sm:$0xff]
  %v1385 = vld [vmem:[%s464 + $0x48] sm:$0xff]
  %v1386 = vld [vmem:[%s464 + $0x50] sm:$0xff]
  %v1387 = vld [vmem:[%s464 + $0x58] sm:$0xff]
  %v1388 = vld [vmem:[%s464 + $0x60] sm:$0xff]
  %v1389 = vld [vmem:[%s464 + $0x68] sm:$0xff]
  %v1390 = vld [vmem:[%s464 + $0x70] sm:$0xff]
  %v1391 = vld [vmem:[%s464 + $0x78] sm:$0xff]
  %1392 = vmatpush.msra.mxu0 %v1391
  %1393 = vmatpush.msra.mxu0 %v1390
  %1394 = vmatpush.msra.mxu0 %v1389
  %1395 = vmatpush.msra.mxu0 %v1388
  %1396 = vmatpush.msra.mxu0 %v1387
  %1397 = vmatpush.msra.mxu0 %v1386
  %1398 = vmatpush.msra.mxu0 %v1385
  %1399 = vmatpush.msra.mxu0 %v1384
  %1400 = vmatpush.msra.mxu0 %v1383
  %1401 = vmatpush.msra.mxu0 %v1382
  %1402 = vmatpush.msra.mxu0 %v1381
  %1403 = vmatpush.msra.mxu0 %v1380
  %1404 = vmatpush.msra.mxu0 %v1379
  %1405 = vmatpush.msra.mxu0 %v1378
  %1406 = vmatpush.msra.mxu0 %v1377
  %1407 = vmatpush.msra.mxu0 %v1376
  %1408 = vmatmul.f32.gmra.mxu0 %v1369
  %v1409 = vpop.f32.mrf.mxu0
  %v1410 = vadd.f32 0.0, %v1409
  %1411 = vmatmul.f32.gmra.mxu0 %v1370
  %v1412 = vpop.f32.mrf.mxu0
  %v1413 = vadd.f32 0.0, %v1412
  %1414 = vmatmul.f32.gmra.mxu0 %v1371
  %v1415 = vpop.f32.mrf.mxu0
  %v1416 = vadd.f32 0.0, %v1415
  %1417 = vmatmul.f32.gmra.mxu0 %v1372
  %v1418 = vpop.f32.mrf.mxu0
  %v1419 = vadd.f32 0.0, %v1418
  %1420 = vmatmul.f32.gmra.mxu0 %v1373
  %v1421 = vpop.f32.mrf.mxu0
  %v1422 = vadd.f32 0.0, %v1421
  %1423 = vmatmul.f32.gmra.mxu0 %v1374
  %v1424 = vpop.f32.mrf.mxu0
  %v1425 = vadd.f32 0.0, %v1424
  %1426 = vmatmul.f32.gmra.mxu0 %v1375
  %v1427 = vpop.f32.mrf.mxu0
  %v1428 = vadd.f32 0.0, %v1427
  %1429 = vdwg.mxu0
  %v1430 = vadd.f32 %v1362, %v1410
  %v1431 = vadd.f32 %v1363, %v1413
  %v1432 = vadd.f32 %v1364, %v1416
  %v1433 = vadd.f32 %v1365, %v1419
  %v1434 = vadd.f32 %v1366, %v1422
  %v1435 = vadd.f32 %v1367, %v1425
  %v1436 = vadd.f32 %v1368, %v1428
  %v1437 = vld [vmem:[#allocation2 + $0x9] sm:$0xff]
  %v1438 = vld [vmem:[#allocation2 + $0x11] sm:$0xff]
  %v1439 = vld [vmem:[#allocation2 + $0x19] sm:$0xff]
  %v1440 = vld [vmem:[#allocation2 + $0x21] sm:$0xff]
  %v1441 = vld [vmem:[#allocation2 + $0x29] sm:$0xff]
  %v1442 = vld [vmem:[#allocation2 + $0x31] sm:$0xff]
  %v1443 = vld [vmem:[#allocation2 + $0x39] sm:$0xff]
  %v1444 = vld [vmem:[%s533] sm:$0xff]
  %v1445 = vld [vmem:[%s533 + $0x8] sm:$0xff]
  %v1446 = vld [vmem:[%s533 + $0x10] sm:$0xff]
  %v1447 = vld [vmem:[%s533 + $0x18] sm:$0xff]
  %v1448 = vld [vmem:[%s533 + $0x20] sm:$0xff]
  %v1449 = vld [vmem:[%s533 + $0x28] sm:$0xff]
  %v1450 = vld [vmem:[%s533 + $0x30] sm:$0xff]
  %v1451 = vld [vmem:[%s533 + $0x38] sm:$0xff]
  %v1452 = vld [vmem:[%s533 + $0x40] sm:$0xff]
  %v1453 = vld [vmem:[%s533 + $0x48] sm:$0xff]
  %v1454 = vld [vmem:[%s533 + $0x50] sm:$0xff]
  %v1455 = vld [vmem:[%s533 + $0x58] sm:$0xff]
  %v1456 = vld [vmem:[%s533 + $0x60] sm:$0xff]
  %v1457 = vld [vmem:[%s533 + $0x68] sm:$0xff]
  %v1458 = vld [vmem:[%s533 + $0x70] sm:$0xff]
  %v1459 = vld [vmem:[%s533 + $0x78] sm:$0xff]
  %1460 = vmatpush.msra.mxu0 %v1459
  %1461 = vmatpush.msra.mxu0 %v1458
  %1462 = vmatpush.msra.mxu0 %v1457
  %1463 = vmatpush.msra.mxu0 %v1456
  %1464 = vmatpush.msra.mxu0 %v1455
  %1465 = vmatpush.msra.mxu0 %v1454
  %1466 = vmatpush.msra.mxu0 %v1453
  %1467 = vmatpush.msra.mxu0 %v1452
  %1468 = vmatpush.msra.mxu0 %v1451
  %1469 = vmatpush.msra.mxu0 %v1450
  %1470 = vmatpush.msra.mxu0 %v1449
  %1471 = vmatpush.msra.mxu0 %v1448
  %1472 = vmatpush.msra.mxu0 %v1447
  %1473 = vmatpush.msra.mxu0 %v1446
  %1474 = vmatpush.msra.mxu0 %v1445
  %1475 = vmatpush.msra.mxu0 %v1444
  %1476 = vmatmul.f32.gmra.mxu0 %v1437
  %v1477 = vpop.f32.mrf.mxu0
  %v1478 = vadd.f32 0.0, %v1477
  %1479 = vmatmul.f32.gmra.mxu0 %v1438
  %v1480 = vpop.f32.mrf.mxu0
  %v1481 = vadd.f32 0.0, %v1480
  %1482 = vmatmul.f32.gmra.mxu0 %v1439
  %v1483 = vpop.f32.mrf.mxu0
  %v1484 = vadd.f32 0.0, %v1483
  %1485 = vmatmul.f32.gmra.mxu0 %v1440
  %v1486 = vpop.f32.mrf.mxu0
  %v1487 = vadd.f32 0.0, %v1486
  %1488 = vmatmul.f32.gmra.mxu0 %v1441
  %v1489 = vpop.f32.mrf.mxu0
  %v1490 = vadd.f32 0.0, %v1489
  %1491 = vmatmul.f32.gmra.mxu0 %v1442
  %v1492 = vpop.f32.mrf.mxu0
  %v1493 = vadd.f32 0.0, %v1492
  %1494 = vmatmul.f32.gmra.mxu0 %v1443
  %v1495 = vpop.f32.mrf.mxu0
  %v1496 = vadd.f32 0.0, %v1495
  %1497 = vdwg.mxu0
  %v1498 = vadd.f32 %v1430, %v1478
  %v1499 = vadd.f32 %v1431, %v1481
  %v1500 = vadd.f32 %v1432, %v1484
  %v1501 = vadd.f32 %v1433, %v1487
  %v1502 = vadd.f32 %v1434, %v1490
  %v1503 = vadd.f32 %v1435, %v1493
  %v1504 = vadd.f32 %v1436, %v1496
  %v1505 = vld [vmem:[%s1065 + $0x9] sm:$0xff]
  %v1506 = vld [vmem:[%s1065 + $0x11] sm:$0xff]
  %v1507 = vld [vmem:[%s1065 + $0x19] sm:$0xff]
  %v1508 = vld [vmem:[%s1065 + $0x21] sm:$0xff]
  %v1509 = vld [vmem:[%s1065 + $0x29] sm:$0xff]
  %v1510 = vld [vmem:[%s1065 + $0x31] sm:$0xff]
  %v1511 = vld [vmem:[%s1065 + $0x39] sm:$0xff]
  %v1512 = vld [vmem:[%s602] sm:$0xff]
  %v1513 = vld [vmem:[%s602 + $0x8] sm:$0xff]
  %v1514 = vld [vmem:[%s602 + $0x10] sm:$0xff]
  %v1515 = vld [vmem:[%s602 + $0x18] sm:$0xff]
  %v1516 = vld [vmem:[%s602 + $0x20] sm:$0xff]
  %v1517 = vld [vmem:[%s602 + $0x28] sm:$0xff]
  %v1518 = vld [vmem:[%s602 + $0x30] sm:$0xff]
  %v1519 = vld [vmem:[%s602 + $0x38] sm:$0xff]
  %v1520 = vld [vmem:[%s602 + $0x40] sm:$0xff]
  %v1521 = vld [vmem:[%s602 + $0x48] sm:$0xff]
  %v1522 = vld [vmem:[%s602 + $0x50] sm:$0xff]
  %v1523 = vld [vmem:[%s602 + $0x58] sm:$0xff]
  %v1524 = vld [vmem:[%s602 + $0x60] sm:$0xff]
  %v1525 = vld [vmem:[%s602 + $0x68] sm:$0xff]
  %v1526 = vld [vmem:[%s602 + $0x70] sm:$0xff]
  %v1527 = vld [vmem:[%s602 + $0x78] sm:$0xff]
  %1528 = vmatpush.msra.mxu0 %v1527
  %1529 = vmatpush.msra.mxu0 %v1526
  %1530 = vmatpush.msra.mxu0 %v1525
  %1531 = vmatpush.msra.mxu0 %v1524
  %1532 = vmatpush.msra.mxu0 %v1523
  %1533 = vmatpush.msra.mxu0 %v1522
  %1534 = vmatpush.msra.mxu0 %v1521
  %1535 = vmatpush.msra.mxu0 %v1520
  %1536 = vmatpush.msra.mxu0 %v1519
  %1537 = vmatpush.msra.mxu0 %v1518
  %1538 = vmatpush.msra.mxu0 %v1517
  %1539 = vmatpush.msra.mxu0 %v1516
  %1540 = vmatpush.msra.mxu0 %v1515
  %1541 = vmatpush.msra.mxu0 %v1514
  %1542 = vmatpush.msra.mxu0 %v1513
  %1543 = vmatpush.msra.mxu0 %v1512
  %1544 = vmatmul.f32.gmra.mxu0 %v1505
  %v1545 = vpop.f32.mrf.mxu0
  %v1546 = vadd.f32 0.0, %v1545
  %1547 = vmatmul.f32.gmra.mxu0 %v1506
  %v1548 = vpop.f32.mrf.mxu0
  %v1549 = vadd.f32 0.0, %v1548
  %1550 = vmatmul.f32.gmra.mxu0 %v1507
  %v1551 = vpop.f32.mrf.mxu0
  %v1552 = vadd.f32 0.0, %v1551
  %1553 = vmatmul.f32.gmra.mxu0 %v1508
  %v1554 = vpop.f32.mrf.mxu0
  %v1555 = vadd.f32 0.0, %v1554
  %1556 = vmatmul.f32.gmra.mxu0 %v1509
  %v1557 = vpop.f32.mrf.mxu0
  %v1558 = vadd.f32 0.0, %v1557
  %1559 = vmatmul.f32.gmra.mxu0 %v1510
  %v1560 = vpop.f32.mrf.mxu0
  %v1561 = vadd.f32 0.0, %v1560
  %1562 = vmatmul.f32.gmra.mxu0 %v1511
  %v1563 = vpop.f32.mrf.mxu0
  %v1564 = vadd.f32 0.0, %v1563
  %1565 = vdwg.mxu0
  %v1566 = vadd.f32 %v1498, %v1546
  %v1567 = vadd.f32 %v1499, %v1549
  %v1568 = vadd.f32 %v1500, %v1552
  %v1569 = vadd.f32 %v1501, %v1555
  %v1570 = vadd.f32 %v1502, %v1558
  %v1571 = vadd.f32 %v1503, %v1561
  %v1572 = vadd.f32 %v1504, %v1564
  %v1573 = vld [vmem:[%s6] sm:$0x1]
  %v1575 = vperm.slane %v1573, 0
  %v1577 = vadd.f32 %v1566, %v1575
  %v1578 = vadd.f32 %v1567, %v1575
  %v1579 = vadd.f32 %v1568, %v1575
  %v1580 = vadd.f32 %v1569, %v1575
  %v1581 = vadd.f32 %v1570, %v1575
  %v1582 = vadd.f32 %v1571, %v1575
  %v1583 = vadd.f32 %v1572, %v1575
  %v1584 = vmax.f32 %v1577, 0.0
  %v1585 = vmax.f32 %v1578, 0.0
  %v1586 = vmax.f32 %v1579, 0.0
  %v1587 = vmax.f32 %v1580, 0.0
  %v1588 = vmax.f32 %v1581, 0.0
  %v1589 = vmax.f32 %v1582, 0.0
  %v1590 = vmax.f32 %v1583, 0.0
  %1591 = vst [vmem:[#allocation3] sm:$0xff] %v1584
  %1592 = vst [vmem:[#allocation3 + $0x8] sm:$0xff] %v1585
  %1593 = vst [vmem:[#allocation3 + $0x10] sm:$0xff] %v1586
  %1594 = vst [vmem:[#allocation3 + $0x18] sm:$0xff] %v1587
  %1595 = vst [vmem:[#allocation3 + $0x20] sm:$0xff] %v1588
  %1596 = vst [vmem:[#allocation3 + $0x28] sm:$0xff] %v1589
  %1597 = vst [vmem:[#allocation3 + $0x30] sm:$0xff] %v1590
  %v1598 = vld [vmem:[#allocation3] sm:$0xff]
  %v1599 = vld [vmem:[#allocation3 + $0x8] sm:$0xff]
  %v1600 = vld [vmem:[#allocation3 + $0x10] sm:$0xff]
  %v1601 = vld [vmem:[#allocation3 + $0x18] sm:$0xff]
  %v1602 = vld [vmem:[#allocation3 + $0x20] sm:$0xff]
  %v1603 = vld [vmem:[#allocation3 + $0x28] sm:$0xff]
  %v1604 = vld [vmem:[%s7] sm:$0xff]
  %v1605 = vld [vmem:[%s7 + $0x8] sm:$0xff]
  %v1606 = vld [vmem:[%s7 + $0x10] sm:$0xff]
  %v1607 = vld [vmem:[%s7 + $0x18] sm:$0xff]
  %v1608 = vld [vmem:[%s7 + $0x20] sm:$0xff]
  %v1609 = vld [vmem:[%s7 + $0x28] sm:$0xff]
  %v1610 = vld [vmem:[%s7 + $0x30] sm:$0xff]
  %v1611 = vld [vmem:[%s7 + $0x38] sm:$0xff]
  %v1612 = vld [vmem:[%s7 + $0x40] sm:$0xff]
  %v1613 = vld [vmem:[%s7 + $0x48] sm:$0xff]
  %v1614 = vld [vmem:[%s7 + $0x50] sm:$0xff]
  %v1615 = vld [vmem:[%s7 + $0x58] sm:$0xff]
  %v1616 = vld [vmem:[%s7 + $0x60] sm:$0xff]
  %v1617 = vld [vmem:[%s7 + $0x68] sm:$0xff]
  %v1618 = vld [vmem:[%s7 + $0x70] sm:$0xff]
  %v1619 = vld [vmem:[%s7 + $0x78] sm:$0xff]
  %v1620 = vld [vmem:[#allocation3 + $0x1] sm:$0xff]
  %v1621 = vld [vmem:[#allocation3 + $0x9] sm:$0xff]
  %v1622 = vld [vmem:[#allocation3 + $0x11] sm:$0xff]
  %v1623 = vld [vmem:[#allocation3 + $0x19] sm:$0xff]
  %v1624 = vld [vmem:[#allocation3 + $0x21] sm:$0xff]
  %v1625 = vld [vmem:[#allocation3 + $0x29] sm:$0xff]
  %v1626 = vld [vmem:[%s717] sm:$0xff]
  %v1627 = vld [vmem:[%s717 + $0x8] sm:$0xff]
  %v1628 = vld [vmem:[%s717 + $0x10] sm:$0xff]
  %v1629 = vld [vmem:[%s717 + $0x18] sm:$0xff]
  %v1630 = vld [vmem:[%s717 + $0x20] sm:$0xff]
  %v1631 = vld [vmem:[%s717 + $0x28] sm:$0xff]
  %v1632 = vld [vmem:[%s717 + $0x30] sm:$0xff]
  %v1633 = vld [vmem:[%s717 + $0x38] sm:$0xff]
  %v1634 = vld [vmem:[%s717 + $0x40] sm:$0xff]
  %v1635 = vld [vmem:[%s717 + $0x48] sm:$0xff]
  %v1636 = vld [vmem:[%s717 + $0x50] sm:$0xff]
  %v1637 = vld [vmem:[%s717 + $0x58] sm:$0xff]
  %v1638 = vld [vmem:[%s717 + $0x60] sm:$0xff]
  %v1639 = vld [vmem:[%s717 + $0x68] sm:$0xff]
  %v1640 = vld [vmem:[%s717 + $0x70] sm:$0xff]
  %v1641 = vld [vmem:[%s717 + $0x78] sm:$0xff]
  %1642 = vmatpush.msra.mxu0 %v1641
  %1643 = vmatpush.msra.mxu0 %v1640
  %1644 = vmatpush.msra.mxu0 %v1639
  %1645 = vmatpush.msra.mxu0 %v1638
  %1646 = vmatpush.msra.mxu0 %v1637
  %1647 = vmatpush.msra.mxu0 %v1636
  %1648 = vmatpush.msra.mxu0 %v1635
  %1649 = vmatpush.msra.mxu0 %v1634
  %1650 = vmatpush.msra.mxu0 %v1633
  %1651 = vmatpush.msra.mxu0 %v1632
  %1652 = vmatpush.msra.mxu0 %v1631
  %1653 = vmatpush.msra.mxu0 %v1630
  %1654 = vmatpush.msra.mxu0 %v1629
  %1655 = vmatpush.msra.mxu0 %v1628
  %1656 = vmatpush.msra.mxu0 %v1627
  %1657 = vmatpush.msra.mxu0 %v1626
  %1658 = vmatmul.f32.gmra.mxu0 %v1620
  %v1659 = vpop.f32.mrf.mxu0
  %v1660 = vadd.f32 0.0, %v1659
  %1661 = vmatmul.f32.gmra.mxu0 %v1621
  %v1662 = vpop.f32.mrf.mxu0
  %v1663 = vadd.f32 0.0, %v1662
  %1664 = vmatmul.f32.gmra.mxu0 %v1622
  %v1665 = vpop.f32.mrf.mxu0
  %v1666 = vadd.f32 0.0, %v1665
  %1667 = vmatmul.f32.gmra.mxu0 %v1623
  %v1668 = vpop.f32.mrf.mxu0
  %v1669 = vadd.f32 0.0, %v1668
  %1670 = vmatmul.f32.gmra.mxu0 %v1624
  %v1671 = vpop.f32.mrf.mxu0
  %v1672 = vadd.f32 0.0, %v1671
  %1673 = vmatmul.f32.gmra.mxu0 %v1625
  %v1674 = vpop.f32.mrf.mxu0
  %v1675 = vadd.f32 0.0, %v1674
  %1676 = vdwg.mxu0
  %1677 = vmatpush.msra.mxu0 %v1619
  %1678 = vmatpush.msra.mxu0 %v1618
  %1679 = vmatpush.msra.mxu0 %v1617
  %1680 = vmatpush.msra.mxu0 %v1616
  %1681 = vmatpush.msra.mxu0 %v1615
  %1682 = vmatpush.msra.mxu0 %v1614
  %1683 = vmatpush.msra.mxu0 %v1613
  %1684 = vmatpush.msra.mxu0 %v1612
  %1685 = vmatpush.msra.mxu0 %v1611
  %1686 = vmatpush.msra.mxu0 %v1610
  %1687 = vmatpush.msra.mxu0 %v1609
  %1688 = vmatpush.msra.mxu0 %v1608
  %1689 = vmatpush.msra.mxu0 %v1607
  %1690 = vmatpush.msra.mxu0 %v1606
  %1691 = vmatpush.msra.mxu0 %v1605
  %1692 = vmatpush.msra.mxu0 %v1604
  %1693 = vmatmul.f32.gmra.mxu0 %v1598
  %v1694 = vpop.f32.mrf.mxu0
  %v1695 = vadd.f32 %v1660, %v1694
  %1696 = vmatmul.f32.gmra.mxu0 %v1599
  %v1697 = vpop.f32.mrf.mxu0
  %v1698 = vadd.f32 %v1663, %v1697
  %1699 = vmatmul.f32.gmra.mxu0 %v1600
  %v1700 = vpop.f32.mrf.mxu0
  %v1701 = vadd.f32 %v1666, %v1700
  %1702 = vmatmul.f32.gmra.mxu0 %v1601
  %v1703 = vpop.f32.mrf.mxu0
  %v1704 = vadd.f32 %v1669, %v1703
  %1705 = vmatmul.f32.gmra.mxu0 %v1602
  %v1706 = vpop.f32.mrf.mxu0
  %v1707 = vadd.f32 %v1672, %v1706
  %1708 = vmatmul.f32.gmra.mxu0 %v1603
  %v1709 = vpop.f32.mrf.mxu0
  %v1710 = vadd.f32 %v1675, %v1709
  %1711 = vdwg.mxu0
  %v1712 = vld [vmem:[#allocation3 + $0x8] sm:$0xff]
  %v1713 = vld [vmem:[#allocation3 + $0x10] sm:$0xff]
  %v1714 = vld [vmem:[#allocation3 + $0x18] sm:$0xff]
  %v1715 = vld [vmem:[#allocation3 + $0x20] sm:$0xff]
  %v1716 = vld [vmem:[#allocation3 + $0x28] sm:$0xff]
  %v1717 = vld [vmem:[#allocation3 + $0x30] sm:$0xff]
  %v1718 = vld [vmem:[%s810] sm:$0xff]
  %v1719 = vld [vmem:[%s810 + $0x8] sm:$0xff]
  %v1720 = vld [vmem:[%s810 + $0x10] sm:$0xff]
  %v1721 = vld [vmem:[%s810 + $0x18] sm:$0xff]
  %v1722 = vld [vmem:[%s810 + $0x20] sm:$0xff]
  %v1723 = vld [vmem:[%s810 + $0x28] sm:$0xff]
  %v1724 = vld [vmem:[%s810 + $0x30] sm:$0xff]
  %v1725 = vld [vmem:[%s810 + $0x38] sm:$0xff]
  %v1726 = vld [vmem:[%s810 + $0x40] sm:$0xff]
  %v1727 = vld [vmem:[%s810 + $0x48] sm:$0xff]
  %v1728 = vld [vmem:[%s810 + $0x50] sm:$0xff]
  %v1729 = vld [vmem:[%s810 + $0x58] sm:$0xff]
  %v1730 = vld [vmem:[%s810 + $0x60] sm:$0xff]
  %v1731 = vld [vmem:[%s810 + $0x68] sm:$0xff]
  %v1732 = vld [vmem:[%s810 + $0x70] sm:$0xff]
  %v1733 = vld [vmem:[%s810 + $0x78] sm:$0xff]
  %1734 = vmatpush.msra.mxu0 %v1733
  %1735 = vmatpush.msra.mxu0 %v1732
  %1736 = vmatpush.msra.mxu0 %v1731
  %1737 = vmatpush.msra.mxu0 %v1730
  %1738 = vmatpush.msra.mxu0 %v1729
  %1739 = vmatpush.msra.mxu0 %v1728
  %1740 = vmatpush.msra.mxu0 %v1727
  %1741 = vmatpush.msra.mxu0 %v1726
  %1742 = vmatpush.msra.mxu0 %v1725
  %1743 = vmatpush.msra.mxu0 %v1724
  %1744 = vmatpush.msra.mxu0 %v1723
  %1745 = vmatpush.msra.mxu0 %v1722
  %1746 = vmatpush.msra.mxu0 %v1721
  %1747 = vmatpush.msra.mxu0 %v1720
  %1748 = vmatpush.msra.mxu0 %v1719
  %1749 = vmatpush.msra.mxu0 %v1718
  %1750 = vmatmul.f32.gmra.mxu0 %v1712
  %v1751 = vpop.f32.mrf.mxu0
  %v1752 = vadd.f32 0.0, %v1751
  %1753 = vmatmul.f32.gmra.mxu0 %v1713
  %v1754 = vpop.f32.mrf.mxu0
  %v1755 = vadd.f32 0.0, %v1754
  %1756 = vmatmul.f32.gmra.mxu0 %v1714
  %v1757 = vpop.f32.mrf.mxu0
  %v1758 = vadd.f32 0.0, %v1757
  %1759 = vmatmul.f32.gmra.mxu0 %v1715
  %v1760 = vpop.f32.mrf.mxu0
  %v1761 = vadd.f32 0.0, %v1760
  %1762 = vmatmul.f32.gmra.mxu0 %v1716
  %v1763 = vpop.f32.mrf.mxu0
  %v1764 = vadd.f32 0.0, %v1763
  %1765 = vmatmul.f32.gmra.mxu0 %v1717
  %v1766 = vpop.f32.mrf.mxu0
  %v1767 = vadd.f32 0.0, %v1766
  %1768 = vdwg.mxu0
  %v1769 = vadd.f32 %v1695, %v1752
  %v1770 = vadd.f32 %v1698, %v1755
  %v1771 = vadd.f32 %v1701, %v1758
  %v1772 = vadd.f32 %v1704, %v1761
  %v1773 = vadd.f32 %v1707, %v1764
  %v1774 = vadd.f32 %v1710, %v1767
  %v1775 = vld [vmem:[#allocation3 + $0x9] sm:$0xff]
  %v1776 = vld [vmem:[#allocation3 + $0x11] sm:$0xff]
  %v1777 = vld [vmem:[#allocation3 + $0x19] sm:$0xff]
  %v1778 = vld [vmem:[#allocation3 + $0x21] sm:$0xff]
  %v1779 = vld [vmem:[#allocation3 + $0x29] sm:$0xff]
  %v1780 = vld [vmem:[#allocation3 + $0x31] sm:$0xff]
  %v1781 = vld [vmem:[%s874] sm:$0xff]
  %v1782 = vld [vmem:[%s874 + $0x8] sm:$0xff]
  %v1783 = vld [vmem:[%s874 + $0x10] sm:$0xff]
  %v1784 = vld [vmem:[%s874 + $0x18] sm:$0xff]
  %v1785 = vld [vmem:[%s874 + $0x20] sm:$0xff]
  %v1786 = vld [vmem:[%s874 + $0x28] sm:$0xff]
  %v1787 = vld [vmem:[%s874 + $0x30] sm:$0xff]
  %v1788 = vld [vmem:[%s874 + $0x38] sm:$0xff]
  %v1789 = vld [vmem:[%s874 + $0x40] sm:$0xff]
  %v1790 = vld [vmem:[%s874 + $0x48] sm:$0xff]
  %v1791 = vld [vmem:[%s874 + $0x50] sm:$0xff]
  %v1792 = vld [vmem:[%s874 + $0x58] sm:$0xff]
  %v1793 = vld [vmem:[%s874 + $0x60] sm:$0xff]
  %v1794 = vld [vmem:[%s874 + $0x68] sm:$0xff]
  %v1795 = vld [vmem:[%s874 + $0x70] sm:$0xff]
  %v1796 = vld [vmem:[%s874 + $0x78] sm:$0xff]
  %1797 = vmatpush.msra.mxu0 %v1796
  %1798 = vmatpush.msra.mxu0 %v1795
  %1799 = vmatpush.msra.mxu0 %v1794
  %1800 = vmatpush.msra.mxu0 %v1793
  %1801 = vmatpush.msra.mxu0 %v1792
  %1802 = vmatpush.msra.mxu0 %v1791
  %1803 = vmatpush.msra.mxu0 %v1790
  %1804 = vmatpush.msra.mxu0 %v1789
  %1805 = vmatpush.msra.mxu0 %v1788
  %1806 = vmatpush.msra.mxu0 %v1787
  %1807 = vmatpush.msra.mxu0 %v1786
  %1808 = vmatpush.msra.mxu0 %v1785
  %1809 = vmatpush.msra.mxu0 %v1784
  %1810 = vmatpush.msra.mxu0 %v1783
  %1811 = vmatpush.msra.mxu0 %v1782
  %1812 = vmatpush.msra.mxu0 %v1781
  %1813 = vmatmul.f32.gmra.mxu0 %v1775
  %v1814 = vpop.f32.mrf.mxu0
  %v1815 = vadd.f32 0.0, %v1814
  %1816 = vmatmul.f32.gmra.mxu0 %v1776
  %v1817 = vpop.f32.mrf.mxu0
  %v1818 = vadd.f32 0.0, %v1817
  %1819 = vmatmul.f32.gmra.mxu0 %v1777
  %v1820 = vpop.f32.mrf.mxu0
  %v1821 = vadd.f32 0.0, %v1820
  %1822 = vmatmul.f32.gmra.mxu0 %v1778
  %v1823 = vpop.f32.mrf.mxu0
  %v1824 = vadd.f32 0.0, %v1823
  %1825 = vmatmul.f32.gmra.mxu0 %v1779
  %v1826 = vpop.f32.mrf.mxu0
  %v1827 = vadd.f32 0.0, %v1826
  %1828 = vmatmul.f32.gmra.mxu0 %v1780
  %v1829 = vpop.f32.mrf.mxu0
  %v1830 = vadd.f32 0.0, %v1829
  %1831 = vdwg.mxu0
  %v1832 = vadd.f32 %v1769, %v1815
  %v1833 = vadd.f32 %v1770, %v1818
  %v1834 = vadd.f32 %v1771, %v1821
  %v1835 = vadd.f32 %v1772, %v1824
  %v1836 = vadd.f32 %v1773, %v1827
  %v1837 = vadd.f32 %v1774, %v1830
  %v1838 = vld [vmem:[%s8] sm:$0x1]
  %v1840 = vperm.slane %v1838, 0
  %v1842 = vadd.f32 %v1832, %v1840
  %v1843 = vadd.f32 %v1833, %v1840
  %v1844 = vadd.f32 %v1834, %v1840
  %v1845 = vadd.f32 %v1835, %v1840
  %v1846 = vadd.f32 %v1836, %v1840
  %v1847 = vadd.f32 %v1837, %v1840
  %s1848 = scalar_lea.vmem %s9, 48
  %1849 = vst [vmem:[%s1848] sm:$0xff] %v1842
  %1850 = vst [vmem:[%s1848 + $0x8] sm:$0xff] %v1843
  %1851 = vst [vmem:[%s1848 + $0x10] sm:$0xff] %v1844
  %1852 = vst [vmem:[%s1848 + $0x18] sm:$0xff] %v1845
  %1853 = vst [vmem:[%s1848 + $0x20] sm:$0xff] %v1846
  %1854 = vst [vmem:[%s1848 + $0x28] sm:$0xff] %v1847
  // Predicated region
  $region38: #{decoder_forward.2} parent=0 // pred_check
    _
  $region39: #{decoder_forward.2} parent=0 // pred_check_branch
    %1856 = sbr.rel (0) target = $region41
  $region40: #{decoder_forward.2} parent=0 // pred_region
    _
  $region41: #{decoder_forward.2} parent=0 // pred_fallthru
    _
  // Predicated region
  $region42: #{decoder_forward.2} parent=0 // pred_check
    _
  $region43: #{decoder_forward.2} parent=0 // pred_check_branch
    %1858 = sbr.rel (0) target = $region45
  $region44: #{decoder_forward.2} parent=0 // pred_region
    _
  $region45: #{decoder_forward.2} parent=0 // pred_fallthru
    _

// kernel: decoder_forward.3
$region0: #{decoder_forward.3}
  #allocation0 [shape = 'u32[]', space=smem, size = 0x4, offset = 0x4, fixed_abs, tag = 'smem constant byte address 0x4 - core index']
  #allocation1 [shape = 'u32[72,128]{1,0:T(1,128)}', space=vmem, size = 0x9000, scoped, tag = 'internal scratch']
  #allocation2 [shape = 'f32[152,64]{1,0:T(8,128)}', space=vmem, size = 0x13000, scoped, tag = 'scratch operand']
  #allocation3 [shape = 'f32[140,64]{1,0:T(8,128)}', space=vmem, size = 0x12000, scoped, tag = 'scratch operand']
  %s0 = inlined_call_operand.vmem [shape: f32[2,144,32], index: 0, kind: input, shape index: {}]
  %s1 = inlined_call_operand.vmem [shape: f32[2,152,64], index: 1, kind: input, shape index: {}]
  %s2 = inlined_call_operand.vmem [shape: f32[32,64], index: 2, kind: input, shape index: {}]
  %s3 = inlined_call_operand.vmem [shape: f32[1,64], index: 3, kind: input, shape index: {}]
  %s4 = inlined_call_operand.vmem [shape: f32[4,64,64], index: 4, kind: input, shape index: {}]
  %s5 = inlined_call_operand.vmem [shape: f32[4,64,64], index: 5, kind: input, shape index: {}]
  %s6 = inlined_call_operand.vmem [shape: f32[1,64], index: 6, kind: input, shape index: {}]
  %s7 = inlined_call_operand.vmem [shape: f32[4,64,64], index: 7, kind: input, shape index: {}]
  %s8 = inlined_call_operand.vmem [shape: f32[1,64], index: 8, kind: input, shape index: {}]
  %s9 = inlined_call_operand.vmem [shape: f32[2,120,64], index: 9, kind: output, shape index: {}]
  %s10 = sld [smem:[#allocation0]]
  $region46: #{decoder_forward.3} parent=0
    _
  %s12 = ssub.s32 1, %s10
  %s13 = scalar_select 0, %s12, %s10
  // Predicated region
  $region2: #{decoder_forward.3} parent=0 // pred_check
    _
  $region3: #{decoder_forward.3} parent=0 // pred_check_branch
    %15 = sbr.rel (0) target = $region5
  $region4: #{decoder_forward.3} parent=0 // pred_region
    _
  $region5: #{decoder_forward.3} parent=0 // pred_fallthru
    _
  // Predicated region
  $region6: #{decoder_forward.3} parent=0 // pred_check
    _
  $region7: #{decoder_forward.3} parent=0 // pred_check_branch
    %17 = sbr.rel (0) target = $region9
  $region8: #{decoder_forward.3} parent=0 // pred_region
    _
  $region9: #{decoder_forward.3} parent=0 // pred_fallthru
    _
  // Predicated region
  $region10: #{decoder_forward.3} parent=0 // pred_check
    _
  $region11: #{decoder_forward.3} parent=0 // pred_check_branch
    %19 = sbr.rel (0) target = $region13
  $region12: #{decoder_forward.3} parent=0 // pred_region
    _
  $region13: #{decoder_forward.3} parent=0 // pred_fallthru
    _
  // Predicated region
  $region14: #{decoder_forward.3} parent=0 // pred_check
    _
  $region15: #{decoder_forward.3} parent=0 // pred_check_branch
    %21 = sbr.rel (0) target = $region17
  $region16: #{decoder_forward.3} parent=0 // pred_region
    _
  $region17: #{decoder_forward.3} parent=0 // pred_fallthru
    _
  // Predicated region
  $region18: #{decoder_forward.3} parent=0 // pred_check
    _
  $region19: #{decoder_forward.3} parent=0 // pred_check_branch
    %23 = sbr.rel (0) target = $region21
  $region20: #{decoder_forward.3} parent=0 // pred_region
    _
  $region21: #{decoder_forward.3} parent=0 // pred_fallthru
    _
  // Predicated region
  $region22: #{decoder_forward.3} parent=0 // pred_check
    _
  $region23: #{decoder_forward.3} parent=0 // pred_check_branch
    %25 = sbr.rel (0) target = $region25
  $region24: #{decoder_forward.3} parent=0 // pred_region
    _
  $region25: #{decoder_forward.3} parent=0 // pred_fallthru
    _
  // Predicated region
  $region26: #{decoder_forward.3} parent=0 // pred_check
    _
  $region27: #{decoder_forward.3} parent=0 // pred_check_branch
    %27 = sbr.rel (0) target = $region29
  $region28: #{decoder_forward.3} parent=0 // pred_region
    _
  $region29: #{decoder_forward.3} parent=0 // pred_fallthru
    _
  // Predicated region
  $region30: #{decoder_forward.3} parent=0 // pred_check
    _
  $region31: #{decoder_forward.3} parent=0 // pred_check_branch
    %29 = sbr.rel (0) target = $region33
  $region32: #{decoder_forward.3} parent=0 // pred_region
    _
  $region33: #{decoder_forward.3} parent=0 // pred_fallthru
    _
  // Predicated region
  $region34: #{decoder_forward.3} parent=0 // pred_check
    _
  $region35: #{decoder_forward.3} parent=0 // pred_check_branch
    %31 = sbr.rel (0) target = $region37
  $region36: #{decoder_forward.3} parent=0 // pred_region
    _
  $region37: #{decoder_forward.3} parent=0 // pred_fallthru
    _
  %vm32 = vcmask 523264
  %33 = vst.msk [vmem:[#allocation2 + $0x90] sm:$0xff] %vm32, 0.0
  %34 = vst.msk [vmem:[#allocation3 + $0x84] sm:$0xff] %vm32, 0.0
  %v35 = vld [vmem:[%s0] sm:$0xff]
  %v36 = vld [vmem:[%s0 + $0x8] sm:$0xff]
  %v37 = vld [vmem:[%s0 + $0x10] sm:$0xff]
  %v38 = vld [vmem:[%s0 + $0x18] sm:$0xff]
  %v39 = vld [vmem:[%s0 + $0x20] sm:$0xff]
  %v40 = vld [vmem:[%s0 + $0x28] sm:$0xff]
  %v41 = vld [vmem:[%s0 + $0x30] sm:$0xff]
  %v42 = vld [vmem:[%s0 + $0x38] sm:$0xff]
  %v43 = vld [vmem:[%s0 + $0x40] sm:$0xff]
  %v44 = vld [vmem:[%s0 + $0x48] sm:$0xff]
  %v45 = vld [vmem:[%s0 + $0x50] sm:$0xff]
  %v46 = vld [vmem:[%s0 + $0x58] sm:$0xff]
  %v47 = vld [vmem:[%s0 + $0x60] sm:$0xff]
  %v48 = vld [vmem:[%s0 + $0x68] sm:$0xff]
  %v49 = vld [vmem:[%s0 + $0x70] sm:$0xff]
  %v50 = vld [vmem:[%s0 + $0x78] sm:$0xff]
  %v51 = vld [vmem:[%s0 + $0x80] sm:$0xff]
  %v52 = vld [vmem:[%s0 + $0x88] sm:$0xff]
  %v53 = vld [vmem:[%s2] sm:$0xff]
  %v54 = vld [vmem:[%s2 + $0x8] sm:$0xff]
  %v55 = vld [vmem:[%s2 + $0x10] sm:$0xff]
  %v56 = vld [vmem:[%s2 + $0x18] sm:$0xff]
  %v57 = vld [vmem:[%s3] sm:$0x1]
  %v59 = vperm.slane %v57, 0
  %vm61 = vcmask 261120
  %v63 = vsel %vm61, %v35, 0
  %v66 = vsel %vm61, %v36, 0
  %v69 = vsel %vm61, %v37, 0
  %v72 = vsel %vm61, %v38, 0
  %v75 = vsel %vm61, %v39, 0
  %v78 = vsel %vm61, %v40, 0
  %v81 = vsel %vm61, %v41, 0
  %v84 = vsel %vm61, %v42, 0
  %v87 = vsel %vm61, %v43, 0
  %v90 = vsel %vm61, %v44, 0
  %v93 = vsel %vm61, %v45, 0
  %v96 = vsel %vm61, %v46, 0
  %v99 = vsel %vm61, %v47, 0
  %v102 = vsel %vm61, %v48, 0
  %v105 = vsel %vm61, %v49, 0
  %v108 = vsel %vm61, %v50, 0
  %v111 = vsel %vm61, %v51, 0
  %v114 = vsel %vm61, %v52, 0
  %116 = vmatpush.msra.mxu0 0.0
  %117 = vmatpush.msra.mxu0 0.0
  %118 = vmatpush.msra.mxu0 0.0
  %119 = vmatpush.msra.mxu0 0.0
  %120 = vmatpush.msra.mxu0 0.0
  %121 = vmatpush.msra.mxu0 0.0
  %122 = vmatpush.msra.mxu0 0.0
  %123 = vmatpush.msra.mxu0 0.0
  %124 = vmatpush.msra.mxu0 0.0
  %125 = vmatpush.msra.mxu0 0.0
  %126 = vmatpush.msra.mxu0 0.0
  %127 = vmatpush.msra.mxu0 0.0
  %128 = vmatpush.msra.mxu0 %v56
  %129 = vmatpush.msra.mxu0 %v55
  %130 = vmatpush.msra.mxu0 %v54
  %131 = vmatpush.msra.mxu0 %v53
  %132 = vmatmul.f32.gmra.mxu0 %v63
  %v133 = vpop.f32.mrf.mxu0
  %v134 = vadd.f32 %v59, %v133
  %135 = vmatmul.f32.gmra.mxu0 %v66
  %v136 = vpop.f32.mrf.mxu0
  %v137 = vadd.f32 %v59, %v136
  %138 = vmatmul.f32.gmra.mxu0 %v69
  %v139 = vpop.f32.mrf.mxu0
  %v140 = vadd.f32 %v59, %v139
  %141 = vmatmul.f32.gmra.mxu0 %v72
  %v142 = vpop.f32.mrf.mxu0
  %v143 = vadd.f32 %v59, %v142
  %144 = vmatmul.f32.gmra.mxu0 %v75
  %v145 = vpop.f32.mrf.mxu0
  %v146 = vadd.f32 %v59, %v145
  %147 = vmatmul.f32.gmra.mxu0 %v78
  %v148 = vpop.f32.mrf.mxu0
  %v149 = vadd.f32 %v59, %v148
  %150 = vmatmul.f32.gmra.mxu0 %v81
  %v151 = vpop.f32.mrf.mxu0
  %v152 = vadd.f32 %v59, %v151
  %153 = vmatmul.f32.gmra.mxu0 %v84
  %v154 = vpop.f32.mrf.mxu0
  %v155 = vadd.f32 %v59, %v154
  %156 = vmatmul.f32.gmra.mxu0 %v87
  %v157 = vpop.f32.mrf.mxu0
  %v158 = vadd.f32 %v59, %v157
  %159 = vmatmul.f32.gmra.mxu0 %v90
  %v160 = vpop.f32.mrf.mxu0
  %v161 = vadd.f32 %v59, %v160
  %162 = vmatmul.f32.gmra.mxu0 %v93
  %v163 = vpop.f32.mrf.mxu0
  %v164 = vadd.f32 %v59, %v163
  %165 = vmatmul.f32.gmra.mxu0 %v96
  %v166 = vpop.f32.mrf.mxu0
  %v167 = vadd.f32 %v59, %v166
  %168 = vmatmul.f32.gmra.mxu0 %v99
  %v169 = vpop.f32.mrf.mxu0
  %v170 = vadd.f32 %v59, %v169
  %171 = vmatmul.f32.gmra.mxu0 %v102
  %v172 = vpop.f32.mrf.mxu0
  %v173 = vadd.f32 %v59, %v172
  %174 = vmatmul.f32.gmra.mxu0 %v105
  %v175 = vpop.f32.mrf.mxu0
  %v176 = vadd.f32 %v59, %v175
  %177 = vmatmul.f32.gmra.mxu0 %v108
  %v178 = vpop.f32.mrf.mxu0
  %v179 = vadd.f32 %v59, %v178
  %180 = vmatmul.f32.gmra.mxu0 %v111
  %v181 = vpop.f32.mrf.mxu0
  %v182 = vadd.f32 %v59, %v181
  %183 = vmatmul.f32.gmra.mxu0 %v114
  %v184 = vpop.f32.mrf.mxu0
  %v185 = vadd.f32 %v59, %v184
  %186 = vdwg.mxu0
  %187 = vst.msk [vmem:[#allocation2] sm:$0xff] %vm32, %v134
  %188 = vst.msk [vmem:[#allocation2 + $0x8] sm:$0xff] %vm32, %v137
  %189 = vst.msk [vmem:[#allocation2 + $0x10] sm:$0xff] %vm32, %v140
  %190 = vst.msk [vmem:[#allocation2 + $0x18] sm:$0xff] %vm32, %v143
  %191 = vst.msk [vmem:[#allocation2 + $0x20] sm:$0xff] %vm32, %v146
  %192 = vst.msk [vmem:[#allocation2 + $0x28] sm:$0xff] %vm32, %v149
  %193 = vst.msk [vmem:[#allocation2 + $0x30] sm:$0xff] %vm32, %v152
  %194 = vst.msk [vmem:[#allocation2 + $0x38] sm:$0xff] %vm32, %v155
  %195 = vst.msk [vmem:[#allocation2 + $0x40] sm:$0xff] %vm32, %v158
  %196 = vst.msk [vmem:[#allocation2 + $0x48] sm:$0xff] %vm32, %v161
  %197 = vst.msk [vmem:[#allocation2 + $0x50] sm:$0xff] %vm32, %v164
  %198 = vst.msk [vmem:[#allocation2 + $0x58] sm:$0xff] %vm32, %v167
  %199 = vst.msk [vmem:[#allocation2 + $0x60] sm:$0xff] %vm32, %v170
  %200 = vst.msk [vmem:[#allocation2 + $0x68] sm:$0xff] %vm32, %v173
  %201 = vst.msk [vmem:[#allocation2 + $0x70] sm:$0xff] %vm32, %v176
  %202 = vst.msk [vmem:[#allocation2 + $0x78] sm:$0xff] %vm32, %v179
  %203 = vst.msk [vmem:[#allocation2 + $0x80] sm:$0xff] %vm32, %v182
  %204 = vst.msk [vmem:[#allocation2 + $0x88] sm:$0xff] %vm32, %v185
  %v205 = vld [vmem:[#allocation2] sm:$0xff]
  %v206 = vld [vmem:[#allocation2 + $0x8] sm:$0xff]
  %v207 = vld [vmem:[#allocation2 + $0x10] sm:$0xff]
  %v208 = vld [vmem:[#allocation2 + $0x18] sm:$0xff]
  %v209 = vld [vmem:[#allocation2 + $0x20] sm:$0xff]
  %v210 = vld [vmem:[#allocation2 + $0x28] sm:$0xff]
  %v211 = vld [vmem:[#allocation2 + $0x30] sm:$0xff]
  %v212 = vld [vmem:[#allocation2 + $0x38] sm:$0xff]
  %v213 = vld [vmem:[#allocation2 + $0x40] sm:$0xff]
  %v214 = vld [vmem:[#allocation2 + $0x48] sm:$0xff]
  %v215 = vld [vmem:[#allocation2 + $0x50] sm:$0xff]
  %v216 = vld [vmem:[#allocation2 + $0x58] sm:$0xff]
  %v217 = vld [vmem:[#allocation2 + $0x60] sm:$0xff]
  %v218 = vld [vmem:[#allocation2 + $0x68] sm:$0xff]
  %v219 = vld [vmem:[#allocation2 + $0x70] sm:$0xff]
  %v220 = vld [vmem:[#allocation2 + $0x78] sm:$0xff]
  %v221 = vld [vmem:[#allocation2 + $0x80] sm:$0xf]
  %v222 = vld [vmem:[%s4] sm:$0xff]
  %v223 = vld [vmem:[%s4 + $0x8] sm:$0xff]
  %v224 = vld [vmem:[%s4 + $0x10] sm:$0xff]
  %v225 = vld [vmem:[%s4 + $0x18] sm:$0xff]
  %v226 = vld [vmem:[%s4 + $0x20] sm:$0xff]
  %v227 = vld [vmem:[%s4 + $0x28] sm:$0xff]
  %v228 = vld [vmem:[%s4 + $0x30] sm:$0xff]
  %v229 = vld [vmem:[%s4 + $0x38] sm:$0xff]
  %v230 = vld [vmem:[%s1] sm:$0xff]
  %v231 = vld [vmem:[%s1 + $0x8] sm:$0xff]
  %v232 = vld [vmem:[%s1 + $0x10] sm:$0xff]
  %v233 = vld [vmem:[%s1 + $0x18] sm:$0xff]
  %v234 = vld [vmem:[%s1 + $0x20] sm:$0xff]
  %v235 = vld [vmem:[%s1 + $0x28] sm:$0xff]
  %v236 = vld [vmem:[%s1 + $0x30] sm:$0xff]
  %v237 = vld [vmem:[%s1 + $0x38] sm:$0xff]
  %v238 = vld [vmem:[%s1 + $0x40] sm:$0xff]
  %v239 = vld [vmem:[%s1 + $0x48] sm:$0xff]
  %v240 = vld [vmem:[%s1 + $0x50] sm:$0xff]
  %v241 = vld [vmem:[%s1 + $0x58] sm:$0xff]
  %v242 = vld [vmem:[%s1 + $0x60] sm:$0xff]
  %v243 = vld [vmem:[%s1 + $0x68] sm:$0xff]
  %v244 = vld [vmem:[%s1 + $0x70] sm:$0xff]
  %v245 = vld [vmem:[%s1 + $0x78] sm:$0xff]
  %v246 = vld [vmem:[%s1 + $0x80] sm:$0xf]
  %v247 = vld [vmem:[%s5] sm:$0xff]
  %v248 = vld [vmem:[%s5 + $0x8] sm:$0xff]
  %v249 = vld [vmem:[%s5 + $0x10] sm:$0xff]
  %v250 = vld [vmem:[%s5 + $0x18] sm:$0xff]
  %v251 = vld [vmem:[%s5 + $0x20] sm:$0xff]
  %v252 = vld [vmem:[%s5 + $0x28] sm:$0xff]
  %v253 = vld [vmem:[%s5 + $0x30] sm:$0xff]
  %v254 = vld [vmem:[%s5 + $0x38] sm:$0xff]
  %v256 = vsel %vm32, %v230, 0
  %v259 = vsel %vm32, %v231, 0
  %v262 = vsel %vm32, %v232, 0
  %v265 = vsel %vm32, %v233, 0
  %v268 = vsel %vm32, %v234, 0
  %v271 = vsel %vm32, %v235, 0
  %v274 = vsel %vm32, %v236, 0
  %v277 = vsel %vm32, %v237, 0
  %v280 = vsel %vm32, %v238, 0
  %v283 = vsel %vm32, %v239, 0
  %v286 = vsel %vm32, %v240, 0
  %v289 = vsel %vm32, %v241, 0
  %v292 = vsel %vm32, %v242, 0
  %v295 = vsel %vm32, %v243, 0
  %v298 = vsel %vm32, %v244, 0
  %v301 = vsel %vm32, %v245, 0
  %v304 = vsel %vm32, %v246, 0
  %306 = vmatpush.msra.mxu0 0.0
  %307 = vmatpush.msra.mxu0 0.0
  %308 = vmatpush.msra.mxu0 0.0
  %309 = vmatpush.msra.mxu0 0.0
  %310 = vmatpush.msra.mxu0 0.0
  %311 = vmatpush.msra.mxu0 0.0
  %312 = vmatpush.msra.mxu0 0.0
  %313 = vmatpush.msra.mxu0 0.0
  %314 = vmatpush.msra.mxu0 %v254
  %315 = vmatpush.msra.mxu0 %v253
  %316 = vmatpush.msra.mxu0 %v252
  %317 = vmatpush.msra.mxu0 %v251
  %318 = vmatpush.msra.mxu0 %v250
  %319 = vmatpush.msra.mxu0 %v249
  %320 = vmatpush.msra.mxu0 %v248
  %321 = vmatpush.msra.mxu0 %v247
  %322 = vmatmul.f32.gmra.mxu0 %v256
  %v323 = vpop.f32.mrf.mxu0
  %v324 = vadd.f32 0.0, %v323
  %325 = vmatmul.f32.gmra.mxu0 %v259
  %v326 = vpop.f32.mrf.mxu0
  %v327 = vadd.f32 0.0, %v326
  %328 = vmatmul.f32.gmra.mxu0 %v262
  %v329 = vpop.f32.mrf.mxu0
  %v330 = vadd.f32 0.0, %v329
  %331 = vmatmul.f32.gmra.mxu0 %v265
  %v332 = vpop.f32.mrf.mxu0
  %v333 = vadd.f32 0.0, %v332
  %334 = vmatmul.f32.gmra.mxu0 %v268
  %v335 = vpop.f32.mrf.mxu0
  %v336 = vadd.f32 0.0, %v335
  %337 = vmatmul.f32.gmra.mxu0 %v271
  %v338 = vpop.f32.mrf.mxu0
  %v339 = vadd.f32 0.0, %v338
  %340 = vmatmul.f32.gmra.mxu0 %v274
  %v341 = vpop.f32.mrf.mxu0
  %v342 = vadd.f32 0.0, %v341
  %343 = vmatmul.f32.gmra.mxu0 %v277
  %v344 = vpop.f32.mrf.mxu0
  %v345 = vadd.f32 0.0, %v344
  %346 = vmatmul.f32.gmra.mxu0 %v280
  %v347 = vpop.f32.mrf.mxu0
  %v348 = vadd.f32 0.0, %v347
  %349 = vmatmul.f32.gmra.mxu0 %v283
  %v350 = vpop.f32.mrf.mxu0
  %v351 = vadd.f32 0.0, %v350
  %352 = vmatmul.f32.gmra.mxu0 %v286
  %v353 = vpop.f32.mrf.mxu0
  %v354 = vadd.f32 0.0, %v353
  %355 = vmatmul.f32.gmra.mxu0 %v289
  %v356 = vpop.f32.mrf.mxu0
  %v357 = vadd.f32 0.0, %v356
  %358 = vmatmul.f32.gmra.mxu0 %v292
  %v359 = vpop.f32.mrf.mxu0
  %v360 = vadd.f32 0.0, %v359
  %361 = vmatmul.f32.gmra.mxu0 %v295
  %v362 = vpop.f32.mrf.mxu0
  %v363 = vadd.f32 0.0, %v362
  %364 = vmatmul.f32.gmra.mxu0 %v298
  %v365 = vpop.f32.mrf.mxu0
  %v366 = vadd.f32 0.0, %v365
  %367 = vmatmul.f32.gmra.mxu0 %v301
  %v368 = vpop.f32.mrf.mxu0
  %v369 = vadd.f32 0.0, %v368
  %370 = vmatmul.f32.gmra.mxu0 %v304
  %v371 = vpop.f32.mrf.mxu0
  %v372 = vadd.f32 0.0, %v371
  %373 = vdwg.mxu0
  %v375 = vsel %vm32, %v205, 0
  %v378 = vsel %vm32, %v206, 0
  %v381 = vsel %vm32, %v207, 0
  %v384 = vsel %vm32, %v208, 0
  %v387 = vsel %vm32, %v209, 0
  %v390 = vsel %vm32, %v210, 0
  %v393 = vsel %vm32, %v211, 0
  %v396 = vsel %vm32, %v212, 0
  %v399 = vsel %vm32, %v213, 0
  %v402 = vsel %vm32, %v214, 0
  %v405 = vsel %vm32, %v215, 0
  %v408 = vsel %vm32, %v216, 0
  %v411 = vsel %vm32, %v217, 0
  %v414 = vsel %vm32, %v218, 0
  %v417 = vsel %vm32, %v219, 0
  %v420 = vsel %vm32, %v220, 0
  %v423 = vsel %vm32, %v221, 0
  %425 = vmatpush.msra.mxu0 0.0
  %426 = vmatpush.msra.mxu0 0.0
  %427 = vmatpush.msra.mxu0 0.0
  %428 = vmatpush.msra.mxu0 0.0
  %429 = vmatpush.msra.mxu0 0.0
  %430 = vmatpush.msra.mxu0 0.0
  %431 = vmatpush.msra.mxu0 0.0
  %432 = vmatpush.msra.mxu0 0.0
  %433 = vmatpush.msra.mxu0 %v229
  %434 = vmatpush.msra.mxu0 %v228
  %435 = vmatpush.msra.mxu0 %v227
  %436 = vmatpush.msra.mxu0 %v226
  %437 = vmatpush.msra.mxu0 %v225
  %438 = vmatpush.msra.mxu0 %v224
  %439 = vmatpush.msra.mxu0 %v223
  %440 = vmatpush.msra.mxu0 %v222
  %441 = vmatmul.f32.gmra.mxu0 %v375
  %v442 = vpop.f32.mrf.mxu0
  %v443 = vadd.f32 %v324, %v442
  %444 = vmatmul.f32.gmra.mxu0 %v378
  %v445 = vpop.f32.mrf.mxu0
  %v446 = vadd.f32 %v327, %v445
  %447 = vmatmul.f32.gmra.mxu0 %v381
  %v448 = vpop.f32.mrf.mxu0
  %v449 = vadd.f32 %v330, %v448
  %450 = vmatmul.f32.gmra.mxu0 %v384
  %v451 = vpop.f32.mrf.mxu0
  %v452 = vadd.f32 %v333, %v451
  %453 = vmatmul.f32.gmra.mxu0 %v387
  %v454 = vpop.f32.mrf.mxu0
  %v455 = vadd.f32 %v336, %v454
  %456 = vmatmul.f32.gmra.mxu0 %v390
  %v457 = vpop.f32.mrf.mxu0
  %v458 = vadd.f32 %v339, %v457
  %459 = vmatmul.f32.gmra.mxu0 %v393
  %v460 = vpop.f32.mrf.mxu0
  %v461 = vadd.f32 %v342, %v460
  %462 = vmatmul.f32.gmra.mxu0 %v396
  %v463 = vpop.f32.mrf.mxu0
  %v464 = vadd.f32 %v345, %v463
  %465 = vmatmul.f32.gmra.mxu0 %v399
  %v466 = vpop.f32.mrf.mxu0
  %v467 = vadd.f32 %v348, %v466
  %468 = vmatmul.f32.gmra.mxu0 %v402
  %v469 = vpop.f32.mrf.mxu0
  %v470 = vadd.f32 %v351, %v469
  %471 = vmatmul.f32.gmra.mxu0 %v405
  %v472 = vpop.f32.mrf.mxu0
  %v473 = vadd.f32 %v354, %v472
  %474 = vmatmul.f32.gmra.mxu0 %v408
  %v475 = vpop.f32.mrf.mxu0
  %v476 = vadd.f32 %v357, %v475
  %477 = vmatmul.f32.gmra.mxu0 %v411
  %v478 = vpop.f32.mrf.mxu0
  %v479 = vadd.f32 %v360, %v478
  %480 = vmatmul.f32.gmra.mxu0 %v414
  %v481 = vpop.f32.mrf.mxu0
  %v482 = vadd.f32 %v363, %v481
  %483 = vmatmul.f32.gmra.mxu0 %v417
  %v484 = vpop.f32.mrf.mxu0
  %v485 = vadd.f32 %v366, %v484
  %486 = vmatmul.f32.gmra.mxu0 %v420
  %v487 = vpop.f32.mrf.mxu0
  %v488 = vadd.f32 %v369, %v487
  %489 = vmatmul.f32.gmra.mxu0 %v423
  %v490 = vpop.f32.mrf.mxu0
  %v491 = vadd.f32 %v372, %v490
  %492 = vdwg.mxu0
  %v493 = vld [vmem:[#allocation2 + $0x1] sm:$0xff]
  %v494 = vld [vmem:[#allocation2 + $0x9] sm:$0xff]
  %v495 = vld [vmem:[#allocation2 + $0x11] sm:$0xff]
  %v496 = vld [vmem:[#allocation2 + $0x19] sm:$0xff]
  %v497 = vld [vmem:[#allocation2 + $0x21] sm:$0xff]
  %v498 = vld [vmem:[#allocation2 + $0x29] sm:$0xff]
  %v499 = vld [vmem:[#allocation2 + $0x31] sm:$0xff]
  %v500 = vld [vmem:[#allocation2 + $0x39] sm:$0xff]
  %v501 = vld [vmem:[#allocation2 + $0x41] sm:$0xff]
  %v502 = vld [vmem:[#allocation2 + $0x49] sm:$0xff]
  %v503 = vld [vmem:[#allocation2 + $0x51] sm:$0xff]
  %v504 = vld [vmem:[#allocation2 + $0x59] sm:$0xff]
  %v505 = vld [vmem:[#allocation2 + $0x61] sm:$0xff]
  %v506 = vld [vmem:[#allocation2 + $0x69] sm:$0xff]
  %v507 = vld [vmem:[#allocation2 + $0x71] sm:$0xff]
  %v508 = vld [vmem:[#allocation2 + $0x79] sm:$0xff]
  %v509 = vld [vmem:[#allocation2 + $0x81] sm:$0xf]
  %s510 = scalar_lea.vmem %s4, 64
  %v511 = vld [vmem:[%s510] sm:$0xff]
  %v512 = vld [vmem:[%s510 + $0x8] sm:$0xff]
  %v513 = vld [vmem:[%s510 + $0x10] sm:$0xff]
  %v514 = vld [vmem:[%s510 + $0x18] sm:$0xff]
  %v515 = vld [vmem:[%s510 + $0x20] sm:$0xff]
  %v516 = vld [vmem:[%s510 + $0x28] sm:$0xff]
  %v517 = vld [vmem:[%s510 + $0x30] sm:$0xff]
  %v518 = vld [vmem:[%s510 + $0x38] sm:$0xff]
  %v520 = vsel %vm32, %v493, 0
  %v523 = vsel %vm32, %v494, 0
  %v526 = vsel %vm32, %v495, 0
  %v529 = vsel %vm32, %v496, 0
  %v532 = vsel %vm32, %v497, 0
  %v535 = vsel %vm32, %v498, 0
  %v538 = vsel %vm32, %v499, 0
  %v541 = vsel %vm32, %v500, 0
  %v544 = vsel %vm32, %v501, 0
  %v547 = vsel %vm32, %v502, 0
  %v550 = vsel %vm32, %v503, 0
  %v553 = vsel %vm32, %v504, 0
  %v556 = vsel %vm32, %v505, 0
  %v559 = vsel %vm32, %v506, 0
  %v562 = vsel %vm32, %v507, 0
  %v565 = vsel %vm32, %v508, 0
  %v568 = vsel %vm32, %v509, 0
  %570 = vmatpush.msra.mxu0 0.0
  %571 = vmatpush.msra.mxu0 0.0
  %572 = vmatpush.msra.mxu0 0.0
  %573 = vmatpush.msra.mxu0 0.0
  %574 = vmatpush.msra.mxu0 0.0
  %575 = vmatpush.msra.mxu0 0.0
  %576 = vmatpush.msra.mxu0 0.0
  %577 = vmatpush.msra.mxu0 0.0
  %578 = vmatpush.msra.mxu0 %v518
  %579 = vmatpush.msra.mxu0 %v517
  %580 = vmatpush.msra.mxu0 %v516
  %581 = vmatpush.msra.mxu0 %v515
  %582 = vmatpush.msra.mxu0 %v514
  %583 = vmatpush.msra.mxu0 %v513
  %584 = vmatpush.msra.mxu0 %v512
  %585 = vmatpush.msra.mxu0 %v511
  %586 = vmatmul.f32.gmra.mxu0 %v520
  %v587 = vpop.f32.mrf.mxu0
  %v588 = vadd.f32 0.0, %v587
  %589 = vmatmul.f32.gmra.mxu0 %v523
  %v590 = vpop.f32.mrf.mxu0
  %v591 = vadd.f32 0.0, %v590
  %592 = vmatmul.f32.gmra.mxu0 %v526
  %v593 = vpop.f32.mrf.mxu0
  %v594 = vadd.f32 0.0, %v593
  %595 = vmatmul.f32.gmra.mxu0 %v529
  %v596 = vpop.f32.mrf.mxu0
  %v597 = vadd.f32 0.0, %v596
  %598 = vmatmul.f32.gmra.mxu0 %v532
  %v599 = vpop.f32.mrf.mxu0
  %v600 = vadd.f32 0.0, %v599
  %601 = vmatmul.f32.gmra.mxu0 %v535
  %v602 = vpop.f32.mrf.mxu0
  %v603 = vadd.f32 0.0, %v602
  %604 = vmatmul.f32.gmra.mxu0 %v538
  %v605 = vpop.f32.mrf.mxu0
  %v606 = vadd.f32 0.0, %v605
  %607 = vmatmul.f32.gmra.mxu0 %v541
  %v608 = vpop.f32.mrf.mxu0
  %v609 = vadd.f32 0.0, %v608
  %610 = vmatmul.f32.gmra.mxu0 %v544
  %v611 = vpop.f32.mrf.mxu0
  %v612 = vadd.f32 0.0, %v611
  %613 = vmatmul.f32.gmra.mxu0 %v547
  %v614 = vpop.f32.mrf.mxu0
  %v615 = vadd.f32 0.0, %v614
  %616 = vmatmul.f32.gmra.mxu0 %v550
  %v617 = vpop.f32.mrf.mxu0
  %v618 = vadd.f32 0.0, %v617
  %619 = vmatmul.f32.gmra.mxu0 %v553
  %v620 = vpop.f32.mrf.mxu0
  %v621 = vadd.f32 0.0, %v620
  %622 = vmatmul.f32.gmra.mxu0 %v556
  %v623 = vpop.f32.mrf.mxu0
  %v624 = vadd.f32 0.0, %v623
  %625 = vmatmul.f32.gmra.mxu0 %v559
  %v626 = vpop.f32.mrf.mxu0
  %v627 = vadd.f32 0.0, %v626
  %628 = vmatmul.f32.gmra.mxu0 %v562
  %v629 = vpop.f32.mrf.mxu0
  %v630 = vadd.f32 0.0, %v629
  %631 = vmatmul.f32.gmra.mxu0 %v565
  %v632 = vpop.f32.mrf.mxu0
  %v633 = vadd.f32 0.0, %v632
  %634 = vmatmul.f32.gmra.mxu0 %v568
  %v635 = vpop.f32.mrf.mxu0
  %v636 = vadd.f32 0.0, %v635
  %637 = vdwg.mxu0
  %v638 = vadd.f32 %v443, %v588
  %v639 = vadd.f32 %v446, %v591
  %v640 = vadd.f32 %v449, %v594
  %v641 = vadd.f32 %v452, %v597
  %v642 = vadd.f32 %v455, %v600
  %v643 = vadd.f32 %v458, %v603
  %v644 = vadd.f32 %v461, %v606
  %v645 = vadd.f32 %v464, %v609
  %v646 = vadd.f32 %v467, %v612
  %v647 = vadd.f32 %v470, %v615
  %v648 = vadd.f32 %v473, %v618
  %v649 = vadd.f32 %v476, %v621
  %v650 = vadd.f32 %v479, %v624
  %v651 = vadd.f32 %v482, %v627
  %v652 = vadd.f32 %v485, %v630
  %v653 = vadd.f32 %v488, %v633
  %v654 = vadd.f32 %v491, %v636
  %v655 = vld [vmem:[%s1 + $0x1] sm:$0xff]
  %v656 = vld [vmem:[%s1 + $0x9] sm:$0xff]
  %v657 = vld [vmem:[%s1 + $0x11] sm:$0xff]
  %v658 = vld [vmem:[%s1 + $0x19] sm:$0xff]
  %v659 = vld [vmem:[%s1 + $0x21] sm:$0xff]
  %v660 = vld [vmem:[%s1 + $0x29] sm:$0xff]
  %v661 = vld [vmem:[%s1 + $0x31] sm:$0xff]
  %v662 = vld [vmem:[%s1 + $0x39] sm:$0xff]
  %v663 = vld [vmem:[%s1 + $0x41] sm:$0xff]
  %v664 = vld [vmem:[%s1 + $0x49] sm:$0xff]
  %v665 = vld [vmem:[%s1 + $0x51] sm:$0xff]
  %v666 = vld [vmem:[%s1 + $0x59] sm:$0xff]
  %v667 = vld [vmem:[%s1 + $0x61] sm:$0xff]
  %v668 = vld [vmem:[%s1 + $0x69] sm:$0xff]
  %v669 = vld [vmem:[%s1 + $0x71] sm:$0xff]
  %v670 = vld [vmem:[%s1 + $0x79] sm:$0xff]
  %v671 = vld [vmem:[%s1 + $0x81] sm:$0xf]
  %s672 = scalar_lea.vmem %s5, 64
  %v673 = vld [vmem:[%s672] sm:$0xff]
  %v674 = vld [vmem:[%s672 + $0x8] sm:$0xff]
  %v675 = vld [vmem:[%s672 + $0x10] sm:$0xff]
  %v676 = vld [vmem:[%s672 + $0x18] sm:$0xff]
  %v677 = vld [vmem:[%s672 + $0x20] sm:$0xff]
  %v678 = vld [vmem:[%s672 + $0x28] sm:$0xff]
  %v679 = vld [vmem:[%s672 + $0x30] sm:$0xff]
  %v680 = vld [vmem:[%s672 + $0x38] sm:$0xff]
  %v682 = vsel %vm32, %v655, 0
  %v685 = vsel %vm32, %v656, 0
  %v688 = vsel %vm32, %v657, 0
  %v691 = vsel %vm32, %v658, 0
  %v694 = vsel %vm32, %v659, 0
  %v697 = vsel %vm32, %v660, 0
  %v700 = vsel %vm32, %v661, 0
  %v703 = vsel %vm32, %v662, 0
  %v706 = vsel %vm32, %v663, 0
  %v709 = vsel %vm32, %v664, 0
  %v712 = vsel %vm32, %v665, 0
  %v715 = vsel %vm32, %v666, 0
  %v718 = vsel %vm32, %v667, 0
  %v721 = vsel %vm32, %v668, 0
  %v724 = vsel %vm32, %v669, 0
  %v727 = vsel %vm32, %v670, 0
  %v730 = vsel %vm32, %v671, 0
  %732 = vmatpush.msra.mxu0 0.0
  %733 = vmatpush.msra.mxu0 0.0
  %734 = vmatpush.msra.mxu0 0.0
  %735 = vmatpush.msra.mxu0 0.0
  %736 = vmatpush.msra.mxu0 0.0
  %737 = vmatpush.msra.mxu0 0.0
  %738 = vmatpush.msra.mxu0 0.0
  %739 = vmatpush.msra.mxu0 0.0
  %740 = vmatpush.msra.mxu0 %v680
  %741 = vmatpush.msra.mxu0 %v679
  %742 = vmatpush.msra.mxu0 %v678
  %743 = vmatpush.msra.mxu0 %v677
  %744 = vmatpush.msra.mxu0 %v676
  %745 = vmatpush.msra.mxu0 %v675
  %746 = vmatpush.msra.mxu0 %v674
  %747 = vmatpush.msra.mxu0 %v673
  %748 = vmatmul.f32.gmra.mxu0 %v682
  %v749 = vpop.f32.mrf.mxu0
  %v750 = vadd.f32 0.0, %v749
  %751 = vmatmul.f32.gmra.mxu0 %v685
  %v752 = vpop.f32.mrf.mxu0
  %v753 = vadd.f32 0.0, %v752
  %754 = vmatmul.f32.gmra.mxu0 %v688
  %v755 = vpop.f32.mrf.mxu0
  %v756 = vadd.f32 0.0, %v755
  %757 = vmatmul.f32.gmra.mxu0 %v691
  %v758 = vpop.f32.mrf.mxu0
  %v759 = vadd.f32 0.0, %v758
  %760 = vmatmul.f32.gmra.mxu0 %v694
  %v761 = vpop.f32.mrf.mxu0
  %v762 = vadd.f32 0.0, %v761
  %763 = vmatmul.f32.gmra.mxu0 %v697
  %v764 = vpop.f32.mrf.mxu0
  %v765 = vadd.f32 0.0, %v764
  %766 = vmatmul.f32.gmra.mxu0 %v700
  %v767 = vpop.f32.mrf.mxu0
  %v768 = vadd.f32 0.0, %v767
  %769 = vmatmul.f32.gmra.mxu0 %v703
  %v770 = vpop.f32.mrf.mxu0
  %v771 = vadd.f32 0.0, %v770
  %772 = vmatmul.f32.gmra.mxu0 %v706
  %v773 = vpop.f32.mrf.mxu0
  %v774 = vadd.f32 0.0, %v773
  %775 = vmatmul.f32.gmra.mxu0 %v709
  %v776 = vpop.f32.mrf.mxu0
  %v777 = vadd.f32 0.0, %v776
  %778 = vmatmul.f32.gmra.mxu0 %v712
  %v779 = vpop.f32.mrf.mxu0
  %v780 = vadd.f32 0.0, %v779
  %781 = vmatmul.f32.gmra.mxu0 %v715
  %v782 = vpop.f32.mrf.mxu0
  %v783 = vadd.f32 0.0, %v782
  %784 = vmatmul.f32.gmra.mxu0 %v718
  %v785 = vpop.f32.mrf.mxu0
  %v786 = vadd.f32 0.0, %v785
  %787 = vmatmul.f32.gmra.mxu0 %v721
  %v788 = vpop.f32.mrf.mxu0
  %v789 = vadd.f32 0.0, %v788
  %790 = vmatmul.f32.gmra.mxu0 %v724
  %v791 = vpop.f32.mrf.mxu0
  %v792 = vadd.f32 0.0, %v791
  %793 = vmatmul.f32.gmra.mxu0 %v727
  %v794 = vpop.f32.mrf.mxu0
  %v795 = vadd.f32 0.0, %v794
  %796 = vmatmul.f32.gmra.mxu0 %v730
  %v797 = vpop.f32.mrf.mxu0
  %v798 = vadd.f32 0.0, %v797
  %799 = vdwg.mxu0
  %v800 = vadd.f32 %v638, %v750
  %v801 = vadd.f32 %v639, %v753
  %v802 = vadd.f32 %v640, %v756
  %v803 = vadd.f32 %v641, %v759
  %v804 = vadd.f32 %v642, %v762
  %v805 = vadd.f32 %v643, %v765
  %v806 = vadd.f32 %v644, %v768
  %v807 = vadd.f32 %v645, %v771
  %v808 = vadd.f32 %v646, %v774
  %v809 = vadd.f32 %v647, %v777
  %v810 = vadd.f32 %v648, %v780
  %v811 = vadd.f32 %v649, %v783
  %v812 = vadd.f32 %v650, %v786
  %v813 = vadd.f32 %v651, %v789
  %v814 = vadd.f32 %v652, %v792
  %v815 = vadd.f32 %v653, %v795
  %v816 = vadd.f32 %v654, %v798
  %v817 = vld [vmem:[#allocation2 + $0xc] sm:$0xff]
  %v818 = vld [vmem:[#allocation2 + $0x14] sm:$0xff]
  %v819 = vld [vmem:[#allocation2 + $0x1c] sm:$0xff]
  %v820 = vld [vmem:[#allocation2 + $0x24] sm:$0xff]
  %v821 = vld [vmem:[#allocation2 + $0x2c] sm:$0xff]
  %v822 = vld [vmem:[#allocation2 + $0x34] sm:$0xff]
  %v823 = vld [vmem:[#allocation2 + $0x3c] sm:$0xff]
  %v824 = vld [vmem:[#allocation2 + $0x44] sm:$0xff]
  %v825 = vld [vmem:[#allocation2 + $0x4c] sm:$0xff]
  %v826 = vld [vmem:[#allocation2 + $0x54] sm:$0xff]
  %v827 = vld [vmem:[#allocation2 + $0x5c] sm:$0xff]
  %v828 = vld [vmem:[#allocation2 + $0x64] sm:$0xff]
  %v829 = vld [vmem:[#allocation2 + $0x6c] sm:$0xff]
  %v830 = vld [vmem:[#allocation2 + $0x74] sm:$0xff]
  %v831 = vld [vmem:[#allocation2 + $0x7c] sm:$0xff]
  %v832 = vld [vmem:[#allocation2 + $0x84] sm:$0xff]
  %v833 = vld [vmem:[#allocation2 + $0x8c] sm:$0xf]
  %s834 = scalar_lea.vmem %s4, 128
  %v835 = vld [vmem:[%s834] sm:$0xff]
  %v836 = vld [vmem:[%s834 + $0x8] sm:$0xff]
  %v837 = vld [vmem:[%s834 + $0x10] sm:$0xff]
  %v838 = vld [vmem:[%s834 + $0x18] sm:$0xff]
  %v839 = vld [vmem:[%s834 + $0x20] sm:$0xff]
  %v840 = vld [vmem:[%s834 + $0x28] sm:$0xff]
  %v841 = vld [vmem:[%s834 + $0x30] sm:$0xff]
  %v842 = vld [vmem:[%s834 + $0x38] sm:$0xff]
  %v844 = vsel %vm32, %v817, 0
  %v847 = vsel %vm32, %v818, 0
  %v850 = vsel %vm32, %v819, 0
  %v853 = vsel %vm32, %v820, 0
  %v856 = vsel %vm32, %v821, 0
  %v859 = vsel %vm32, %v822, 0
  %v862 = vsel %vm32, %v823, 0
  %v865 = vsel %vm32, %v824, 0
  %v868 = vsel %vm32, %v825, 0
  %v871 = vsel %vm32, %v826, 0
  %v874 = vsel %vm32, %v827, 0
  %v877 = vsel %vm32, %v828, 0
  %v880 = vsel %vm32, %v829, 0
  %v883 = vsel %vm32, %v830, 0
  %v886 = vsel %vm32, %v831, 0
  %v889 = vsel %vm32, %v832, 0
  %v892 = vsel %vm32, %v833, 0
  %894 = vmatpush.msra.mxu0 0.0
  %895 = vmatpush.msra.mxu0 0.0
  %896 = vmatpush.msra.mxu0 0.0
  %897 = vmatpush.msra.mxu0 0.0
  %898 = vmatpush.msra.mxu0 0.0
  %899 = vmatpush.msra.mxu0 0.0
  %900 = vmatpush.msra.mxu0 0.0
  %901 = vmatpush.msra.mxu0 0.0
  %902 = vmatpush.msra.mxu0 %v842
  %903 = vmatpush.msra.mxu0 %v841
  %904 = vmatpush.msra.mxu0 %v840
  %905 = vmatpush.msra.mxu0 %v839
  %906 = vmatpush.msra.mxu0 %v838
  %907 = vmatpush.msra.mxu0 %v837
  %908 = vmatpush.msra.mxu0 %v836
  %909 = vmatpush.msra.mxu0 %v835
  %910 = vmatmul.f32.gmra.mxu0 %v844
  %v911 = vpop.f32.mrf.mxu0
  %v912 = vadd.f32 0.0, %v911
  %913 = vmatmul.f32.gmra.mxu0 %v847
  %v914 = vpop.f32.mrf.mxu0
  %v915 = vadd.f32 0.0, %v914
  %916 = vmatmul.f32.gmra.mxu0 %v850
  %v917 = vpop.f32.mrf.mxu0
  %v918 = vadd.f32 0.0, %v917
  %919 = vmatmul.f32.gmra.mxu0 %v853
  %v920 = vpop.f32.mrf.mxu0
  %v921 = vadd.f32 0.0, %v920
  %922 = vmatmul.f32.gmra.mxu0 %v856
  %v923 = vpop.f32.mrf.mxu0
  %v924 = vadd.f32 0.0, %v923
  %925 = vmatmul.f32.gmra.mxu0 %v859
  %v926 = vpop.f32.mrf.mxu0
  %v927 = vadd.f32 0.0, %v926
  %928 = vmatmul.f32.gmra.mxu0 %v862
  %v929 = vpop.f32.mrf.mxu0
  %v930 = vadd.f32 0.0, %v929
  %931 = vmatmul.f32.gmra.mxu0 %v865
  %v932 = vpop.f32.mrf.mxu0
  %v933 = vadd.f32 0.0, %v932
  %934 = vmatmul.f32.gmra.mxu0 %v868
  %v935 = vpop.f32.mrf.mxu0
  %v936 = vadd.f32 0.0, %v935
  %937 = vmatmul.f32.gmra.mxu0 %v871
  %v938 = vpop.f32.mrf.mxu0
  %v939 = vadd.f32 0.0, %v938
  %940 = vmatmul.f32.gmra.mxu0 %v874
  %v941 = vpop.f32.mrf.mxu0
  %v942 = vadd.f32 0.0, %v941
  %943 = vmatmul.f32.gmra.mxu0 %v877
  %v944 = vpop.f32.mrf.mxu0
  %v945 = vadd.f32 0.0, %v944
  %946 = vmatmul.f32.gmra.mxu0 %v880
  %v947 = vpop.f32.mrf.mxu0
  %v948 = vadd.f32 0.0, %v947
  %949 = vmatmul.f32.gmra.mxu0 %v883
  %v950 = vpop.f32.mrf.mxu0
  %v951 = vadd.f32 0.0, %v950
  %952 = vmatmul.f32.gmra.mxu0 %v886
  %v953 = vpop.f32.mrf.mxu0
  %v954 = vadd.f32 0.0, %v953
  %955 = vmatmul.f32.gmra.mxu0 %v889
  %v956 = vpop.f32.mrf.mxu0
  %v957 = vadd.f32 0.0, %v956
  %958 = vmatmul.f32.gmra.mxu0 %v892
  %v959 = vpop.f32.mrf.mxu0
  %v960 = vadd.f32 0.0, %v959
  %961 = vdwg.mxu0
  %v962 = vadd.f32 %v800, %v912
  %v963 = vadd.f32 %v801, %v915
  %v964 = vadd.f32 %v802, %v918
  %v965 = vadd.f32 %v803, %v921
  %v966 = vadd.f32 %v804, %v924
  %v967 = vadd.f32 %v805, %v927
  %v968 = vadd.f32 %v806, %v930
  %v969 = vadd.f32 %v807, %v933
  %v970 = vadd.f32 %v808, %v936
  %v971 = vadd.f32 %v809, %v939
  %v972 = vadd.f32 %v810, %v942
  %v973 = vadd.f32 %v811, %v945
  %v974 = vadd.f32 %v812, %v948
  %v975 = vadd.f32 %v813, %v951
  %v976 = vadd.f32 %v814, %v954
  %v977 = vadd.f32 %v815, %v957
  %v978 = vadd.f32 %v816, %v960
  %v979 = vld [vmem:[%s1 + $0xc] sm:$0xff]
  %v980 = vld [vmem:[%s1 + $0x14] sm:$0xff]
  %v981 = vld [vmem:[%s1 + $0x1c] sm:$0xff]
  %v982 = vld [vmem:[%s1 + $0x24] sm:$0xff]
  %v983 = vld [vmem:[%s1 + $0x2c] sm:$0xff]
  %v984 = vld [vmem:[%s1 + $0x34] sm:$0xff]
  %v985 = vld [vmem:[%s1 + $0x3c] sm:$0xff]
  %v986 = vld [vmem:[%s1 + $0x44] sm:$0xff]
  %v987 = vld [vmem:[%s1 + $0x4c] sm:$0xff]
  %v988 = vld [vmem:[%s1 + $0x54] sm:$0xff]
  %v989 = vld [vmem:[%s1 + $0x5c] sm:$0xff]
  %v990 = vld [vmem:[%s1 + $0x64] sm:$0xff]
  %v991 = vld [vmem:[%s1 + $0x6c] sm:$0xff]
  %v992 = vld [vmem:[%s1 + $0x74] sm:$0xff]
  %v993 = vld [vmem:[%s1 + $0x7c] sm:$0xff]
  %v994 = vld [vmem:[%s1 + $0x84] sm:$0xff]
  %v995 = vld [vmem:[%s1 + $0x8c] sm:$0xf]
  %s996 = scalar_lea.vmem %s5, 128
  %v997 = vld [vmem:[%s996] sm:$0xff]
  %v998 = vld [vmem:[%s996 + $0x8] sm:$0xff]
  %v999 = vld [vmem:[%s996 + $0x10] sm:$0xff]
  %v1000 = vld [vmem:[%s996 + $0x18] sm:$0xff]
  %v1001 = vld [vmem:[%s996 + $0x20] sm:$0xff]
  %v1002 = vld [vmem:[%s996 + $0x28] sm:$0xff]
  %v1003 = vld [vmem:[%s996 + $0x30] sm:$0xff]
  %v1004 = vld [vmem:[%s996 + $0x38] sm:$0xff]
  %v1006 = vsel %vm32, %v979, 0
  %v1009 = vsel %vm32, %v980, 0
  %v1012 = vsel %vm32, %v981, 0
  %v1015 = vsel %vm32, %v982, 0
  %v1018 = vsel %vm32, %v983, 0
  %v1021 = vsel %vm32, %v984, 0
  %v1024 = vsel %vm32, %v985, 0
  %v1027 = vsel %vm32, %v986, 0
  %v1030 = vsel %vm32, %v987, 0
  %v1033 = vsel %vm32, %v988, 0
  %v1036 = vsel %vm32, %v989, 0
  %v1039 = vsel %vm32, %v990, 0
  %v1042 = vsel %vm32, %v991, 0
  %v1045 = vsel %vm32, %v992, 0
  %v1048 = vsel %vm32, %v993, 0
  %v1051 = vsel %vm32, %v994, 0
  %v1054 = vsel %vm32, %v995, 0
  %1056 = vmatpush.msra.mxu0 0.0
  %1057 = vmatpush.msra.mxu0 0.0
  %1058 = vmatpush.msra.mxu0 0.0
  %1059 = vmatpush.msra.mxu0 0.0
  %1060 = vmatpush.msra.mxu0 0.0
  %1061 = vmatpush.msra.mxu0 0.0
  %1062 = vmatpush.msra.mxu0 0.0
  %1063 = vmatpush.msra.mxu0 0.0
  %1064 = vmatpush.msra.mxu0 %v1004
  %1065 = vmatpush.msra.mxu0 %v1003
  %1066 = vmatpush.msra.mxu0 %v1002
  %1067 = vmatpush.msra.mxu0 %v1001
  %1068 = vmatpush.msra.mxu0 %v1000
  %1069 = vmatpush.msra.mxu0 %v999
  %1070 = vmatpush.msra.mxu0 %v998
  %1071 = vmatpush.msra.mxu0 %v997
  %1072 = vmatmul.f32.gmra.mxu0 %v1006
  %v1073 = vpop.f32.mrf.mxu0
  %v1074 = vadd.f32 0.0, %v1073
  %1075 = vmatmul.f32.gmra.mxu0 %v1009
  %v1076 = vpop.f32.mrf.mxu0
  %v1077 = vadd.f32 0.0, %v1076
  %1078 = vmatmul.f32.gmra.mxu0 %v1012
  %v1079 = vpop.f32.mrf.mxu0
  %v1080 = vadd.f32 0.0, %v1079
  %1081 = vmatmul.f32.gmra.mxu0 %v1015
  %v1082 = vpop.f32.mrf.mxu0
  %v1083 = vadd.f32 0.0, %v1082
  %1084 = vmatmul.f32.gmra.mxu0 %v1018
  %v1085 = vpop.f32.mrf.mxu0
  %v1086 = vadd.f32 0.0, %v1085
  %1087 = vmatmul.f32.gmra.mxu0 %v1021
  %v1088 = vpop.f32.mrf.mxu0
  %v1089 = vadd.f32 0.0, %v1088
  %1090 = vmatmul.f32.gmra.mxu0 %v1024
  %v1091 = vpop.f32.mrf.mxu0
  %v1092 = vadd.f32 0.0, %v1091
  %1093 = vmatmul.f32.gmra.mxu0 %v1027
  %v1094 = vpop.f32.mrf.mxu0
  %v1095 = vadd.f32 0.0, %v1094
  %1096 = vmatmul.f32.gmra.mxu0 %v1030
  %v1097 = vpop.f32.mrf.mxu0
  %v1098 = vadd.f32 0.0, %v1097
  %1099 = vmatmul.f32.gmra.mxu0 %v1033
  %v1100 = vpop.f32.mrf.mxu0
  %v1101 = vadd.f32 0.0, %v1100
  %1102 = vmatmul.f32.gmra.mxu0 %v1036
  %v1103 = vpop.f32.mrf.mxu0
  %v1104 = vadd.f32 0.0, %v1103
  %1105 = vmatmul.f32.gmra.mxu0 %v1039
  %v1106 = vpop.f32.mrf.mxu0
  %v1107 = vadd.f32 0.0, %v1106
  %1108 = vmatmul.f32.gmra.mxu0 %v1042
  %v1109 = vpop.f32.mrf.mxu0
  %v1110 = vadd.f32 0.0, %v1109
  %1111 = vmatmul.f32.gmra.mxu0 %v1045
  %v1112 = vpop.f32.mrf.mxu0
  %v1113 = vadd.f32 0.0, %v1112
  %1114 = vmatmul.f32.gmra.mxu0 %v1048
  %v1115 = vpop.f32.mrf.mxu0
  %v1116 = vadd.f32 0.0, %v1115
  %1117 = vmatmul.f32.gmra.mxu0 %v1051
  %v1118 = vpop.f32.mrf.mxu0
  %v1119 = vadd.f32 0.0, %v1118
  %1120 = vmatmul.f32.gmra.mxu0 %v1054
  %v1121 = vpop.f32.mrf.mxu0
  %v1122 = vadd.f32 0.0, %v1121
  %1123 = vdwg.mxu0
  %v1124 = vadd.f32 %v962, %v1074
  %v1125 = vadd.f32 %v963, %v1077
  %v1126 = vadd.f32 %v964, %v1080
  %v1127 = vadd.f32 %v965, %v1083
  %v1128 = vadd.f32 %v966, %v1086
  %v1129 = vadd.f32 %v967, %v1089
  %v1130 = vadd.f32 %v968, %v1092
  %v1131 = vadd.f32 %v969, %v1095
  %v1132 = vadd.f32 %v970, %v1098
  %v1133 = vadd.f32 %v971, %v1101
  %v1134 = vadd.f32 %v972, %v1104
  %v1135 = vadd.f32 %v973, %v1107
  %v1136 = vadd.f32 %v974, %v1110
  %v1137 = vadd.f32 %v975, %v1113
  %v1138 = vadd.f32 %v976, %v1116
  %v1139 = vadd.f32 %v977, %v1119
  %v1140 = vadd.f32 %v978, %v1122
  %v1141 = vld [vmem:[#allocation2 + $0xd] sm:$0xff]
  %v1142 = vld [vmem:[#allocation2 + $0x15] sm:$0xff]
  %v1143 = vld [vmem:[#allocation2 + $0x1d] sm:$0xff]
  %v1144 = vld [vmem:[#allocation2 + $0x25] sm:$0xff]
  %v1145 = vld [vmem:[#allocation2 + $0x2d] sm:$0xff]
  %v1146 = vld [vmem:[#allocation2 + $0x35] sm:$0xff]
  %v1147 = vld [vmem:[#allocation2 + $0x3d] sm:$0xff]
  %v1148 = vld [vmem:[#allocation2 + $0x45] sm:$0xff]
  %v1149 = vld [vmem:[#allocation2 + $0x4d] sm:$0xff]
  %v1150 = vld [vmem:[#allocation2 + $0x55] sm:$0xff]
  %v1151 = vld [vmem:[#allocation2 + $0x5d] sm:$0xff]
  %v1152 = vld [vmem:[#allocation2 + $0x65] sm:$0xff]
  %v1153 = vld [vmem:[#allocation2 + $0x6d] sm:$0xff]
  %v1154 = vld [vmem:[#allocation2 + $0x75] sm:$0xff]
  %v1155 = vld [vmem:[#allocation2 + $0x7d] sm:$0xff]
  %v1156 = vld [vmem:[#allocation2 + $0x85] sm:$0xff]
  %v1157 = vld [vmem:[#allocation2 + $0x8d] sm:$0xf]
  %s1158 = scalar_lea.vmem %s4, 192
  %v1159 = vld [vmem:[%s1158] sm:$0xff]
  %v1160 = vld [vmem:[%s1158 + $0x8] sm:$0xff]
  %v1161 = vld [vmem:[%s1158 + $0x10] sm:$0xff]
  %v1162 = vld [vmem:[%s1158 + $0x18] sm:$0xff]
  %v1163 = vld [vmem:[%s1158 + $0x20] sm:$0xff]
  %v1164 = vld [vmem:[%s1158 + $0x28] sm:$0xff]
  %v1165 = vld [vmem:[%s1158 + $0x30] sm:$0xff]
  %v1166 = vld [vmem:[%s1158 + $0x38] sm:$0xff]
  %v1168 = vsel %vm32, %v1141, 0
  %v1171 = vsel %vm32, %v1142, 0
  %v1174 = vsel %vm32, %v1143, 0
  %v1177 = vsel %vm32, %v1144, 0
  %v1180 = vsel %vm32, %v1145, 0
  %v1183 = vsel %vm32, %v1146, 0
  %v1186 = vsel %vm32, %v1147, 0
  %v1189 = vsel %vm32, %v1148, 0
  %v1192 = vsel %vm32, %v1149, 0
  %v1195 = vsel %vm32, %v1150, 0
  %v1198 = vsel %vm32, %v1151, 0
  %v1201 = vsel %vm32, %v1152, 0
  %v1204 = vsel %vm32, %v1153, 0
  %v1207 = vsel %vm32, %v1154, 0
  %v1210 = vsel %vm32, %v1155, 0
  %v1213 = vsel %vm32, %v1156, 0
  %v1216 = vsel %vm32, %v1157, 0
  %1218 = vmatpush.msra.mxu0 0.0
  %1219 = vmatpush.msra.mxu0 0.0
  %1220 = vmatpush.msra.mxu0 0.0
  %1221 = vmatpush.msra.mxu0 0.0
  %1222 = vmatpush.msra.mxu0 0.0
  %1223 = vmatpush.msra.mxu0 0.0
  %1224 = vmatpush.msra.mxu0 0.0
  %1225 = vmatpush.msra.mxu0 0.0
  %1226 = vmatpush.msra.mxu0 %v1166
  %1227 = vmatpush.msra.mxu0 %v1165
  %1228 = vmatpush.msra.mxu0 %v1164
  %1229 = vmatpush.msra.mxu0 %v1163
  %1230 = vmatpush.msra.mxu0 %v1162
  %1231 = vmatpush.msra.mxu0 %v1161
  %1232 = vmatpush.msra.mxu0 %v1160
  %1233 = vmatpush.msra.mxu0 %v1159
  %1234 = vmatmul.f32.gmra.mxu0 %v1168
  %v1235 = vpop.f32.mrf.mxu0
  %v1236 = vadd.f32 0.0, %v1235
  %1237 = vmatmul.f32.gmra.mxu0 %v1171
  %v1238 = vpop.f32.mrf.mxu0
  %v1239 = vadd.f32 0.0, %v1238
  %1240 = vmatmul.f32.gmra.mxu0 %v1174
  %v1241 = vpop.f32.mrf.mxu0
  %v1242 = vadd.f32 0.0, %v1241
  %1243 = vmatmul.f32.gmra.mxu0 %v1177
  %v1244 = vpop.f32.mrf.mxu0
  %v1245 = vadd.f32 0.0, %v1244
  %1246 = vmatmul.f32.gmra.mxu0 %v1180
  %v1247 = vpop.f32.mrf.mxu0
  %v1248 = vadd.f32 0.0, %v1247
  %1249 = vmatmul.f32.gmra.mxu0 %v1183
  %v1250 = vpop.f32.mrf.mxu0
  %v1251 = vadd.f32 0.0, %v1250
  %1252 = vmatmul.f32.gmra.mxu0 %v1186
  %v1253 = vpop.f32.mrf.mxu0
  %v1254 = vadd.f32 0.0, %v1253
  %1255 = vmatmul.f32.gmra.mxu0 %v1189
  %v1256 = vpop.f32.mrf.mxu0
  %v1257 = vadd.f32 0.0, %v1256
  %1258 = vmatmul.f32.gmra.mxu0 %v1192
  %v1259 = vpop.f32.mrf.mxu0
  %v1260 = vadd.f32 0.0, %v1259
  %1261 = vmatmul.f32.gmra.mxu0 %v1195
  %v1262 = vpop.f32.mrf.mxu0
  %v1263 = vadd.f32 0.0, %v1262
  %1264 = vmatmul.f32.gmra.mxu0 %v1198
  %v1265 = vpop.f32.mrf.mxu0
  %v1266 = vadd.f32 0.0, %v1265
  %1267 = vmatmul.f32.gmra.mxu0 %v1201
  %v1268 = vpop.f32.mrf.mxu0
  %v1269 = vadd.f32 0.0, %v1268
  %1270 = vmatmul.f32.gmra.mxu0 %v1204
  %v1271 = vpop.f32.mrf.mxu0
  %v1272 = vadd.f32 0.0, %v1271
  %1273 = vmatmul.f32.gmra.mxu0 %v1207
  %v1274 = vpop.f32.mrf.mxu0
  %v1275 = vadd.f32 0.0, %v1274
  %1276 = vmatmul.f32.gmra.mxu0 %v1210
  %v1277 = vpop.f32.mrf.mxu0
  %v1278 = vadd.f32 0.0, %v1277
  %1279 = vmatmul.f32.gmra.mxu0 %v1213
  %v1280 = vpop.f32.mrf.mxu0
  %v1281 = vadd.f32 0.0, %v1280
  %1282 = vmatmul.f32.gmra.mxu0 %v1216
  %v1283 = vpop.f32.mrf.mxu0
  %v1284 = vadd.f32 0.0, %v1283
  %1285 = vdwg.mxu0
  %v1286 = vadd.f32 %v1124, %v1236
  %v1287 = vadd.f32 %v1125, %v1239
  %v1288 = vadd.f32 %v1126, %v1242
  %v1289 = vadd.f32 %v1127, %v1245
  %v1290 = vadd.f32 %v1128, %v1248
  %v1291 = vadd.f32 %v1129, %v1251
  %v1292 = vadd.f32 %v1130, %v1254
  %v1293 = vadd.f32 %v1131, %v1257
  %v1294 = vadd.f32 %v1132, %v1260
  %v1295 = vadd.f32 %v1133, %v1263
  %v1296 = vadd.f32 %v1134, %v1266
  %v1297 = vadd.f32 %v1135, %v1269
  %v1298 = vadd.f32 %v1136, %v1272
  %v1299 = vadd.f32 %v1137, %v1275
  %v1300 = vadd.f32 %v1138, %v1278
  %v1301 = vadd.f32 %v1139, %v1281
  %v1302 = vadd.f32 %v1140, %v1284
  %v1303 = vld [vmem:[%s1 + $0xd] sm:$0xff]
  %v1304 = vld [vmem:[%s1 + $0x15] sm:$0xff]
  %v1305 = vld [vmem:[%s1 + $0x1d] sm:$0xff]
  %v1306 = vld [vmem:[%s1 + $0x25] sm:$0xff]
  %v1307 = vld [vmem:[%s1 + $0x2d] sm:$0xff]
  %v1308 = vld [vmem:[%s1 + $0x35] sm:$0xff]
  %v1309 = vld [vmem:[%s1 + $0x3d] sm:$0xff]
  %v1310 = vld [vmem:[%s1 + $0x45] sm:$0xff]
  %v1311 = vld [vmem:[%s1 + $0x4d] sm:$0xff]
  %v1312 = vld [vmem:[%s1 + $0x55] sm:$0xff]
  %v1313 = vld [vmem:[%s1 + $0x5d] sm:$0xff]
  %v1314 = vld [vmem:[%s1 + $0x65] sm:$0xff]
  %v1315 = vld [vmem:[%s1 + $0x6d] sm:$0xff]
  %v1316 = vld [vmem:[%s1 + $0x75] sm:$0xff]
  %v1317 = vld [vmem:[%s1 + $0x7d] sm:$0xff]
  %v1318 = vld [vmem:[%s1 + $0x85] sm:$0xff]
  %v1319 = vld [vmem:[%s1 + $0x8d] sm:$0xf]
  %s1320 = scalar_lea.vmem %s5, 192
  %v1321 = vld [vmem:[%s1320] sm:$0xff]
  %v1322 = vld [vmem:[%s1320 + $0x8] sm:$0xff]
  %v1323 = vld [vmem:[%s1320 + $0x10] sm:$0xff]
  %v1324 = vld [vmem:[%s1320 + $0x18] sm:$0xff]
  %v1325 = vld [vmem:[%s1320 + $0x20] sm:$0xff]
  %v1326 = vld [vmem:[%s1320 + $0x28] sm:$0xff]
  %v1327 = vld [vmem:[%s1320 + $0x30] sm:$0xff]
  %v1328 = vld [vmem:[%s1320 + $0x38] sm:$0xff]
  %v1330 = vsel %vm32, %v1303, 0
  %v1333 = vsel %vm32, %v1304, 0
  %v1336 = vsel %vm32, %v1305, 0
  %v1339 = vsel %vm32, %v1306, 0
  %v1342 = vsel %vm32, %v1307, 0
  %v1345 = vsel %vm32, %v1308, 0
  %v1348 = vsel %vm32, %v1309, 0
  %v1351 = vsel %vm32, %v1310, 0
  %v1354 = vsel %vm32, %v1311, 0
  %v1357 = vsel %vm32, %v1312, 0
  %v1360 = vsel %vm32, %v1313, 0
  %v1363 = vsel %vm32, %v1314, 0
  %v1366 = vsel %vm32, %v1315, 0
  %v1369 = vsel %vm32, %v1316, 0
  %v1372 = vsel %vm32, %v1317, 0
  %v1375 = vsel %vm32, %v1318, 0
  %v1378 = vsel %vm32, %v1319, 0
  %1380 = vmatpush.msra.mxu0 0.0
  %1381 = vmatpush.msra.mxu0 0.0
  %1382 = vmatpush.msra.mxu0 0.0
  %1383 = vmatpush.msra.mxu0 0.0
  %1384 = vmatpush.msra.mxu0 0.0
  %1385 = vmatpush.msra.mxu0 0.0
  %1386 = vmatpush.msra.mxu0 0.0
  %1387 = vmatpush.msra.mxu0 0.0
  %1388 = vmatpush.msra.mxu0 %v1328
  %1389 = vmatpush.msra.mxu0 %v1327
  %1390 = vmatpush.msra.mxu0 %v1326
  %1391 = vmatpush.msra.mxu0 %v1325
  %1392 = vmatpush.msra.mxu0 %v1324
  %1393 = vmatpush.msra.mxu0 %v1323
  %1394 = vmatpush.msra.mxu0 %v1322
  %1395 = vmatpush.msra.mxu0 %v1321
  %1396 = vmatmul.f32.gmra.mxu0 %v1330
  %v1397 = vpop.f32.mrf.mxu0
  %v1398 = vadd.f32 0.0, %v1397
  %1399 = vmatmul.f32.gmra.mxu0 %v1333
  %v1400 = vpop.f32.mrf.mxu0
  %v1401 = vadd.f32 0.0, %v1400
  %1402 = vmatmul.f32.gmra.mxu0 %v1336
  %v1403 = vpop.f32.mrf.mxu0
  %v1404 = vadd.f32 0.0, %v1403
  %1405 = vmatmul.f32.gmra.mxu0 %v1339
  %v1406 = vpop.f32.mrf.mxu0
  %v1407 = vadd.f32 0.0, %v1406
  %1408 = vmatmul.f32.gmra.mxu0 %v1342
  %v1409 = vpop.f32.mrf.mxu0
  %v1410 = vadd.f32 0.0, %v1409
  %1411 = vmatmul.f32.gmra.mxu0 %v1345
  %v1412 = vpop.f32.mrf.mxu0
  %v1413 = vadd.f32 0.0, %v1412
  %1414 = vmatmul.f32.gmra.mxu0 %v1348
  %v1415 = vpop.f32.mrf.mxu0
  %v1416 = vadd.f32 0.0, %v1415
  %1417 = vmatmul.f32.gmra.mxu0 %v1351
  %v1418 = vpop.f32.mrf.mxu0
  %v1419 = vadd.f32 0.0, %v1418
  %1420 = vmatmul.f32.gmra.mxu0 %v1354
  %v1421 = vpop.f32.mrf.mxu0
  %v1422 = vadd.f32 0.0, %v1421
  %1423 = vmatmul.f32.gmra.mxu0 %v1357
  %v1424 = vpop.f32.mrf.mxu0
  %v1425 = vadd.f32 0.0, %v1424
  %1426 = vmatmul.f32.gmra.mxu0 %v1360
  %v1427 = vpop.f32.mrf.mxu0
  %v1428 = vadd.f32 0.0, %v1427
  %1429 = vmatmul.f32.gmra.mxu0 %v1363
  %v1430 = vpop.f32.mrf.mxu0
  %v1431 = vadd.f32 0.0, %v1430
  %1432 = vmatmul.f32.gmra.mxu0 %v1366
  %v1433 = vpop.f32.mrf.mxu0
  %v1434 = vadd.f32 0.0, %v1433
  %1435 = vmatmul.f32.gmra.mxu0 %v1369
  %v1436 = vpop.f32.mrf.mxu0
  %v1437 = vadd.f32 0.0, %v1436
  %1438 = vmatmul.f32.gmra.mxu0 %v1372
  %v1439 = vpop.f32.mrf.mxu0
  %v1440 = vadd.f32 0.0, %v1439
  %1441 = vmatmul.f32.gmra.mxu0 %v1375
  %v1442 = vpop.f32.mrf.mxu0
  %v1443 = vadd.f32 0.0, %v1442
  %1444 = vmatmul.f32.gmra.mxu0 %v1378
  %v1445 = vpop.f32.mrf.mxu0
  %v1446 = vadd.f32 0.0, %v1445
  %1447 = vdwg.mxu0
  %v1448 = vadd.f32 %v1286, %v1398
  %v1449 = vadd.f32 %v1287, %v1401
  %v1450 = vadd.f32 %v1288, %v1404
  %v1451 = vadd.f32 %v1289, %v1407
  %v1452 = vadd.f32 %v1290, %v1410
  %v1453 = vadd.f32 %v1291, %v1413
  %v1454 = vadd.f32 %v1292, %v1416
  %v1455 = vadd.f32 %v1293, %v1419
  %v1456 = vadd.f32 %v1294, %v1422
  %v1457 = vadd.f32 %v1295, %v1425
  %v1458 = vadd.f32 %v1296, %v1428
  %v1459 = vadd.f32 %v1297, %v1431
  %v1460 = vadd.f32 %v1298, %v1434
  %v1461 = vadd.f32 %v1299, %v1437
  %v1462 = vadd.f32 %v1300, %v1440
  %v1463 = vadd.f32 %v1301, %v1443
  %v1464 = vadd.f32 %v1302, %v1446
  %v1465 = vld [vmem:[%s6] sm:$0x1]
  %v1467 = vperm.slane %v1465, 0
  %v1469 = vadd.f32 %v1448, %v1467
  %v1470 = vadd.f32 %v1449, %v1467
  %v1471 = vadd.f32 %v1450, %v1467
  %v1472 = vadd.f32 %v1451, %v1467
  %v1473 = vadd.f32 %v1452, %v1467
  %v1474 = vadd.f32 %v1453, %v1467
  %v1475 = vadd.f32 %v1454, %v1467
  %v1476 = vadd.f32 %v1455, %v1467
  %v1477 = vadd.f32 %v1456, %v1467
  %v1478 = vadd.f32 %v1457, %v1467
  %v1479 = vadd.f32 %v1458, %v1467
  %v1480 = vadd.f32 %v1459, %v1467
  %v1481 = vadd.f32 %v1460, %v1467
  %v1482 = vadd.f32 %v1461, %v1467
  %v1483 = vadd.f32 %v1462, %v1467
  %v1484 = vadd.f32 %v1463, %v1467
  %v1485 = vadd.f32 %v1464, %v1467
  %v1486 = vmax.f32 %v1469, 0.0
  %v1487 = vmax.f32 %v1470, 0.0
  %v1488 = vmax.f32 %v1471, 0.0
  %v1489 = vmax.f32 %v1472, 0.0
  %v1490 = vmax.f32 %v1473, 0.0
  %v1491 = vmax.f32 %v1474, 0.0
  %v1492 = vmax.f32 %v1475, 0.0
  %v1493 = vmax.f32 %v1476, 0.0
  %v1494 = vmax.f32 %v1477, 0.0
  %v1495 = vmax.f32 %v1478, 0.0
  %v1496 = vmax.f32 %v1479, 0.0
  %v1497 = vmax.f32 %v1480, 0.0
  %v1498 = vmax.f32 %v1481, 0.0
  %v1499 = vmax.f32 %v1482, 0.0
  %v1500 = vmax.f32 %v1483, 0.0
  %v1501 = vmax.f32 %v1484, 0.0
  %v1502 = vmax.f32 %v1485, 0.0
  %1503 = vst.msk [vmem:[#allocation3] sm:$0xff] %vm32, %v1486
  %1504 = vst.msk [vmem:[#allocation3 + $0x8] sm:$0xff] %vm32, %v1487
  %1505 = vst.msk [vmem:[#allocation3 + $0x10] sm:$0xff] %vm32, %v1488
  %1506 = vst.msk [vmem:[#allocation3 + $0x18] sm:$0xff] %vm32, %v1489
  %1507 = vst.msk [vmem:[#allocation3 + $0x20] sm:$0xff] %vm32, %v1490
  %1508 = vst.msk [vmem:[#allocation3 + $0x28] sm:$0xff] %vm32, %v1491
  %1509 = vst.msk [vmem:[#allocation3 + $0x30] sm:$0xff] %vm32, %v1492
  %1510 = vst.msk [vmem:[#allocation3 + $0x38] sm:$0xff] %vm32, %v1493
  %1511 = vst.msk [vmem:[#allocation3 + $0x40] sm:$0xff] %vm32, %v1494
  %1512 = vst.msk [vmem:[#allocation3 + $0x48] sm:$0xff] %vm32, %v1495
  %1513 = vst.msk [vmem:[#allocation3 + $0x50] sm:$0xff] %vm32, %v1496
  %1514 = vst.msk [vmem:[#allocation3 + $0x58] sm:$0xff] %vm32, %v1497
  %1515 = vst.msk [vmem:[#allocation3 + $0x60] sm:$0xff] %vm32, %v1498
  %1516 = vst.msk [vmem:[#allocation3 + $0x68] sm:$0xff] %vm32, %v1499
  %1517 = vst.msk [vmem:[#allocation3 + $0x70] sm:$0xff] %vm32, %v1500
  %1518 = vst.msk [vmem:[#allocation3 + $0x78] sm:$0xff] %vm32, %v1501
  %vm1519 = vcmask 519168
  %1520 = vst.msk [vmem:[#allocation3 + $0x80] sm:$0xf] %vm1519, %v1502
  %v1521 = vld [vmem:[#allocation3] sm:$0xff]
  %v1522 = vld [vmem:[#allocation3 + $0x8] sm:$0xff]
  %v1523 = vld [vmem:[#allocation3 + $0x10] sm:$0xff]
  %v1524 = vld [vmem:[#allocation3 + $0x18] sm:$0xff]
  %v1525 = vld [vmem:[#allocation3 + $0x20] sm:$0xff]
  %v1526 = vld [vmem:[#allocation3 + $0x28] sm:$0xff]
  %v1527 = vld [vmem:[#allocation3 + $0x30] sm:$0xff]
  %v1528 = vld [vmem:[#allocation3 + $0x38] sm:$0xff]
  %v1529 = vld [vmem:[#allocation3 + $0x40] sm:$0xff]
  %v1530 = vld [vmem:[#allocation3 + $0x48] sm:$0xff]
  %v1531 = vld [vmem:[#allocation3 + $0x50] sm:$0xff]
  %v1532 = vld [vmem:[#allocation3 + $0x58] sm:$0xff]
  %v1533 = vld [vmem:[#allocation3 + $0x60] sm:$0xff]
  %v1534 = vld [vmem:[#allocation3 + $0x68] sm:$0xff]
  %v1535 = vld [vmem:[#allocation3 + $0x70] sm:$0xff]
  %v1536 = vld [vmem:[%s7] sm:$0xff]
  %v1537 = vld [vmem:[%s7 + $0x8] sm:$0xff]
  %v1538 = vld [vmem:[%s7 + $0x10] sm:$0xff]
  %v1539 = vld [vmem:[%s7 + $0x18] sm:$0xff]
  %v1540 = vld [vmem:[%s7 + $0x20] sm:$0xff]
  %v1541 = vld [vmem:[%s7 + $0x28] sm:$0xff]
  %v1542 = vld [vmem:[%s7 + $0x30] sm:$0xff]
  %v1543 = vld [vmem:[%s7 + $0x38] sm:$0xff]
  %v1544 = vld [vmem:[#allocation3 + $0x1] sm:$0xff]
  %v1545 = vld [vmem:[#allocation3 + $0x9] sm:$0xff]
  %v1546 = vld [vmem:[#allocation3 + $0x11] sm:$0xff]
  %v1547 = vld [vmem:[#allocation3 + $0x19] sm:$0xff]
  %v1548 = vld [vmem:[#allocation3 + $0x21] sm:$0xff]
  %v1549 = vld [vmem:[#allocation3 + $0x29] sm:$0xff]
  %v1550 = vld [vmem:[#allocation3 + $0x31] sm:$0xff]
  %v1551 = vld [vmem:[#allocation3 + $0x39] sm:$0xff]
  %v1552 = vld [vmem:[#allocation3 + $0x41] sm:$0xff]
  %v1553 = vld [vmem:[#allocation3 + $0x49] sm:$0xff]
  %v1554 = vld [vmem:[#allocation3 + $0x51] sm:$0xff]
  %v1555 = vld [vmem:[#allocation3 + $0x59] sm:$0xff]
  %v1556 = vld [vmem:[#allocation3 + $0x61] sm:$0xff]
  %v1557 = vld [vmem:[#allocation3 + $0x69] sm:$0xff]
  %v1558 = vld [vmem:[#allocation3 + $0x71] sm:$0xff]
  %s1559 = scalar_lea.vmem %s7, 64
  %v1560 = vld [vmem:[%s1559] sm:$0xff]
  %v1561 = vld [vmem:[%s1559 + $0x8] sm:$0xff]
  %v1562 = vld [vmem:[%s1559 + $0x10] sm:$0xff]
  %v1563 = vld [vmem:[%s1559 + $0x18] sm:$0xff]
  %v1564 = vld [vmem:[%s1559 + $0x20] sm:$0xff]
  %v1565 = vld [vmem:[%s1559 + $0x28] sm:$0xff]
  %v1566 = vld [vmem:[%s1559 + $0x30] sm:$0xff]
  %v1567 = vld [vmem:[%s1559 + $0x38] sm:$0xff]
  %v1569 = vsel %vm32, %v1544, 0
  %v1572 = vsel %vm32, %v1545, 0
  %v1575 = vsel %vm32, %v1546, 0
  %v1578 = vsel %vm32, %v1547, 0
  %v1581 = vsel %vm32, %v1548, 0
  %v1584 = vsel %vm32, %v1549, 0
  %v1587 = vsel %vm32, %v1550, 0
  %v1590 = vsel %vm32, %v1551, 0
  %v1593 = vsel %vm32, %v1552, 0
  %v1596 = vsel %vm32, %v1553, 0
  %v1599 = vsel %vm32, %v1554, 0
  %v1602 = vsel %vm32, %v1555, 0
  %v1605 = vsel %vm32, %v1556, 0
  %v1608 = vsel %vm32, %v1557, 0
  %v1611 = vsel %vm32, %v1558, 0
  %1613 = vmatpush.msra.mxu0 0.0
  %1614 = vmatpush.msra.mxu0 0.0
  %1615 = vmatpush.msra.mxu0 0.0
  %1616 = vmatpush.msra.mxu0 0.0
  %1617 = vmatpush.msra.mxu0 0.0
  %1618 = vmatpush.msra.mxu0 0.0
  %1619 = vmatpush.msra.mxu0 0.0
  %1620 = vmatpush.msra.mxu0 0.0
  %1621 = vmatpush.msra.mxu0 %v1567
  %1622 = vmatpush.msra.mxu0 %v1566
  %1623 = vmatpush.msra.mxu0 %v1565
  %1624 = vmatpush.msra.mxu0 %v1564
  %1625 = vmatpush.msra.mxu0 %v1563
  %1626 = vmatpush.msra.mxu0 %v1562
  %1627 = vmatpush.msra.mxu0 %v1561
  %1628 = vmatpush.msra.mxu0 %v1560
  %1629 = vmatmul.f32.gmra.mxu0 %v1569
  %v1630 = vpop.f32.mrf.mxu0
  %v1631 = vadd.f32 0.0, %v1630
  %1632 = vmatmul.f32.gmra.mxu0 %v1572
  %v1633 = vpop.f32.mrf.mxu0
  %v1634 = vadd.f32 0.0, %v1633
  %1635 = vmatmul.f32.gmra.mxu0 %v1575
  %v1636 = vpop.f32.mrf.mxu0
  %v1637 = vadd.f32 0.0, %v1636
  %1638 = vmatmul.f32.gmra.mxu0 %v1578
  %v1639 = vpop.f32.mrf.mxu0
  %v1640 = vadd.f32 0.0, %v1639
  %1641 = vmatmul.f32.gmra.mxu0 %v1581
  %v1642 = vpop.f32.mrf.mxu0
  %v1643 = vadd.f32 0.0, %v1642
  %1644 = vmatmul.f32.gmra.mxu0 %v1584
  %v1645 = vpop.f32.mrf.mxu0
  %v1646 = vadd.f32 0.0, %v1645
  %1647 = vmatmul.f32.gmra.mxu0 %v1587
  %v1648 = vpop.f32.mrf.mxu0
  %v1649 = vadd.f32 0.0, %v1648
  %1650 = vmatmul.f32.gmra.mxu0 %v1590
  %v1651 = vpop.f32.mrf.mxu0
  %v1652 = vadd.f32 0.0, %v1651
  %1653 = vmatmul.f32.gmra.mxu0 %v1593
  %v1654 = vpop.f32.mrf.mxu0
  %v1655 = vadd.f32 0.0, %v1654
  %1656 = vmatmul.f32.gmra.mxu0 %v1596
  %v1657 = vpop.f32.mrf.mxu0
  %v1658 = vadd.f32 0.0, %v1657
  %1659 = vmatmul.f32.gmra.mxu0 %v1599
  %v1660 = vpop.f32.mrf.mxu0
  %v1661 = vadd.f32 0.0, %v1660
  %1662 = vmatmul.f32.gmra.mxu0 %v1602
  %v1663 = vpop.f32.mrf.mxu0
  %v1664 = vadd.f32 0.0, %v1663
  %1665 = vmatmul.f32.gmra.mxu0 %v1605
  %v1666 = vpop.f32.mrf.mxu0
  %v1667 = vadd.f32 0.0, %v1666
  %1668 = vmatmul.f32.gmra.mxu0 %v1608
  %v1669 = vpop.f32.mrf.mxu0
  %v1670 = vadd.f32 0.0, %v1669
  %1671 = vmatmul.f32.gmra.mxu0 %v1611
  %v1672 = vpop.f32.mrf.mxu0
  %v1673 = vadd.f32 0.0, %v1672
  %1674 = vdwg.mxu0
  %v1676 = vsel %vm32, %v1521, 0
  %v1679 = vsel %vm32, %v1522, 0
  %v1682 = vsel %vm32, %v1523, 0
  %v1685 = vsel %vm32, %v1524, 0
  %v1688 = vsel %vm32, %v1525, 0
  %v1691 = vsel %vm32, %v1526, 0
  %v1694 = vsel %vm32, %v1527, 0
  %v1697 = vsel %vm32, %v1528, 0
  %v1700 = vsel %vm32, %v1529, 0
  %v1703 = vsel %vm32, %v1530, 0
  %v1706 = vsel %vm32, %v1531, 0
  %v1709 = vsel %vm32, %v1532, 0
  %v1712 = vsel %vm32, %v1533, 0
  %v1715 = vsel %vm32, %v1534, 0
  %v1718 = vsel %vm32, %v1535, 0
  %1720 = vmatpush.msra.mxu0 0.0
  %1721 = vmatpush.msra.mxu0 0.0
  %1722 = vmatpush.msra.mxu0 0.0
  %1723 = vmatpush.msra.mxu0 0.0
  %1724 = vmatpush.msra.mxu0 0.0
  %1725 = vmatpush.msra.mxu0 0.0
  %1726 = vmatpush.msra.mxu0 0.0
  %1727 = vmatpush.msra.mxu0 0.0
  %1728 = vmatpush.msra.mxu0 %v1543
  %1729 = vmatpush.msra.mxu0 %v1542
  %1730 = vmatpush.msra.mxu0 %v1541
  %1731 = vmatpush.msra.mxu0 %v1540
  %1732 = vmatpush.msra.mxu0 %v1539
  %1733 = vmatpush.msra.mxu0 %v1538
  %1734 = vmatpush.msra.mxu0 %v1537
  %1735 = vmatpush.msra.mxu0 %v1536
  %1736 = vmatmul.f32.gmra.mxu0 %v1676
  %v1737 = vpop.f32.mrf.mxu0
  %v1738 = vadd.f32 %v1631, %v1737
  %1739 = vmatmul.f32.gmra.mxu0 %v1679
  %v1740 = vpop.f32.mrf.mxu0
  %v1741 = vadd.f32 %v1634, %v1740
  %1742 = vmatmul.f32.gmra.mxu0 %v1682
  %v1743 = vpop.f32.mrf.mxu0
  %v1744 = vadd.f32 %v1637, %v1743
  %1745 = vmatmul.f32.gmra.mxu0 %v1685
  %v1746 = vpop.f32.mrf.mxu0
  %v1747 = vadd.f32 %v1640, %v1746
  %1748 = vmatmul.f32.gmra.mxu0 %v1688
  %v1749 = vpop.f32.mrf.mxu0
  %v1750 = vadd.f32 %v1643, %v1749
  %1751 = vmatmul.f32.gmra.mxu0 %v1691
  %v1752 = vpop.f32.mrf.mxu0
  %v1753 = vadd.f32 %v1646, %v1752
  %1754 = vmatmul.f32.gmra.mxu0 %v1694
  %v1755 = vpop.f32.mrf.mxu0
  %v1756 = vadd.f32 %v1649, %v1755
  %1757 = vmatmul.f32.gmra.mxu0 %v1697
  %v1758 = vpop.f32.mrf.mxu0
  %v1759 = vadd.f32 %v1652, %v1758
  %1760 = vmatmul.f32.gmra.mxu0 %v1700
  %v1761 = vpop.f32.mrf.mxu0
  %v1762 = vadd.f32 %v1655, %v1761
  %1763 = vmatmul.f32.gmra.mxu0 %v1703
  %v1764 = vpop.f32.mrf.mxu0
  %v1765 = vadd.f32 %v1658, %v1764
  %1766 = vmatmul.f32.gmra.mxu0 %v1706
  %v1767 = vpop.f32.mrf.mxu0
  %v1768 = vadd.f32 %v1661, %v1767
  %1769 = vmatmul.f32.gmra.mxu0 %v1709
  %v1770 = vpop.f32.mrf.mxu0
  %v1771 = vadd.f32 %v1664, %v1770
  %1772 = vmatmul.f32.gmra.mxu0 %v1712
  %v1773 = vpop.f32.mrf.mxu0
  %v1774 = vadd.f32 %v1667, %v1773
  %1775 = vmatmul.f32.gmra.mxu0 %v1715
  %v1776 = vpop.f32.mrf.mxu0
  %v1777 = vadd.f32 %v1670, %v1776
  %1778 = vmatmul.f32.gmra.mxu0 %v1718
  %v1779 = vpop.f32.mrf.mxu0
  %v1780 = vadd.f32 %v1673, %v1779
  %1781 = vdwg.mxu0
  %v1782 = vld [vmem:[#allocation3 + $0xc] sm:$0xff]
  %v1783 = vld [vmem:[#allocation3 + $0x14] sm:$0xff]
  %v1784 = vld [vmem:[#allocation3 + $0x1c] sm:$0xff]
  %v1785 = vld [vmem:[#allocation3 + $0x24] sm:$0xff]
  %v1786 = vld [vmem:[#allocation3 + $0x2c] sm:$0xff]
  %v1787 = vld [vmem:[#allocation3 + $0x34] sm:$0xff]
  %v1788 = vld [vmem:[#allocation3 + $0x3c] sm:$0xff]
  %v1789 = vld [vmem:[#allocation3 + $0x44] sm:$0xff]
  %v1790 = vld [vmem:[#allocation3 + $0x4c] sm:$0xff]
  %v1791 = vld [vmem:[#allocation3 + $0x54] sm:$0xff]
  %v1792 = vld [vmem:[#allocation3 + $0x5c] sm:$0xff]
  %v1793 = vld [vmem:[#allocation3 + $0x64] sm:$0xff]
  %v1794 = vld [vmem:[#allocation3 + $0x6c] sm:$0xff]
  %v1795 = vld [vmem:[#allocation3 + $0x74] sm:$0xff]
  %v1796 = vld [vmem:[#allocation3 + $0x7c] sm:$0xff]
  %s1797 = scalar_lea.vmem %s7, 128
  %v1798 = vld [vmem:[%s1797] sm:$0xff]
  %v1799 = vld [vmem:[%s1797 + $0x8] sm:$0xff]
  %v1800 = vld [vmem:[%s1797 + $0x10] sm:$0xff]
  %v1801 = vld [vmem:[%s1797 + $0x18] sm:$0xff]
  %v1802 = vld [vmem:[%s1797 + $0x20] sm:$0xff]
  %v1803 = vld [vmem:[%s1797 + $0x28] sm:$0xff]
  %v1804 = vld [vmem:[%s1797 + $0x30] sm:$0xff]
  %v1805 = vld [vmem:[%s1797 + $0x38] sm:$0xff]
  %v1807 = vsel %vm32, %v1782, 0
  %v1810 = vsel %vm32, %v1783, 0
  %v1813 = vsel %vm32, %v1784, 0
  %v1816 = vsel %vm32, %v1785, 0
  %v1819 = vsel %vm32, %v1786, 0
  %v1822 = vsel %vm32, %v1787, 0
  %v1825 = vsel %vm32, %v1788, 0
  %v1828 = vsel %vm32, %v1789, 0
  %v1831 = vsel %vm32, %v1790, 0
  %v1834 = vsel %vm32, %v1791, 0
  %v1837 = vsel %vm32, %v1792, 0
  %v1840 = vsel %vm32, %v1793, 0
  %v1843 = vsel %vm32, %v1794, 0
  %v1846 = vsel %vm32, %v1795, 0
  %v1849 = vsel %vm32, %v1796, 0
  %1851 = vmatpush.msra.mxu0 0.0
  %1852 = vmatpush.msra.mxu0 0.0
  %1853 = vmatpush.msra.mxu0 0.0
  %1854 = vmatpush.msra.mxu0 0.0
  %1855 = vmatpush.msra.mxu0 0.0
  %1856 = vmatpush.msra.mxu0 0.0
  %1857 = vmatpush.msra.mxu0 0.0
  %1858 = vmatpush.msra.mxu0 0.0
  %1859 = vmatpush.msra.mxu0 %v1805
  %1860 = vmatpush.msra.mxu0 %v1804
  %1861 = vmatpush.msra.mxu0 %v1803
  %1862 = vmatpush.msra.mxu0 %v1802
  %1863 = vmatpush.msra.mxu0 %v1801
  %1864 = vmatpush.msra.mxu0 %v1800
  %1865 = vmatpush.msra.mxu0 %v1799
  %1866 = vmatpush.msra.mxu0 %v1798
  %1867 = vmatmul.f32.gmra.mxu0 %v1807
  %v1868 = vpop.f32.mrf.mxu0
  %v1869 = vadd.f32 0.0, %v1868
  %1870 = vmatmul.f32.gmra.mxu0 %v1810
  %v1871 = vpop.f32.mrf.mxu0
  %v1872 = vadd.f32 0.0, %v1871
  %1873 = vmatmul.f32.gmra.mxu0 %v1813
  %v1874 = vpop.f32.mrf.mxu0
  %v1875 = vadd.f32 0.0, %v1874
  %1876 = vmatmul.f32.gmra.mxu0 %v1816
  %v1877 = vpop.f32.mrf.mxu0
  %v1878 = vadd.f32 0.0, %v1877
  %1879 = vmatmul.f32.gmra.mxu0 %v1819
  %v1880 = vpop.f32.mrf.mxu0
  %v1881 = vadd.f32 0.0, %v1880
  %1882 = vmatmul.f32.gmra.mxu0 %v1822
  %v1883 = vpop.f32.mrf.mxu0
  %v1884 = vadd.f32 0.0, %v1883
  %1885 = vmatmul.f32.gmra.mxu0 %v1825
  %v1886 = vpop.f32.mrf.mxu0
  %v1887 = vadd.f32 0.0, %v1886
  %1888 = vmatmul.f32.gmra.mxu0 %v1828
  %v1889 = vpop.f32.mrf.mxu0
  %v1890 = vadd.f32 0.0, %v1889
  %1891 = vmatmul.f32.gmra.mxu0 %v1831
  %v1892 = vpop.f32.mrf.mxu0
  %v1893 = vadd.f32 0.0, %v1892
  %1894 = vmatmul.f32.gmra.mxu0 %v1834
  %v1895 = vpop.f32.mrf.mxu0
  %v1896 = vadd.f32 0.0, %v1895
  %1897 = vmatmul.f32.gmra.mxu0 %v1837
  %v1898 = vpop.f32.mrf.mxu0
  %v1899 = vadd.f32 0.0, %v1898
  %1900 = vmatmul.f32.gmra.mxu0 %v1840
  %v1901 = vpop.f32.mrf.mxu0
  %v1902 = vadd.f32 0.0, %v1901
  %1903 = vmatmul.f32.gmra.mxu0 %v1843
  %v1904 = vpop.f32.mrf.mxu0
  %v1905 = vadd.f32 0.0, %v1904
  %1906 = vmatmul.f32.gmra.mxu0 %v1846
  %v1907 = vpop.f32.mrf.mxu0
  %v1908 = vadd.f32 0.0, %v1907
  %1909 = vmatmul.f32.gmra.mxu0 %v1849
  %v1910 = vpop.f32.mrf.mxu0
  %v1911 = vadd.f32 0.0, %v1910
  %1912 = vdwg.mxu0
  %v1913 = vadd.f32 %v1738, %v1869
  %v1914 = vadd.f32 %v1741, %v1872
  %v1915 = vadd.f32 %v1744, %v1875
  %v1916 = vadd.f32 %v1747, %v1878
  %v1917 = vadd.f32 %v1750, %v1881
  %v1918 = vadd.f32 %v1753, %v1884
  %v1919 = vadd.f32 %v1756, %v1887
  %v1920 = vadd.f32 %v1759, %v1890
  %v1921 = vadd.f32 %v1762, %v1893
  %v1922 = vadd.f32 %v1765, %v1896
  %v1923 = vadd.f32 %v1768, %v1899
  %v1924 = vadd.f32 %v1771, %v1902
  %v1925 = vadd.f32 %v1774, %v1905
  %v1926 = vadd.f32 %v1777, %v1908
  %v1927 = vadd.f32 %v1780, %v1911
  %v1928 = vld [vmem:[#allocation3 + $0xd] sm:$0xff]
  %v1929 = vld [vmem:[#allocation3 + $0x15] sm:$0xff]
  %v1930 = vld [vmem:[#allocation3 + $0x1d] sm:$0xff]
  %v1931 = vld [vmem:[#allocation3 + $0x25] sm:$0xff]
  %v1932 = vld [vmem:[#allocation3 + $0x2d] sm:$0xff]
  %v1933 = vld [vmem:[#allocation3 + $0x35] sm:$0xff]
  %v1934 = vld [vmem:[#allocation3 + $0x3d] sm:$0xff]
  %v1935 = vld [vmem:[#allocation3 + $0x45] sm:$0xff]
  %v1936 = vld [vmem:[#allocation3 + $0x4d] sm:$0xff]
  %v1937 = vld [vmem:[#allocation3 + $0x55] sm:$0xff]
  %v1938 = vld [vmem:[#allocation3 + $0x5d] sm:$0xff]
  %v1939 = vld [vmem:[#allocation3 + $0x65] sm:$0xff]
  %v1940 = vld [vmem:[#allocation3 + $0x6d] sm:$0xff]
  %v1941 = vld [vmem:[#allocation3 + $0x75] sm:$0xff]
  %v1942 = vld [vmem:[#allocation3 + $0x7d] sm:$0xff]
  %s1943 = scalar_lea.vmem %s7, 192
  %v1944 = vld [vmem:[%s1943] sm:$0xff]
  %v1945 = vld [vmem:[%s1943 + $0x8] sm:$0xff]
  %v1946 = vld [vmem:[%s1943 + $0x10] sm:$0xff]
  %v1947 = vld [vmem:[%s1943 + $0x18] sm:$0xff]
  %v1948 = vld [vmem:[%s1943 + $0x20] sm:$0xff]
  %v1949 = vld [vmem:[%s1943 + $0x28] sm:$0xff]
  %v1950 = vld [vmem:[%s1943 + $0x30] sm:$0xff]
  %v1951 = vld [vmem:[%s1943 + $0x38] sm:$0xff]
  %v1953 = vsel %vm32, %v1928, 0
  %v1956 = vsel %vm32, %v1929, 0
  %v1959 = vsel %vm32, %v1930, 0
  %v1962 = vsel %vm32, %v1931, 0
  %v1965 = vsel %vm32, %v1932, 0
  %v1968 = vsel %vm32, %v1933, 0
  %v1971 = vsel %vm32, %v1934, 0
  %v1974 = vsel %vm32, %v1935, 0
  %v1977 = vsel %vm32, %v1936, 0
  %v1980 = vsel %vm32, %v1937, 0
  %v1983 = vsel %vm32, %v1938, 0
  %v1986 = vsel %vm32, %v1939, 0
  %v1989 = vsel %vm32, %v1940, 0
  %v1992 = vsel %vm32, %v1941, 0
  %v1995 = vsel %vm32, %v1942, 0
  %1997 = vmatpush.msra.mxu0 0.0
  %1998 = vmatpush.msra.mxu0 0.0
  %1999 = vmatpush.msra.mxu0 0.0
  %2000 = vmatpush.msra.mxu0 0.0
  %2001 = vmatpush.msra.mxu0 0.0
  %2002 = vmatpush.msra.mxu0 0.0
  %2003 = vmatpush.msra.mxu0 0.0
  %2004 = vmatpush.msra.mxu0 0.0
  %2005 = vmatpush.msra.mxu0 %v1951
  %2006 = vmatpush.msra.mxu0 %v1950
  %2007 = vmatpush.msra.mxu0 %v1949
  %2008 = vmatpush.msra.mxu0 %v1948
  %2009 = vmatpush.msra.mxu0 %v1947
  %2010 = vmatpush.msra.mxu0 %v1946
  %2011 = vmatpush.msra.mxu0 %v1945
  %2012 = vmatpush.msra.mxu0 %v1944
  %2013 = vmatmul.f32.gmra.mxu0 %v1953
  %v2014 = vpop.f32.mrf.mxu0
  %v2015 = vadd.f32 0.0, %v2014
  %2016 = vmatmul.f32.gmra.mxu0 %v1956
  %v2017 = vpop.f32.mrf.mxu0
  %v2018 = vadd.f32 0.0, %v2017
  %2019 = vmatmul.f32.gmra.mxu0 %v1959
  %v2020 = vpop.f32.mrf.mxu0
  %v2021 = vadd.f32 0.0, %v2020
  %2022 = vmatmul.f32.gmra.mxu0 %v1962
  %v2023 = vpop.f32.mrf.mxu0
  %v2024 = vadd.f32 0.0, %v2023
  %2025 = vmatmul.f32.gmra.mxu0 %v1965
  %v2026 = vpop.f32.mrf.mxu0
  %v2027 = vadd.f32 0.0, %v2026
  %2028 = vmatmul.f32.gmra.mxu0 %v1968
  %v2029 = vpop.f32.mrf.mxu0
  %v2030 = vadd.f32 0.0, %v2029
  %2031 = vmatmul.f32.gmra.mxu0 %v1971
  %v2032 = vpop.f32.mrf.mxu0
  %v2033 = vadd.f32 0.0, %v2032
  %2034 = vmatmul.f32.gmra.mxu0 %v1974
  %v2035 = vpop.f32.mrf.mxu0
  %v2036 = vadd.f32 0.0, %v2035
  %2037 = vmatmul.f32.gmra.mxu0 %v1977
  %v2038 = vpop.f32.mrf.mxu0
  %v2039 = vadd.f32 0.0, %v2038
  %2040 = vmatmul.f32.gmra.mxu0 %v1980
  %v2041 = vpop.f32.mrf.mxu0
  %v2042 = vadd.f32 0.0, %v2041
  %2043 = vmatmul.f32.gmra.mxu0 %v1983
  %v2044 = vpop.f32.mrf.mxu0
  %v2045 = vadd.f32 0.0, %v2044
  %2046 = vmatmul.f32.gmra.mxu0 %v1986
  %v2047 = vpop.f32.mrf.mxu0
  %v2048 = vadd.f32 0.0, %v2047
  %2049 = vmatmul.f32.gmra.mxu0 %v1989
  %v2050 = vpop.f32.mrf.mxu0
  %v2051 = vadd.f32 0.0, %v2050
  %2052 = vmatmul.f32.gmra.mxu0 %v1992
  %v2053 = vpop.f32.mrf.mxu0
  %v2054 = vadd.f32 0.0, %v2053
  %2055 = vmatmul.f32.gmra.mxu0 %v1995
  %v2056 = vpop.f32.mrf.mxu0
  %v2057 = vadd.f32 0.0, %v2056
  %2058 = vdwg.mxu0
  %v2059 = vadd.f32 %v1913, %v2015
  %v2060 = vadd.f32 %v1914, %v2018
  %v2061 = vadd.f32 %v1915, %v2021
  %v2062 = vadd.f32 %v1916, %v2024
  %v2063 = vadd.f32 %v1917, %v2027
  %v2064 = vadd.f32 %v1918, %v2030
  %v2065 = vadd.f32 %v1919, %v2033
  %v2066 = vadd.f32 %v1920, %v2036
  %v2067 = vadd.f32 %v1921, %v2039
  %v2068 = vadd.f32 %v1922, %v2042
  %v2069 = vadd.f32 %v1923, %v2045
  %v2070 = vadd.f32 %v1924, %v2048
  %v2071 = vadd.f32 %v1925, %v2051
  %v2072 = vadd.f32 %v1926, %v2054
  %v2073 = vadd.f32 %v1927, %v2057
  %v2074 = vld [vmem:[%s8] sm:$0x1]
  %v2076 = vperm.slane %v2074, 0
  %v2078 = vadd.f32 %v2059, %v2076
  %v2079 = vadd.f32 %v2060, %v2076
  %v2080 = vadd.f32 %v2061, %v2076
  %v2081 = vadd.f32 %v2062, %v2076
  %v2082 = vadd.f32 %v2063, %v2076
  %v2083 = vadd.f32 %v2064, %v2076
  %v2084 = vadd.f32 %v2065, %v2076
  %v2085 = vadd.f32 %v2066, %v2076
  %v2086 = vadd.f32 %v2067, %v2076
  %v2087 = vadd.f32 %v2068, %v2076
  %v2088 = vadd.f32 %v2069, %v2076
  %v2089 = vadd.f32 %v2070, %v2076
  %v2090 = vadd.f32 %v2071, %v2076
  %v2091 = vadd.f32 %v2072, %v2076
  %v2092 = vadd.f32 %v2073, %v2076
  %2093 = vst.msk [vmem:[%s9] sm:$0xff] %vm32, %v2078
  %2094 = vst.msk [vmem:[%s9 + $0x8] sm:$0xff] %vm32, %v2079
  %2095 = vst.msk [vmem:[%s9 + $0x10] sm:$0xff] %vm32, %v2080
  %2096 = vst.msk [vmem:[%s9 + $0x18] sm:$0xff] %vm32, %v2081
  %2097 = vst.msk [vmem:[%s9 + $0x20] sm:$0xff] %vm32, %v2082
  %2098 = vst.msk [vmem:[%s9 + $0x28] sm:$0xff] %vm32, %v2083
  %2099 = vst.msk [vmem:[%s9 + $0x30] sm:$0xff] %vm32, %v2084
  %2100 = vst.msk [vmem:[%s9 + $0x38] sm:$0xff] %vm32, %v2085
  %2101 = vst.msk [vmem:[%s9 + $0x40] sm:$0xff] %vm32, %v2086
  %2102 = vst.msk [vmem:[%s9 + $0x48] sm:$0xff] %vm32, %v2087
  %2103 = vst.msk [vmem:[%s9 + $0x50] sm:$0xff] %vm32, %v2088
  %2104 = vst.msk [vmem:[%s9 + $0x58] sm:$0xff] %vm32, %v2089
  %2105 = vst.msk [vmem:[%s9 + $0x60] sm:$0xff] %vm32, %v2090
  %2106 = vst.msk [vmem:[%s9 + $0x68] sm:$0xff] %vm32, %v2091
  %2107 = vst.msk [vmem:[%s9 + $0x70] sm:$0xff] %vm32, %v2092
  %s2108 = scalar_lea.vmem %s0, 144
  %v2109 = vld [vmem:[%s2108] sm:$0xff]
  %v2110 = vld [vmem:[%s2108 + $0x8] sm:$0xff]
  %v2111 = vld [vmem:[%s2108 + $0x10] sm:$0xff]
  %v2112 = vld [vmem:[%s2108 + $0x18] sm:$0xff]
  %v2113 = vld [vmem:[%s2108 + $0x20] sm:$0xff]
  %v2114 = vld [vmem:[%s2108 + $0x28] sm:$0xff]
  %v2115 = vld [vmem:[%s2108 + $0x30] sm:$0xff]
  %v2116 = vld [vmem:[%s2108 + $0x38] sm:$0xff]
  %v2117 = vld [vmem:[%s2108 + $0x40] sm:$0xff]
  %v2118 = vld [vmem:[%s2108 + $0x48] sm:$0xff]
  %v2119 = vld [vmem:[%s2108 + $0x50] sm:$0xff]
  %v2120 = vld [vmem:[%s2108 + $0x58] sm:$0xff]
  %v2121 = vld [vmem:[%s2108 + $0x60] sm:$0xff]
  %v2122 = vld [vmem:[%s2108 + $0x68] sm:$0xff]
  %v2123 = vld [vmem:[%s2108 + $0x70] sm:$0xff]
  %v2124 = vld [vmem:[%s2108 + $0x78] sm:$0xff]
  %v2125 = vld [vmem:[%s2108 + $0x80] sm:$0xff]
  %v2126 = vld [vmem:[%s2108 + $0x88] sm:$0xff]
  %v2127 = vld [vmem:[%s2] sm:$0xff]
  %v2128 = vld [vmem:[%s2 + $0x8] sm:$0xff]
  %v2129 = vld [vmem:[%s2 + $0x10] sm:$0xff]
  %v2130 = vld [vmem:[%s2 + $0x18] sm:$0xff]
  %v2131 = vld [vmem:[%s3] sm:$0x1]
  %v2133 = vperm.slane %v2131, 0
  %v2136 = vsel %vm61, %v2109, 0
  %v2139 = vsel %vm61, %v2110, 0
  %v2142 = vsel %vm61, %v2111, 0
  %v2145 = vsel %vm61, %v2112, 0
  %v2148 = vsel %vm61, %v2113, 0
  %v2151 = vsel %vm61, %v2114, 0
  %v2154 = vsel %vm61, %v2115, 0
  %v2157 = vsel %vm61, %v2116, 0
  %v2160 = vsel %vm61, %v2117, 0
  %v2163 = vsel %vm61, %v2118, 0
  %v2166 = vsel %vm61, %v2119, 0
  %v2169 = vsel %vm61, %v2120, 0
  %v2172 = vsel %vm61, %v2121, 0
  %v2175 = vsel %vm61, %v2122, 0
  %v2178 = vsel %vm61, %v2123, 0
  %v2181 = vsel %vm61, %v2124, 0
  %v2184 = vsel %vm61, %v2125, 0
  %v2187 = vsel %vm61, %v2126, 0
  %2189 = vmatpush.msra.mxu0 0.0
  %2190 = vmatpush.msra.mxu0 0.0
  %2191 = vmatpush.msra.mxu0 0.0
  %2192 = vmatpush.msra.mxu0 0.0
  %2193 = vmatpush.msra.mxu0 0.0
  %2194 = vmatpush.msra.mxu0 0.0
  %2195 = vmatpush.msra.mxu0 0.0
  %2196 = vmatpush.msra.mxu0 0.0
  %2197 = vmatpush.msra.mxu0 0.0
  %2198 = vmatpush.msra.mxu0 0.0
  %2199 = vmatpush.msra.mxu0 0.0
  %2200 = vmatpush.msra.mxu0 0.0
  %2201 = vmatpush.msra.mxu0 %v2130
  %2202 = vmatpush.msra.mxu0 %v2129
  %2203 = vmatpush.msra.mxu0 %v2128
  %2204 = vmatpush.msra.mxu0 %v2127
  %2205 = vmatmul.f32.gmra.mxu0 %v2136
  %v2206 = vpop.f32.mrf.mxu0
  %v2207 = vadd.f32 %v2133, %v2206
  %2208 = vmatmul.f32.gmra.mxu0 %v2139
  %v2209 = vpop.f32.mrf.mxu0
  %v2210 = vadd.f32 %v2133, %v2209
  %2211 = vmatmul.f32.gmra.mxu0 %v2142
  %v2212 = vpop.f32.mrf.mxu0
  %v2213 = vadd.f32 %v2133, %v2212
  %2214 = vmatmul.f32.gmra.mxu0 %v2145
  %v2215 = vpop.f32.mrf.mxu0
  %v2216 = vadd.f32 %v2133, %v2215
  %2217 = vmatmul.f32.gmra.mxu0 %v2148
  %v2218 = vpop.f32.mrf.mxu0
  %v2219 = vadd.f32 %v2133, %v2218
  %2220 = vmatmul.f32.gmra.mxu0 %v2151
  %v2221 = vpop.f32.mrf.mxu0
  %v2222 = vadd.f32 %v2133, %v2221
  %2223 = vmatmul.f32.gmra.mxu0 %v2154
  %v2224 = vpop.f32.mrf.mxu0
  %v2225 = vadd.f32 %v2133, %v2224
  %2226 = vmatmul.f32.gmra.mxu0 %v2157
  %v2227 = vpop.f32.mrf.mxu0
  %v2228 = vadd.f32 %v2133, %v2227
  %2229 = vmatmul.f32.gmra.mxu0 %v2160
  %v2230 = vpop.f32.mrf.mxu0
  %v2231 = vadd.f32 %v2133, %v2230
  %2232 = vmatmul.f32.gmra.mxu0 %v2163
  %v2233 = vpop.f32.mrf.mxu0
  %v2234 = vadd.f32 %v2133, %v2233
  %2235 = vmatmul.f32.gmra.mxu0 %v2166
  %v2236 = vpop.f32.mrf.mxu0
  %v2237 = vadd.f32 %v2133, %v2236
  %2238 = vmatmul.f32.gmra.mxu0 %v2169
  %v2239 = vpop.f32.mrf.mxu0
  %v2240 = vadd.f32 %v2133, %v2239
  %2241 = vmatmul.f32.gmra.mxu0 %v2172
  %v2242 = vpop.f32.mrf.mxu0
  %v2243 = vadd.f32 %v2133, %v2242
  %2244 = vmatmul.f32.gmra.mxu0 %v2175
  %v2245 = vpop.f32.mrf.mxu0
  %v2246 = vadd.f32 %v2133, %v2245
  %2247 = vmatmul.f32.gmra.mxu0 %v2178
  %v2248 = vpop.f32.mrf.mxu0
  %v2249 = vadd.f32 %v2133, %v2248
  %2250 = vmatmul.f32.gmra.mxu0 %v2181
  %v2251 = vpop.f32.mrf.mxu0
  %v2252 = vadd.f32 %v2133, %v2251
  %2253 = vmatmul.f32.gmra.mxu0 %v2184
  %v2254 = vpop.f32.mrf.mxu0
  %v2255 = vadd.f32 %v2133, %v2254
  %2256 = vmatmul.f32.gmra.mxu0 %v2187
  %v2257 = vpop.f32.mrf.mxu0
  %v2258 = vadd.f32 %v2133, %v2257
  %2259 = vdwg.mxu0
  %2260 = vst.msk [vmem:[#allocation2] sm:$0xff] %vm32, %v2207
  %2261 = vst.msk [vmem:[#allocation2 + $0x8] sm:$0xff] %vm32, %v2210
  %2262 = vst.msk [vmem:[#allocation2 + $0x10] sm:$0xff] %vm32, %v2213
  %2263 = vst.msk [vmem:[#allocation2 + $0x18] sm:$0xff] %vm32, %v2216
  %2264 = vst.msk [vmem:[#allocation2 + $0x20] sm:$0xff] %vm32, %v2219
  %2265 = vst.msk [vmem:[#allocation2 + $0x28] sm:$0xff] %vm32, %v2222
  %2266 = vst.msk [vmem:[#allocation2 + $0x30] sm:$0xff] %vm32, %v2225
  %2267 = vst.msk [vmem:[#allocation2 + $0x38] sm:$0xff] %vm32, %v2228
  %2268 = vst.msk [vmem:[#allocation2 + $0x40] sm:$0xff] %vm32, %v2231
  %2269 = vst.msk [vmem:[#allocation2 + $0x48] sm:$0xff] %vm32, %v2234
  %2270 = vst.msk [vmem:[#allocation2 + $0x50] sm:$0xff] %vm32, %v2237
  %2271 = vst.msk [vmem:[#allocation2 + $0x58] sm:$0xff] %vm32, %v2240
  %2272 = vst.msk [vmem:[#allocation2 + $0x60] sm:$0xff] %vm32, %v2243
  %2273 = vst.msk [vmem:[#allocation2 + $0x68] sm:$0xff] %vm32, %v2246
  %2274 = vst.msk [vmem:[#allocation2 + $0x70] sm:$0xff] %vm32, %v2249
  %2275 = vst.msk [vmem:[#allocation2 + $0x78] sm:$0xff] %vm32, %v2252
  %2276 = vst.msk [vmem:[#allocation2 + $0x80] sm:$0xff] %vm32, %v2255
  %2277 = vst.msk [vmem:[#allocation2 + $0x88] sm:$0xff] %vm32, %v2258
  %v2278 = vld [vmem:[#allocation2] sm:$0xff]
  %v2279 = vld [vmem:[#allocation2 + $0x8] sm:$0xff]
  %v2280 = vld [vmem:[#allocation2 + $0x10] sm:$0xff]
  %v2281 = vld [vmem:[#allocation2 + $0x18] sm:$0xff]
  %v2282 = vld [vmem:[#allocation2 + $0x20] sm:$0xff]
  %v2283 = vld [vmem:[#allocation2 + $0x28] sm:$0xff]
  %v2284 = vld [vmem:[#allocation2 + $0x30] sm:$0xff]
  %v2285 = vld [vmem:[#allocation2 + $0x38] sm:$0xff]
  %v2286 = vld [vmem:[#allocation2 + $0x40] sm:$0xff]
  %v2287 = vld [vmem:[#allocation2 + $0x48] sm:$0xff]
  %v2288 = vld [vmem:[#allocation2 + $0x50] sm:$0xff]
  %v2289 = vld [vmem:[#allocation2 + $0x58] sm:$0xff]
  %v2290 = vld [vmem:[#allocation2 + $0x60] sm:$0xff]
  %v2291 = vld [vmem:[#allocation2 + $0x68] sm:$0xff]
  %v2292 = vld [vmem:[#allocation2 + $0x70] sm:$0xff]
  %v2293 = vld [vmem:[#allocation2 + $0x78] sm:$0xff]
  %v2294 = vld [vmem:[#allocation2 + $0x80] sm:$0xf]
  %v2295 = vld [vmem:[%s4] sm:$0xff]
  %v2296 = vld [vmem:[%s4 + $0x8] sm:$0xff]
  %v2297 = vld [vmem:[%s4 + $0x10] sm:$0xff]
  %v2298 = vld [vmem:[%s4 + $0x18] sm:$0xff]
  %v2299 = vld [vmem:[%s4 + $0x20] sm:$0xff]
  %v2300 = vld [vmem:[%s4 + $0x28] sm:$0xff]
  %v2301 = vld [vmem:[%s4 + $0x30] sm:$0xff]
  %v2302 = vld [vmem:[%s4 + $0x38] sm:$0xff]
  %s2303 = scalar_lea.vmem %s1, 152
  %v2304 = vld [vmem:[%s2303] sm:$0xff]
  %v2305 = vld [vmem:[%s2303 + $0x8] sm:$0xff]
  %v2306 = vld [vmem:[%s2303 + $0x10] sm:$0xff]
  %v2307 = vld [vmem:[%s2303 + $0x18] sm:$0xff]
  %v2308 = vld [vmem:[%s2303 + $0x20] sm:$0xff]
  %v2309 = vld [vmem:[%s2303 + $0x28] sm:$0xff]
  %v2310 = vld [vmem:[%s2303 + $0x30] sm:$0xff]
  %v2311 = vld [vmem:[%s2303 + $0x38] sm:$0xff]
  %v2312 = vld [vmem:[%s2303 + $0x40] sm:$0xff]
  %v2313 = vld [vmem:[%s2303 + $0x48] sm:$0xff]
  %v2314 = vld [vmem:[%s2303 + $0x50] sm:$0xff]
  %v2315 = vld [vmem:[%s2303 + $0x58] sm:$0xff]
  %v2316 = vld [vmem:[%s2303 + $0x60] sm:$0xff]
  %v2317 = vld [vmem:[%s2303 + $0x68] sm:$0xff]
  %v2318 = vld [vmem:[%s2303 + $0x70] sm:$0xff]
  %v2319 = vld [vmem:[%s2303 + $0x78] sm:$0xff]
  %v2320 = vld [vmem:[%s2303 + $0x80] sm:$0xf]
  %v2321 = vld [vmem:[%s5] sm:$0xff]
  %v2322 = vld [vmem:[%s5 + $0x8] sm:$0xff]
  %v2323 = vld [vmem:[%s5 + $0x10] sm:$0xff]
  %v2324 = vld [vmem:[%s5 + $0x18] sm:$0xff]
  %v2325 = vld [vmem:[%s5 + $0x20] sm:$0xff]
  %v2326 = vld [vmem:[%s5 + $0x28] sm:$0xff]
  %v2327 = vld [vmem:[%s5 + $0x30] sm:$0xff]
  %v2328 = vld [vmem:[%s5 + $0x38] sm:$0xff]
  %v2330 = vsel %vm32, %v2304, 0
  %v2333 = vsel %vm32, %v2305, 0
  %v2336 = vsel %vm32, %v2306, 0
  %v2339 = vsel %vm32, %v2307, 0
  %v2342 = vsel %vm32, %v2308, 0
  %v2345 = vsel %vm32, %v2309, 0
  %v2348 = vsel %vm32, %v2310, 0
  %v2351 = vsel %vm32, %v2311, 0
  %v2354 = vsel %vm32, %v2312, 0
  %v2357 = vsel %vm32, %v2313, 0
  %v2360 = vsel %vm32, %v2314, 0
  %v2363 = vsel %vm32, %v2315, 0
  %v2366 = vsel %vm32, %v2316, 0
  %v2369 = vsel %vm32, %v2317, 0
  %v2372 = vsel %vm32, %v2318, 0
  %v2375 = vsel %vm32, %v2319, 0
  %v2378 = vsel %vm32, %v2320, 0
  %2380 = vmatpush.msra.mxu0 0.0
  %2381 = vmatpush.msra.mxu0 0.0
  %2382 = vmatpush.msra.mxu0 0.0
  %2383 = vmatpush.msra.mxu0 0.0
  %2384 = vmatpush.msra.mxu0 0.0
  %2385 = vmatpush.msra.mxu0 0.0
  %2386 = vmatpush.msra.mxu0 0.0
  %2387 = vmatpush.msra.mxu0 0.0
  %2388 = vmatpush.msra.mxu0 %v2328
  %2389 = vmatpush.msra.mxu0 %v2327
  %2390 = vmatpush.msra.mxu0 %v2326
  %2391 = vmatpush.msra.mxu0 %v2325
  %2392 = vmatpush.msra.mxu0 %v2324
  %2393 = vmatpush.msra.mxu0 %v2323
  %2394 = vmatpush.msra.mxu0 %v2322
  %2395 = vmatpush.msra.mxu0 %v2321
  %2396 = vmatmul.f32.gmra.mxu0 %v2330
  %v2397 = vpop.f32.mrf.mxu0
  %v2398 = vadd.f32 0.0, %v2397
  %2399 = vmatmul.f32.gmra.mxu0 %v2333
  %v2400 = vpop.f32.mrf.mxu0
  %v2401 = vadd.f32 0.0, %v2400
  %2402 = vmatmul.f32.gmra.mxu0 %v2336
  %v2403 = vpop.f32.mrf.mxu0
  %v2404 = vadd.f32 0.0, %v2403
  %2405 = vmatmul.f32.gmra.mxu0 %v2339
  %v2406 = vpop.f32.mrf.mxu0
  %v2407 = vadd.f32 0.0, %v2406
  %2408 = vmatmul.f32.gmra.mxu0 %v2342
  %v2409 = vpop.f32.mrf.mxu0
  %v2410 = vadd.f32 0.0, %v2409
  %2411 = vmatmul.f32.gmra.mxu0 %v2345
  %v2412 = vpop.f32.mrf.mxu0
  %v2413 = vadd.f32 0.0, %v2412
  %2414 = vmatmul.f32.gmra.mxu0 %v2348
  %v2415 = vpop.f32.mrf.mxu0
  %v2416 = vadd.f32 0.0, %v2415
  %2417 = vmatmul.f32.gmra.mxu0 %v2351
  %v2418 = vpop.f32.mrf.mxu0
  %v2419 = vadd.f32 0.0, %v2418
  %2420 = vmatmul.f32.gmra.mxu0 %v2354
  %v2421 = vpop.f32.mrf.mxu0
  %v2422 = vadd.f32 0.0, %v2421
  %2423 = vmatmul.f32.gmra.mxu0 %v2357
  %v2424 = vpop.f32.mrf.mxu0
  %v2425 = vadd.f32 0.0, %v2424
  %2426 = vmatmul.f32.gmra.mxu0 %v2360
  %v2427 = vpop.f32.mrf.mxu0
  %v2428 = vadd.f32 0.0, %v2427
  %2429 = vmatmul.f32.gmra.mxu0 %v2363
  %v2430 = vpop.f32.mrf.mxu0
  %v2431 = vadd.f32 0.0, %v2430
  %2432 = vmatmul.f32.gmra.mxu0 %v2366
  %v2433 = vpop.f32.mrf.mxu0
  %v2434 = vadd.f32 0.0, %v2433
  %2435 = vmatmul.f32.gmra.mxu0 %v2369
  %v2436 = vpop.f32.mrf.mxu0
  %v2437 = vadd.f32 0.0, %v2436
  %2438 = vmatmul.f32.gmra.mxu0 %v2372
  %v2439 = vpop.f32.mrf.mxu0
  %v2440 = vadd.f32 0.0, %v2439
  %2441 = vmatmul.f32.gmra.mxu0 %v2375
  %v2442 = vpop.f32.mrf.mxu0
  %v2443 = vadd.f32 0.0, %v2442
  %2444 = vmatmul.f32.gmra.mxu0 %v2378
  %v2445 = vpop.f32.mrf.mxu0
  %v2446 = vadd.f32 0.0, %v2445
  %2447 = vdwg.mxu0
  %v2449 = vsel %vm32, %v2278, 0
  %v2452 = vsel %vm32, %v2279, 0
  %v2455 = vsel %vm32, %v2280, 0
  %v2458 = vsel %vm32, %v2281, 0
  %v2461 = vsel %vm32, %v2282, 0
  %v2464 = vsel %vm32, %v2283, 0
  %v2467 = vsel %vm32, %v2284, 0
  %v2470 = vsel %vm32, %v2285, 0
  %v2473 = vsel %vm32, %v2286, 0
  %v2476 = vsel %vm32, %v2287, 0
  %v2479 = vsel %vm32, %v2288, 0
  %v2482 = vsel %vm32, %v2289, 0
  %v2485 = vsel %vm32, %v2290, 0
  %v2488 = vsel %vm32, %v2291, 0
  %v2491 = vsel %vm32, %v2292, 0
  %v2494 = vsel %vm32, %v2293, 0
  %v2497 = vsel %vm32, %v2294, 0
  %2499 = vmatpush.msra.mxu0 0.0
  %2500 = vmatpush.msra.mxu0 0.0
  %2501 = vmatpush.msra.mxu0 0.0
  %2502 = vmatpush.msra.mxu0 0.0
  %2503 = vmatpush.msra.mxu0 0.0
  %2504 = vmatpush.msra.mxu0 0.0
  %2505 = vmatpush.msra.mxu0 0.0
  %2506 = vmatpush.msra.mxu0 0.0
  %2507 = vmatpush.msra.mxu0 %v2302
  %2508 = vmatpush.msra.mxu0 %v2301
  %2509 = vmatpush.msra.mxu0 %v2300
  %2510 = vmatpush.msra.mxu0 %v2299
  %2511 = vmatpush.msra.mxu0 %v2298
  %2512 = vmatpush.msra.mxu0 %v2297
  %2513 = vmatpush.msra.mxu0 %v2296
  %2514 = vmatpush.msra.mxu0 %v2295
  %2515 = vmatmul.f32.gmra.mxu0 %v2449
  %v2516 = vpop.f32.mrf.mxu0
  %v2517 = vadd.f32 %v2398, %v2516
  %2518 = vmatmul.f32.gmra.mxu0 %v2452
  %v2519 = vpop.f32.mrf.mxu0
  %v2520 = vadd.f32 %v2401, %v2519
  %2521 = vmatmul.f32.gmra.mxu0 %v2455
  %v2522 = vpop.f32.mrf.mxu0
  %v2523 = vadd.f32 %v2404, %v2522
  %2524 = vmatmul.f32.gmra.mxu0 %v2458
  %v2525 = vpop.f32.mrf.mxu0
  %v2526 = vadd.f32 %v2407, %v2525
  %2527 = vmatmul.f32.gmra.mxu0 %v2461
  %v2528 = vpop.f32.mrf.mxu0
  %v2529 = vadd.f32 %v2410, %v2528
  %2530 = vmatmul.f32.gmra.mxu0 %v2464
  %v2531 = vpop.f32.mrf.mxu0
  %v2532 = vadd.f32 %v2413, %v2531
  %2533 = vmatmul.f32.gmra.mxu0 %v2467
  %v2534 = vpop.f32.mrf.mxu0
  %v2535 = vadd.f32 %v2416, %v2534
  %2536 = vmatmul.f32.gmra.mxu0 %v2470
  %v2537 = vpop.f32.mrf.mxu0
  %v2538 = vadd.f32 %v2419, %v2537
  %2539 = vmatmul.f32.gmra.mxu0 %v2473
  %v2540 = vpop.f32.mrf.mxu0
  %v2541 = vadd.f32 %v2422, %v2540
  %2542 = vmatmul.f32.gmra.mxu0 %v2476
  %v2543 = vpop.f32.mrf.mxu0
  %v2544 = vadd.f32 %v2425, %v2543
  %2545 = vmatmul.f32.gmra.mxu0 %v2479
  %v2546 = vpop.f32.mrf.mxu0
  %v2547 = vadd.f32 %v2428, %v2546
  %2548 = vmatmul.f32.gmra.mxu0 %v2482
  %v2549 = vpop.f32.mrf.mxu0
  %v2550 = vadd.f32 %v2431, %v2549
  %2551 = vmatmul.f32.gmra.mxu0 %v2485
  %v2552 = vpop.f32.mrf.mxu0
  %v2553 = vadd.f32 %v2434, %v2552
  %2554 = vmatmul.f32.gmra.mxu0 %v2488
  %v2555 = vpop.f32.mrf.mxu0
  %v2556 = vadd.f32 %v2437, %v2555
  %2557 = vmatmul.f32.gmra.mxu0 %v2491
  %v2558 = vpop.f32.mrf.mxu0
  %v2559 = vadd.f32 %v2440, %v2558
  %2560 = vmatmul.f32.gmra.mxu0 %v2494
  %v2561 = vpop.f32.mrf.mxu0
  %v2562 = vadd.f32 %v2443, %v2561
  %2563 = vmatmul.f32.gmra.mxu0 %v2497
  %v2564 = vpop.f32.mrf.mxu0
  %v2565 = vadd.f32 %v2446, %v2564
  %2566 = vdwg.mxu0
  %v2567 = vld [vmem:[#allocation2 + $0x1] sm:$0xff]
  %v2568 = vld [vmem:[#allocation2 + $0x9] sm:$0xff]
  %v2569 = vld [vmem:[#allocation2 + $0x11] sm:$0xff]
  %v2570 = vld [vmem:[#allocation2 + $0x19] sm:$0xff]
  %v2571 = vld [vmem:[#allocation2 + $0x21] sm:$0xff]
  %v2572 = vld [vmem:[#allocation2 + $0x29] sm:$0xff]
  %v2573 = vld [vmem:[#allocation2 + $0x31] sm:$0xff]
  %v2574 = vld [vmem:[#allocation2 + $0x39] sm:$0xff]
  %v2575 = vld [vmem:[#allocation2 + $0x41] sm:$0xff]
  %v2576 = vld [vmem:[#allocation2 + $0x49] sm:$0xff]
  %v2577 = vld [vmem:[#allocation2 + $0x51] sm:$0xff]
  %v2578 = vld [vmem:[#allocation2 + $0x59] sm:$0xff]
  %v2579 = vld [vmem:[#allocation2 + $0x61] sm:$0xff]
  %v2580 = vld [vmem:[#allocation2 + $0x69] sm:$0xff]
  %v2581 = vld [vmem:[#allocation2 + $0x71] sm:$0xff]
  %v2582 = vld [vmem:[#allocation2 + $0x79] sm:$0xff]
  %v2583 = vld [vmem:[#allocation2 + $0x81] sm:$0xf]
  %v2584 = vld [vmem:[%s510] sm:$0xff]
  %v2585 = vld [vmem:[%s510 + $0x8] sm:$0xff]
  %v2586 = vld [vmem:[%s510 + $0x10] sm:$0xff]
  %v2587 = vld [vmem:[%s510 + $0x18] sm:$0xff]
  %v2588 = vld [vmem:[%s510 + $0x20] sm:$0xff]
  %v2589 = vld [vmem:[%s510 + $0x28] sm:$0xff]
  %v2590 = vld [vmem:[%s510 + $0x30] sm:$0xff]
  %v2591 = vld [vmem:[%s510 + $0x38] sm:$0xff]
  %v2593 = vsel %vm32, %v2567, 0
  %v2596 = vsel %vm32, %v2568, 0
  %v2599 = vsel %vm32, %v2569, 0
  %v2602 = vsel %vm32, %v2570, 0
  %v2605 = vsel %vm32, %v2571, 0
  %v2608 = vsel %vm32, %v2572, 0
  %v2611 = vsel %vm32, %v2573, 0
  %v2614 = vsel %vm32, %v2574, 0
  %v2617 = vsel %vm32, %v2575, 0
  %v2620 = vsel %vm32, %v2576, 0
  %v2623 = vsel %vm32, %v2577, 0
  %v2626 = vsel %vm32, %v2578, 0
  %v2629 = vsel %vm32, %v2579, 0
  %v2632 = vsel %vm32, %v2580, 0
  %v2635 = vsel %vm32, %v2581, 0
  %v2638 = vsel %vm32, %v2582, 0
  %v2641 = vsel %vm32, %v2583, 0
  %2643 = vmatpush.msra.mxu0 0.0
  %2644 = vmatpush.msra.mxu0 0.0
  %2645 = vmatpush.msra.mxu0 0.0
  %2646 = vmatpush.msra.mxu0 0.0
  %2647 = vmatpush.msra.mxu0 0.0
  %2648 = vmatpush.msra.mxu0 0.0
  %2649 = vmatpush.msra.mxu0 0.0
  %2650 = vmatpush.msra.mxu0 0.0
  %2651 = vmatpush.msra.mxu0 %v2591
  %2652 = vmatpush.msra.mxu0 %v2590
  %2653 = vmatpush.msra.mxu0 %v2589
  %2654 = vmatpush.msra.mxu0 %v2588
  %2655 = vmatpush.msra.mxu0 %v2587
  %2656 = vmatpush.msra.mxu0 %v2586
  %2657 = vmatpush.msra.mxu0 %v2585
  %2658 = vmatpush.msra.mxu0 %v2584
  %2659 = vmatmul.f32.gmra.mxu0 %v2593
  %v2660 = vpop.f32.mrf.mxu0
  %v2661 = vadd.f32 0.0, %v2660
  %2662 = vmatmul.f32.gmra.mxu0 %v2596
  %v2663 = vpop.f32.mrf.mxu0
  %v2664 = vadd.f32 0.0, %v2663
  %2665 = vmatmul.f32.gmra.mxu0 %v2599
  %v2666 = vpop.f32.mrf.mxu0
  %v2667 = vadd.f32 0.0, %v2666
  %2668 = vmatmul.f32.gmra.mxu0 %v2602
  %v2669 = vpop.f32.mrf.mxu0
  %v2670 = vadd.f32 0.0, %v2669
  %2671 = vmatmul.f32.gmra.mxu0 %v2605
  %v2672 = vpop.f32.mrf.mxu0
  %v2673 = vadd.f32 0.0, %v2672
  %2674 = vmatmul.f32.gmra.mxu0 %v2608
  %v2675 = vpop.f32.mrf.mxu0
  %v2676 = vadd.f32 0.0, %v2675
  %2677 = vmatmul.f32.gmra.mxu0 %v2611
  %v2678 = vpop.f32.mrf.mxu0
  %v2679 = vadd.f32 0.0, %v2678
  %2680 = vmatmul.f32.gmra.mxu0 %v2614
  %v2681 = vpop.f32.mrf.mxu0
  %v2682 = vadd.f32 0.0, %v2681
  %2683 = vmatmul.f32.gmra.mxu0 %v2617
  %v2684 = vpop.f32.mrf.mxu0
  %v2685 = vadd.f32 0.0, %v2684
  %2686 = vmatmul.f32.gmra.mxu0 %v2620
  %v2687 = vpop.f32.mrf.mxu0
  %v2688 = vadd.f32 0.0, %v2687
  %2689 = vmatmul.f32.gmra.mxu0 %v2623
  %v2690 = vpop.f32.mrf.mxu0
  %v2691 = vadd.f32 0.0, %v2690
  %2692 = vmatmul.f32.gmra.mxu0 %v2626
  %v2693 = vpop.f32.mrf.mxu0
  %v2694 = vadd.f32 0.0, %v2693
  %2695 = vmatmul.f32.gmra.mxu0 %v2629
  %v2696 = vpop.f32.mrf.mxu0
  %v2697 = vadd.f32 0.0, %v2696
  %2698 = vmatmul.f32.gmra.mxu0 %v2632
  %v2699 = vpop.f32.mrf.mxu0
  %v2700 = vadd.f32 0.0, %v2699
  %2701 = vmatmul.f32.gmra.mxu0 %v2635
  %v2702 = vpop.f32.mrf.mxu0
  %v2703 = vadd.f32 0.0, %v2702
  %2704 = vmatmul.f32.gmra.mxu0 %v2638
  %v2705 = vpop.f32.mrf.mxu0
  %v2706 = vadd.f32 0.0, %v2705
  %2707 = vmatmul.f32.gmra.mxu0 %v2641
  %v2708 = vpop.f32.mrf.mxu0
  %v2709 = vadd.f32 0.0, %v2708
  %2710 = vdwg.mxu0
  %v2711 = vadd.f32 %v2517, %v2661
  %v2712 = vadd.f32 %v2520, %v2664
  %v2713 = vadd.f32 %v2523, %v2667
  %v2714 = vadd.f32 %v2526, %v2670
  %v2715 = vadd.f32 %v2529, %v2673
  %v2716 = vadd.f32 %v2532, %v2676
  %v2717 = vadd.f32 %v2535, %v2679
  %v2718 = vadd.f32 %v2538, %v2682
  %v2719 = vadd.f32 %v2541, %v2685
  %v2720 = vadd.f32 %v2544, %v2688
  %v2721 = vadd.f32 %v2547, %v2691
  %v2722 = vadd.f32 %v2550, %v2694
  %v2723 = vadd.f32 %v2553, %v2697
  %v2724 = vadd.f32 %v2556, %v2700
  %v2725 = vadd.f32 %v2559, %v2703
  %v2726 = vadd.f32 %v2562, %v2706
  %v2727 = vadd.f32 %v2565, %v2709
  %v2728 = vld [vmem:[%s2303 + $0x1] sm:$0xff]
  %v2729 = vld [vmem:[%s2303 + $0x9] sm:$0xff]
  %v2730 = vld [vmem:[%s2303 + $0x11] sm:$0xff]
  %v2731 = vld [vmem:[%s2303 + $0x19] sm:$0xff]
  %v2732 = vld [vmem:[%s2303 + $0x21] sm:$0xff]
  %v2733 = vld [vmem:[%s2303 + $0x29] sm:$0xff]
  %v2734 = vld [vmem:[%s2303 + $0x31] sm:$0xff]
  %v2735 = vld [vmem:[%s2303 + $0x39] sm:$0xff]
  %v2736 = vld [vmem:[%s2303 + $0x41] sm:$0xff]
  %v2737 = vld [vmem:[%s2303 + $0x49] sm:$0xff]
  %v2738 = vld [vmem:[%s2303 + $0x51] sm:$0xff]
  %v2739 = vld [vmem:[%s2303 + $0x59] sm:$0xff]
  %v2740 = vld [vmem:[%s2303 + $0x61] sm:$0xff]
  %v2741 = vld [vmem:[%s2303 + $0x69] sm:$0xff]
  %v2742 = vld [vmem:[%s2303 + $0x71] sm:$0xff]
  %v2743 = vld [vmem:[%s2303 + $0x79] sm:$0xff]
  %v2744 = vld [vmem:[%s2303 + $0x81] sm:$0xf]
  %v2745 = vld [vmem:[%s672] sm:$0xff]
  %v2746 = vld [vmem:[%s672 + $0x8] sm:$0xff]
  %v2747 = vld [vmem:[%s672 + $0x10] sm:$0xff]
  %v2748 = vld [vmem:[%s672 + $0x18] sm:$0xff]
  %v2749 = vld [vmem:[%s672 + $0x20] sm:$0xff]
  %v2750 = vld [vmem:[%s672 + $0x28] sm:$0xff]
  %v2751 = vld [vmem:[%s672 + $0x30] sm:$0xff]
  %v2752 = vld [vmem:[%s672 + $0x38] sm:$0xff]
  %v2754 = vsel %vm32, %v2728, 0
  %v2757 = vsel %vm32, %v2729, 0
  %v2760 = vsel %vm32, %v2730, 0
  %v2763 = vsel %vm32, %v2731, 0
  %v2766 = vsel %vm32, %v2732, 0
  %v2769 = vsel %vm32, %v2733, 0
  %v2772 = vsel %vm32, %v2734, 0
  %v2775 = vsel %vm32, %v2735, 0
  %v2778 = vsel %vm32, %v2736, 0
  %v2781 = vsel %vm32, %v2737, 0
  %v2784 = vsel %vm32, %v2738, 0
  %v2787 = vsel %vm32, %v2739, 0
  %v2790 = vsel %vm32, %v2740, 0
  %v2793 = vsel %vm32, %v2741, 0
  %v2796 = vsel %vm32, %v2742, 0
  %v2799 = vsel %vm32, %v2743, 0
  %v2802 = vsel %vm32, %v2744, 0
  %2804 = vmatpush.msra.mxu0 0.0
  %2805 = vmatpush.msra.mxu0 0.0
  %2806 = vmatpush.msra.mxu0 0.0
  %2807 = vmatpush.msra.mxu0 0.0
  %2808 = vmatpush.msra.mxu0 0.0
  %2809 = vmatpush.msra.mxu0 0.0
  %2810 = vmatpush.msra.mxu0 0.0
  %2811 = vmatpush.msra.mxu0 0.0
  %2812 = vmatpush.msra.mxu0 %v2752
  %2813 = vmatpush.msra.mxu0 %v2751
  %2814 = vmatpush.msra.mxu0 %v2750
  %2815 = vmatpush.msra.mxu0 %v2749
  %2816 = vmatpush.msra.mxu0 %v2748
  %2817 = vmatpush.msra.mxu0 %v2747
  %2818 = vmatpush.msra.mxu0 %v2746
  %2819 = vmatpush.msra.mxu0 %v2745
  %2820 = vmatmul.f32.gmra.mxu0 %v2754
  %v2821 = vpop.f32.mrf.mxu0
  %v2822 = vadd.f32 0.0, %v2821
  %2823 = vmatmul.f32.gmra.mxu0 %v2757
  %v2824 = vpop.f32.mrf.mxu0
  %v2825 = vadd.f32 0.0, %v2824
  %2826 = vmatmul.f32.gmra.mxu0 %v2760
  %v2827 = vpop.f32.mrf.mxu0
  %v2828 = vadd.f32 0.0, %v2827
  %2829 = vmatmul.f32.gmra.mxu0 %v2763
  %v2830 = vpop.f32.mrf.mxu0
  %v2831 = vadd.f32 0.0, %v2830
  %2832 = vmatmul.f32.gmra.mxu0 %v2766
  %v2833 = vpop.f32.mrf.mxu0
  %v2834 = vadd.f32 0.0, %v2833
  %2835 = vmatmul.f32.gmra.mxu0 %v2769
  %v2836 = vpop.f32.mrf.mxu0
  %v2837 = vadd.f32 0.0, %v2836
  %2838 = vmatmul.f32.gmra.mxu0 %v2772
  %v2839 = vpop.f32.mrf.mxu0
  %v2840 = vadd.f32 0.0, %v2839
  %2841 = vmatmul.f32.gmra.mxu0 %v2775
  %v2842 = vpop.f32.mrf.mxu0
  %v2843 = vadd.f32 0.0, %v2842
  %2844 = vmatmul.f32.gmra.mxu0 %v2778
  %v2845 = vpop.f32.mrf.mxu0
  %v2846 = vadd.f32 0.0, %v2845
  %2847 = vmatmul.f32.gmra.mxu0 %v2781
  %v2848 = vpop.f32.mrf.mxu0
  %v2849 = vadd.f32 0.0, %v2848
  %2850 = vmatmul.f32.gmra.mxu0 %v2784
  %v2851 = vpop.f32.mrf.mxu0
  %v2852 = vadd.f32 0.0, %v2851
  %2853 = vmatmul.f32.gmra.mxu0 %v2787
  %v2854 = vpop.f32.mrf.mxu0
  %v2855 = vadd.f32 0.0, %v2854
  %2856 = vmatmul.f32.gmra.mxu0 %v2790
  %v2857 = vpop.f32.mrf.mxu0
  %v2858 = vadd.f32 0.0, %v2857
  %2859 = vmatmul.f32.gmra.mxu0 %v2793
  %v2860 = vpop.f32.mrf.mxu0
  %v2861 = vadd.f32 0.0, %v2860
  %2862 = vmatmul.f32.gmra.mxu0 %v2796
  %v2863 = vpop.f32.mrf.mxu0
  %v2864 = vadd.f32 0.0, %v2863
  %2865 = vmatmul.f32.gmra.mxu0 %v2799
  %v2866 = vpop.f32.mrf.mxu0
  %v2867 = vadd.f32 0.0, %v2866
  %2868 = vmatmul.f32.gmra.mxu0 %v2802
  %v2869 = vpop.f32.mrf.mxu0
  %v2870 = vadd.f32 0.0, %v2869
  %2871 = vdwg.mxu0
  %v2872 = vadd.f32 %v2711, %v2822
  %v2873 = vadd.f32 %v2712, %v2825
  %v2874 = vadd.f32 %v2713, %v2828
  %v2875 = vadd.f32 %v2714, %v2831
  %v2876 = vadd.f32 %v2715, %v2834
  %v2877 = vadd.f32 %v2716, %v2837
  %v2878 = vadd.f32 %v2717, %v2840
  %v2879 = vadd.f32 %v2718, %v2843
  %v2880 = vadd.f32 %v2719, %v2846
  %v2881 = vadd.f32 %v2720, %v2849
  %v2882 = vadd.f32 %v2721, %v2852
  %v2883 = vadd.f32 %v2722, %v2855
  %v2884 = vadd.f32 %v2723, %v2858
  %v2885 = vadd.f32 %v2724, %v2861
  %v2886 = vadd.f32 %v2725, %v2864
  %v2887 = vadd.f32 %v2726, %v2867
  %v2888 = vadd.f32 %v2727, %v2870
  %v2889 = vld [vmem:[#allocation2 + $0xc] sm:$0xff]
  %v2890 = vld [vmem:[#allocation2 + $0x14] sm:$0xff]
  %v2891 = vld [vmem:[#allocation2 + $0x1c] sm:$0xff]
  %v2892 = vld [vmem:[#allocation2 + $0x24] sm:$0xff]
  %v2893 = vld [vmem:[#allocation2 + $0x2c] sm:$0xff]
  %v2894 = vld [vmem:[#allocation2 + $0x34] sm:$0xff]
  %v2895 = vld [vmem:[#allocation2 + $0x3c] sm:$0xff]
  %v2896 = vld [vmem:[#allocation2 + $0x44] sm:$0xff]
  %v2897 = vld [vmem:[#allocation2 + $0x4c] sm:$0xff]
  %v2898 = vld [vmem:[#allocation2 + $0x54] sm:$0xff]
  %v2899 = vld [vmem:[#allocation2 + $0x5c] sm:$0xff]
  %v2900 = vld [vmem:[#allocation2 + $0x64] sm:$0xff]
  %v2901 = vld [vmem:[#allocation2 + $0x6c] sm:$0xff]
  %v2902 = vld [vmem:[#allocation2 + $0x74] sm:$0xff]
  %v2903 = vld [vmem:[#allocation2 + $0x7c] sm:$0xff]
  %v2904 = vld [vmem:[#allocation2 + $0x84] sm:$0xff]
  %v2905 = vld [vmem:[#allocation2 + $0x8c] sm:$0xf]
  %v2906 = vld [vmem:[%s834] sm:$0xff]
  %v2907 = vld [vmem:[%s834 + $0x8] sm:$0xff]
  %v2908 = vld [vmem:[%s834 + $0x10] sm:$0xff]
  %v2909 = vld [vmem:[%s834 + $0x18] sm:$0xff]
  %v2910 = vld [vmem:[%s834 + $0x20] sm:$0xff]
  %v2911 = vld [vmem:[%s834 + $0x28] sm:$0xff]
  %v2912 = vld [vmem:[%s834 + $0x30] sm:$0xff]
  %v2913 = vld [vmem:[%s834 + $0x38] sm:$0xff]
  %v2915 = vsel %vm32, %v2889, 0
  %v2918 = vsel %vm32, %v2890, 0
  %v2921 = vsel %vm32, %v2891, 0
  %v2924 = vsel %vm32, %v2892, 0
  %v2927 = vsel %vm32, %v2893, 0
  %v2930 = vsel %vm32, %v2894, 0
  %v2933 = vsel %vm32, %v2895, 0
  %v2936 = vsel %vm32, %v2896, 0
  %v2939 = vsel %vm32, %v2897, 0
  %v2942 = vsel %vm32, %v2898, 0
  %v2945 = vsel %vm32, %v2899, 0
  %v2948 = vsel %vm32, %v2900, 0
  %v2951 = vsel %vm32, %v2901, 0
  %v2954 = vsel %vm32, %v2902, 0
  %v2957 = vsel %vm32, %v2903, 0
  %v2960 = vsel %vm32, %v2904, 0
  %v2963 = vsel %vm32, %v2905, 0
  %2965 = vmatpush.msra.mxu0 0.0
  %2966 = vmatpush.msra.mxu0 0.0
  %2967 = vmatpush.msra.mxu0 0.0
  %2968 = vmatpush.msra.mxu0 0.0
  %2969 = vmatpush.msra.mxu0 0.0
  %2970 = vmatpush.msra.mxu0 0.0
  %2971 = vmatpush.msra.mxu0 0.0
  %2972 = vmatpush.msra.mxu0 0.0
  %2973 = vmatpush.msra.mxu0 %v2913
  %2974 = vmatpush.msra.mxu0 %v2912
  %2975 = vmatpush.msra.mxu0 %v2911
  %2976 = vmatpush.msra.mxu0 %v2910
  %2977 = vmatpush.msra.mxu0 %v2909
  %2978 = vmatpush.msra.mxu0 %v2908
  %2979 = vmatpush.msra.mxu0 %v2907
  %2980 = vmatpush.msra.mxu0 %v2906
  %2981 = vmatmul.f32.gmra.mxu0 %v2915
  %v2982 = vpop.f32.mrf.mxu0
  %v2983 = vadd.f32 0.0, %v2982
  %2984 = vmatmul.f32.gmra.mxu0 %v2918
  %v2985 = vpop.f32.mrf.mxu0
  %v2986 = vadd.f32 0.0, %v2985
  %2987 = vmatmul.f32.gmra.mxu0 %v2921
  %v2988 = vpop.f32.mrf.mxu0
  %v2989 = vadd.f32 0.0, %v2988
  %2990 = vmatmul.f32.gmra.mxu0 %v2924
  %v2991 = vpop.f32.mrf.mxu0
  %v2992 = vadd.f32 0.0, %v2991
  %2993 = vmatmul.f32.gmra.mxu0 %v2927
  %v2994 = vpop.f32.mrf.mxu0
  %v2995 = vadd.f32 0.0, %v2994
  %2996 = vmatmul.f32.gmra.mxu0 %v2930
  %v2997 = vpop.f32.mrf.mxu0
  %v2998 = vadd.f32 0.0, %v2997
  %2999 = vmatmul.f32.gmra.mxu0 %v2933
  %v3000 = vpop.f32.mrf.mxu0
  %v3001 = vadd.f32 0.0, %v3000
  %3002 = vmatmul.f32.gmra.mxu0 %v2936
  %v3003 = vpop.f32.mrf.mxu0
  %v3004 = vadd.f32 0.0, %v3003
  %3005 = vmatmul.f32.gmra.mxu0 %v2939
  %v3006 = vpop.f32.mrf.mxu0
  %v3007 = vadd.f32 0.0, %v3006
  %3008 = vmatmul.f32.gmra.mxu0 %v2942
  %v3009 = vpop.f32.mrf.mxu0
  %v3010 = vadd.f32 0.0, %v3009
  %3011 = vmatmul.f32.gmra.mxu0 %v2945
  %v3012 = vpop.f32.mrf.mxu0
  %v3013 = vadd.f32 0.0, %v3012
  %3014 = vmatmul.f32.gmra.mxu0 %v2948
  %v3015 = vpop.f32.mrf.mxu0
  %v3016 = vadd.f32 0.0, %v3015
  %3017 = vmatmul.f32.gmra.mxu0 %v2951
  %v3018 = vpop.f32.mrf.mxu0
  %v3019 = vadd.f32 0.0, %v3018
  %3020 = vmatmul.f32.gmra.mxu0 %v2954
  %v3021 = vpop.f32.mrf.mxu0
  %v3022 = vadd.f32 0.0, %v3021
  %3023 = vmatmul.f32.gmra.mxu0 %v2957
  %v3024 = vpop.f32.mrf.mxu0
  %v3025 = vadd.f32 0.0, %v3024
  %3026 = vmatmul.f32.gmra.mxu0 %v2960
  %v3027 = vpop.f32.mrf.mxu0
  %v3028 = vadd.f32 0.0, %v3027
  %3029 = vmatmul.f32.gmra.mxu0 %v2963
  %v3030 = vpop.f32.mrf.mxu0
  %v3031 = vadd.f32 0.0, %v3030
  %3032 = vdwg.mxu0
  %v3033 = vadd.f32 %v2872, %v2983
  %v3034 = vadd.f32 %v2873, %v2986
  %v3035 = vadd.f32 %v2874, %v2989
  %v3036 = vadd.f32 %v2875, %v2992
  %v3037 = vadd.f32 %v2876, %v2995
  %v3038 = vadd.f32 %v2877, %v2998
  %v3039 = vadd.f32 %v2878, %v3001
  %v3040 = vadd.f32 %v2879, %v3004
  %v3041 = vadd.f32 %v2880, %v3007
  %v3042 = vadd.f32 %v2881, %v3010
  %v3043 = vadd.f32 %v2882, %v3013
  %v3044 = vadd.f32 %v2883, %v3016
  %v3045 = vadd.f32 %v2884, %v3019
  %v3046 = vadd.f32 %v2885, %v3022
  %v3047 = vadd.f32 %v2886, %v3025
  %v3048 = vadd.f32 %v2887, %v3028
  %v3049 = vadd.f32 %v2888, %v3031
  %v3050 = vld [vmem:[%s2303 + $0xc] sm:$0xff]
  %v3051 = vld [vmem:[%s2303 + $0x14] sm:$0xff]
  %v3052 = vld [vmem:[%s2303 + $0x1c] sm:$0xff]
  %v3053 = vld [vmem:[%s2303 + $0x24] sm:$0xff]
  %v3054 = vld [vmem:[%s2303 + $0x2c] sm:$0xff]
  %v3055 = vld [vmem:[%s2303 + $0x34] sm:$0xff]
  %v3056 = vld [vmem:[%s2303 + $0x3c] sm:$0xff]
  %v3057 = vld [vmem:[%s2303 + $0x44] sm:$0xff]
  %v3058 = vld [vmem:[%s2303 + $0x4c] sm:$0xff]
  %v3059 = vld [vmem:[%s2303 + $0x54] sm:$0xff]
  %v3060 = vld [vmem:[%s2303 + $0x5c] sm:$0xff]
  %v3061 = vld [vmem:[%s2303 + $0x64] sm:$0xff]
  %v3062 = vld [vmem:[%s2303 + $0x6c] sm:$0xff]
  %v3063 = vld [vmem:[%s2303 + $0x74] sm:$0xff]
  %v3064 = vld [vmem:[%s2303 + $0x7c] sm:$0xff]
  %v3065 = vld [vmem:[%s2303 + $0x84] sm:$0xff]
  %v3066 = vld [vmem:[%s2303 + $0x8c] sm:$0xf]
  %v3067 = vld [vmem:[%s996] sm:$0xff]
  %v3068 = vld [vmem:[%s996 + $0x8] sm:$0xff]
  %v3069 = vld [vmem:[%s996 + $0x10] sm:$0xff]
  %v3070 = vld [vmem:[%s996 + $0x18] sm:$0xff]
  %v3071 = vld [vmem:[%s996 + $0x20] sm:$0xff]
  %v3072 = vld [vmem:[%s996 + $0x28] sm:$0xff]
  %v3073 = vld [vmem:[%s996 + $0x30] sm:$0xff]
  %v3074 = vld [vmem:[%s996 + $0x38] sm:$0xff]
  %v3076 = vsel %vm32, %v3050, 0
  %v3079 = vsel %vm32, %v3051, 0
  %v3082 = vsel %vm32, %v3052, 0
  %v3085 = vsel %vm32, %v3053, 0
  %v3088 = vsel %vm32, %v3054, 0
  %v3091 = vsel %vm32, %v3055, 0
  %v3094 = vsel %vm32, %v3056, 0
  %v3097 = vsel %vm32, %v3057, 0
  %v3100 = vsel %vm32, %v3058, 0
  %v3103 = vsel %vm32, %v3059, 0
  %v3106 = vsel %vm32, %v3060, 0
  %v3109 = vsel %vm32, %v3061, 0
  %v3112 = vsel %vm32, %v3062, 0
  %v3115 = vsel %vm32, %v3063, 0
  %v3118 = vsel %vm32, %v3064, 0
  %v3121 = vsel %vm32, %v3065, 0
  %v3124 = vsel %vm32, %v3066, 0
  %3126 = vmatpush.msra.mxu0 0.0
  %3127 = vmatpush.msra.mxu0 0.0
  %3128 = vmatpush.msra.mxu0 0.0
  %3129 = vmatpush.msra.mxu0 0.0
  %3130 = vmatpush.msra.mxu0 0.0
  %3131 = vmatpush.msra.mxu0 0.0
  %3132 = vmatpush.msra.mxu0 0.0
  %3133 = vmatpush.msra.mxu0 0.0
  %3134 = vmatpush.msra.mxu0 %v3074
  %3135 = vmatpush.msra.mxu0 %v3073
  %3136 = vmatpush.msra.mxu0 %v3072
  %3137 = vmatpush.msra.mxu0 %v3071
  %3138 = vmatpush.msra.mxu0 %v3070
  %3139 = vmatpush.msra.mxu0 %v3069
  %3140 = vmatpush.msra.mxu0 %v3068
  %3141 = vmatpush.msra.mxu0 %v3067
  %3142 = vmatmul.f32.gmra.mxu0 %v3076
  %v3143 = vpop.f32.mrf.mxu0
  %v3144 = vadd.f32 0.0, %v3143
  %3145 = vmatmul.f32.gmra.mxu0 %v3079
  %v3146 = vpop.f32.mrf.mxu0
  %v3147 = vadd.f32 0.0, %v3146
  %3148 = vmatmul.f32.gmra.mxu0 %v3082
  %v3149 = vpop.f32.mrf.mxu0
  %v3150 = vadd.f32 0.0, %v3149
  %3151 = vmatmul.f32.gmra.mxu0 %v3085
  %v3152 = vpop.f32.mrf.mxu0
  %v3153 = vadd.f32 0.0, %v3152
  %3154 = vmatmul.f32.gmra.mxu0 %v3088
  %v3155 = vpop.f32.mrf.mxu0
  %v3156 = vadd.f32 0.0, %v3155
  %3157 = vmatmul.f32.gmra.mxu0 %v3091
  %v3158 = vpop.f32.mrf.mxu0
  %v3159 = vadd.f32 0.0, %v3158
  %3160 = vmatmul.f32.gmra.mxu0 %v3094
  %v3161 = vpop.f32.mrf.mxu0
  %v3162 = vadd.f32 0.0, %v3161
  %3163 = vmatmul.f32.gmra.mxu0 %v3097
  %v3164 = vpop.f32.mrf.mxu0
  %v3165 = vadd.f32 0.0, %v3164
  %3166 = vmatmul.f32.gmra.mxu0 %v3100
  %v3167 = vpop.f32.mrf.mxu0
  %v3168 = vadd.f32 0.0, %v3167
  %3169 = vmatmul.f32.gmra.mxu0 %v3103
  %v3170 = vpop.f32.mrf.mxu0
  %v3171 = vadd.f32 0.0, %v3170
  %3172 = vmatmul.f32.gmra.mxu0 %v3106
  %v3173 = vpop.f32.mrf.mxu0
  %v3174 = vadd.f32 0.0, %v3173
  %3175 = vmatmul.f32.gmra.mxu0 %v3109
  %v3176 = vpop.f32.mrf.mxu0
  %v3177 = vadd.f32 0.0, %v3176
  %3178 = vmatmul.f32.gmra.mxu0 %v3112
  %v3179 = vpop.f32.mrf.mxu0
  %v3180 = vadd.f32 0.0, %v3179
  %3181 = vmatmul.f32.gmra.mxu0 %v3115
  %v3182 = vpop.f32.mrf.mxu0
  %v3183 = vadd.f32 0.0, %v3182
  %3184 = vmatmul.f32.gmra.mxu0 %v3118
  %v3185 = vpop.f32.mrf.mxu0
  %v3186 = vadd.f32 0.0, %v3185
  %3187 = vmatmul.f32.gmra.mxu0 %v3121
  %v3188 = vpop.f32.mrf.mxu0
  %v3189 = vadd.f32 0.0, %v3188
  %3190 = vmatmul.f32.gmra.mxu0 %v3124
  %v3191 = vpop.f32.mrf.mxu0
  %v3192 = vadd.f32 0.0, %v3191
  %3193 = vdwg.mxu0
  %v3194 = vadd.f32 %v3033, %v3144
  %v3195 = vadd.f32 %v3034, %v3147
  %v3196 = vadd.f32 %v3035, %v3150
  %v3197 = vadd.f32 %v3036, %v3153
  %v3198 = vadd.f32 %v3037, %v3156
  %v3199 = vadd.f32 %v3038, %v3159
  %v3200 = vadd.f32 %v3039, %v3162
  %v3201 = vadd.f32 %v3040, %v3165
  %v3202 = vadd.f32 %v3041, %v3168
  %v3203 = vadd.f32 %v3042, %v3171
  %v3204 = vadd.f32 %v3043, %v3174
  %v3205 = vadd.f32 %v3044, %v3177
  %v3206 = vadd.f32 %v3045, %v3180
  %v3207 = vadd.f32 %v3046, %v3183
  %v3208 = vadd.f32 %v3047, %v3186
  %v3209 = vadd.f32 %v3048, %v3189
  %v3210 = vadd.f32 %v3049, %v3192
  %v3211 = vld [vmem:[#allocation2 + $0xd] sm:$0xff]
  %v3212 = vld [vmem:[#allocation2 + $0x15] sm:$0xff]
  %v3213 = vld [vmem:[#allocation2 + $0x1d] sm:$0xff]
  %v3214 = vld [vmem:[#allocation2 + $0x25] sm:$0xff]
  %v3215 = vld [vmem:[#allocation2 + $0x2d] sm:$0xff]
  %v3216 = vld [vmem:[#allocation2 + $0x35] sm:$0xff]
  %v3217 = vld [vmem:[#allocation2 + $0x3d] sm:$0xff]
  %v3218 = vld [vmem:[#allocation2 + $0x45] sm:$0xff]
  %v3219 = vld [vmem:[#allocation2 + $0x4d] sm:$0xff]
  %v3220 = vld [vmem:[#allocation2 + $0x55] sm:$0xff]
  %v3221 = vld [vmem:[#allocation2 + $0x5d] sm:$0xff]
  %v3222 = vld [vmem:[#allocation2 + $0x65] sm:$0xff]
  %v3223 = vld [vmem:[#allocation2 + $0x6d] sm:$0xff]
  %v3224 = vld [vmem:[#allocation2 + $0x75] sm:$0xff]
  %v3225 = vld [vmem:[#allocation2 + $0x7d] sm:$0xff]
  %v3226 = vld [vmem:[#allocation2 + $0x85] sm:$0xff]
  %v3227 = vld [vmem:[#allocation2 + $0x8d] sm:$0xf]
  %v3228 = vld [vmem:[%s1158] sm:$0xff]
  %v3229 = vld [vmem:[%s1158 + $0x8] sm:$0xff]
  %v3230 = vld [vmem:[%s1158 + $0x10] sm:$0xff]
  %v3231 = vld [vmem:[%s1158 + $0x18] sm:$0xff]
  %v3232 = vld [vmem:[%s1158 + $0x20] sm:$0xff]
  %v3233 = vld [vmem:[%s1158 + $0x28] sm:$0xff]
  %v3234 = vld [vmem:[%s1158 + $0x30] sm:$0xff]
  %v3235 = vld [vmem:[%s1158 + $0x38] sm:$0xff]
  %v3237 = vsel %vm32, %v3211, 0
  %v3240 = vsel %vm32, %v3212, 0
  %v3243 = vsel %vm32, %v3213, 0
  %v3246 = vsel %vm32, %v3214, 0
  %v3249 = vsel %vm32, %v3215, 0
  %v3252 = vsel %vm32, %v3216, 0
  %v3255 = vsel %vm32, %v3217, 0
  %v3258 = vsel %vm32, %v3218, 0
  %v3261 = vsel %vm32, %v3219, 0
  %v3264 = vsel %vm32, %v3220, 0
  %v3267 = vsel %vm32, %v3221, 0
  %v3270 = vsel %vm32, %v3222, 0
  %v3273 = vsel %vm32, %v3223, 0
  %v3276 = vsel %vm32, %v3224, 0
  %v3279 = vsel %vm32, %v3225, 0
  %v3282 = vsel %vm32, %v3226, 0
  %v3285 = vsel %vm32, %v3227, 0
  %3287 = vmatpush.msra.mxu0 0.0
  %3288 = vmatpush.msra.mxu0 0.0
  %3289 = vmatpush.msra.mxu0 0.0
  %3290 = vmatpush.msra.mxu0 0.0
  %3291 = vmatpush.msra.mxu0 0.0
  %3292 = vmatpush.msra.mxu0 0.0
  %3293 = vmatpush.msra.mxu0 0.0
  %3294 = vmatpush.msra.mxu0 0.0
  %3295 = vmatpush.msra.mxu0 %v3235
  %3296 = vmatpush.msra.mxu0 %v3234
  %3297 = vmatpush.msra.mxu0 %v3233
  %3298 = vmatpush.msra.mxu0 %v3232
  %3299 = vmatpush.msra.mxu0 %v3231
  %3300 = vmatpush.msra.mxu0 %v3230
  %3301 = vmatpush.msra.mxu0 %v3229
  %3302 = vmatpush.msra.mxu0 %v3228
  %3303 = vmatmul.f32.gmra.mxu0 %v3237
  %v3304 = vpop.f32.mrf.mxu0
  %v3305 = vadd.f32 0.0, %v3304
  %3306 = vmatmul.f32.gmra.mxu0 %v3240
  %v3307 = vpop.f32.mrf.mxu0
  %v3308 = vadd.f32 0.0, %v3307
  %3309 = vmatmul.f32.gmra.mxu0 %v3243
  %v3310 = vpop.f32.mrf.mxu0
  %v3311 = vadd.f32 0.0, %v3310
  %3312 = vmatmul.f32.gmra.mxu0 %v3246
  %v3313 = vpop.f32.mrf.mxu0
  %v3314 = vadd.f32 0.0, %v3313
  %3315 = vmatmul.f32.gmra.mxu0 %v3249
  %v3316 = vpop.f32.mrf.mxu0
  %v3317 = vadd.f32 0.0, %v3316
  %3318 = vmatmul.f32.gmra.mxu0 %v3252
  %v3319 = vpop.f32.mrf.mxu0
  %v3320 = vadd.f32 0.0, %v3319
  %3321 = vmatmul.f32.gmra.mxu0 %v3255
  %v3322 = vpop.f32.mrf.mxu0
  %v3323 = vadd.f32 0.0, %v3322
  %3324 = vmatmul.f32.gmra.mxu0 %v3258
  %v3325 = vpop.f32.mrf.mxu0
  %v3326 = vadd.f32 0.0, %v3325
  %3327 = vmatmul.f32.gmra.mxu0 %v3261
  %v3328 = vpop.f32.mrf.mxu0
  %v3329 = vadd.f32 0.0, %v3328
  %3330 = vmatmul.f32.gmra.mxu0 %v3264
  %v3331 = vpop.f32.mrf.mxu0
  %v3332 = vadd.f32 0.0, %v3331
  %3333 = vmatmul.f32.gmra.mxu0 %v3267
  %v3334 = vpop.f32.mrf.mxu0
  %v3335 = vadd.f32 0.0, %v3334
  %3336 = vmatmul.f32.gmra.mxu0 %v3270
  %v3337 = vpop.f32.mrf.mxu0
  %v3338 = vadd.f32 0.0, %v3337
  %3339 = vmatmul.f32.gmra.mxu0 %v3273
  %v3340 = vpop.f32.mrf.mxu0
  %v3341 = vadd.f32 0.0, %v3340
  %3342 = vmatmul.f32.gmra.mxu0 %v3276
  %v3343 = vpop.f32.mrf.mxu0
  %v3344 = vadd.f32 0.0, %v3343
  %3345 = vmatmul.f32.gmra.mxu0 %v3279
  %v3346 = vpop.f32.mrf.mxu0
  %v3347 = vadd.f32 0.0, %v3346
  %3348 = vmatmul.f32.gmra.mxu0 %v3282
  %v3349 = vpop.f32.mrf.mxu0
  %v3350 = vadd.f32 0.0, %v3349
  %3351 = vmatmul.f32.gmra.mxu0 %v3285
  %v3352 = vpop.f32.mrf.mxu0
  %v3353 = vadd.f32 0.0, %v3352
  %3354 = vdwg.mxu0
  %v3355 = vadd.f32 %v3194, %v3305
  %v3356 = vadd.f32 %v3195, %v3308
  %v3357 = vadd.f32 %v3196, %v3311
  %v3358 = vadd.f32 %v3197, %v3314
  %v3359 = vadd.f32 %v3198, %v3317
  %v3360 = vadd.f32 %v3199, %v3320
  %v3361 = vadd.f32 %v3200, %v3323
  %v3362 = vadd.f32 %v3201, %v3326
  %v3363 = vadd.f32 %v3202, %v3329
  %v3364 = vadd.f32 %v3203, %v3332
  %v3365 = vadd.f32 %v3204, %v3335
  %v3366 = vadd.f32 %v3205, %v3338
  %v3367 = vadd.f32 %v3206, %v3341
  %v3368 = vadd.f32 %v3207, %v3344
  %v3369 = vadd.f32 %v3208, %v3347
  %v3370 = vadd.f32 %v3209, %v3350
  %v3371 = vadd.f32 %v3210, %v3353
  %v3372 = vld [vmem:[%s2303 + $0xd] sm:$0xff]
  %v3373 = vld [vmem:[%s2303 + $0x15] sm:$0xff]
  %v3374 = vld [vmem:[%s2303 + $0x1d] sm:$0xff]
  %v3375 = vld [vmem:[%s2303 + $0x25] sm:$0xff]
  %v3376 = vld [vmem:[%s2303 + $0x2d] sm:$0xff]
  %v3377 = vld [vmem:[%s2303 + $0x35] sm:$0xff]
  %v3378 = vld [vmem:[%s2303 + $0x3d] sm:$0xff]
  %v3379 = vld [vmem:[%s2303 + $0x45] sm:$0xff]
  %v3380 = vld [vmem:[%s2303 + $0x4d] sm:$0xff]
  %v3381 = vld [vmem:[%s2303 + $0x55] sm:$0xff]
  %v3382 = vld [vmem:[%s2303 + $0x5d] sm:$0xff]
  %v3383 = vld [vmem:[%s2303 + $0x65] sm:$0xff]
  %v3384 = vld [vmem:[%s2303 + $0x6d] sm:$0xff]
  %v3385 = vld [vmem:[%s2303 + $0x75] sm:$0xff]
  %v3386 = vld [vmem:[%s2303 + $0x7d] sm:$0xff]
  %v3387 = vld [vmem:[%s2303 + $0x85] sm:$0xff]
  %v3388 = vld [vmem:[%s2303 + $0x8d] sm:$0xf]
  %v3389 = vld [vmem:[%s1320] sm:$0xff]
  %v3390 = vld [vmem:[%s1320 + $0x8] sm:$0xff]
  %v3391 = vld [vmem:[%s1320 + $0x10] sm:$0xff]
  %v3392 = vld [vmem:[%s1320 + $0x18] sm:$0xff]
  %v3393 = vld [vmem:[%s1320 + $0x20] sm:$0xff]
  %v3394 = vld [vmem:[%s1320 + $0x28] sm:$0xff]
  %v3395 = vld [vmem:[%s1320 + $0x30] sm:$0xff]
  %v3396 = vld [vmem:[%s1320 + $0x38] sm:$0xff]
  %v3398 = vsel %vm32, %v3372, 0
  %v3401 = vsel %vm32, %v3373, 0
  %v3404 = vsel %vm32, %v3374, 0
  %v3407 = vsel %vm32, %v3375, 0
  %v3410 = vsel %vm32, %v3376, 0
  %v3413 = vsel %vm32, %v3377, 0
  %v3416 = vsel %vm32, %v3378, 0
  %v3419 = vsel %vm32, %v3379, 0
  %v3422 = vsel %vm32, %v3380, 0
  %v3425 = vsel %vm32, %v3381, 0
  %v3428 = vsel %vm32, %v3382, 0
  %v3431 = vsel %vm32, %v3383, 0
  %v3434 = vsel %vm32, %v3384, 0
  %v3437 = vsel %vm32, %v3385, 0
  %v3440 = vsel %vm32, %v3386, 0
  %v3443 = vsel %vm32, %v3387, 0
  %v3446 = vsel %vm32, %v3388, 0
  %3448 = vmatpush.msra.mxu0 0.0
  %3449 = vmatpush.msra.mxu0 0.0
  %3450 = vmatpush.msra.mxu0 0.0
  %3451 = vmatpush.msra.mxu0 0.0
  %3452 = vmatpush.msra.mxu0 0.0
  %3453 = vmatpush.msra.mxu0 0.0
  %3454 = vmatpush.msra.mxu0 0.0
  %3455 = vmatpush.msra.mxu0 0.0
  %3456 = vmatpush.msra.mxu0 %v3396
  %3457 = vmatpush.msra.mxu0 %v3395
  %3458 = vmatpush.msra.mxu0 %v3394
  %3459 = vmatpush.msra.mxu0 %v3393
  %3460 = vmatpush.msra.mxu0 %v3392
  %3461 = vmatpush.msra.mxu0 %v3391
  %3462 = vmatpush.msra.mxu0 %v3390
  %3463 = vmatpush.msra.mxu0 %v3389
  %3464 = vmatmul.f32.gmra.mxu0 %v3398
  %v3465 = vpop.f32.mrf.mxu0
  %v3466 = vadd.f32 0.0, %v3465
  %3467 = vmatmul.f32.gmra.mxu0 %v3401
  %v3468 = vpop.f32.mrf.mxu0
  %v3469 = vadd.f32 0.0, %v3468
  %3470 = vmatmul.f32.gmra.mxu0 %v3404
  %v3471 = vpop.f32.mrf.mxu0
  %v3472 = vadd.f32 0.0, %v3471
  %3473 = vmatmul.f32.gmra.mxu0 %v3407
  %v3474 = vpop.f32.mrf.mxu0
  %v3475 = vadd.f32 0.0, %v3474
  %3476 = vmatmul.f32.gmra.mxu0 %v3410
  %v3477 = vpop.f32.mrf.mxu0
  %v3478 = vadd.f32 0.0, %v3477
  %3479 = vmatmul.f32.gmra.mxu0 %v3413
  %v3480 = vpop.f32.mrf.mxu0
  %v3481 = vadd.f32 0.0, %v3480
  %3482 = vmatmul.f32.gmra.mxu0 %v3416
  %v3483 = vpop.f32.mrf.mxu0
  %v3484 = vadd.f32 0.0, %v3483
  %3485 = vmatmul.f32.gmra.mxu0 %v3419
  %v3486 = vpop.f32.mrf.mxu0
  %v3487 = vadd.f32 0.0, %v3486
  %3488 = vmatmul.f32.gmra.mxu0 %v3422
  %v3489 = vpop.f32.mrf.mxu0
  %v3490 = vadd.f32 0.0, %v3489
  %3491 = vmatmul.f32.gmra.mxu0 %v3425
  %v3492 = vpop.f32.mrf.mxu0
  %v3493 = vadd.f32 0.0, %v3492
  %3494 = vmatmul.f32.gmra.mxu0 %v3428
  %v3495 = vpop.f32.mrf.mxu0
  %v3496 = vadd.f32 0.0, %v3495
  %3497 = vmatmul.f32.gmra.mxu0 %v3431
  %v3498 = vpop.f32.mrf.mxu0
  %v3499 = vadd.f32 0.0, %v3498
  %3500 = vmatmul.f32.gmra.mxu0 %v3434
  %v3501 = vpop.f32.mrf.mxu0
  %v3502 = vadd.f32 0.0, %v3501
  %3503 = vmatmul.f32.gmra.mxu0 %v3437
  %v3504 = vpop.f32.mrf.mxu0
  %v3505 = vadd.f32 0.0, %v3504
  %3506 = vmatmul.f32.gmra.mxu0 %v3440
  %v3507 = vpop.f32.mrf.mxu0
  %v3508 = vadd.f32 0.0, %v3507
  %3509 = vmatmul.f32.gmra.mxu0 %v3443
  %v3510 = vpop.f32.mrf.mxu0
  %v3511 = vadd.f32 0.0, %v3510
  %3512 = vmatmul.f32.gmra.mxu0 %v3446
  %v3513 = vpop.f32.mrf.mxu0
  %v3514 = vadd.f32 0.0, %v3513
  %3515 = vdwg.mxu0
  %v3516 = vadd.f32 %v3355, %v3466
  %v3517 = vadd.f32 %v3356, %v3469
  %v3518 = vadd.f32 %v3357, %v3472
  %v3519 = vadd.f32 %v3358, %v3475
  %v3520 = vadd.f32 %v3359, %v3478
  %v3521 = vadd.f32 %v3360, %v3481
  %v3522 = vadd.f32 %v3361, %v3484
  %v3523 = vadd.f32 %v3362, %v3487
  %v3524 = vadd.f32 %v3363, %v3490
  %v3525 = vadd.f32 %v3364, %v3493
  %v3526 = vadd.f32 %v3365, %v3496
  %v3527 = vadd.f32 %v3366, %v3499
  %v3528 = vadd.f32 %v3367, %v3502
  %v3529 = vadd.f32 %v3368, %v3505
  %v3530 = vadd.f32 %v3369, %v3508
  %v3531 = vadd.f32 %v3370, %v3511
  %v3532 = vadd.f32 %v3371, %v3514
  %v3533 = vld [vmem:[%s6] sm:$0x1]
  %v3535 = vperm.slane %v3533, 0
  %v3537 = vadd.f32 %v3516, %v3535
  %v3538 = vadd.f32 %v3517, %v3535
  %v3539 = vadd.f32 %v3518, %v3535
  %v3540 = vadd.f32 %v3519, %v3535
  %v3541 = vadd.f32 %v3520, %v3535
  %v3542 = vadd.f32 %v3521, %v3535
  %v3543 = vadd.f32 %v3522, %v3535
  %v3544 = vadd.f32 %v3523, %v3535
  %v3545 = vadd.f32 %v3524, %v3535
  %v3546 = vadd.f32 %v3525, %v3535
  %v3547 = vadd.f32 %v3526, %v3535
  %v3548 = vadd.f32 %v3527, %v3535
  %v3549 = vadd.f32 %v3528, %v3535
  %v3550 = vadd.f32 %v3529, %v3535
  %v3551 = vadd.f32 %v3530, %v3535
  %v3552 = vadd.f32 %v3531, %v3535
  %v3553 = vadd.f32 %v3532, %v3535
  %v3554 = vmax.f32 %v3537, 0.0
  %v3555 = vmax.f32 %v3538, 0.0
  %v3556 = vmax.f32 %v3539, 0.0
  %v3557 = vmax.f32 %v3540, 0.0
  %v3558 = vmax.f32 %v3541, 0.0
  %v3559 = vmax.f32 %v3542, 0.0
  %v3560 = vmax.f32 %v3543, 0.0
  %v3561 = vmax.f32 %v3544, 0.0
  %v3562 = vmax.f32 %v3545, 0.0
  %v3563 = vmax.f32 %v3546, 0.0
  %v3564 = vmax.f32 %v3547, 0.0
  %v3565 = vmax.f32 %v3548, 0.0
  %v3566 = vmax.f32 %v3549, 0.0
  %v3567 = vmax.f32 %v3550, 0.0
  %v3568 = vmax.f32 %v3551, 0.0
  %v3569 = vmax.f32 %v3552, 0.0
  %v3570 = vmax.f32 %v3553, 0.0
  %3571 = vst.msk [vmem:[#allocation3] sm:$0xff] %vm32, %v3554
  %3572 = vst.msk [vmem:[#allocation3 + $0x8] sm:$0xff] %vm32, %v3555
  %3573 = vst.msk [vmem:[#allocation3 + $0x10] sm:$0xff] %vm32, %v3556
  %3574 = vst.msk [vmem:[#allocation3 + $0x18] sm:$0xff] %vm32, %v3557
  %3575 = vst.msk [vmem:[#allocation3 + $0x20] sm:$0xff] %vm32, %v3558
  %3576 = vst.msk [vmem:[#allocation3 + $0x28] sm:$0xff] %vm32, %v3559
  %3577 = vst.msk [vmem:[#allocation3 + $0x30] sm:$0xff] %vm32, %v3560
  %3578 = vst.msk [vmem:[#allocation3 + $0x38] sm:$0xff] %vm32, %v3561
  %3579 = vst.msk [vmem:[#allocation3 + $0x40] sm:$0xff] %vm32, %v3562
  %3580 = vst.msk [vmem:[#allocation3 + $0x48] sm:$0xff] %vm32, %v3563
  %3581 = vst.msk [vmem:[#allocation3 + $0x50] sm:$0xff] %vm32, %v3564
  %3582 = vst.msk [vmem:[#allocation3 + $0x58] sm:$0xff] %vm32, %v3565
  %3583 = vst.msk [vmem:[#allocation3 + $0x60] sm:$0xff] %vm32, %v3566
  %3584 = vst.msk [vmem:[#allocation3 + $0x68] sm:$0xff] %vm32, %v3567
  %3585 = vst.msk [vmem:[#allocation3 + $0x70] sm:$0xff] %vm32, %v3568
  %3586 = vst.msk [vmem:[#allocation3 + $0x78] sm:$0xff] %vm32, %v3569
  %3587 = vst.msk [vmem:[#allocation3 + $0x80] sm:$0xf] %vm1519, %v3570
  %v3588 = vld [vmem:[#allocation3] sm:$0xff]
  %v3589 = vld [vmem:[#allocation3 + $0x8] sm:$0xff]
  %v3590 = vld [vmem:[#allocation3 + $0x10] sm:$0xff]
  %v3591 = vld [vmem:[#allocation3 + $0x18] sm:$0xff]
  %v3592 = vld [vmem:[#allocation3 + $0x20] sm:$0xff]
  %v3593 = vld [vmem:[#allocation3 + $0x28] sm:$0xff]
  %v3594 = vld [vmem:[#allocation3 + $0x30] sm:$0xff]
  %v3595 = vld [vmem:[#allocation3 + $0x38] sm:$0xff]
  %v3596 = vld [vmem:[#allocation3 + $0x40] sm:$0xff]
  %v3597 = vld [vmem:[#allocation3 + $0x48] sm:$0xff]
  %v3598 = vld [vmem:[#allocation3 + $0x50] sm:$0xff]
  %v3599 = vld [vmem:[#allocation3 + $0x58] sm:$0xff]
  %v3600 = vld [vmem:[#allocation3 + $0x60] sm:$0xff]
  %v3601 = vld [vmem:[#allocation3 + $0x68] sm:$0xff]
  %v3602 = vld [vmem:[#allocation3 + $0x70] sm:$0xff]
  %v3603 = vld [vmem:[%s7] sm:$0xff]
  %v3604 = vld [vmem:[%s7 + $0x8] sm:$0xff]
  %v3605 = vld [vmem:[%s7 + $0x10] sm:$0xff]
  %v3606 = vld [vmem:[%s7 + $0x18] sm:$0xff]
  %v3607 = vld [vmem:[%s7 + $0x20] sm:$0xff]
  %v3608 = vld [vmem:[%s7 + $0x28] sm:$0xff]
  %v3609 = vld [vmem:[%s7 + $0x30] sm:$0xff]
  %v3610 = vld [vmem:[%s7 + $0x38] sm:$0xff]
  %v3611 = vld [vmem:[#allocation3 + $0x1] sm:$0xff]
  %v3612 = vld [vmem:[#allocation3 + $0x9] sm:$0xff]
  %v3613 = vld [vmem:[#allocation3 + $0x11] sm:$0xff]
  %v3614 = vld [vmem:[#allocation3 + $0x19] sm:$0xff]
  %v3615 = vld [vmem:[#allocation3 + $0x21] sm:$0xff]
  %v3616 = vld [vmem:[#allocation3 + $0x29] sm:$0xff]
  %v3617 = vld [vmem:[#allocation3 + $0x31] sm:$0xff]
  %v3618 = vld [vmem:[#allocation3 + $0x39] sm:$0xff]
  %v3619 = vld [vmem:[#allocation3 + $0x41] sm:$0xff]
  %v3620 = vld [vmem:[#allocation3 + $0x49] sm:$0xff]
  %v3621 = vld [vmem:[#allocation3 + $0x51] sm:$0xff]
  %v3622 = vld [vmem:[#allocation3 + $0x59] sm:$0xff]
  %v3623 = vld [vmem:[#allocation3 + $0x61] sm:$0xff]
  %v3624 = vld [vmem:[#allocation3 + $0x69] sm:$0xff]
  %v3625 = vld [vmem:[#allocation3 + $0x71] sm:$0xff]
  %v3626 = vld [vmem:[%s1559] sm:$0xff]
  %v3627 = vld [vmem:[%s1559 + $0x8] sm:$0xff]
  %v3628 = vld [vmem:[%s1559 + $0x10] sm:$0xff]
  %v3629 = vld [vmem:[%s1559 + $0x18] sm:$0xff]
  %v3630 = vld [vmem:[%s1559 + $0x20] sm:$0xff]
  %v3631 = vld [vmem:[%s1559 + $0x28] sm:$0xff]
  %v3632 = vld [vmem:[%s1559 + $0x30] sm:$0xff]
  %v3633 = vld [vmem:[%s1559 + $0x38] sm:$0xff]
  %v3635 = vsel %vm32, %v3611, 0
  %v3638 = vsel %vm32, %v3612, 0
  %v3641 = vsel %vm32, %v3613, 0
  %v3644 = vsel %vm32, %v3614, 0
  %v3647 = vsel %vm32, %v3615, 0
  %v3650 = vsel %vm32, %v3616, 0
  %v3653 = vsel %vm32, %v3617, 0
  %v3656 = vsel %vm32, %v3618, 0
  %v3659 = vsel %vm32, %v3619, 0
  %v3662 = vsel %vm32, %v3620, 0
  %v3665 = vsel %vm32, %v3621, 0
  %v3668 = vsel %vm32, %v3622, 0
  %v3671 = vsel %vm32, %v3623, 0
  %v3674 = vsel %vm32, %v3624, 0
  %v3677 = vsel %vm32, %v3625, 0
  %3679 = vmatpush.msra.mxu0 0.0
  %3680 = vmatpush.msra.mxu0 0.0
  %3681 = vmatpush.msra.mxu0 0.0
  %3682 = vmatpush.msra.mxu0 0.0
  %3683 = vmatpush.msra.mxu0 0.0
  %3684 = vmatpush.msra.mxu0 0.0
  %3685 = vmatpush.msra.mxu0 0.0
  %3686 = vmatpush.msra.mxu0 0.0
  %3687 = vmatpush.msra.mxu0 %v3633
  %3688 = vmatpush.msra.mxu0 %v3632
  %3689 = vmatpush.msra.mxu0 %v3631
  %3690 = vmatpush.msra.mxu0 %v3630
  %3691 = vmatpush.msra.mxu0 %v3629
  %3692 = vmatpush.msra.mxu0 %v3628
  %3693 = vmatpush.msra.mxu0 %v3627
  %3694 = vmatpush.msra.mxu0 %v3626
  %3695 = vmatmul.f32.gmra.mxu0 %v3635
  %v3696 = vpop.f32.mrf.mxu0
  %v3697 = vadd.f32 0.0, %v3696
  %3698 = vmatmul.f32.gmra.mxu0 %v3638
  %v3699 = vpop.f32.mrf.mxu0
  %v3700 = vadd.f32 0.0, %v3699
  %3701 = vmatmul.f32.gmra.mxu0 %v3641
  %v3702 = vpop.f32.mrf.mxu0
  %v3703 = vadd.f32 0.0, %v3702
  %3704 = vmatmul.f32.gmra.mxu0 %v3644
  %v3705 = vpop.f32.mrf.mxu0
  %v3706 = vadd.f32 0.0, %v3705
  %3707 = vmatmul.f32.gmra.mxu0 %v3647
  %v3708 = vpop.f32.mrf.mxu0
  %v3709 = vadd.f32 0.0, %v3708
  %3710 = vmatmul.f32.gmra.mxu0 %v3650
  %v3711 = vpop.f32.mrf.mxu0
  %v3712 = vadd.f32 0.0, %v3711
  %3713 = vmatmul.f32.gmra.mxu0 %v3653
  %v3714 = vpop.f32.mrf.mxu0
  %v3715 = vadd.f32 0.0, %v3714
  %3716 = vmatmul.f32.gmra.mxu0 %v3656
  %v3717 = vpop.f32.mrf.mxu0
  %v3718 = vadd.f32 0.0, %v3717
  %3719 = vmatmul.f32.gmra.mxu0 %v3659
  %v3720 = vpop.f32.mrf.mxu0
  %v3721 = vadd.f32 0.0, %v3720
  %3722 = vmatmul.f32.gmra.mxu0 %v3662
  %v3723 = vpop.f32.mrf.mxu0
  %v3724 = vadd.f32 0.0, %v3723
  %3725 = vmatmul.f32.gmra.mxu0 %v3665
  %v3726 = vpop.f32.mrf.mxu0
  %v3727 = vadd.f32 0.0, %v3726
  %3728 = vmatmul.f32.gmra.mxu0 %v3668
  %v3729 = vpop.f32.mrf.mxu0
  %v3730 = vadd.f32 0.0, %v3729
  %3731 = vmatmul.f32.gmra.mxu0 %v3671
  %v3732 = vpop.f32.mrf.mxu0
  %v3733 = vadd.f32 0.0, %v3732
  %3734 = vmatmul.f32.gmra.mxu0 %v3674
  %v3735 = vpop.f32.mrf.mxu0
  %v3736 = vadd.f32 0.0, %v3735
  %3737 = vmatmul.f32.gmra.mxu0 %v3677
  %v3738 = vpop.f32.mrf.mxu0
  %v3739 = vadd.f32 0.0, %v3738
  %3740 = vdwg.mxu0
  %v3742 = vsel %vm32, %v3588, 0
  %v3745 = vsel %vm32, %v3589, 0
  %v3748 = vsel %vm32, %v3590, 0
  %v3751 = vsel %vm32, %v3591, 0
  %v3754 = vsel %vm32, %v3592, 0
  %v3757 = vsel %vm32, %v3593, 0
  %v3760 = vsel %vm32, %v3594, 0
  %v3763 = vsel %vm32, %v3595, 0
  %v3766 = vsel %vm32, %v3596, 0
  %v3769 = vsel %vm32, %v3597, 0
  %v3772 = vsel %vm32, %v3598, 0
  %v3775 = vsel %vm32, %v3599, 0
  %v3778 = vsel %vm32, %v3600, 0
  %v3781 = vsel %vm32, %v3601, 0
  %v3784 = vsel %vm32, %v3602, 0
  %3786 = vmatpush.msra.mxu0 0.0
  %3787 = vmatpush.msra.mxu0 0.0
  %3788 = vmatpush.msra.mxu0 0.0
  %3789 = vmatpush.msra.mxu0 0.0
  %3790 = vmatpush.msra.mxu0 0.0
  %3791 = vmatpush.msra.mxu0 0.0
  %3792 = vmatpush.msra.mxu0 0.0
  %3793 = vmatpush.msra.mxu0 0.0
  %3794 = vmatpush.msra.mxu0 %v3610
  %3795 = vmatpush.msra.mxu0 %v3609
  %3796 = vmatpush.msra.mxu0 %v3608
  %3797 = vmatpush.msra.mxu0 %v3607
  %3798 = vmatpush.msra.mxu0 %v3606
  %3799 = vmatpush.msra.mxu0 %v3605
  %3800 = vmatpush.msra.mxu0 %v3604
  %3801 = vmatpush.msra.mxu0 %v3603
  %3802 = vmatmul.f32.gmra.mxu0 %v3742
  %v3803 = vpop.f32.mrf.mxu0
  %v3804 = vadd.f32 %v3697, %v3803
  %3805 = vmatmul.f32.gmra.mxu0 %v3745
  %v3806 = vpop.f32.mrf.mxu0
  %v3807 = vadd.f32 %v3700, %v3806
  %3808 = vmatmul.f32.gmra.mxu0 %v3748
  %v3809 = vpop.f32.mrf.mxu0
  %v3810 = vadd.f32 %v3703, %v3809
  %3811 = vmatmul.f32.gmra.mxu0 %v3751
  %v3812 = vpop.f32.mrf.mxu0
  %v3813 = vadd.f32 %v3706, %v3812
  %3814 = vmatmul.f32.gmra.mxu0 %v3754
  %v3815 = vpop.f32.mrf.mxu0
  %v3816 = vadd.f32 %v3709, %v3815
  %3817 = vmatmul.f32.gmra.mxu0 %v3757
  %v3818 = vpop.f32.mrf.mxu0
  %v3819 = vadd.f32 %v3712, %v3818
  %3820 = vmatmul.f32.gmra.mxu0 %v3760
  %v3821 = vpop.f32.mrf.mxu0
  %v3822 = vadd.f32 %v3715, %v3821
  %3823 = vmatmul.f32.gmra.mxu0 %v3763
  %v3824 = vpop.f32.mrf.mxu0
  %v3825 = vadd.f32 %v3718, %v3824
  %3826 = vmatmul.f32.gmra.mxu0 %v3766
  %v3827 = vpop.f32.mrf.mxu0
  %v3828 = vadd.f32 %v3721, %v3827
  %3829 = vmatmul.f32.gmra.mxu0 %v3769
  %v3830 = vpop.f32.mrf.mxu0
  %v3831 = vadd.f32 %v3724, %v3830
  %3832 = vmatmul.f32.gmra.mxu0 %v3772
  %v3833 = vpop.f32.mrf.mxu0
  %v3834 = vadd.f32 %v3727, %v3833
  %3835 = vmatmul.f32.gmra.mxu0 %v3775
  %v3836 = vpop.f32.mrf.mxu0
  %v3837 = vadd.f32 %v3730, %v3836
  %3838 = vmatmul.f32.gmra.mxu0 %v3778
  %v3839 = vpop.f32.mrf.mxu0
  %v3840 = vadd.f32 %v3733, %v3839
  %3841 = vmatmul.f32.gmra.mxu0 %v3781
  %v3842 = vpop.f32.mrf.mxu0
  %v3843 = vadd.f32 %v3736, %v3842
  %3844 = vmatmul.f32.gmra.mxu0 %v3784
  %v3845 = vpop.f32.mrf.mxu0
  %v3846 = vadd.f32 %v3739, %v3845
  %3847 = vdwg.mxu0
  %v3848 = vld [vmem:[#allocation3 + $0xc] sm:$0xff]
  %v3849 = vld [vmem:[#allocation3 + $0x14] sm:$0xff]
  %v3850 = vld [vmem:[#allocation3 + $0x1c] sm:$0xff]
  %v3851 = vld [vmem:[#allocation3 + $0x24] sm:$0xff]
  %v3852 = vld [vmem:[#allocation3 + $0x2c] sm:$0xff]
  %v3853 = vld [vmem:[#allocation3 + $0x34] sm:$0xff]
  %v3854 = vld [vmem:[#allocation3 + $0x3c] sm:$0xff]
  %v3855 = vld [vmem:[#allocation3 + $0x44] sm:$0xff]
  %v3856 = vld [vmem:[#allocation3 + $0x4c] sm:$0xff]
  %v3857 = vld [vmem:[#allocation3 + $0x54] sm:$0xff]
  %v3858 = vld [vmem:[#allocation3 + $0x5c] sm:$0xff]
  %v3859 = vld [vmem:[#allocation3 + $0x64] sm:$0xff]
  %v3860 = vld [vmem:[#allocation3 + $0x6c] sm:$0xff]
  %v3861 = vld [vmem:[#allocation3 + $0x74] sm:$0xff]
  %v3862 = vld [vmem:[#allocation3 + $0x7c] sm:$0xff]
  %v3863 = vld [vmem:[%s1797] sm:$0xff]
  %v3864 = vld [vmem:[%s1797 + $0x8] sm:$0xff]
  %v3865 = vld [vmem:[%s1797 + $0x10] sm:$0xff]
  %v3866 = vld [vmem:[%s1797 + $0x18] sm:$0xff]
  %v3867 = vld [vmem:[%s1797 + $0x20] sm:$0xff]
  %v3868 = vld [vmem:[%s1797 + $0x28] sm:$0xff]
  %v3869 = vld [vmem:[%s1797 + $0x30] sm:$0xff]
  %v3870 = vld [vmem:[%s1797 + $0x38] sm:$0xff]
  %v3872 = vsel %vm32, %v3848, 0
  %v3875 = vsel %vm32, %v3849, 0
  %v3878 = vsel %vm32, %v3850, 0
  %v3881 = vsel %vm32, %v3851, 0
  %v3884 = vsel %vm32, %v3852, 0
  %v3887 = vsel %vm32, %v3853, 0
  %v3890 = vsel %vm32, %v3854, 0
  %v3893 = vsel %vm32, %v3855, 0
  %v3896 = vsel %vm32, %v3856, 0
  %v3899 = vsel %vm32, %v3857, 0
  %v3902 = vsel %vm32, %v3858, 0
  %v3905 = vsel %vm32, %v3859, 0
  %v3908 = vsel %vm32, %v3860, 0
  %v3911 = vsel %vm32, %v3861, 0
  %v3914 = vsel %vm32, %v3862, 0
  %3916 = vmatpush.msra.mxu0 0.0
  %3917 = vmatpush.msra.mxu0 0.0
  %3918 = vmatpush.msra.mxu0 0.0
  %3919 = vmatpush.msra.mxu0 0.0
  %3920 = vmatpush.msra.mxu0 0.0
  %3921 = vmatpush.msra.mxu0 0.0
  %3922 = vmatpush.msra.mxu0 0.0
  %3923 = vmatpush.msra.mxu0 0.0
  %3924 = vmatpush.msra.mxu0 %v3870
  %3925 = vmatpush.msra.mxu0 %v3869
  %3926 = vmatpush.msra.mxu0 %v3868
  %3927 = vmatpush.msra.mxu0 %v3867
  %3928 = vmatpush.msra.mxu0 %v3866
  %3929 = vmatpush.msra.mxu0 %v3865
  %3930 = vmatpush.msra.mxu0 %v3864
  %3931 = vmatpush.msra.mxu0 %v3863
  %3932 = vmatmul.f32.gmra.mxu0 %v3872
  %v3933 = vpop.f32.mrf.mxu0
  %v3934 = vadd.f32 0.0, %v3933
  %3935 = vmatmul.f32.gmra.mxu0 %v3875
  %v3936 = vpop.f32.mrf.mxu0
  %v3937 = vadd.f32 0.0, %v3936
  %3938 = vmatmul.f32.gmra.mxu0 %v3878
  %v3939 = vpop.f32.mrf.mxu0
  %v3940 = vadd.f32 0.0, %v3939
  %3941 = vmatmul.f32.gmra.mxu0 %v3881
  %v3942 = vpop.f32.mrf.mxu0
  %v3943 = vadd.f32 0.0, %v3942
  %3944 = vmatmul.f32.gmra.mxu0 %v3884
  %v3945 = vpop.f32.mrf.mxu0
  %v3946 = vadd.f32 0.0, %v3945
  %3947 = vmatmul.f32.gmra.mxu0 %v3887
  %v3948 = vpop.f32.mrf.mxu0
  %v3949 = vadd.f32 0.0, %v3948
  %3950 = vmatmul.f32.gmra.mxu0 %v3890
  %v3951 = vpop.f32.mrf.mxu0
  %v3952 = vadd.f32 0.0, %v3951
  %3953 = vmatmul.f32.gmra.mxu0 %v3893
  %v3954 = vpop.f32.mrf.mxu0
  %v3955 = vadd.f32 0.0, %v3954
  %3956 = vmatmul.f32.gmra.mxu0 %v3896
  %v3957 = vpop.f32.mrf.mxu0
  %v3958 = vadd.f32 0.0, %v3957
  %3959 = vmatmul.f32.gmra.mxu0 %v3899
  %v3960 = vpop.f32.mrf.mxu0
  %v3961 = vadd.f32 0.0, %v3960
  %3962 = vmatmul.f32.gmra.mxu0 %v3902
  %v3963 = vpop.f32.mrf.mxu0
  %v3964 = vadd.f32 0.0, %v3963
  %3965 = vmatmul.f32.gmra.mxu0 %v3905
  %v3966 = vpop.f32.mrf.mxu0
  %v3967 = vadd.f32 0.0, %v3966
  %3968 = vmatmul.f32.gmra.mxu0 %v3908
  %v3969 = vpop.f32.mrf.mxu0
  %v3970 = vadd.f32 0.0, %v3969
  %3971 = vmatmul.f32.gmra.mxu0 %v3911
  %v3972 = vpop.f32.mrf.mxu0
  %v3973 = vadd.f32 0.0, %v3972
  %3974 = vmatmul.f32.gmra.mxu0 %v3914
  %v3975 = vpop.f32.mrf.mxu0
  %v3976 = vadd.f32 0.0, %v3975
  %3977 = vdwg.mxu0
  %v3978 = vadd.f32 %v3804, %v3934
  %v3979 = vadd.f32 %v3807, %v3937
  %v3980 = vadd.f32 %v3810, %v3940
  %v3981 = vadd.f32 %v3813, %v3943
  %v3982 = vadd.f32 %v3816, %v3946
  %v3983 = vadd.f32 %v3819, %v3949
  %v3984 = vadd.f32 %v3822, %v3952
  %v3985 = vadd.f32 %v3825, %v3955
  %v3986 = vadd.f32 %v3828, %v3958
  %v3987 = vadd.f32 %v3831, %v3961
  %v3988 = vadd.f32 %v3834, %v3964
  %v3989 = vadd.f32 %v3837, %v3967
  %v3990 = vadd.f32 %v3840, %v3970
  %v3991 = vadd.f32 %v3843, %v3973
  %v3992 = vadd.f32 %v3846, %v3976
  %v3993 = vld [vmem:[#allocation3 + $0xd] sm:$0xff]
  %v3994 = vld [vmem:[#allocation3 + $0x15] sm:$0xff]
  %v3995 = vld [vmem:[#allocation3 + $0x1d] sm:$0xff]
  %v3996 = vld [vmem:[#allocation3 + $0x25] sm:$0xff]
  %v3997 = vld [vmem:[#allocation3 + $0x2d] sm:$0xff]
  %v3998 = vld [vmem:[#allocation3 + $0x35] sm:$0xff]
  %v3999 = vld [vmem:[#allocation3 + $0x3d] sm:$0xff]
  %v4000 = vld [vmem:[#allocation3 + $0x45] sm:$0xff]
  %v4001 = vld [vmem:[#allocation3 + $0x4d] sm:$0xff]
  %v4002 = vld [vmem:[#allocation3 + $0x55] sm:$0xff]
  %v4003 = vld [vmem:[#allocation3 + $0x5d] sm:$0xff]
  %v4004 = vld [vmem:[#allocation3 + $0x65] sm:$0xff]
  %v4005 = vld [vmem:[#allocation3 + $0x6d] sm:$0xff]
  %v4006 = vld [vmem:[#allocation3 + $0x75] sm:$0xff]
  %v4007 = vld [vmem:[#allocation3 + $0x7d] sm:$0xff]
  %v4008 = vld [vmem:[%s1943] sm:$0xff]
  %v4009 = vld [vmem:[%s1943 + $0x8] sm:$0xff]
  %v4010 = vld [vmem:[%s1943 + $0x10] sm:$0xff]
  %v4011 = vld [vmem:[%s1943 + $0x18] sm:$0xff]
  %v4012 = vld [vmem:[%s1943 + $0x20] sm:$0xff]
  %v4013 = vld [vmem:[%s1943 + $0x28] sm:$0xff]
  %v4014 = vld [vmem:[%s1943 + $0x30] sm:$0xff]
  %v4015 = vld [vmem:[%s1943 + $0x38] sm:$0xff]
  %v4017 = vsel %vm32, %v3993, 0
  %v4020 = vsel %vm32, %v3994, 0
  %v4023 = vsel %vm32, %v3995, 0
  %v4026 = vsel %vm32, %v3996, 0
  %v4029 = vsel %vm32, %v3997, 0
  %v4032 = vsel %vm32, %v3998, 0
  %v4035 = vsel %vm32, %v3999, 0
  %v4038 = vsel %vm32, %v4000, 0
  %v4041 = vsel %vm32, %v4001, 0
  %v4044 = vsel %vm32, %v4002, 0
  %v4047 = vsel %vm32, %v4003, 0
  %v4050 = vsel %vm32, %v4004, 0
  %v4053 = vsel %vm32, %v4005, 0
  %v4056 = vsel %vm32, %v4006, 0
  %v4059 = vsel %vm32, %v4007, 0
  %4061 = vmatpush.msra.mxu0 0.0
  %4062 = vmatpush.msra.mxu0 0.0
  %4063 = vmatpush.msra.mxu0 0.0
  %4064 = vmatpush.msra.mxu0 0.0
  %4065 = vmatpush.msra.mxu0 0.0
  %4066 = vmatpush.msra.mxu0 0.0
  %4067 = vmatpush.msra.mxu0 0.0
  %4068 = vmatpush.msra.mxu0 0.0
  %4069 = vmatpush.msra.mxu0 %v4015
  %4070 = vmatpush.msra.mxu0 %v4014
  %4071 = vmatpush.msra.mxu0 %v4013
  %4072 = vmatpush.msra.mxu0 %v4012
  %4073 = vmatpush.msra.mxu0 %v4011
  %4074 = vmatpush.msra.mxu0 %v4010
  %4075 = vmatpush.msra.mxu0 %v4009
  %4076 = vmatpush.msra.mxu0 %v4008
  %4077 = vmatmul.f32.gmra.mxu0 %v4017
  %v4078 = vpop.f32.mrf.mxu0
  %v4079 = vadd.f32 0.0, %v4078
  %4080 = vmatmul.f32.gmra.mxu0 %v4020
  %v4081 = vpop.f32.mrf.mxu0
  %v4082 = vadd.f32 0.0, %v4081
  %4083 = vmatmul.f32.gmra.mxu0 %v4023
  %v4084 = vpop.f32.mrf.mxu0
  %v4085 = vadd.f32 0.0, %v4084
  %4086 = vmatmul.f32.gmra.mxu0 %v4026
  %v4087 = vpop.f32.mrf.mxu0
  %v4088 = vadd.f32 0.0, %v4087
  %4089 = vmatmul.f32.gmra.mxu0 %v4029
  %v4090 = vpop.f32.mrf.mxu0
  %v4091 = vadd.f32 0.0, %v4090
  %4092 = vmatmul.f32.gmra.mxu0 %v4032
  %v4093 = vpop.f32.mrf.mxu0
  %v4094 = vadd.f32 0.0, %v4093
  %4095 = vmatmul.f32.gmra.mxu0 %v4035
  %v4096 = vpop.f32.mrf.mxu0
  %v4097 = vadd.f32 0.0, %v4096
  %4098 = vmatmul.f32.gmra.mxu0 %v4038
  %v4099 = vpop.f32.mrf.mxu0
  %v4100 = vadd.f32 0.0, %v4099
  %4101 = vmatmul.f32.gmra.mxu0 %v4041
  %v4102 = vpop.f32.mrf.mxu0
  %v4103 = vadd.f32 0.0, %v4102
  %4104 = vmatmul.f32.gmra.mxu0 %v4044
  %v4105 = vpop.f32.mrf.mxu0
  %v4106 = vadd.f32 0.0, %v4105
  %4107 = vmatmul.f32.gmra.mxu0 %v4047
  %v4108 = vpop.f32.mrf.mxu0
  %v4109 = vadd.f32 0.0, %v4108
  %4110 = vmatmul.f32.gmra.mxu0 %v4050
  %v4111 = vpop.f32.mrf.mxu0
  %v4112 = vadd.f32 0.0, %v4111
  %4113 = vmatmul.f32.gmra.mxu0 %v4053
  %v4114 = vpop.f32.mrf.mxu0
  %v4115 = vadd.f32 0.0, %v4114
  %4116 = vmatmul.f32.gmra.mxu0 %v4056
  %v4117 = vpop.f32.mrf.mxu0
  %v4118 = vadd.f32 0.0, %v4117
  %4119 = vmatmul.f32.gmra.mxu0 %v4059
  %v4120 = vpop.f32.mrf.mxu0
  %v4121 = vadd.f32 0.0, %v4120
  %4122 = vdwg.mxu0
  %v4123 = vadd.f32 %v3978, %v4079
  %v4124 = vadd.f32 %v3979, %v4082
  %v4125 = vadd.f32 %v3980, %v4085
  %v4126 = vadd.f32 %v3981, %v4088
  %v4127 = vadd.f32 %v3982, %v4091
  %v4128 = vadd.f32 %v3983, %v4094
  %v4129 = vadd.f32 %v3984, %v4097
  %v4130 = vadd.f32 %v3985, %v4100
  %v4131 = vadd.f32 %v3986, %v4103
  %v4132 = vadd.f32 %v3987, %v4106
  %v4133 = vadd.f32 %v3988, %v4109
  %v4134 = vadd.f32 %v3989, %v4112
  %v4135 = vadd.f32 %v3990, %v4115
  %v4136 = vadd.f32 %v3991, %v4118
  %v4137 = vadd.f32 %v3992, %v4121
  %v4138 = vld [vmem:[%s8] sm:$0x1]
  %v4140 = vperm.slane %v4138, 0
  %v4142 = vadd.f32 %v4123, %v4140
  %v4143 = vadd.f32 %v4124, %v4140
  %v4144 = vadd.f32 %v4125, %v4140
  %v4145 = vadd.f32 %v4126, %v4140
  %v4146 = vadd.f32 %v4127, %v4140
  %v4147 = vadd.f32 %v4128, %v4140
  %v4148 = vadd.f32 %v4129, %v4140
  %v4149 = vadd.f32 %v4130, %v4140
  %v4150 = vadd.f32 %v4131, %v4140
  %v4151 = vadd.f32 %v4132, %v4140
  %v4152 = vadd.f32 %v4133, %v4140
  %v4153 = vadd.f32 %v4134, %v4140
  %v4154 = vadd.f32 %v4135, %v4140
  %v4155 = vadd.f32 %v4136, %v4140
  %v4156 = vadd.f32 %v4137, %v4140
  %s4157 = scalar_lea.vmem %s9, 120
  %4158 = vst.msk [vmem:[%s4157] sm:$0xff] %vm32, %v4142
  %4159 = vst.msk [vmem:[%s4157 + $0x8] sm:$0xff] %vm32, %v4143
  %4160 = vst.msk [vmem:[%s4157 + $0x10] sm:$0xff] %vm32, %v4144
  %4161 = vst.msk [vmem:[%s4157 + $0x18] sm:$0xff] %vm32, %v4145
  %4162 = vst.msk [vmem:[%s4157 + $0x20] sm:$0xff] %vm32, %v4146
  %4163 = vst.msk [vmem:[%s4157 + $0x28] sm:$0xff] %vm32, %v4147
  %4164 = vst.msk [vmem:[%s4157 + $0x30] sm:$0xff] %vm32, %v4148
  %4165 = vst.msk [vmem:[%s4157 + $0x38] sm:$0xff] %vm32, %v4149
  %4166 = vst.msk [vmem:[%s4157 + $0x40] sm:$0xff] %vm32, %v4150
  %4167 = vst.msk [vmem:[%s4157 + $0x48] sm:$0xff] %vm32, %v4151
  %4168 = vst.msk [vmem:[%s4157 + $0x50] sm:$0xff] %vm32, %v4152
  %4169 = vst.msk [vmem:[%s4157 + $0x58] sm:$0xff] %vm32, %v4153
  %4170 = vst.msk [vmem:[%s4157 + $0x60] sm:$0xff] %vm32, %v4154
  %4171 = vst.msk [vmem:[%s4157 + $0x68] sm:$0xff] %vm32, %v4155
  %4172 = vst.msk [vmem:[%s4157 + $0x70] sm:$0xff] %vm32, %v4156
  // Predicated region
  $region38: #{decoder_forward.3} parent=0 // pred_check
    _
  $region39: #{decoder_forward.3} parent=0 // pred_check_branch
    %4174 = sbr.rel (0) target = $region41
  $region40: #{decoder_forward.3} parent=0 // pred_region
    _
  $region41: #{decoder_forward.3} parent=0 // pred_fallthru
    _
  // Predicated region
  $region42: #{decoder_forward.3} parent=0 // pred_check
    _
  $region43: #{decoder_forward.3} parent=0 // pred_check_branch
    %4176 = sbr.rel (0) target = $region45
  $region44: #{decoder_forward.3} parent=0 // pred_region
    _
  $region45: #{decoder_forward.3} parent=0 // pred_fallthru
    _

</llo_original>
